<compile_context>
chip_gen: v7x
topology: tpu7x:2x2x1
jax: 0.10.0
libtpu: 0.0.40
codegen_flags: <defaults>
</compile_context>

<pallas_src>
import functools
import math

import jax
import jax.numpy as jnp
from jax.experimental import pallas as pl
from jax.experimental.pallas import tpu as pltpu

# MXU input dtype; accumulation + elementwise stay f32.
MXU_DTYPE = jnp.bfloat16

# Channel widths fixed by the module definition.
C0, C1, C2, C3 = 3, 64, 128, 256      # encoder:   3 -> 64 -> 128 -> 256
D3 = 2                                # decoder final channels
DEC_N = 2 * 2 * 2 * 2 * 2 * 2 * D3    # 128 columns of the composed decoder weight


# ---------------------------------------------------------------------------
# Fused whole-network kernel (BB batch elements per grid step)
# ---------------------------------------------------------------------------
def _dwm_kernel(x_ref, w1_ref, b1_ref, w2_ref, b2_ref, w3_ref, b3_ref,
                wd_ref, bd_ref, o_ref, p1_ref, p2_ref, p3_ref, *, H, W, BB):
    # x_ref : (BB, H, W, 3)      bf16  NHWC input block
    # w*_ref: (9*Cin, Cout)      bf16  conv weights, row = (kh*3+kw)*Cin + ci
    # b*_ref: (1, Cout)          f32   conv biases
    # wd_ref: (256, 128)         bf16  composed decoder weight, col = (dh1,dw1,dh2,dw2,dh3,dw3,c)
    # bd_ref: (1, 128)           f32   composed decoder bias
    # o_ref : (BB, H3*W3, 128)   f32   sigmoid output, lane-dense (128 lanes) store
    # p1/p2/p3: bf16 VMEM pad scratches (zero halo + interior written each step)
    f32 = jnp.float32
    H1, W1 = H // 2, W // 2
    H2, W2 = H // 4, W // 4
    H3, W3 = H // 8, W // 8

    def zero_halo(pad_ref, Hs, Ws):
        # Only the 1-element border needs zeroing; the interior is overwritten below.
        C = pad_ref.shape[-1]
        zr = jnp.zeros((BB, 1, Ws + 2, C), pad_ref.dtype)
        zc = jnp.zeros((BB, Hs, 1, C), pad_ref.dtype)
        pad_ref[:, 0:1, :, :] = zr
        pad_ref[:, Hs + 1:Hs + 2, :, :] = zr
        pad_ref[:, 1:Hs + 1, 0:1, :] = zc
        pad_ref[:, 1:Hs + 1, Ws + 1:Ws + 2, :] = zc

    def relu_pool(y, Hs, Ws):
        # y: (BB*Hs*Ws, C) f32 -> ReLU -> 2x2/2 max-pool -> (BB, Hs//2, Ws//2, C) f32
        C = y.shape[-1]
        y = jnp.maximum(y, 0.0)
        y = y.reshape(BB, Hs // 2, 2, Ws // 2, 2, C)
        return jnp.max(jnp.max(y, axis=4), axis=2)

    def conv_stage(a, pad_ref, w_ref, b_ref, Hs, Ws):
        # a: (BB, Hs, Ws, Cin) bf16 -> conv3x3(pad=1) + ReLU + pool -> (BB, Hs//2, Ws//2, Cout) bf16
        Cin = a.shape[-1]
        zero_halo(pad_ref, Hs, Ws)
        pad_ref[:, 1:Hs + 1, 1:Ws + 1, :] = a
        taps = [pad_ref[:, dh:dh + Hs, dw:dw + Ws, :].reshape(BB * Hs * Ws, Cin)
                for dh in range(3) for dw in range(3)]
        slab = jnp.concatenate(taps, axis=-1)                  # (BB*Hs*Ws, 9*Cin) bf16
        y = jnp.dot(slab, w_ref[...], preferred_element_type=f32) + b_ref[...]
        return relu_pool(y, Hs, Ws).astype(MXU_DTYPE)

    # ---- Encoder ----------------------------------------------------------
    a = conv_stage(x_ref[...], p1_ref, w1_ref, b1_ref, H, W)   # (BB, H1, W1, 64)
    a = conv_stage(a, p2_ref, w2_ref, b2_ref, H1, W1)          # (BB, H2, W2, 128)
    a = conv_stage(a, p3_ref, w3_ref, b3_ref, H2, W2)          # (BB, H3, W3, 256)

    # ---- Decoder: 3 composed ConvTranspose2d(k=2,s=2) == one matmul, + sigmoid ----
    y = jnp.dot(a.reshape(BB * H3 * W3, C3), wd_ref[...],
                preferred_element_type=f32) + bd_ref[...]      # (BB*H3*W3, 128)
    y = jax.nn.sigmoid(y)
    o_ref[...] = y.reshape(BB, H3 * W3, DEC_N).astype(o_ref.dtype)


# ---------------------------------------------------------------------------
# One-time weight re-layout / decoder composition (off the per-call path)
# ---------------------------------------------------------------------------
def prepare_params(params):
    f32 = jnp.float32

    def conv_w(w):   # (Cout, Cin, 3, 3) -> (9*Cin, Cout), row = (kh*3+kw)*Cin + ci
        co, ci, _, _ = w.shape
        return jnp.transpose(w, (2, 3, 1, 0)).reshape(9 * ci, co).astype(MXU_DTYPE)

    # Compose the three overlap-free ConvTranspose2d layers (no nonlinearity between
    # them in the reference module) into one (256, 128) weight + (1, 128) bias.
    # Column layout: (dh1, dw1, dh2, dw2, dh3, dw3, c_out).
    w1 = params["up1_w"].astype(f32)   # (256, 128, 2, 2)
    w2 = params["up2_w"].astype(f32)   # (128,  64, 2, 2)
    w3 = params["up3_w"].astype(f32)   # ( 64,   2, 2, 2)
    b1 = params["up1_b"].astype(f32)
    b2 = params["up2_b"].astype(f32)
    b3 = params["up3_b"].astype(f32)

    wd = jnp.einsum("abpq,bcrs,cdtu->apqrstud", w1, w2, w3)
    wd = wd.reshape(C3, DEC_N).astype(MXU_DTYPE)

    t2 = jnp.einsum("c,cdtu->tud", b2, w3)                 # (dh3, dw3, c)
    t3 = jnp.einsum("b,bcrs,cdtu->rstud", b1, w2, w3)      # (dh2, dw2, dh3, dw3, c)
    bd = (b3.reshape(1, 1, 1, 1, 1, 1, D3)
          + t2.reshape(1, 1, 1, 1, 2, 2, D3)
          + t3.reshape(1, 1, 2, 2, 2, 2, D3))
    bd = jnp.broadcast_to(bd, (2, 2, 2, 2, 2, 2, D3)).reshape(1, DEC_N).astype(f32)

    return {
        "w1": conv_w(params["conv1_w"]), "b1": params["conv1_b"].reshape(1, -1).astype(f32),
        "w2": conv_w(params["conv2_w"]), "b2": params["conv2_b"].reshape(1, -1).astype(f32),
        "w3": conv_w(params["conv3_w"]), "b3": params["conv3_b"].reshape(1, -1).astype(f32),
        "wd": wd, "bd": bd,
    }


def _pick_bb(B):
    # Largest batch-block size (<=8) that keeps >=2 grid steps (so v7x's two
    # TensorCores can split the grid); fattens matmul M and amortises step overhead.
    best = 1
    for bb in range(1, min(B, 8) + 1):
        if B % bb == 0 and B // bb >= 2:
            best = bb
    return best


# ---------------------------------------------------------------------------
# Forward pass (NCHW in, NCHW out)
# ---------------------------------------------------------------------------
@jax.jit
def dwm_forward(x_nchw, kp):
    B, Cin, H, W = x_nchw.shape
    assert Cin == C0 and H % 8 == 0 and W % 8 == 0
    H3, W3 = H // 8, W // 8
    BB = _pick_bb(B)

    # NCHW -> NHWC bf16 (layout plumbing in XLA; im2col is built in-kernel).
    x = jnp.transpose(x_nchw, (0, 2, 3, 1)).astype(MXU_DTYPE)

    def full(arr):
        return pl.BlockSpec(arr.shape, lambda i, _nd=arr.ndim: (0,) * _nd)

    out = pl.pallas_call(
        functools.partial(_dwm_kernel, H=H, W=W, BB=BB),
        out_shape=jax.ShapeDtypeStruct((B, H3 * W3, DEC_N), jnp.float32),
        grid=(B // BB,),
        in_specs=[
            pl.BlockSpec((BB, H, W, C0), lambda i: (i, 0, 0, 0)),
            full(kp["w1"]), full(kp["b1"]),
            full(kp["w2"]), full(kp["b2"]),
            full(kp["w3"]), full(kp["b3"]),
            full(kp["wd"]), full(kp["bd"]),
        ],
        out_specs=pl.BlockSpec((BB, H3 * W3, DEC_N), lambda i: (i, 0, 0)),
        scratch_shapes=[
            pltpu.VMEM((BB, H + 2, W + 2, C0), MXU_DTYPE),            # conv1 pad
            pltpu.VMEM((BB, H // 2 + 2, W // 2 + 2, C1), MXU_DTYPE),  # conv2 pad
            pltpu.VMEM((BB, H // 4 + 2, W // 4 + 2, C2), MXU_DTYPE),  # conv3 pad
        ],
        compiler_params=pltpu.CompilerParams(dimension_semantics=("parallel",)),
    )(x, kp["w1"], kp["b1"], kp["w2"], kp["b2"], kp["w3"], kp["b3"],
      kp["wd"], kp["bd"])

    # Un-scramble: out[b, h3*W3 + w3, k], k = (dh1,dw1,dh2,dw2,dh3,dw3,c)
    #   -> NCHW pixel (8*h3 + 4*dh1 + 2*dh2 + dh3, 8*w3 + 4*dw1 + 2*dw2 + dw3).
    y = out.reshape(B, H3, W3, 2, 2, 2, 2, 2, 2, D3)
    y = jnp.transpose(y, (0, 9, 1, 3, 5, 7, 2, 4, 6, 8))
    return y.reshape(B, D3, H, W)


# ---------------------------------------------------------------------------
# Pure-JAX f32 reference (for in-script validation)
# ---------------------------------------------------------------------------
def dwm_reference(x_nchw, params):
    f32 = jnp.float32
    x = jnp.transpose(x_nchw, (0, 2, 3, 1)).astype(f32)

    def conv_relu_pool(a, w, b):
        B, Hs, Ws, _ = a.shape
        ap = jnp.pad(a, ((0, 0), (1, 1), (1, 1), (0, 0)))
        y = jnp.zeros((B, Hs, Ws, w.shape[0]), f32) + b
        for kh in range(3):
            for kw in range(3):
                y = y + jnp.einsum("bhwi,oi->bhwo",
                                   ap[:, kh:kh + Hs, kw:kw + Ws, :], w[:, :, kh, kw])
        y = jnp.maximum(y, 0.0)
        y = y.reshape(B, Hs // 2, 2, Ws // 2, 2, -1)
        return y.max(axis=(2, 4))

    def deconv(a, w, b):
        B, Hs, Ws, _ = a.shape
        out = jnp.zeros((B, 2 * Hs, 2 * Ws, w.shape[1]), f32)
        for kh in range(2):
            for kw in range(2):
                out = out.at[:, kh::2, kw::2, :].set(
                    jnp.einsum("bhwi,io->bhwo", a, w[:, :, kh, kw]) + b)
        return out

    a = conv_relu_pool(x, params["conv1_w"], params["conv1_b"])
    a = conv_relu_pool(a, params["conv2_w"], params["conv2_b"])
    a = conv_relu_pool(a, params["conv3_w"], params["conv3_b"])
    a = deconv(a, params["up1_w"], params["up1_b"])
    a = deconv(a, params["up2_w"], params["up2_b"])
    a = deconv(a, params["up3_w"], params["up3_b"])
    return jnp.transpose(jax.nn.sigmoid(a), (0, 3, 1, 2))


# ---------------------------------------------------------------------------
# Deterministic parameter initialization (PyTorch-like uniform(-1/sqrt(fan), ...))
# ---------------------------------------------------------------------------
def _init_params(key):
    def u(k, shape, fan_in):
        bound = 1.0 / math.sqrt(fan_in)
        return jax.random.uniform(k, shape, jnp.float32, -bound, bound)

    ks = jax.random.split(key, 12)
    return {
        "conv1_w": u(ks[0], (64, 3, 3, 3), 3 * 9),    "conv1_b": u(ks[1], (64,), 3 * 9),
        "conv2_w": u(ks[2], (128, 64, 3, 3), 64 * 9), "conv2_b": u(ks[3], (128,), 64 * 9),
        "conv3_w": u(ks[4], (256, 128, 3, 3), 128 * 9), "conv3_b": u(ks[5], (256,), 128 * 9),
        "up1_w": u(ks[6], (256, 128, 2, 2), 128 * 4), "up1_b": u(ks[7], (128,), 128 * 4),
        "up2_w": u(ks[8], (128, 64, 2, 2), 64 * 4),   "up2_b": u(ks[9], (64,), 64 * 4),
        "up3_w": u(ks[10], (64, 2, 2, 2), 2 * 4),     "up3_b": u(ks[11], (2,), 2 * 4),
    }


if __name__ == "__main__":
    root = jax.random.PRNGKey(0)
    k_params, k_x = jax.random.split(root)
    params = _init_params(k_params)
    kparams = prepare_params(params)          # one-time weight re-layout / composition

    # Input follows the PyTorch NCHW convention: (batch=2, channels=3, 16, 16)
    x = jax.random.normal(k_x, (2, 3, 16, 16), jnp.float32)

    out = jax.block_until_ready(dwm_forward(x, kparams))
    ref = jax.block_until_ready(dwm_reference(x, params))

    assert out.shape == (2, 2, 16, 16), out.shape
    assert bool(jnp.all(jnp.isfinite(out)))
    assert bool(jnp.all((out >= 0.0) & (out <= 1.0)))          # sigmoid output range
    max_err = float(jnp.max(jnp.abs(out - ref)))
    assert max_err < 5e-2, f"mismatch vs f32 reference: {max_err}"   # bf16 MXU tolerance
    print("KERNEL_OK")
</pallas_src>

<mosaic_0001>
module attributes {stable_mosaic.version = 11 : i64} {
  func.func @_dwm_kernel(%arg0: i32, %arg1: memref<1x16x16x3xbf16, #tpu.memory_space<vmem>>, %arg2: memref<27x64xbf16, #tpu.memory_space<vmem>>, %arg3: memref<1x64xf32, #tpu.memory_space<vmem>>, %arg4: memref<576x128xbf16, #tpu.memory_space<vmem>>, %arg5: memref<1x128xf32, #tpu.memory_space<vmem>>, %arg6: memref<1152x256xbf16, #tpu.memory_space<vmem>>, %arg7: memref<1x256xf32, #tpu.memory_space<vmem>>, %arg8: memref<256x128xbf16, #tpu.memory_space<vmem>>, %arg9: memref<1x128xf32, #tpu.memory_space<vmem>>, %arg10: memref<1x4x128xf32, #tpu.memory_space<vmem>>, %arg11: memref<1x18x18x3xbf16, #tpu.memory_space<vmem>>, %arg12: memref<1x10x10x64xbf16, #tpu.memory_space<vmem>>, %arg13: memref<1x6x6x128xbf16, #tpu.memory_space<vmem>>) attributes {dimension_semantics = [#tpu.dimension_semantics<parallel>], iteration_bounds = array<i64: 2>, scalar_prefetch = 0 : i64, scratch_operands = 3 : i64, tpu.core_type = #tpu.core_type<tc>, window_params = [{transform_indices = @transform_0, window_bounds = array<i64: 1, 16, 16, 3>}, {pipeline_mode = #tpu.pipeline_mode<synchronous>, transform_indices = @transform_1, window_bounds = array<i64: 27, 64>}, {pipeline_mode = #tpu.pipeline_mode<synchronous>, transform_indices = @transform_2, window_bounds = array<i64: 1, 64>}, {pipeline_mode = #tpu.pipeline_mode<synchronous>, transform_indices = @transform_3, window_bounds = array<i64: 576, 128>}, {pipeline_mode = #tpu.pipeline_mode<synchronous>, transform_indices = @transform_4, window_bounds = array<i64: 1, 128>}, {pipeline_mode = #tpu.pipeline_mode<synchronous>, transform_indices = @transform_5, window_bounds = array<i64: 1152, 256>}, {pipeline_mode = #tpu.pipeline_mode<synchronous>, transform_indices = @transform_6, window_bounds = array<i64: 1, 256>}, {pipeline_mode = #tpu.pipeline_mode<synchronous>, transform_indices = @transform_7, window_bounds = array<i64: 256, 128>}, {pipeline_mode = #tpu.pipeline_mode<synchronous>, transform_indices = @transform_8, window_bounds = array<i64: 1, 128>}, {transform_indices = @transform_9, window_bounds = array<i64: 1, 4, 128>}]} {
    %c0 = arith.constant 0 : index
    %c0_0 = arith.constant 0 : index
    %c0_1 = arith.constant 0 : index
    %c0_2 = arith.constant 0 : index
    %0 = vector.load %arg1[%c0, %c0_0, %c0_1, %c0_2] : memref<1x16x16x3xbf16, #tpu.memory_space<vmem>>, vector<1x16x16x3xbf16>
    %cst = arith.constant 0.000000e+00 : bf16
    %1 = vector.broadcast %cst : bf16 to vector<1x1x18x3xbf16>
    %cst_3 = arith.constant 0.000000e+00 : bf16
    %2 = vector.broadcast %cst_3 : bf16 to vector<1x16x1x3xbf16>
    %c0_4 = arith.constant 0 : index
    %c0_5 = arith.constant 0 : index
    %c0_6 = arith.constant 0 : index
    %c0_7 = arith.constant 0 : index
    %3 = vector.load %arg11[%c0_4, %c0_5, %c0_6, %c0_7] : memref<1x18x18x3xbf16, #tpu.memory_space<vmem>>, vector<1x1x18x3xbf16>
    tpu.vector_store %arg11[%c0_4, %c0_5, %c0_6, %c0_7], %1 {strides = array<i32>} : memref<1x18x18x3xbf16, #tpu.memory_space<vmem>>, vector<1x1x18x3xbf16>,
    %c0_8 = arith.constant 0 : index
    %c17 = arith.constant 17 : index
    %c0_9 = arith.constant 0 : index
    %c0_10 = arith.constant 0 : index
    %4 = vector.load %arg11[%c0_8, %c17, %c0_9, %c0_10] : memref<1x18x18x3xbf16, #tpu.memory_space<vmem>>, vector<1x1x18x3xbf16>
    tpu.vector_store %arg11[%c0_8, %c17, %c0_9, %c0_10], %1 {strides = array<i32>} : memref<1x18x18x3xbf16, #tpu.memory_space<vmem>>, vector<1x1x18x3xbf16>,
    %c0_11 = arith.constant 0 : index
    %c1 = arith.constant 1 : index
    %c0_12 = arith.constant 0 : index
    %c0_13 = arith.constant 0 : index
    %5 = vector.load %arg11[%c0_11, %c1, %c0_12, %c0_13] : memref<1x18x18x3xbf16, #tpu.memory_space<vmem>>, vector<1x16x1x3xbf16>
    tpu.vector_store %arg11[%c0_11, %c1, %c0_12, %c0_13], %2 {strides = array<i32>} : memref<1x18x18x3xbf16, #tpu.memory_space<vmem>>, vector<1x16x1x3xbf16>,
    %c0_14 = arith.constant 0 : index
    %c1_15 = arith.constant 1 : index
    %c17_16 = arith.constant 17 : index
    %c0_17 = arith.constant 0 : index
    %6 = vector.load %arg11[%c0_14, %c1_15, %c17_16, %c0_17] : memref<1x18x18x3xbf16, #tpu.memory_space<vmem>>, vector<1x16x1x3xbf16>
    tpu.vector_store %arg11[%c0_14, %c1_15, %c17_16, %c0_17], %2 {strides = array<i32>} : memref<1x18x18x3xbf16, #tpu.memory_space<vmem>>, vector<1x16x1x3xbf16>,
    %c0_18 = arith.constant 0 : index
    %c1_19 = arith.constant 1 : index
    %c1_20 = arith.constant 1 : index
    %c0_21 = arith.constant 0 : index
    %7 = vector.load %arg11[%c0_18, %c1_19, %c1_20, %c0_21] : memref<1x18x18x3xbf16, #tpu.memory_space<vmem>>, vector<1x16x16x3xbf16>
    tpu.vector_store %arg11[%c0_18, %c1_19, %c1_20, %c0_21], %0 {strides = array<i32>} : memref<1x18x18x3xbf16, #tpu.memory_space<vmem>>, vector<1x16x16x3xbf16>,
    %c0_22 = arith.constant 0 : index
    %c0_23 = arith.constant 0 : index
    %c0_24 = arith.constant 0 : index
    %c0_25 = arith.constant 0 : index
    %8 = vector.load %arg11[%c0_22, %c0_23, %c0_24, %c0_25] : memref<1x18x18x3xbf16, #tpu.memory_space<vmem>>, vector<1x16x16x3xbf16>
    %9 = vector.shape_cast %8 : vector<1x16x16x3xbf16> to vector<256x3xbf16>
    %c0_26 = arith.constant 0 : index
    %c0_27 = arith.constant 0 : index
    %c1_28 = arith.constant 1 : index
    %c0_29 = arith.constant 0 : index
    %10 = vector.load %arg11[%c0_26, %c0_27, %c1_28, %c0_29] : memref<1x18x18x3xbf16, #tpu.memory_space<vmem>>, vector<1x16x16x3xbf16>
    %11 = vector.shape_cast %10 : vector<1x16x16x3xbf16> to vector<256x3xbf16>
    %c0_30 = arith.constant 0 : index
    %c0_31 = arith.constant 0 : index
    %c2 = arith.constant 2 : index
    %c0_32 = arith.constant 0 : index
    %12 = vector.load %arg11[%c0_30, %c0_31, %c2, %c0_32] : memref<1x18x18x3xbf16, #tpu.memory_space<vmem>>, vector<1x16x16x3xbf16>
    %13 = vector.shape_cast %12 : vector<1x16x16x3xbf16> to vector<256x3xbf16>
    %c0_33 = arith.constant 0 : index
    %c1_34 = arith.constant 1 : index
    %c0_35 = arith.constant 0 : index
    %c0_36 = arith.constant 0 : index
    %14 = vector.load %arg11[%c0_33, %c1_34, %c0_35, %c0_36] : memref<1x18x18x3xbf16, #tpu.memory_space<vmem>>, vector<1x16x16x3xbf16>
    %15 = vector.shape_cast %14 : vector<1x16x16x3xbf16> to vector<256x3xbf16>
    %c0_37 = arith.constant 0 : index
    %c1_38 = arith.constant 1 : index
    %c1_39 = arith.constant 1 : index
    %c0_40 = arith.constant 0 : index
    %16 = vector.load %arg11[%c0_37, %c1_38, %c1_39, %c0_40] : memref<1x18x18x3xbf16, #tpu.memory_space<vmem>>, vector<1x16x16x3xbf16>
    %17 = vector.shape_cast %16 : vector<1x16x16x3xbf16> to vector<256x3xbf16>
    %c0_41 = arith.constant 0 : index
    %c1_42 = arith.constant 1 : index
    %c2_43 = arith.constant 2 : index
    %c0_44 = arith.constant 0 : index
    %18 = vector.load %arg11[%c0_41, %c1_42, %c2_43, %c0_44] : memref<1x18x18x3xbf16, #tpu.memory_space<vmem>>, vector<1x16x16x3xbf16>
    %19 = vector.shape_cast %18 : vector<1x16x16x3xbf16> to vector<256x3xbf16>
    %c0_45 = arith.constant 0 : index
    %c2_46 = arith.constant 2 : index
    %c0_47 = arith.constant 0 : index
    %c0_48 = arith.constant 0 : index
    %20 = vector.load %arg11[%c0_45, %c2_46, %c0_47, %c0_48] : memref<1x18x18x3xbf16, #tpu.memory_space<vmem>>, vector<1x16x16x3xbf16>
    %21 = vector.shape_cast %20 : vector<1x16x16x3xbf16> to vector<256x3xbf16>
    %c0_49 = arith.constant 0 : index
    %c2_50 = arith.constant 2 : index
    %c1_51 = arith.constant 1 : index
    %c0_52 = arith.constant 0 : index
    %22 = vector.load %arg11[%c0_49, %c2_50, %c1_51, %c0_52] : memref<1x18x18x3xbf16, #tpu.memory_space<vmem>>, vector<1x16x16x3xbf16>
    %23 = vector.shape_cast %22 : vector<1x16x16x3xbf16> to vector<256x3xbf16>
    %c0_53 = arith.constant 0 : index
    %c2_54 = arith.constant 2 : index
    %c2_55 = arith.constant 2 : index
    %c0_56 = arith.constant 0 : index
    %24 = vector.load %arg11[%c0_53, %c2_54, %c2_55, %c0_56] : memref<1x18x18x3xbf16, #tpu.memory_space<vmem>>, vector<1x16x16x3xbf16>
    %25 = vector.shape_cast %24 : vector<1x16x16x3xbf16> to vector<256x3xbf16>
    %26 = tpu.concatenate %9, %11, %13, %15, %17, %19, %21, %23, %25 in 1 : vector<256x3xbf16>, vector<256x3xbf16>, vector<256x3xbf16>, vector<256x3xbf16>, vector<256x3xbf16>, vector<256x3xbf16>, vector<256x3xbf16>, vector<256x3xbf16>, vector<256x3xbf16> -> vector<256x27xbf16>
    %c0_57 = arith.constant 0 : index
    %c0_58 = arith.constant 0 : index
    %27 = vector.load %arg2[%c0_57, %c0_58] : memref<27x64xbf16, #tpu.memory_space<vmem>>, vector<27x64xbf16>
    %cst_59 = arith.constant dense<0.000000e+00> : vector<256x64xf32>
    %28 = tpu.matmul %26, %27, %cst_59 {dimension_numbers = #tpu.dot_dimension_numbers<[1], [0], [0], [1], [0, 0, 1, 1], [], []>} : vector<256x27xbf16>, vector<27x64xbf16>, vector<256x64xf32> -> vector<256x64xf32>
    %c0_60 = arith.constant 0 : index
    %c0_61 = arith.constant 0 : index
    %29 = vector.load %arg3[%c0_60, %c0_61] : memref<1x64xf32, #tpu.memory_space<vmem>>, vector<1x64xf32>
    %30 = vector.broadcast %29 : vector<1x64xf32> to vector<256x64xf32>
    %31 = arith.addf %28, %30 : vector<256x64xf32>
    %cst_62 = arith.constant 0.000000e+00 : f32
    %32 = vector.broadcast %cst_62 : f32 to vector<256x64xf32>
    %33 = arith.maximumf %31, %32 : vector<256x64xf32>
    %34 = vector.shape_cast %33 : vector<256x64xf32> to vector<1x8x2x8x2x64xf32>
    %cst_63 = arith.constant dense<0xFF800000> : vector<1x8x2x8x64xf32>
    %35 = vector.multi_reduction <maximumf>, %34, %cst_63 [4] : vector<1x8x2x8x2x64xf32> to vector<1x8x2x8x64xf32>
    %cst_64 = arith.constant dense<0xFF800000> : vector<1x8x8x64xf32>
    %36 = vector.multi_reduction <maximumf>, %35, %cst_64 [2] : vector<1x8x2x8x64xf32> to vector<1x8x8x64xf32>
    %37 = arith.truncf %36 : vector<1x8x8x64xf32> to vector<1x8x8x64xbf16>
    %cst_65 = arith.constant 0.000000e+00 : bf16
    %38 = vector.broadcast %cst_65 : bf16 to vector<1x1x10x64xbf16>
    %cst_66 = arith.constant 0.000000e+00 : bf16
    %39 = vector.broadcast %cst_66 : bf16 to vector<1x8x1x64xbf16>
    %c0_67 = arith.constant 0 : index
    %c0_68 = arith.constant 0 : index
    %c0_69 = arith.constant 0 : index
    %c0_70 = arith.constant 0 : index
    %40 = vector.load %arg12[%c0_67, %c0_68, %c0_69, %c0_70] : memref<1x10x10x64xbf16, #tpu.memory_space<vmem>>, vector<1x1x10x64xbf16>
    tpu.vector_store %arg12[%c0_67, %c0_68, %c0_69, %c0_70], %38 {strides = array<i32>} : memref<1x10x10x64xbf16, #tpu.memory_space<vmem>>, vector<1x1x10x64xbf16>,
    %c0_71 = arith.constant 0 : index
    %c9 = arith.constant 9 : index
    %c0_72 = arith.constant 0 : index
    %c0_73 = arith.constant 0 : index
    %41 = vector.load %arg12[%c0_71, %c9, %c0_72, %c0_73] : memref<1x10x10x64xbf16, #tpu.memory_space<vmem>>, vector<1x1x10x64xbf16>
    tpu.vector_store %arg12[%c0_71, %c9, %c0_72, %c0_73], %38 {strides = array<i32>} : memref<1x10x10x64xbf16, #tpu.memory_space<vmem>>, vector<1x1x10x64xbf16>,
    %c0_74 = arith.constant 0 : index
    %c1_75 = arith.constant 1 : index
    %c0_76 = arith.constant 0 : index
    %c0_77 = arith.constant 0 : index
    %42 = vector.load %arg12[%c0_74, %c1_75, %c0_76, %c0_77] : memref<1x10x10x64xbf16, #tpu.memory_space<vmem>>, vector<1x8x1x64xbf16>
    tpu.vector_store %arg12[%c0_74, %c1_75, %c0_76, %c0_77], %39 {strides = array<i32>} : memref<1x10x10x64xbf16, #tpu.memory_space<vmem>>, vector<1x8x1x64xbf16>,
    %c0_78 = arith.constant 0 : index
    %c1_79 = arith.constant 1 : index
    %c9_80 = arith.constant 9 : index
    %c0_81 = arith.constant 0 : index
    %43 = vector.load %arg12[%c0_78, %c1_79, %c9_80, %c0_81] : memref<1x10x10x64xbf16, #tpu.memory_space<vmem>>, vector<1x8x1x64xbf16>
    tpu.vector_store %arg12[%c0_78, %c1_79, %c9_80, %c0_81], %39 {strides = array<i32>} : memref<1x10x10x64xbf16, #tpu.memory_space<vmem>>, vector<1x8x1x64xbf16>,
    %c0_82 = arith.constant 0 : index
    %c1_83 = arith.constant 1 : index
    %c1_84 = arith.constant 1 : index
    %c0_85 = arith.constant 0 : index
    %44 = vector.load %arg12[%c0_82, %c1_83, %c1_84, %c0_85] : memref<1x10x10x64xbf16, #tpu.memory_space<vmem>>, vector<1x8x8x64xbf16>
    tpu.vector_store %arg12[%c0_82, %c1_83, %c1_84, %c0_85], %37 {strides = array<i32>} : memref<1x10x10x64xbf16, #tpu.memory_space<vmem>>, vector<1x8x8x64xbf16>,
    %c0_86 = arith.constant 0 : index
    %c0_87 = arith.constant 0 : index
    %c0_88 = arith.constant 0 : index
    %c0_89 = arith.constant 0 : index
    %45 = vector.load %arg12[%c0_86, %c0_87, %c0_88, %c0_89] : memref<1x10x10x64xbf16, #tpu.memory_space<vmem>>, vector<1x8x8x64xbf16>
    %46 = vector.shape_cast %45 : vector<1x8x8x64xbf16> to vector<64x64xbf16>
    %c0_90 = arith.constant 0 : index
    %c0_91 = arith.constant 0 : index
    %c1_92 = arith.constant 1 : index
    %c0_93 = arith.constant 0 : index
    %47 = vector.load %arg12[%c0_90, %c0_91, %c1_92, %c0_93] : memref<1x10x10x64xbf16, #tpu.memory_space<vmem>>, vector<1x8x8x64xbf16>
    %48 = vector.shape_cast %47 : vector<1x8x8x64xbf16> to vector<64x64xbf16>
    %c0_94 = arith.constant 0 : index
    %c0_95 = arith.constant 0 : index
    %c2_96 = arith.constant 2 : index
    %c0_97 = arith.constant 0 : index
    %49 = vector.load %arg12[%c0_94, %c0_95, %c2_96, %c0_97] : memref<1x10x10x64xbf16, #tpu.memory_space<vmem>>, vector<1x8x8x64xbf16>
    %50 = vector.shape_cast %49 : vector<1x8x8x64xbf16> to vector<64x64xbf16>
    %c0_98 = arith.constant 0 : index
    %c1_99 = arith.constant 1 : index
    %c0_100 = arith.constant 0 : index
    %c0_101 = arith.constant 0 : index
    %51 = vector.load %arg12[%c0_98, %c1_99, %c0_100, %c0_101] : memref<1x10x10x64xbf16, #tpu.memory_space<vmem>>, vector<1x8x8x64xbf16>
    %52 = vector.shape_cast %51 : vector<1x8x8x64xbf16> to vector<64x64xbf16>
    %c0_102 = arith.constant 0 : index
    %c1_103 = arith.constant 1 : index
    %c1_104 = arith.constant 1 : index
    %c0_105 = arith.constant 0 : index
    %53 = vector.load %arg12[%c0_102, %c1_103, %c1_104, %c0_105] : memref<1x10x10x64xbf16, #tpu.memory_space<vmem>>, vector<1x8x8x64xbf16>
    %54 = vector.shape_cast %53 : vector<1x8x8x64xbf16> to vector<64x64xbf16>
    %c0_106 = arith.constant 0 : index
    %c1_107 = arith.constant 1 : index
    %c2_108 = arith.constant 2 : index
    %c0_109 = arith.constant 0 : index
    %55 = vector.load %arg12[%c0_106, %c1_107, %c2_108, %c0_109] : memref<1x10x10x64xbf16, #tpu.memory_space<vmem>>, vector<1x8x8x64xbf16>
    %56 = vector.shape_cast %55 : vector<1x8x8x64xbf16> to vector<64x64xbf16>
    %c0_110 = arith.constant 0 : index
    %c2_111 = arith.constant 2 : index
    %c0_112 = arith.constant 0 : index
    %c0_113 = arith.constant 0 : index
    %57 = vector.load %arg12[%c0_110, %c2_111, %c0_112, %c0_113] : memref<1x10x10x64xbf16, #tpu.memory_space<vmem>>, vector<1x8x8x64xbf16>
    %58 = vector.shape_cast %57 : vector<1x8x8x64xbf16> to vector<64x64xbf16>
    %c0_114 = arith.constant 0 : index
    %c2_115 = arith.constant 2 : index
    %c1_116 = arith.constant 1 : index
    %c0_117 = arith.constant 0 : index
    %59 = vector.load %arg12[%c0_114, %c2_115, %c1_116, %c0_117] : memref<1x10x10x64xbf16, #tpu.memory_space<vmem>>, vector<1x8x8x64xbf16>
    %60 = vector.shape_cast %59 : vector<1x8x8x64xbf16> to vector<64x64xbf16>
    %c0_118 = arith.constant 0 : index
    %c2_119 = arith.constant 2 : index
    %c2_120 = arith.constant 2 : index
    %c0_121 = arith.constant 0 : index
    %61 = vector.load %arg12[%c0_118, %c2_119, %c2_120, %c0_121] : memref<1x10x10x64xbf16, #tpu.memory_space<vmem>>, vector<1x8x8x64xbf16>
    %62 = vector.shape_cast %61 : vector<1x8x8x64xbf16> to vector<64x64xbf16>
    %63 = tpu.concatenate %46, %48, %50, %52, %54, %56, %58, %60, %62 in 1 : vector<64x64xbf16>, vector<64x64xbf16>, vector<64x64xbf16>, vector<64x64xbf16>, vector<64x64xbf16>, vector<64x64xbf16>, vector<64x64xbf16>, vector<64x64xbf16>, vector<64x64xbf16> -> vector<64x576xbf16>
    %c0_122 = arith.constant 0 : index
    %c0_123 = arith.constant 0 : index
    %64 = vector.load %arg4[%c0_122, %c0_123] : memref<576x128xbf16, #tpu.memory_space<vmem>>, vector<576x128xbf16>
    %cst_124 = arith.constant dense<0.000000e+00> : vector<64x128xf32>
    %65 = tpu.matmul %63, %64, %cst_124 {dimension_numbers = #tpu.dot_dimension_numbers<[1], [0], [0], [1], [0, 0, 1, 1], [], []>} : vector<64x576xbf16>, vector<576x128xbf16>, vector<64x128xf32> -> vector<64x128xf32>
    %c0_125 = arith.constant 0 : index
    %c0_126 = arith.constant 0 : index
    %66 = vector.load %arg5[%c0_125, %c0_126] : memref<1x128xf32, #tpu.memory_space<vmem>>, vector<1x128xf32>
    %67 = vector.broadcast %66 : vector<1x128xf32> to vector<64x128xf32>
    %68 = arith.addf %65, %67 : vector<64x128xf32>
    %cst_127 = arith.constant 0.000000e+00 : f32
    %69 = vector.broadcast %cst_127 : f32 to vector<64x128xf32>
    %70 = arith.maximumf %68, %69 : vector<64x128xf32>
    %71 = vector.shape_cast %70 : vector<64x128xf32> to vector<1x4x2x4x2x128xf32>
    %cst_128 = arith.constant dense<0xFF800000> : vector<1x4x2x4x128xf32>
    %72 = vector.multi_reduction <maximumf>, %71, %cst_128 [4] : vector<1x4x2x4x2x128xf32> to vector<1x4x2x4x128xf32>
    %cst_129 = arith.constant dense<0xFF800000> : vector<1x4x4x128xf32>
    %73 = vector.multi_reduction <maximumf>, %72, %cst_129 [2] : vector<1x4x2x4x128xf32> to vector<1x4x4x128xf32>
    %74 = arith.truncf %73 : vector<1x4x4x128xf32> to vector<1x4x4x128xbf16>
    %cst_130 = arith.constant 0.000000e+00 : bf16
    %75 = vector.broadcast %cst_130 : bf16 to vector<1x1x6x128xbf16>
    %cst_131 = arith.constant 0.000000e+00 : bf16
    %76 = vector.broadcast %cst_131 : bf16 to vector<1x4x1x128xbf16>
    %c0_132 = arith.constant 0 : index
    %c0_133 = arith.constant 0 : index
    %c0_134 = arith.constant 0 : index
    %c0_135 = arith.constant 0 : index
    %77 = vector.load %arg13[%c0_132, %c0_133, %c0_134, %c0_135] : memref<1x6x6x128xbf16, #tpu.memory_space<vmem>>, vector<1x1x6x128xbf16>
    tpu.vector_store %arg13[%c0_132, %c0_133, %c0_134, %c0_135], %75 {strides = array<i32>} : memref<1x6x6x128xbf16, #tpu.memory_space<vmem>>, vector<1x1x6x128xbf16>,
    %c0_136 = arith.constant 0 : index
    %c5 = arith.constant 5 : index
    %c0_137 = arith.constant 0 : index
    %c0_138 = arith.constant 0 : index
    %78 = vector.load %arg13[%c0_136, %c5, %c0_137, %c0_138] : memref<1x6x6x128xbf16, #tpu.memory_space<vmem>>, vector<1x1x6x128xbf16>
    tpu.vector_store %arg13[%c0_136, %c5, %c0_137, %c0_138], %75 {strides = array<i32>} : memref<1x6x6x128xbf16, #tpu.memory_space<vmem>>, vector<1x1x6x128xbf16>,
    %c0_139 = arith.constant 0 : index
    %c1_140 = arith.constant 1 : index
    %c0_141 = arith.constant 0 : index
    %c0_142 = arith.constant 0 : index
    %79 = vector.load %arg13[%c0_139, %c1_140, %c0_141, %c0_142] : memref<1x6x6x128xbf16, #tpu.memory_space<vmem>>, vector<1x4x1x128xbf16>
    tpu.vector_store %arg13[%c0_139, %c1_140, %c0_141, %c0_142], %76 {strides = array<i32>} : memref<1x6x6x128xbf16, #tpu.memory_space<vmem>>, vector<1x4x1x128xbf16>,
    %c0_143 = arith.constant 0 : index
    %c1_144 = arith.constant 1 : index
    %c5_145 = arith.constant 5 : index
    %c0_146 = arith.constant 0 : index
    %80 = vector.load %arg13[%c0_143, %c1_144, %c5_145, %c0_146] : memref<1x6x6x128xbf16, #tpu.memory_space<vmem>>, vector<1x4x1x128xbf16>
    tpu.vector_store %arg13[%c0_143, %c1_144, %c5_145, %c0_146], %76 {strides = array<i32>} : memref<1x6x6x128xbf16, #tpu.memory_space<vmem>>, vector<1x4x1x128xbf16>,
    %c0_147 = arith.constant 0 : index
    %c1_148 = arith.constant 1 : index
    %c1_149 = arith.constant 1 : index
    %c0_150 = arith.constant 0 : index
    %81 = vector.load %arg13[%c0_147, %c1_148, %c1_149, %c0_150] : memref<1x6x6x128xbf16, #tpu.memory_space<vmem>>, vector<1x4x4x128xbf16>
    tpu.vector_store %arg13[%c0_147, %c1_148, %c1_149, %c0_150], %74 {strides = array<i32>} : memref<1x6x6x128xbf16, #tpu.memory_space<vmem>>, vector<1x4x4x128xbf16>,
    %c0_151 = arith.constant 0 : index
    %c0_152 = arith.constant 0 : index
    %c0_153 = arith.constant 0 : index
    %c0_154 = arith.constant 0 : index
    %82 = vector.load %arg13[%c0_151, %c0_152, %c0_153, %c0_154] : memref<1x6x6x128xbf16, #tpu.memory_space<vmem>>, vector<1x4x4x128xbf16>
    %83 = vector.shape_cast %82 : vector<1x4x4x128xbf16> to vector<16x128xbf16>
    %c0_155 = arith.constant 0 : index
    %c0_156 = arith.constant 0 : index
    %c1_157 = arith.constant 1 : index
    %c0_158 = arith.constant 0 : index
    %84 = vector.load %arg13[%c0_155, %c0_156, %c1_157, %c0_158] : memref<1x6x6x128xbf16, #tpu.memory_space<vmem>>, vector<1x4x4x128xbf16>
    %85 = vector.shape_cast %84 : vector<1x4x4x128xbf16> to vector<16x128xbf16>
    %c0_159 = arith.constant 0 : index
    %c0_160 = arith.constant 0 : index
    %c2_161 = arith.constant 2 : index
    %c0_162 = arith.constant 0 : index
    %86 = vector.load %arg13[%c0_159, %c0_160, %c2_161, %c0_162] : memref<1x6x6x128xbf16, #tpu.memory_space<vmem>>, vector<1x4x4x128xbf16>
    %87 = vector.shape_cast %86 : vector<1x4x4x128xbf16> to vector<16x128xbf16>
    %c0_163 = arith.constant 0 : index
    %c1_164 = arith.constant 1 : index
    %c0_165 = arith.constant 0 : index
    %c0_166 = arith.constant 0 : index
    %88 = vector.load %arg13[%c0_163, %c1_164, %c0_165, %c0_166] : memref<1x6x6x128xbf16, #tpu.memory_space<vmem>>, vector<1x4x4x128xbf16>
    %89 = vector.shape_cast %88 : vector<1x4x4x128xbf16> to vector<16x128xbf16>
    %c0_167 = arith.constant 0 : index
    %c1_168 = arith.constant 1 : index
    %c1_169 = arith.constant 1 : index
    %c0_170 = arith.constant 0 : index
    %90 = vector.load %arg13[%c0_167, %c1_168, %c1_169, %c0_170] : memref<1x6x6x128xbf16, #tpu.memory_space<vmem>>, vector<1x4x4x128xbf16>
    %91 = vector.shape_cast %90 : vector<1x4x4x128xbf16> to vector<16x128xbf16>
    %c0_171 = arith.constant 0 : index
    %c1_172 = arith.constant 1 : index
    %c2_173 = arith.constant 2 : index
    %c0_174 = arith.constant 0 : index
    %92 = vector.load %arg13[%c0_171, %c1_172, %c2_173, %c0_174] : memref<1x6x6x128xbf16, #tpu.memory_space<vmem>>, vector<1x4x4x128xbf16>
    %93 = vector.shape_cast %92 : vector<1x4x4x128xbf16> to vector<16x128xbf16>
    %c0_175 = arith.constant 0 : index
    %c2_176 = arith.constant 2 : index
    %c0_177 = arith.constant 0 : index
    %c0_178 = arith.constant 0 : index
    %94 = vector.load %arg13[%c0_175, %c2_176, %c0_177, %c0_178] : memref<1x6x6x128xbf16, #tpu.memory_space<vmem>>, vector<1x4x4x128xbf16>
    %95 = vector.shape_cast %94 : vector<1x4x4x128xbf16> to vector<16x128xbf16>
    %c0_179 = arith.constant 0 : index
    %c2_180 = arith.constant 2 : index
    %c1_181 = arith.constant 1 : index
    %c0_182 = arith.constant 0 : index
    %96 = vector.load %arg13[%c0_179, %c2_180, %c1_181, %c0_182] : memref<1x6x6x128xbf16, #tpu.memory_space<vmem>>, vector<1x4x4x128xbf16>
    %97 = vector.shape_cast %96 : vector<1x4x4x128xbf16> to vector<16x128xbf16>
    %c0_183 = arith.constant 0 : index
    %c2_184 = arith.constant 2 : index
    %c2_185 = arith.constant 2 : index
    %c0_186 = arith.constant 0 : index
    %98 = vector.load %arg13[%c0_183, %c2_184, %c2_185, %c0_186] : memref<1x6x6x128xbf16, #tpu.memory_space<vmem>>, vector<1x4x4x128xbf16>
    %99 = vector.shape_cast %98 : vector<1x4x4x128xbf16> to vector<16x128xbf16>
    %100 = tpu.concatenate %83, %85, %87, %89, %91, %93, %95, %97, %99 in 1 : vector<16x128xbf16>, vector<16x128xbf16>, vector<16x128xbf16>, vector<16x128xbf16>, vector<16x128xbf16>, vector<16x128xbf16>, vector<16x128xbf16>, vector<16x128xbf16>, vector<16x128xbf16> -> vector<16x1152xbf16>
    %c0_187 = arith.constant 0 : index
    %c0_188 = arith.constant 0 : index
    %101 = vector.load %arg6[%c0_187, %c0_188] : memref<1152x256xbf16, #tpu.memory_space<vmem>>, vector<1152x256xbf16>
    %cst_189 = arith.constant dense<0.000000e+00> : vector<16x256xf32>
    %102 = tpu.matmul %100, %101, %cst_189 {dimension_numbers = #tpu.dot_dimension_numbers<[1], [0], [0], [1], [0, 0, 1, 1], [], []>} : vector<16x1152xbf16>, vector<1152x256xbf16>, vector<16x256xf32> -> vector<16x256xf32>
    %c0_190 = arith.constant 0 : index
    %c0_191 = arith.constant 0 : index
    %103 = vector.load %arg7[%c0_190, %c0_191] : memref<1x256xf32, #tpu.memory_space<vmem>>, vector<1x256xf32>
    %104 = vector.broadcast %103 : vector<1x256xf32> to vector<16x256xf32>
    %105 = arith.addf %102, %104 : vector<16x256xf32>
    %cst_192 = arith.constant 0.000000e+00 : f32
    %106 = vector.broadcast %cst_192 : f32 to vector<16x256xf32>
    %107 = arith.maximumf %105, %106 : vector<16x256xf32>
    %108 = vector.shape_cast %107 : vector<16x256xf32> to vector<1x2x2x2x2x256xf32>
    %cst_193 = arith.constant dense<0xFF800000> : vector<1x2x2x2x256xf32>
    %109 = vector.multi_reduction <maximumf>, %108, %cst_193 [4] : vector<1x2x2x2x2x256xf32> to vector<1x2x2x2x256xf32>
    %cst_194 = arith.constant dense<0xFF800000> : vector<1x2x2x256xf32>
    %110 = vector.multi_reduction <maximumf>, %109, %cst_194 [2] : vector<1x2x2x2x256xf32> to vector<1x2x2x256xf32>
    %111 = arith.truncf %110 : vector<1x2x2x256xf32> to vector<1x2x2x256xbf16>
    %112 = vector.shape_cast %111 : vector<1x2x2x256xbf16> to vector<4x256xbf16>
    %c0_195 = arith.constant 0 : index
    %c0_196 = arith.constant 0 : index
    %113 = vector.load %arg8[%c0_195, %c0_196] : memref<256x128xbf16, #tpu.memory_space<vmem>>, vector<256x128xbf16>
    %cst_197 = arith.constant dense<0.000000e+00> : vector<4x128xf32>
    %114 = tpu.matmul %112, %113, %cst_197 {dimension_numbers = #tpu.dot_dimension_numbers<[1], [0], [0], [1], [0, 0, 1, 1], [], []>} : vector<4x256xbf16>, vector<256x128xbf16>, vector<4x128xf32> -> vector<4x128xf32>
    %c0_198 = arith.constant 0 : index
    %c0_199 = arith.constant 0 : index
    %115 = vector.load %arg9[%c0_198, %c0_199] : memref<1x128xf32, #tpu.memory_space<vmem>>, vector<1x128xf32>
    %116 = vector.broadcast %115 : vector<1x128xf32> to vector<4x128xf32>
    %117 = arith.addf %114, %116 : vector<4x128xf32>
    %118 = arith.negf %117 : vector<4x128xf32>
    %119 = math.exp %118 : vector<4x128xf32>
    %cst_200 = arith.constant 1.000000e+00 : f32
    %120 = vector.broadcast %cst_200 : f32 to vector<4x128xf32>
    %121 = arith.addf %120, %119 : vector<4x128xf32>
    %122 = arith.divf %120, %121 : vector<4x128xf32>
    %123 = vector.shape_cast %122 : vector<4x128xf32> to vector<1x4x128xf32>
    %c0_201 = arith.constant 0 : index
    %c0_202 = arith.constant 0 : index
    %c0_203 = arith.constant 0 : index
    %124 = vector.load %arg10[%c0_201, %c0_202, %c0_203] : memref<1x4x128xf32, #tpu.memory_space<vmem>>, vector<1x4x128xf32>
    tpu.vector_store %arg10[%c0_201, %c0_202, %c0_203], %123 {strides = array<i32>} : memref<1x4x128xf32, #tpu.memory_space<vmem>>, vector<1x4x128xf32>,
    return
  }
  func.func @transform_0(%arg0: i32) -> (i32, i32, i32, i32) {
    %c0_i32 = arith.constant 0 : i32
    %c0_i32_0 = arith.constant 0 : i32
    %c0_i32_1 = arith.constant 0 : i32
    %c0_i32_2 = arith.constant 0 : i32
    return %arg0, %c0_i32, %c0_i32_0, %c0_i32_1 : i32, i32, i32, i32
  }
  func.func @transform_1(%arg0: i32) -> (i32, i32) {
    %c0_i32 = arith.constant 0 : i32
    %c0_i32_0 = arith.constant 0 : i32
    %c0_i32_1 = arith.constant 0 : i32
    return %c0_i32, %c0_i32_0 : i32, i32
  }
  func.func @transform_2(%arg0: i32) -> (i32, i32) {
    %c0_i32 = arith.constant 0 : i32
    %c0_i32_0 = arith.constant 0 : i32
    %c0_i32_1 = arith.constant 0 : i32
    return %c0_i32, %c0_i32_0 : i32, i32
  }
  func.func @transform_3(%arg0: i32) -> (i32, i32) {
    %c0_i32 = arith.constant 0 : i32
    %c0_i32_0 = arith.constant 0 : i32
    %c0_i32_1 = arith.constant 0 : i32
    return %c0_i32, %c0_i32_0 : i32, i32
  }
  func.func @transform_4(%arg0: i32) -> (i32, i32) {
    %c0_i32 = arith.constant 0 : i32
    %c0_i32_0 = arith.constant 0 : i32
    %c0_i32_1 = arith.constant 0 : i32
    return %c0_i32, %c0_i32_0 : i32, i32
  }
  func.func @transform_5(%arg0: i32) -> (i32, i32) {
    %c0_i32 = arith.constant 0 : i32
    %c0_i32_0 = arith.constant 0 : i32
    %c0_i32_1 = arith.constant 0 : i32
    return %c0_i32, %c0_i32_0 : i32, i32
  }
  func.func @transform_6(%arg0: i32) -> (i32, i32) {
    %c0_i32 = arith.constant 0 : i32
    %c0_i32_0 = arith.constant 0 : i32
    %c0_i32_1 = arith.constant 0 : i32
    return %c0_i32, %c0_i32_0 : i32, i32
  }
  func.func @transform_7(%arg0: i32) -> (i32, i32) {
    %c0_i32 = arith.constant 0 : i32
    %c0_i32_0 = arith.constant 0 : i32
    %c0_i32_1 = arith.constant 0 : i32
    return %c0_i32, %c0_i32_0 : i32, i32
  }
  func.func @transform_8(%arg0: i32) -> (i32, i32) {
    %c0_i32 = arith.constant 0 : i32
    %c0_i32_0 = arith.constant 0 : i32
    %c0_i32_1 = arith.constant 0 : i32
    return %c0_i32, %c0_i32_0 : i32, i32
  }
  func.func @transform_9(%arg0: i32) -> (i32, i32, i32) {
    %c0_i32 = arith.constant 0 : i32
    %c0_i32_0 = arith.constant 0 : i32
    %c0_i32_1 = arith.constant 0 : i32
    return %arg0, %c0_i32, %c0_i32_0 : i32, i32, i32
  }
}

</mosaic_0001>

<llo_original>
// kernel: dwm_forward.1
$region0: #{dwm_forward.1}
  #allocation0 [shape = 'u32[]', space=smem, size = 0x4, offset = 0x4, fixed_abs, tag = 'smem constant byte address 0x4 - core index']
  #allocation1 [shape = 'u32[144,128]{1,0:T(1,128)}', space=vmem, size = 0x12000, scoped, tag = 'internal scratch']
  #allocation2 [shape = 'bf16[1,18,18,3]{3,2,1,0:T(8,128)(2,1)}', space=vmem, size = 0x1b000, scoped, tag = 'scratch operand']
  #allocation3 [shape = 'bf16[1,10,10,64]{3,2,1,0:T(8,128)(2,1)}', space=vmem, size = 0xa000, scoped, tag = 'scratch operand']
  #allocation4 [shape = 'bf16[1,6,6,128]{3,2,1,0:T(8,128)(2,1)}', space=vmem, size = 0x3000, scoped, tag = 'scratch operand']
  %s0 = inlined_call_operand.vmem [shape: bf16[2,16,16,3], index: 0, kind: input, shape index: {}]
  %s1 = inlined_call_operand.vmem [shape: bf16[27,64], index: 1, kind: input, shape index: {}]
  %s2 = inlined_call_operand.vmem [shape: f32[1,64], index: 2, kind: input, shape index: {}]
  %s3 = inlined_call_operand.vmem [shape: bf16[576,128], index: 3, kind: input, shape index: {}]
  %s4 = inlined_call_operand.vmem [shape: f32[1,128], index: 4, kind: input, shape index: {}]
  %s5 = inlined_call_operand.hbm [shape: bf16[1152,256], index: 5, kind: input, shape index: {}]
  %s6 = inlined_call_operand.vmem [shape: f32[1,256], index: 6, kind: input, shape index: {}]
  %s7 = inlined_call_operand.vmem [shape: bf16[256,128], index: 7, kind: input, shape index: {}]
  %s8 = inlined_call_operand.vmem [shape: f32[1,128], index: 8, kind: input, shape index: {}]
  %s9 = inlined_call_operand.vmem [shape: f32[2,4,128], index: 9, kind: output, shape index: {}]
  %s10 = sld [smem:[#allocation0]]
  $region73: #{dwm_forward.1} parent=0
    _
  %s12 = ssub.s32 1, %s10
  %s13 = scalar_select 0, %s12, %s10
  $region1: #{dwm_forward.1} parent=0
    #allocation5 [shape = 'u8[589824]{0}', space=vmem, size = 0x90000, scoped, tag = 'input window, operand 5, single buffered']
    #allocation6 [shape = 's32[2]{0}', space=sflag, size = 0x8, scoped, tag = 'scoped memory for dwm_forward.1']
    %14 = vsyncpa [#allocation6], 0
    loop: start=0, step=1, limit=4
    $region2: #{dwm_forward.1} parent=1 // loop_pre_header
      _
    $region3: #{dwm_forward.1} parent=1 // loop_header
      %s16 = sphi 0, %s20
      %p17 = scmp.ge.s32.totalorder %s16, 4
      %s26 = sphi 0, %s28
      %s29 = sphi 0, %s26
      %s30 = sphi 0, %s29
      %s46 = sphi 0, %s30
      %s50 = sphi 0, %s50
      %s52 = sphi 0, %s50
      %s53 = sphi 0, %s52
      %s67 = sphi 0, %s53
      %s71 = sphi 0, %s71
      %s73 = sphi 0, %s71
      %s74 = sphi 0, %s73
      %s88 = sphi 0, %s74
      %s92 = sphi 0, %s92
      %s94 = sphi 0, %s92
      %s95 = sphi 0, %s94
      %s109 = sphi 0, %s95
      %s113 = sphi 0, %s113
      %s115 = sphi 0, %s113
      %s116 = sphi 0, %s115
      %s130 = sphi 0, %s116
      %s134 = sphi 0, %s134
      %s136 = sphi 0, %s134
      %s137 = sphi 0, %s136
      %s151 = sphi 0, %s137
      %s155 = sphi 0, %s155
      %s157 = sphi 0, %s155
      %s158 = sphi 0, %s157
      %s172 = sphi 0, %s158
      %s176 = sphi 0, %s176
      %s178 = sphi 0, %s176
      %s179 = sphi 0, %s178
      %s193 = sphi 0, %s179
      %s197 = sphi 0, %s197
      %s199 = sphi 0, %s197
      %s200 = sphi 0, %s199
      %s214 = sphi 0, %s200
      %s220 = sphi 0, %s222
      %s223 = sphi 0, %s220
      %s224 = sphi 0, %s223
      %s240 = sphi 0, %s224
    $region4: #{dwm_forward.1} parent=1 // loop_header_branch
      %19 = sbr.rel (%p17) target = $region8
    $region5: #{dwm_forward.1} parent=1 // loop_body
      %s21 = ssub.s32 %s16, 1
      %s22 = ssub.s32 %s16, 2
      %s23 = sadd.s32 %s16, 1
      %s24 = ssub.s32 %s16, %s23
      %p25 = scmp.eq.s32.totalorder %s24, 0
      %s27 = sadd.s32 %s26, 1
      %s28 = scalar_select %p25, %s26, %s27
      %p31 = pneg %p25
      %p32 = scmp.eq.s32.totalorder %s16, 1
      %p33 = por %p31, %p32
      %p34 = scmp.ne.s32.totalorder %s26, %s29
      %p35 = scmp.eq.s32.totalorder %s16, 0
      %p36 = por %p34, %p35
      %p37 = scmp.ne.s32.totalorder %s26, %s29
      %p38 = scmp.eq.s32.totalorder %s21, 1
      %p39 = por %p37, %p38
      %p40 = scmp.ne.s32.totalorder %s29, %s30
      %p41 = scmp.eq.s32.totalorder %s21, 0
      %p42 = por %p40, %p41
      %p43 = scmp.ne.s32.totalorder %s29, %s30
      %p44 = scmp.eq.s32.totalorder %s22, 1
      %p45 = por %p43, %p44
      %p47 = scmp.ne.s32.totalorder %s30, %s46
      %p48 = scmp.eq.s32.totalorder %s22, 0
      %p49 = por %p47, %p48
      %s51 = sadd.s32 %s50, 1
      %p54 = scmp.eq.s32.totalorder %s16, 1
      %p55 = scmp.ne.s32.totalorder %s50, %s52
      %p56 = scmp.eq.s32.totalorder %s16, 0
      %p57 = por %p55, %p56
      %p58 = scmp.ne.s32.totalorder %s50, %s52
      %p59 = scmp.eq.s32.totalorder %s21, 1
      %p60 = por %p58, %p59
      %p61 = scmp.ne.s32.totalorder %s52, %s53
      %p62 = scmp.eq.s32.totalorder %s21, 0
      %p63 = por %p61, %p62
      %p64 = scmp.ne.s32.totalorder %s52, %s53
      %p65 = scmp.eq.s32.totalorder %s22, 1
      %p66 = por %p64, %p65
      %p68 = scmp.ne.s32.totalorder %s53, %s67
      %p69 = scmp.eq.s32.totalorder %s22, 0
      %p70 = por %p68, %p69
      %s72 = sadd.s32 %s71, 1
      %p75 = scmp.eq.s32.totalorder %s16, 1
      %p76 = scmp.ne.s32.totalorder %s71, %s73
      %p77 = scmp.eq.s32.totalorder %s16, 0
      %p78 = por %p76, %p77
      %p79 = scmp.ne.s32.totalorder %s71, %s73
      %p80 = scmp.eq.s32.totalorder %s21, 1
      %p81 = por %p79, %p80
      %p82 = scmp.ne.s32.totalorder %s73, %s74
      %p83 = scmp.eq.s32.totalorder %s21, 0
      %p84 = por %p82, %p83
      %p85 = scmp.ne.s32.totalorder %s73, %s74
      %p86 = scmp.eq.s32.totalorder %s22, 1
      %p87 = por %p85, %p86
      %p89 = scmp.ne.s32.totalorder %s74, %s88
      %p90 = scmp.eq.s32.totalorder %s22, 0
      %p91 = por %p89, %p90
      %s93 = sadd.s32 %s92, 1
      %p96 = scmp.eq.s32.totalorder %s16, 1
      %p97 = scmp.ne.s32.totalorder %s92, %s94
      %p98 = scmp.eq.s32.totalorder %s16, 0
      %p99 = por %p97, %p98
      %p100 = scmp.ne.s32.totalorder %s92, %s94
      %p101 = scmp.eq.s32.totalorder %s21, 1
      %p102 = por %p100, %p101
      %p103 = scmp.ne.s32.totalorder %s94, %s95
      %p104 = scmp.eq.s32.totalorder %s21, 0
      %p105 = por %p103, %p104
      %p106 = scmp.ne.s32.totalorder %s94, %s95
      %p107 = scmp.eq.s32.totalorder %s22, 1
      %p108 = por %p106, %p107
      %p110 = scmp.ne.s32.totalorder %s95, %s109
      %p111 = scmp.eq.s32.totalorder %s22, 0
      %p112 = por %p110, %p111
      %s114 = sadd.s32 %s113, 1
      %p117 = scmp.eq.s32.totalorder %s16, 1
      %p118 = scmp.ne.s32.totalorder %s113, %s115
      %p119 = scmp.eq.s32.totalorder %s16, 0
      %p120 = por %p118, %p119
      %p121 = scmp.ne.s32.totalorder %s113, %s115
      %p122 = scmp.eq.s32.totalorder %s21, 1
      %p123 = por %p121, %p122
      %p124 = scmp.ne.s32.totalorder %s115, %s116
      %p125 = scmp.eq.s32.totalorder %s21, 0
      %p126 = por %p124, %p125
      %p127 = scmp.ne.s32.totalorder %s115, %s116
      %p128 = scmp.eq.s32.totalorder %s22, 1
      %p129 = por %p127, %p128
      %p131 = scmp.ne.s32.totalorder %s116, %s130
      %p132 = scmp.eq.s32.totalorder %s22, 0
      %p133 = por %p131, %p132
      %s135 = sadd.s32 %s134, 1
      %p138 = scmp.eq.s32.totalorder %s16, 1
      %p139 = scmp.ne.s32.totalorder %s134, %s136
      %p140 = scmp.eq.s32.totalorder %s16, 0
      %p141 = por %p139, %p140
      %p142 = scmp.ne.s32.totalorder %s134, %s136
      %p143 = scmp.eq.s32.totalorder %s21, 1
      %p144 = por %p142, %p143
      %p145 = scmp.ne.s32.totalorder %s136, %s137
      %p146 = scmp.eq.s32.totalorder %s21, 0
      %p147 = por %p145, %p146
      %p148 = scmp.ne.s32.totalorder %s136, %s137
      %p149 = scmp.eq.s32.totalorder %s22, 1
      %p150 = por %p148, %p149
      %p152 = scmp.ne.s32.totalorder %s137, %s151
      %p153 = scmp.eq.s32.totalorder %s22, 0
      %p154 = por %p152, %p153
      %s156 = sadd.s32 %s155, 1
      %p159 = scmp.eq.s32.totalorder %s16, 1
      %p160 = scmp.ne.s32.totalorder %s155, %s157
      %p161 = scmp.eq.s32.totalorder %s16, 0
      %p162 = por %p160, %p161
      %p163 = scmp.ne.s32.totalorder %s155, %s157
      %p164 = scmp.eq.s32.totalorder %s21, 1
      %p165 = por %p163, %p164
      %p166 = scmp.ne.s32.totalorder %s157, %s158
      %p167 = scmp.eq.s32.totalorder %s21, 0
      %p168 = por %p166, %p167
      %p169 = scmp.ne.s32.totalorder %s157, %s158
      %p170 = scmp.eq.s32.totalorder %s22, 1
      %p171 = por %p169, %p170
      %p173 = scmp.ne.s32.totalorder %s158, %s172
      %p174 = scmp.eq.s32.totalorder %s22, 0
      %p175 = por %p173, %p174
      %s177 = sadd.s32 %s176, 1
      %p180 = scmp.eq.s32.totalorder %s16, 1
      %p181 = scmp.ne.s32.totalorder %s176, %s178
      %p182 = scmp.eq.s32.totalorder %s16, 0
      %p183 = por %p181, %p182
      %p184 = scmp.ne.s32.totalorder %s176, %s178
      %p185 = scmp.eq.s32.totalorder %s21, 1
      %p186 = por %p184, %p185
      %p187 = scmp.ne.s32.totalorder %s178, %s179
      %p188 = scmp.eq.s32.totalorder %s21, 0
      %p189 = por %p187, %p188
      %p190 = scmp.ne.s32.totalorder %s178, %s179
      %p191 = scmp.eq.s32.totalorder %s22, 1
      %p192 = por %p190, %p191
      %p194 = scmp.ne.s32.totalorder %s179, %s193
      %p195 = scmp.eq.s32.totalorder %s22, 0
      %p196 = por %p194, %p195
      %s198 = sadd.s32 %s197, 1
      %p201 = scmp.eq.s32.totalorder %s16, 1
      %p202 = scmp.ne.s32.totalorder %s197, %s199
      %p203 = scmp.eq.s32.totalorder %s16, 0
      %p204 = por %p202, %p203
      %p205 = scmp.ne.s32.totalorder %s197, %s199
      %p206 = scmp.eq.s32.totalorder %s21, 1
      %p207 = por %p205, %p206
      %p208 = scmp.ne.s32.totalorder %s199, %s200
      %p209 = scmp.eq.s32.totalorder %s21, 0
      %p210 = por %p208, %p209
      %p211 = scmp.ne.s32.totalorder %s199, %s200
      %p212 = scmp.eq.s32.totalorder %s22, 1
      %p213 = por %p211, %p212
      %p215 = scmp.ne.s32.totalorder %s200, %s214
      %p216 = scmp.eq.s32.totalorder %s22, 0
      %p217 = por %p215, %p216
      %s218 = ssub.s32 %s16, %s23
      %p219 = scmp.eq.s32.totalorder %s218, 0
      %s221 = sadd.s32 %s220, 1
      %s222 = scalar_select %p219, %s220, %s221
      %p225 = pneg %p219
      %p226 = scmp.eq.s32.totalorder %s16, 1
      %p227 = por %p225, %p226
      %p228 = scmp.ne.s32.totalorder %s220, %s223
      %p229 = scmp.eq.s32.totalorder %s16, 0
      %p230 = por %p228, %p229
      %p231 = scmp.ne.s32.totalorder %s220, %s223
      %p232 = scmp.eq.s32.totalorder %s21, 1
      %p233 = por %p231, %p232
      %p234 = scmp.ne.s32.totalorder %s223, %s224
      %p235 = scmp.eq.s32.totalorder %s21, 0
      %p236 = por %p234, %p235
      %p237 = scmp.ne.s32.totalorder %s223, %s224
      %p238 = scmp.eq.s32.totalorder %s22, 1
      %p239 = por %p237, %p238
      %p241 = scmp.ne.s32.totalorder %s224, %s240
      %p242 = scmp.eq.s32.totalorder %s22, 0
      %p243 = por %p241, %p242
      %p244 = scmp.le.s32.totalorder 1, %s16
      %p245 = scmp.lt.s32.totalorder %s16, 3
      %p246 = pnand %p244, %p245
      %p247 = pneg %p246
      // Predicated region
      $region9: #{dwm_forward.1} parent=5 // pred_check
        _
      $region10: #{dwm_forward.1} parent=5 // pred_check_branch
        %249 = sbr.rel (%p246) target = $region12
      $region11: #{dwm_forward.1} parent=5 // pred_region
        %s250 = ssub.s32 %s16, 1
        // Predicated region
        $region13: #{dwm_forward.1} parent=11 // pred_check
          %p251 = pneg %p63
        $region14: #{dwm_forward.1} parent=11 // pred_check_branch
          %253 = sbr.rel (%p251) target = $region16
        $region15: #{dwm_forward.1} parent=11 // pred_region
          _
        $region16: #{dwm_forward.1} parent=11 // pred_fallthru
          _
        // Predicated region
        $region17: #{dwm_forward.1} parent=11 // pred_check
          %p254 = pneg %p84
        $region18: #{dwm_forward.1} parent=11 // pred_check_branch
          %256 = sbr.rel (%p254) target = $region20
        $region19: #{dwm_forward.1} parent=11 // pred_region
          _
        $region20: #{dwm_forward.1} parent=11 // pred_fallthru
          _
        // Predicated region
        $region21: #{dwm_forward.1} parent=11 // pred_check
          %p257 = pneg %p105
        $region22: #{dwm_forward.1} parent=11 // pred_check_branch
          %259 = sbr.rel (%p257) target = $region24
        $region23: #{dwm_forward.1} parent=11 // pred_region
          _
        $region24: #{dwm_forward.1} parent=11 // pred_fallthru
          _
        // Predicated region
        $region25: #{dwm_forward.1} parent=11 // pred_check
          %p260 = pneg %p126
        $region26: #{dwm_forward.1} parent=11 // pred_check_branch
          %262 = sbr.rel (%p260) target = $region28
        $region27: #{dwm_forward.1} parent=11 // pred_region
          _
        $region28: #{dwm_forward.1} parent=11 // pred_fallthru
          _
        // Predicated region
        $region29: #{dwm_forward.1} parent=11 // pred_check
          %p263 = pneg %p147
        $region30: #{dwm_forward.1} parent=11 // pred_check_branch
          %265 = sbr.rel (%p263) target = $region32
        $region31: #{dwm_forward.1} parent=11 // pred_region
          %s267 = ssub.s32 18432, 18432
          %268 = vsyncadd [#allocation6], %s267
          %s269 = sshll.u32 [#allocation5], 4
          %s270 = int_to_ptr.vmem [resolvable:$true] %s269
          %275 = dma.hbm_to_vmem [thread:$0]  %s5, 18432, %s270, [#allocation6], 128, 128, 8
        $region32: #{dwm_forward.1} parent=11 // pred_fallthru
          _
        // Predicated region
        $region33: #{dwm_forward.1} parent=11 // pred_check
          %p276 = pneg %p168
        $region34: #{dwm_forward.1} parent=11 // pred_check_branch
          %278 = sbr.rel (%p276) target = $region36
        $region35: #{dwm_forward.1} parent=11 // pred_region
          _
        $region36: #{dwm_forward.1} parent=11 // pred_fallthru
          _
        // Predicated region
        $region37: #{dwm_forward.1} parent=11 // pred_check
          %p279 = pneg %p189
        $region38: #{dwm_forward.1} parent=11 // pred_check_branch
          %281 = sbr.rel (%p279) target = $region40
        $region39: #{dwm_forward.1} parent=11 // pred_region
          _
        $region40: #{dwm_forward.1} parent=11 // pred_fallthru
          _
        // Predicated region
        $region41: #{dwm_forward.1} parent=11 // pred_check
          %p282 = pneg %p210
        $region42: #{dwm_forward.1} parent=11 // pred_check_branch
          %284 = sbr.rel (%p282) target = $region44
        $region43: #{dwm_forward.1} parent=11 // pred_region
          _
        $region44: #{dwm_forward.1} parent=11 // pred_fallthru
          _
      $region12: #{dwm_forward.1} parent=5 // pred_fallthru
        _
      %p285 = scmp.lt.s32.totalorder %s16, 2
      // Predicated region
      $region45: #{dwm_forward.1} parent=5 // pred_check
        %p286 = pneg %p285
      $region46: #{dwm_forward.1} parent=5 // pred_check_branch
        %288 = sbr.rel (%p286) target = $region48
      $region47: #{dwm_forward.1} parent=5 // pred_region
        // Predicated region
        $region49: #{dwm_forward.1} parent=47 // pred_check
          %p289 = pneg %p36
        $region50: #{dwm_forward.1} parent=47 // pred_check_branch
          %291 = sbr.rel (%p289) target = $region52
        $region51: #{dwm_forward.1} parent=47 // pred_region
          %p292 = scmp.lt.s32.totalorder %s16, 1
          %s293 = scalar_select %p292, %s16, 1
          %s294 = smul.addr %s293, 32
          %s295 = smul.addr %s294, 4
          %s296 = scalar_lea.vmem %s0, %s295
        $region52: #{dwm_forward.1} parent=47 // pred_fallthru
          _
      $region48: #{dwm_forward.1} parent=5 // pred_fallthru
        _
      %p297 = scmp.le.s32.totalorder 1, %s16
      %p298 = scmp.lt.s32.totalorder %s16, 3
      %p299 = pnand %p297, %p298
      %p300 = pneg %p299
      // Predicated region
      $region53: #{dwm_forward.1} parent=5 // pred_check
        _
      $region54: #{dwm_forward.1} parent=5 // pred_check_branch
        %302 = sbr.rel (%p299) target = $region56
      $region55: #{dwm_forward.1} parent=5 // pred_region
        %s303 = ssub.s32 %s16, 1
        // Predicated region
        $region57: #{dwm_forward.1} parent=55 // pred_check
          %p304 = pneg %p147
        $region58: #{dwm_forward.1} parent=55 // pred_check_branch
          %306 = sbr.rel (%p304) target = $region60
        $region59: #{dwm_forward.1} parent=55 // pred_region
          %307 = dma.done [#allocation6], 18432
        $region60: #{dwm_forward.1} parent=55 // pred_fallthru
          _
        %p308 = scmp.lt.s32.totalorder %s21, 1
        %s309 = scalar_select %p308, %s21, 1
        %s310 = smul.addr %s309, 32
        %s311 = smul.addr %s310, 4
        %s312 = scalar_lea.vmem %s0, %s311
        %p313 = pneg %p42
        %p314 = pneg %p39
        %p315 = pneg %p63
        %p316 = pneg %p60
        %p317 = pneg %p84
        %p318 = pneg %p81
        %p319 = pneg %p105
        %p320 = pneg %p102
        %p321 = pneg %p126
        %p322 = pneg %p123
        %p323 = pneg %p147
        %p324 = pneg %p144
        %p325 = pneg %p168
        %p326 = pneg %p165
        %p327 = pneg %p189
        %p328 = pneg %p186
        %p329 = pneg %p210
        %p330 = pneg %p207
        %p331 = pneg %p236
        %p332 = pneg %p233
        %p333 = scmp.lt.s32.totalorder %s21, 1
        %s334 = scalar_select %p333, %s21, 1
        %s335 = smul.addr %s334, 4
        %s336 = scalar_lea.vmem %s9, %s335
        %p337 = scmp.lt.s32.totalorder %s21, 1
        %s338 = scalar_select %p337, %s21, 1
        %s339 = smul.addr %s338, 32
        %s340 = smul.addr %s339, 4
        %s341 = scalar_lea.vmem %s0, %s340
        %p342 = scmp.lt.s32.totalorder %s21, 1
        %s343 = scalar_select %p342, %s21, 1
        %s344 = smul.addr %s343, 4
        %s345 = scalar_lea.vmem %s9, %s344
        %v347 = vld [vmem:[%s341] sm:$0xf]
        %v348 = vld [vmem:[%s341 + $0x4] sm:$0xf]
        %v349 = vld [vmem:[%s341 + $0x8] sm:$0xf]
        %v350 = vld [vmem:[%s341 + $0xc] sm:$0xf]
        %v351 = vld [vmem:[%s341 + $0x10] sm:$0xf]
        %v352 = vld [vmem:[%s341 + $0x14] sm:$0xf]
        %v353 = vld [vmem:[%s341 + $0x18] sm:$0xf]
        %v354 = vld [vmem:[%s341 + $0x1c] sm:$0xf]
        %v355 = vld [vmem:[%s341 + $0x20] sm:$0xf]
        %v356 = vld [vmem:[%s341 + $0x24] sm:$0xf]
        %v357 = vld [vmem:[%s341 + $0x28] sm:$0xf]
        %v358 = vld [vmem:[%s341 + $0x2c] sm:$0xf]
        %v359 = vld [vmem:[%s341 + $0x30] sm:$0xf]
        %v360 = vld [vmem:[%s341 + $0x34] sm:$0xf]
        %v361 = vld [vmem:[%s341 + $0x38] sm:$0xf]
        %v362 = vld [vmem:[%s341 + $0x3c] sm:$0xf]
        %v363 = vld [vmem:[%s341 + $0x40] sm:$0xf]
        %v364 = vld [vmem:[%s341 + $0x44] sm:$0xf]
        %v365 = vld [vmem:[%s341 + $0x48] sm:$0xf]
        %v366 = vld [vmem:[%s341 + $0x4c] sm:$0xf]
        %v367 = vld [vmem:[%s341 + $0x50] sm:$0xf]
        %v368 = vld [vmem:[%s341 + $0x54] sm:$0xf]
        %v369 = vld [vmem:[%s341 + $0x58] sm:$0xf]
        %v370 = vld [vmem:[%s341 + $0x5c] sm:$0xf]
        %v371 = vld [vmem:[%s341 + $0x60] sm:$0xf]
        %v372 = vld [vmem:[%s341 + $0x64] sm:$0xf]
        %v373 = vld [vmem:[%s341 + $0x68] sm:$0xf]
        %v374 = vld [vmem:[%s341 + $0x6c] sm:$0xf]
        %v375 = vld [vmem:[%s341 + $0x70] sm:$0xf]
        %v376 = vld [vmem:[%s341 + $0x74] sm:$0xf]
        %v377 = vld [vmem:[%s341 + $0x78] sm:$0xf]
        %v378 = vld [vmem:[%s341 + $0x7c] sm:$0xf]
        %vm379 = vcmask 19456
        %380 = vst.msk [vmem:[#allocation2] sm:$0xf] %vm379, 0
        %381 = vst.msk [vmem:[#allocation2 + $0x4] sm:$0xf] %vm379, 0
        %vm382 = vcmask 16384
        %383 = vst.msk [vmem:[#allocation2 + $0x8] sm:$0x1] %vm382, 0
        %s384 = scalar_lea.vmem [#allocation2], 204
        %385 = vst.msk [vmem:[%s384] sm:$0xf] %vm379, 0
        %386 = vst.msk [vmem:[%s384 + $0x4] sm:$0xf] %vm379, 0
        %387 = vst.msk [vmem:[%s384 + $0x8] sm:$0x1] %vm382, 0
        %s388 = scalar_lea.vmem [#allocation2], 12
        %vm389 = vcmask 16384
        %vm390 = vsmask.f32 256
        %vm391 = vmand %vm389, %vm390
        %v392 = vld [vmem:[%s388] sm:$0x1]
        %v393 = vsel %vm391, 0, %v392
        %394 = vst [vmem:[%s388] sm:$0x1] %v393
        %v395 = vld [vmem:[%s388 + $0xc] sm:$0x1]
        %v396 = vsel %vm391, 0, %v395
        %397 = vst [vmem:[%s388 + $0xc] sm:$0x1] %v396
        %v398 = vld [vmem:[%s388 + $0x18] sm:$0x1]
        %v399 = vsel %vm391, 0, %v398
        %400 = vst [vmem:[%s388 + $0x18] sm:$0x1] %v399
        %v401 = vld [vmem:[%s388 + $0x24] sm:$0x1]
        %v402 = vsel %vm391, 0, %v401
        %403 = vst [vmem:[%s388 + $0x24] sm:$0x1] %v402
        %v404 = vld [vmem:[%s388 + $0x30] sm:$0x1]
        %v405 = vsel %vm391, 0, %v404
        %406 = vst [vmem:[%s388 + $0x30] sm:$0x1] %v405
        %v407 = vld [vmem:[%s388 + $0x3c] sm:$0x1]
        %v408 = vsel %vm391, 0, %v407
        %409 = vst [vmem:[%s388 + $0x3c] sm:$0x1] %v408
        %v410 = vld [vmem:[%s388 + $0x48] sm:$0x1]
        %v411 = vsel %vm391, 0, %v410
        %412 = vst [vmem:[%s388 + $0x48] sm:$0x1] %v411
        %v413 = vld [vmem:[%s388 + $0x54] sm:$0x1]
        %v414 = vsel %vm391, 0, %v413
        %415 = vst [vmem:[%s388 + $0x54] sm:$0x1] %v414
        %v416 = vld [vmem:[%s388 + $0x60] sm:$0x1]
        %v417 = vsel %vm391, 0, %v416
        %418 = vst [vmem:[%s388 + $0x60] sm:$0x1] %v417
        %v419 = vld [vmem:[%s388 + $0x6c] sm:$0x1]
        %v420 = vsel %vm391, 0, %v419
        %421 = vst [vmem:[%s388 + $0x6c] sm:$0x1] %v420
        %v422 = vld [vmem:[%s388 + $0x78] sm:$0x1]
        %v423 = vsel %vm391, 0, %v422
        %424 = vst [vmem:[%s388 + $0x78] sm:$0x1] %v423
        %v425 = vld [vmem:[%s388 + $0x84] sm:$0x1]
        %v426 = vsel %vm391, 0, %v425
        %427 = vst [vmem:[%s388 + $0x84] sm:$0x1] %v426
        %v428 = vld [vmem:[%s388 + $0x90] sm:$0x1]
        %v429 = vsel %vm391, 0, %v428
        %430 = vst [vmem:[%s388 + $0x90] sm:$0x1] %v429
        %v431 = vld [vmem:[%s388 + $0x9c] sm:$0x1]
        %v432 = vsel %vm391, 0, %v431
        %433 = vst [vmem:[%s388 + $0x9c] sm:$0x1] %v432
        %v434 = vld [vmem:[%s388 + $0xa8] sm:$0x1]
        %v435 = vsel %vm391, 0, %v434
        %436 = vst [vmem:[%s388 + $0xa8] sm:$0x1] %v435
        %v437 = vld [vmem:[%s388 + $0xb4] sm:$0x1]
        %v438 = vsel %vm391, 0, %v437
        %439 = vst [vmem:[%s388 + $0xb4] sm:$0x1] %v438
        %vm440 = vsmask.f32 7938
        %vm441 = vmand %vm389, %vm440
        %v442 = vld [vmem:[%s388 + $0x8] sm:$0x1]
        %v443 = vsel %vm441, 0, %v442
        %444 = vst [vmem:[%s388 + $0x8] sm:$0x1] %v443
        %v445 = vld [vmem:[%s388 + $0x14] sm:$0x1]
        %v446 = vsel %vm441, 0, %v445
        %447 = vst [vmem:[%s388 + $0x14] sm:$0x1] %v446
        %v448 = vld [vmem:[%s388 + $0x20] sm:$0x1]
        %v449 = vsel %vm441, 0, %v448
        %450 = vst [vmem:[%s388 + $0x20] sm:$0x1] %v449
        %v451 = vld [vmem:[%s388 + $0x2c] sm:$0x1]
        %v452 = vsel %vm441, 0, %v451
        %453 = vst [vmem:[%s388 + $0x2c] sm:$0x1] %v452
        %v454 = vld [vmem:[%s388 + $0x38] sm:$0x1]
        %v455 = vsel %vm441, 0, %v454
        %456 = vst [vmem:[%s388 + $0x38] sm:$0x1] %v455
        %v457 = vld [vmem:[%s388 + $0x44] sm:$0x1]
        %v458 = vsel %vm441, 0, %v457
        %459 = vst [vmem:[%s388 + $0x44] sm:$0x1] %v458
        %v460 = vld [vmem:[%s388 + $0x50] sm:$0x1]
        %v461 = vsel %vm441, 0, %v460
        %462 = vst [vmem:[%s388 + $0x50] sm:$0x1] %v461
        %v463 = vld [vmem:[%s388 + $0x5c] sm:$0x1]
        %v464 = vsel %vm441, 0, %v463
        %465 = vst [vmem:[%s388 + $0x5c] sm:$0x1] %v464
        %v466 = vld [vmem:[%s388 + $0x68] sm:$0x1]
        %v467 = vsel %vm441, 0, %v466
        %468 = vst [vmem:[%s388 + $0x68] sm:$0x1] %v467
        %v469 = vld [vmem:[%s388 + $0x74] sm:$0x1]
        %v470 = vsel %vm441, 0, %v469
        %471 = vst [vmem:[%s388 + $0x74] sm:$0x1] %v470
        %v472 = vld [vmem:[%s388 + $0x80] sm:$0x1]
        %v473 = vsel %vm441, 0, %v472
        %474 = vst [vmem:[%s388 + $0x80] sm:$0x1] %v473
        %v475 = vld [vmem:[%s388 + $0x8c] sm:$0x1]
        %v476 = vsel %vm441, 0, %v475
        %477 = vst [vmem:[%s388 + $0x8c] sm:$0x1] %v476
        %v478 = vld [vmem:[%s388 + $0x98] sm:$0x1]
        %v479 = vsel %vm441, 0, %v478
        %480 = vst [vmem:[%s388 + $0x98] sm:$0x1] %v479
        %v481 = vld [vmem:[%s388 + $0xa4] sm:$0x1]
        %v482 = vsel %vm441, 0, %v481
        %483 = vst [vmem:[%s388 + $0xa4] sm:$0x1] %v482
        %v484 = vld [vmem:[%s388 + $0xb0] sm:$0x1]
        %v485 = vsel %vm441, 0, %v484
        %486 = vst [vmem:[%s388 + $0xb0] sm:$0x1] %v485
        %v487 = vld [vmem:[%s388 + $0xbc] sm:$0x1]
        %v488 = vsel %vm441, 0, %v487
        %489 = vst [vmem:[%s388 + $0xbc] sm:$0x1] %v488
        %vm490 = vsmask.f32 4368
        %vm491 = vmor %vm390, %vm490
        %v493 = vshrl.u32 %v347, 16
        %v495 = vrot.slane %v493, 7
        %v496 = vshll.u32 %v347, 16
        %v498 = vor.u32 %v495, %v496
        %v499 = vrot.slane %v495, 4
        %v501 = vshrl.u32 %v348, 16
        %v503 = vrot.slane %v501, 7
        %v504 = vshll.u32 %v348, 16
        %v506 = vor.u32 %v503, %v504
        %v507 = vsel %vm491, %v499, %v506
        %v508 = vrot.slane %v503, 4
        %v510 = vshrl.u32 %v349, 16
        %v512 = vrot.slane %v510, 7
        %v513 = vshll.u32 %v349, 16
        %v515 = vor.u32 %v512, %v513
        %v516 = vrot.slane %v512, 4
        %v518 = vshrl.u32 %v350, 16
        %v520 = vrot.slane %v518, 7
        %v521 = vshll.u32 %v350, 16
        %v523 = vor.u32 %v520, %v521
        %v524 = vsel %vm491, %v516, %v523
        %v525 = vrot.slane %v520, 4
        %v527 = vshrl.u32 %v351, 16
        %v529 = vrot.slane %v527, 7
        %v530 = vshll.u32 %v351, 16
        %v532 = vor.u32 %v529, %v530
        %v533 = vrot.slane %v529, 4
        %v535 = vshrl.u32 %v352, 16
        %v537 = vrot.slane %v535, 7
        %v538 = vshll.u32 %v352, 16
        %v540 = vor.u32 %v537, %v538
        %v541 = vsel %vm491, %v533, %v540
        %v542 = vrot.slane %v537, 4
        %v544 = vshrl.u32 %v353, 16
        %v546 = vrot.slane %v544, 7
        %v547 = vshll.u32 %v353, 16
        %v549 = vor.u32 %v546, %v547
        %v550 = vrot.slane %v546, 4
        %v552 = vshrl.u32 %v354, 16
        %v554 = vrot.slane %v552, 7
        %v555 = vshll.u32 %v354, 16
        %v557 = vor.u32 %v554, %v555
        %v558 = vsel %vm491, %v550, %v557
        %v559 = vrot.slane %v554, 4
        %v561 = vshrl.u32 %v355, 16
        %v563 = vrot.slane %v561, 7
        %v564 = vshll.u32 %v355, 16
        %v566 = vor.u32 %v563, %v564
        %v567 = vrot.slane %v563, 4
        %v569 = vshrl.u32 %v356, 16
        %v571 = vrot.slane %v569, 7
        %v572 = vshll.u32 %v356, 16
        %v574 = vor.u32 %v571, %v572
        %v575 = vsel %vm491, %v567, %v574
        %v576 = vrot.slane %v571, 4
        %v578 = vshrl.u32 %v357, 16
        %v580 = vrot.slane %v578, 7
        %v581 = vshll.u32 %v357, 16
        %v583 = vor.u32 %v580, %v581
        %v584 = vrot.slane %v580, 4
        %v586 = vshrl.u32 %v358, 16
        %v588 = vrot.slane %v586, 7
        %v589 = vshll.u32 %v358, 16
        %v591 = vor.u32 %v588, %v589
        %v592 = vsel %vm491, %v584, %v591
        %v593 = vrot.slane %v588, 4
        %v595 = vshrl.u32 %v359, 16
        %v597 = vrot.slane %v595, 7
        %v598 = vshll.u32 %v359, 16
        %v600 = vor.u32 %v597, %v598
        %v601 = vrot.slane %v597, 4
        %v603 = vshrl.u32 %v360, 16
        %v605 = vrot.slane %v603, 7
        %v606 = vshll.u32 %v360, 16
        %v608 = vor.u32 %v605, %v606
        %v609 = vsel %vm491, %v601, %v608
        %v610 = vrot.slane %v605, 4
        %v612 = vshrl.u32 %v361, 16
        %v614 = vrot.slane %v612, 7
        %v615 = vshll.u32 %v361, 16
        %v617 = vor.u32 %v614, %v615
        %v618 = vrot.slane %v614, 4
        %v620 = vshrl.u32 %v362, 16
        %v622 = vrot.slane %v620, 7
        %v623 = vshll.u32 %v362, 16
        %v625 = vor.u32 %v622, %v623
        %v626 = vsel %vm491, %v618, %v625
        %v627 = vrot.slane %v622, 4
        %v629 = vshrl.u32 %v363, 16
        %v631 = vrot.slane %v629, 7
        %v632 = vshll.u32 %v363, 16
        %v634 = vor.u32 %v631, %v632
        %v635 = vrot.slane %v631, 4
        %v637 = vshrl.u32 %v364, 16
        %v639 = vrot.slane %v637, 7
        %v640 = vshll.u32 %v364, 16
        %v642 = vor.u32 %v639, %v640
        %v643 = vsel %vm491, %v635, %v642
        %v644 = vrot.slane %v639, 4
        %v646 = vshrl.u32 %v365, 16
        %v648 = vrot.slane %v646, 7
        %v649 = vshll.u32 %v365, 16
        %v651 = vor.u32 %v648, %v649
        %v652 = vrot.slane %v648, 4
        %v654 = vshrl.u32 %v366, 16
        %v656 = vrot.slane %v654, 7
        %v657 = vshll.u32 %v366, 16
        %v659 = vor.u32 %v656, %v657
        %v660 = vsel %vm491, %v652, %v659
        %v661 = vrot.slane %v656, 4
        %v663 = vshrl.u32 %v367, 16
        %v665 = vrot.slane %v663, 7
        %v666 = vshll.u32 %v367, 16
        %v668 = vor.u32 %v665, %v666
        %v669 = vrot.slane %v665, 4
        %v671 = vshrl.u32 %v368, 16
        %v673 = vrot.slane %v671, 7
        %v674 = vshll.u32 %v368, 16
        %v676 = vor.u32 %v673, %v674
        %v677 = vsel %vm491, %v669, %v676
        %v678 = vrot.slane %v673, 4
        %v680 = vshrl.u32 %v369, 16
        %v682 = vrot.slane %v680, 7
        %v683 = vshll.u32 %v369, 16
        %v685 = vor.u32 %v682, %v683
        %v686 = vrot.slane %v682, 4
        %v688 = vshrl.u32 %v370, 16
        %v690 = vrot.slane %v688, 7
        %v691 = vshll.u32 %v370, 16
        %v693 = vor.u32 %v690, %v691
        %v694 = vsel %vm491, %v686, %v693
        %v695 = vrot.slane %v690, 4
        %v697 = vshrl.u32 %v371, 16
        %v699 = vrot.slane %v697, 7
        %v700 = vshll.u32 %v371, 16
        %v702 = vor.u32 %v699, %v700
        %v703 = vrot.slane %v699, 4
        %v705 = vshrl.u32 %v372, 16
        %v707 = vrot.slane %v705, 7
        %v708 = vshll.u32 %v372, 16
        %v710 = vor.u32 %v707, %v708
        %v711 = vsel %vm491, %v703, %v710
        %v712 = vrot.slane %v707, 4
        %v714 = vshrl.u32 %v373, 16
        %v716 = vrot.slane %v714, 7
        %v717 = vshll.u32 %v373, 16
        %v719 = vor.u32 %v716, %v717
        %v720 = vrot.slane %v716, 4
        %v722 = vshrl.u32 %v374, 16
        %v724 = vrot.slane %v722, 7
        %v725 = vshll.u32 %v374, 16
        %v727 = vor.u32 %v724, %v725
        %v728 = vsel %vm491, %v720, %v727
        %v729 = vrot.slane %v724, 4
        %v731 = vshrl.u32 %v375, 16
        %v733 = vrot.slane %v731, 7
        %v734 = vshll.u32 %v375, 16
        %v736 = vor.u32 %v733, %v734
        %v737 = vrot.slane %v733, 4
        %v739 = vshrl.u32 %v376, 16
        %v741 = vrot.slane %v739, 7
        %v742 = vshll.u32 %v376, 16
        %v744 = vor.u32 %v741, %v742
        %v745 = vsel %vm491, %v737, %v744
        %v746 = vrot.slane %v741, 4
        %v748 = vshrl.u32 %v377, 16
        %v750 = vrot.slane %v748, 7
        %v751 = vshll.u32 %v377, 16
        %v753 = vor.u32 %v750, %v751
        %v754 = vrot.slane %v750, 4
        %v756 = vshrl.u32 %v378, 16
        %v758 = vrot.slane %v756, 7
        %v759 = vshll.u32 %v378, 16
        %v761 = vor.u32 %v758, %v759
        %v762 = vsel %vm491, %v754, %v761
        %v763 = vrot.slane %v758, 4
        %vm812 = vcmask 19456
        %vm813 = vmand %vm812, %vm440
        %v814 = vld [vmem:[%s388] sm:$0xf]
        %v815 = vsel %vm813, %v498, %v814
        %816 = vst [vmem:[%s388] sm:$0xf] %v815
        %817 = vst.msk [vmem:[%s388 + $0x4] sm:$0xf] %vm379, %v507
        %v818 = vld [vmem:[%s388 + $0x8] sm:$0x1]
        %v819 = vsel %vm391, %v508, %v818
        %820 = vst [vmem:[%s388 + $0x8] sm:$0x1] %v819
        %v821 = vld [vmem:[%s388 + $0xc] sm:$0xf]
        %v822 = vsel %vm813, %v515, %v821
        %823 = vst [vmem:[%s388 + $0xc] sm:$0xf] %v822
        %824 = vst.msk [vmem:[%s388 + $0x10] sm:$0xf] %vm379, %v524
        %v825 = vld [vmem:[%s388 + $0x14] sm:$0x1]
        %v826 = vsel %vm391, %v525, %v825
        %827 = vst [vmem:[%s388 + $0x14] sm:$0x1] %v826
        %v828 = vld [vmem:[%s388 + $0x18] sm:$0xf]
        %v829 = vsel %vm813, %v532, %v828
        %830 = vst [vmem:[%s388 + $0x18] sm:$0xf] %v829
        %831 = vst.msk [vmem:[%s388 + $0x1c] sm:$0xf] %vm379, %v541
        %v832 = vld [vmem:[%s388 + $0x20] sm:$0x1]
        %v833 = vsel %vm391, %v542, %v832
        %834 = vst [vmem:[%s388 + $0x20] sm:$0x1] %v833
        %v835 = vld [vmem:[%s388 + $0x24] sm:$0xf]
        %v836 = vsel %vm813, %v549, %v835
        %837 = vst [vmem:[%s388 + $0x24] sm:$0xf] %v836
        %838 = vst.msk [vmem:[%s388 + $0x28] sm:$0xf] %vm379, %v558
        %v839 = vld [vmem:[%s388 + $0x2c] sm:$0x1]
        %v840 = vsel %vm391, %v559, %v839
        %841 = vst [vmem:[%s388 + $0x2c] sm:$0x1] %v840
        %v842 = vld [vmem:[%s388 + $0x30] sm:$0xf]
        %v843 = vsel %vm813, %v566, %v842
        %844 = vst [vmem:[%s388 + $0x30] sm:$0xf] %v843
        %845 = vst.msk [vmem:[%s388 + $0x34] sm:$0xf] %vm379, %v575
        %v846 = vld [vmem:[%s388 + $0x38] sm:$0x1]
        %v847 = vsel %vm391, %v576, %v846
        %848 = vst [vmem:[%s388 + $0x38] sm:$0x1] %v847
        %v849 = vld [vmem:[%s388 + $0x3c] sm:$0xf]
        %v850 = vsel %vm813, %v583, %v849
        %851 = vst [vmem:[%s388 + $0x3c] sm:$0xf] %v850
        %852 = vst.msk [vmem:[%s388 + $0x40] sm:$0xf] %vm379, %v592
        %v853 = vld [vmem:[%s388 + $0x44] sm:$0x1]
        %v854 = vsel %vm391, %v593, %v853
        %855 = vst [vmem:[%s388 + $0x44] sm:$0x1] %v854
        %v856 = vld [vmem:[%s388 + $0x48] sm:$0xf]
        %v857 = vsel %vm813, %v600, %v856
        %858 = vst [vmem:[%s388 + $0x48] sm:$0xf] %v857
        %859 = vst.msk [vmem:[%s388 + $0x4c] sm:$0xf] %vm379, %v609
        %v860 = vld [vmem:[%s388 + $0x50] sm:$0x1]
        %v861 = vsel %vm391, %v610, %v860
        %862 = vst [vmem:[%s388 + $0x50] sm:$0x1] %v861
        %v863 = vld [vmem:[%s388 + $0x54] sm:$0xf]
        %v864 = vsel %vm813, %v617, %v863
        %865 = vst [vmem:[%s388 + $0x54] sm:$0xf] %v864
        %866 = vst.msk [vmem:[%s388 + $0x58] sm:$0xf] %vm379, %v626
        %v867 = vld [vmem:[%s388 + $0x5c] sm:$0x1]
        %v868 = vsel %vm391, %v627, %v867
        %869 = vst [vmem:[%s388 + $0x5c] sm:$0x1] %v868
        %v870 = vld [vmem:[%s388 + $0x60] sm:$0xf]
        %v871 = vsel %vm813, %v634, %v870
        %872 = vst [vmem:[%s388 + $0x60] sm:$0xf] %v871
        %873 = vst.msk [vmem:[%s388 + $0x64] sm:$0xf] %vm379, %v643
        %v874 = vld [vmem:[%s388 + $0x68] sm:$0x1]
        %v875 = vsel %vm391, %v644, %v874
        %876 = vst [vmem:[%s388 + $0x68] sm:$0x1] %v875
        %v877 = vld [vmem:[%s388 + $0x6c] sm:$0xf]
        %v878 = vsel %vm813, %v651, %v877
        %879 = vst [vmem:[%s388 + $0x6c] sm:$0xf] %v878
        %880 = vst.msk [vmem:[%s388 + $0x70] sm:$0xf] %vm379, %v660
        %v881 = vld [vmem:[%s388 + $0x74] sm:$0x1]
        %v882 = vsel %vm391, %v661, %v881
        %883 = vst [vmem:[%s388 + $0x74] sm:$0x1] %v882
        %v884 = vld [vmem:[%s388 + $0x78] sm:$0xf]
        %v885 = vsel %vm813, %v668, %v884
        %886 = vst [vmem:[%s388 + $0x78] sm:$0xf] %v885
        %887 = vst.msk [vmem:[%s388 + $0x7c] sm:$0xf] %vm379, %v677
        %v888 = vld [vmem:[%s388 + $0x80] sm:$0x1]
        %v889 = vsel %vm391, %v678, %v888
        %890 = vst [vmem:[%s388 + $0x80] sm:$0x1] %v889
        %v891 = vld [vmem:[%s388 + $0x84] sm:$0xf]
        %v892 = vsel %vm813, %v685, %v891
        %893 = vst [vmem:[%s388 + $0x84] sm:$0xf] %v892
        %894 = vst.msk [vmem:[%s388 + $0x88] sm:$0xf] %vm379, %v694
        %v895 = vld [vmem:[%s388 + $0x8c] sm:$0x1]
        %v896 = vsel %vm391, %v695, %v895
        %897 = vst [vmem:[%s388 + $0x8c] sm:$0x1] %v896
        %v898 = vld [vmem:[%s388 + $0x90] sm:$0xf]
        %v899 = vsel %vm813, %v702, %v898
        %900 = vst [vmem:[%s388 + $0x90] sm:$0xf] %v899
        %901 = vst.msk [vmem:[%s388 + $0x94] sm:$0xf] %vm379, %v711
        %v902 = vld [vmem:[%s388 + $0x98] sm:$0x1]
        %v903 = vsel %vm391, %v712, %v902
        %904 = vst [vmem:[%s388 + $0x98] sm:$0x1] %v903
        %v905 = vld [vmem:[%s388 + $0x9c] sm:$0xf]
        %v906 = vsel %vm813, %v719, %v905
        %907 = vst [vmem:[%s388 + $0x9c] sm:$0xf] %v906
        %908 = vst.msk [vmem:[%s388 + $0xa0] sm:$0xf] %vm379, %v728
        %v909 = vld [vmem:[%s388 + $0xa4] sm:$0x1]
        %v910 = vsel %vm391, %v729, %v909
        %911 = vst [vmem:[%s388 + $0xa4] sm:$0x1] %v910
        %v912 = vld [vmem:[%s388 + $0xa8] sm:$0xf]
        %v913 = vsel %vm813, %v736, %v912
        %914 = vst [vmem:[%s388 + $0xa8] sm:$0xf] %v913
        %915 = vst.msk [vmem:[%s388 + $0xac] sm:$0xf] %vm379, %v745
        %v916 = vld [vmem:[%s388 + $0xb0] sm:$0x1]
        %v917 = vsel %vm391, %v746, %v916
        %918 = vst [vmem:[%s388 + $0xb0] sm:$0x1] %v917
        %v919 = vld [vmem:[%s388 + $0xb4] sm:$0xf]
        %v920 = vsel %vm813, %v753, %v919
        %921 = vst [vmem:[%s388 + $0xb4] sm:$0xf] %v920
        %922 = vst.msk [vmem:[%s388 + $0xb8] sm:$0xf] %vm379, %v762
        %v923 = vld [vmem:[%s388 + $0xbc] sm:$0x1]
        %v924 = vsel %vm391, %v763, %v923
        %925 = vst [vmem:[%s388 + $0xbc] sm:$0x1] %v924
        %v926 = vld [vmem:[#allocation2] sm:$0xf]
        %v927 = vld [vmem:[#allocation2 + $0x4] sm:$0xf]
        %v928 = vld [vmem:[#allocation2 + $0xc] sm:$0xf]
        %v929 = vld [vmem:[#allocation2 + $0x10] sm:$0xf]
        %v930 = vld [vmem:[#allocation2 + $0x18] sm:$0xf]
        %v931 = vld [vmem:[#allocation2 + $0x1c] sm:$0xf]
        %v932 = vld [vmem:[#allocation2 + $0x24] sm:$0xf]
        %v933 = vld [vmem:[#allocation2 + $0x28] sm:$0xf]
        %v934 = vld [vmem:[#allocation2 + $0x30] sm:$0xf]
        %v935 = vld [vmem:[#allocation2 + $0x34] sm:$0xf]
        %v936 = vld [vmem:[#allocation2 + $0x3c] sm:$0xf]
        %v937 = vld [vmem:[#allocation2 + $0x40] sm:$0xf]
        %v938 = vld [vmem:[#allocation2 + $0x48] sm:$0xf]
        %v939 = vld [vmem:[#allocation2 + $0x4c] sm:$0xf]
        %v940 = vld [vmem:[#allocation2 + $0x54] sm:$0xf]
        %v941 = vld [vmem:[#allocation2 + $0x58] sm:$0xf]
        %v942 = vld [vmem:[#allocation2 + $0x60] sm:$0xf]
        %v943 = vld [vmem:[#allocation2 + $0x64] sm:$0xf]
        %v944 = vld [vmem:[#allocation2 + $0x6c] sm:$0xf]
        %v945 = vld [vmem:[#allocation2 + $0x70] sm:$0xf]
        %v946 = vld [vmem:[#allocation2 + $0x78] sm:$0xf]
        %v947 = vld [vmem:[#allocation2 + $0x7c] sm:$0xf]
        %v948 = vld [vmem:[#allocation2 + $0x84] sm:$0xf]
        %v949 = vld [vmem:[#allocation2 + $0x88] sm:$0xf]
        %v950 = vld [vmem:[#allocation2 + $0x90] sm:$0xf]
        %v951 = vld [vmem:[#allocation2 + $0x94] sm:$0xf]
        %v952 = vld [vmem:[#allocation2 + $0x9c] sm:$0xf]
        %v953 = vld [vmem:[#allocation2 + $0xa0] sm:$0xf]
        %v954 = vld [vmem:[#allocation2 + $0xa8] sm:$0xf]
        %v955 = vld [vmem:[#allocation2 + $0xac] sm:$0xf]
        %v956 = vld [vmem:[#allocation2 + $0xb4] sm:$0xf]
        %v957 = vld [vmem:[#allocation2 + $0xb8] sm:$0xf]
        %v958 = vld [vmem:[#allocation2 + $0x8] sm:$0x1]
        %v959 = vld [vmem:[#allocation2 + $0x14] sm:$0x1]
        %v960 = vld [vmem:[#allocation2 + $0x20] sm:$0x1]
        %v961 = vld [vmem:[#allocation2 + $0x2c] sm:$0x1]
        %v962 = vld [vmem:[#allocation2 + $0x38] sm:$0x1]
        %v963 = vld [vmem:[#allocation2 + $0x44] sm:$0x1]
        %v964 = vld [vmem:[#allocation2 + $0x50] sm:$0x1]
        %v965 = vld [vmem:[#allocation2 + $0x5c] sm:$0x1]
        %v966 = vld [vmem:[#allocation2 + $0x68] sm:$0x1]
        %v967 = vld [vmem:[#allocation2 + $0x74] sm:$0x1]
        %v968 = vld [vmem:[#allocation2 + $0x80] sm:$0x1]
        %v969 = vld [vmem:[#allocation2 + $0x8c] sm:$0x1]
        %v970 = vld [vmem:[#allocation2 + $0x98] sm:$0x1]
        %v971 = vld [vmem:[#allocation2 + $0xa4] sm:$0x1]
        %v972 = vld [vmem:[#allocation2 + $0xb0] sm:$0x1]
        %v973 = vld [vmem:[#allocation2 + $0xbc] sm:$0x1]
        %vm974 = vsmask.f32 3328
        %vm975 = vsmask.f32 7440
        %vm976 = vmor %vm974, %vm975
        %v978 = vshrl.u32 %v926, 16
        %v980 = vrot.slane %v978, 4
        %v981 = vshll.u32 %v926, 16
        %v983 = vrot.slane %v981, 5
        %v984 = vor.u32 %v980, %v983
        %v985 = vrot.slane %v984, 4
        %v987 = vshll.u32 %v927, 16
        %v989 = vrot.slane %v987, 5
        %v990 = vsel %vm976, %v985, %v989
        %v991 = vshrl.u32 %v927, 16
        %v993 = vrot.slane %v991, 4
        %v994 = vor.u32 %v993, %v989
        %v995 = vrot.slane %v994, 4
        %v997 = vshll.u32 %v958, 16
        %v999 = vrot.slane %v997, 5
        %v1000 = vsel %vm976, %v995, %v999
        %v1002 = vshrl.u32 %v928, 16
        %v1004 = vrot.slane %v1002, 4
        %v1005 = vshll.u32 %v928, 16
        %v1007 = vrot.slane %v1005, 5
        %v1008 = vor.u32 %v1004, %v1007
        %v1009 = vrot.slane %v1008, 4
        %v1011 = vshll.u32 %v929, 16
        %v1013 = vrot.slane %v1011, 5
        %v1014 = vsel %vm976, %v1009, %v1013
        %v1015 = vshrl.u32 %v929, 16
        %v1017 = vrot.slane %v1015, 4
        %v1018 = vor.u32 %v1017, %v1013
        %v1019 = vrot.slane %v1018, 4
        %v1021 = vshll.u32 %v959, 16
        %v1023 = vrot.slane %v1021, 5
        %v1024 = vsel %vm976, %v1019, %v1023
        %v1026 = vshrl.u32 %v930, 16
        %v1028 = vrot.slane %v1026, 4
        %v1029 = vshll.u32 %v930, 16
        %v1031 = vrot.slane %v1029, 5
        %v1032 = vor.u32 %v1028, %v1031
        %v1033 = vrot.slane %v1032, 4
        %v1035 = vshll.u32 %v931, 16
        %v1037 = vrot.slane %v1035, 5
        %v1038 = vsel %vm976, %v1033, %v1037
        %v1039 = vshrl.u32 %v931, 16
        %v1041 = vrot.slane %v1039, 4
        %v1042 = vor.u32 %v1041, %v1037
        %v1043 = vrot.slane %v1042, 4
        %v1045 = vshll.u32 %v960, 16
        %v1047 = vrot.slane %v1045, 5
        %v1048 = vsel %vm976, %v1043, %v1047
        %v1050 = vshrl.u32 %v932, 16
        %v1052 = vrot.slane %v1050, 4
        %v1053 = vshll.u32 %v932, 16
        %v1055 = vrot.slane %v1053, 5
        %v1056 = vor.u32 %v1052, %v1055
        %v1057 = vrot.slane %v1056, 4
        %v1059 = vshll.u32 %v933, 16
        %v1061 = vrot.slane %v1059, 5
        %v1062 = vsel %vm976, %v1057, %v1061
        %v1063 = vshrl.u32 %v933, 16
        %v1065 = vrot.slane %v1063, 4
        %v1066 = vor.u32 %v1065, %v1061
        %v1067 = vrot.slane %v1066, 4
        %v1069 = vshll.u32 %v961, 16
        %v1071 = vrot.slane %v1069, 5
        %v1072 = vsel %vm976, %v1067, %v1071
        %v1074 = vshrl.u32 %v934, 16
        %v1076 = vrot.slane %v1074, 4
        %v1077 = vshll.u32 %v934, 16
        %v1079 = vrot.slane %v1077, 5
        %v1080 = vor.u32 %v1076, %v1079
        %v1081 = vrot.slane %v1080, 4
        %v1083 = vshll.u32 %v935, 16
        %v1085 = vrot.slane %v1083, 5
        %v1086 = vsel %vm976, %v1081, %v1085
        %v1087 = vshrl.u32 %v935, 16
        %v1089 = vrot.slane %v1087, 4
        %v1090 = vor.u32 %v1089, %v1085
        %v1091 = vrot.slane %v1090, 4
        %v1093 = vshll.u32 %v962, 16
        %v1095 = vrot.slane %v1093, 5
        %v1096 = vsel %vm976, %v1091, %v1095
        %v1098 = vshrl.u32 %v936, 16
        %v1100 = vrot.slane %v1098, 4
        %v1101 = vshll.u32 %v936, 16
        %v1103 = vrot.slane %v1101, 5
        %v1104 = vor.u32 %v1100, %v1103
        %v1105 = vrot.slane %v1104, 4
        %v1107 = vshll.u32 %v937, 16
        %v1109 = vrot.slane %v1107, 5
        %v1110 = vsel %vm976, %v1105, %v1109
        %v1111 = vshrl.u32 %v937, 16
        %v1113 = vrot.slane %v1111, 4
        %v1114 = vor.u32 %v1113, %v1109
        %v1115 = vrot.slane %v1114, 4
        %v1117 = vshll.u32 %v963, 16
        %v1119 = vrot.slane %v1117, 5
        %v1120 = vsel %vm976, %v1115, %v1119
        %v1122 = vshrl.u32 %v938, 16
        %v1124 = vrot.slane %v1122, 4
        %v1125 = vshll.u32 %v938, 16
        %v1127 = vrot.slane %v1125, 5
        %v1128 = vor.u32 %v1124, %v1127
        %v1129 = vrot.slane %v1128, 4
        %v1131 = vshll.u32 %v939, 16
        %v1133 = vrot.slane %v1131, 5
        %v1134 = vsel %vm976, %v1129, %v1133
        %v1135 = vshrl.u32 %v939, 16
        %v1137 = vrot.slane %v1135, 4
        %v1138 = vor.u32 %v1137, %v1133
        %v1139 = vrot.slane %v1138, 4
        %v1141 = vshll.u32 %v964, 16
        %v1143 = vrot.slane %v1141, 5
        %v1144 = vsel %vm976, %v1139, %v1143
        %v1146 = vshrl.u32 %v940, 16
        %v1148 = vrot.slane %v1146, 4
        %v1149 = vshll.u32 %v940, 16
        %v1151 = vrot.slane %v1149, 5
        %v1152 = vor.u32 %v1148, %v1151
        %v1153 = vrot.slane %v1152, 4
        %v1155 = vshll.u32 %v941, 16
        %v1157 = vrot.slane %v1155, 5
        %v1158 = vsel %vm976, %v1153, %v1157
        %v1159 = vshrl.u32 %v941, 16
        %v1161 = vrot.slane %v1159, 4
        %v1162 = vor.u32 %v1161, %v1157
        %v1163 = vrot.slane %v1162, 4
        %v1165 = vshll.u32 %v965, 16
        %v1167 = vrot.slane %v1165, 5
        %v1168 = vsel %vm976, %v1163, %v1167
        %v1170 = vshrl.u32 %v942, 16
        %v1172 = vrot.slane %v1170, 4
        %v1173 = vshll.u32 %v942, 16
        %v1175 = vrot.slane %v1173, 5
        %v1176 = vor.u32 %v1172, %v1175
        %v1177 = vrot.slane %v1176, 4
        %v1179 = vshll.u32 %v943, 16
        %v1181 = vrot.slane %v1179, 5
        %v1182 = vsel %vm976, %v1177, %v1181
        %v1183 = vshrl.u32 %v943, 16
        %v1185 = vrot.slane %v1183, 4
        %v1186 = vor.u32 %v1185, %v1181
        %v1187 = vrot.slane %v1186, 4
        %v1189 = vshll.u32 %v966, 16
        %v1191 = vrot.slane %v1189, 5
        %v1192 = vsel %vm976, %v1187, %v1191
        %v1194 = vshrl.u32 %v944, 16
        %v1196 = vrot.slane %v1194, 4
        %v1197 = vshll.u32 %v944, 16
        %v1199 = vrot.slane %v1197, 5
        %v1200 = vor.u32 %v1196, %v1199
        %v1201 = vrot.slane %v1200, 4
        %v1203 = vshll.u32 %v945, 16
        %v1205 = vrot.slane %v1203, 5
        %v1206 = vsel %vm976, %v1201, %v1205
        %v1207 = vshrl.u32 %v945, 16
        %v1209 = vrot.slane %v1207, 4
        %v1210 = vor.u32 %v1209, %v1205
        %v1211 = vrot.slane %v1210, 4
        %v1213 = vshll.u32 %v967, 16
        %v1215 = vrot.slane %v1213, 5
        %v1216 = vsel %vm976, %v1211, %v1215
        %v1218 = vshrl.u32 %v946, 16
        %v1220 = vrot.slane %v1218, 4
        %v1221 = vshll.u32 %v946, 16
        %v1223 = vrot.slane %v1221, 5
        %v1224 = vor.u32 %v1220, %v1223
        %v1225 = vrot.slane %v1224, 4
        %v1227 = vshll.u32 %v947, 16
        %v1229 = vrot.slane %v1227, 5
        %v1230 = vsel %vm976, %v1225, %v1229
        %v1231 = vshrl.u32 %v947, 16
        %v1233 = vrot.slane %v1231, 4
        %v1234 = vor.u32 %v1233, %v1229
        %v1235 = vrot.slane %v1234, 4
        %v1237 = vshll.u32 %v968, 16
        %v1239 = vrot.slane %v1237, 5
        %v1240 = vsel %vm976, %v1235, %v1239
        %v1242 = vshrl.u32 %v948, 16
        %v1244 = vrot.slane %v1242, 4
        %v1245 = vshll.u32 %v948, 16
        %v1247 = vrot.slane %v1245, 5
        %v1248 = vor.u32 %v1244, %v1247
        %v1249 = vrot.slane %v1248, 4
        %v1251 = vshll.u32 %v949, 16
        %v1253 = vrot.slane %v1251, 5
        %v1254 = vsel %vm976, %v1249, %v1253
        %v1255 = vshrl.u32 %v949, 16
        %v1257 = vrot.slane %v1255, 4
        %v1258 = vor.u32 %v1257, %v1253
        %v1259 = vrot.slane %v1258, 4
        %v1261 = vshll.u32 %v969, 16
        %v1263 = vrot.slane %v1261, 5
        %v1264 = vsel %vm976, %v1259, %v1263
        %v1266 = vshrl.u32 %v950, 16
        %v1268 = vrot.slane %v1266, 4
        %v1269 = vshll.u32 %v950, 16
        %v1271 = vrot.slane %v1269, 5
        %v1272 = vor.u32 %v1268, %v1271
        %v1273 = vrot.slane %v1272, 4
        %v1275 = vshll.u32 %v951, 16
        %v1277 = vrot.slane %v1275, 5
        %v1278 = vsel %vm976, %v1273, %v1277
        %v1279 = vshrl.u32 %v951, 16
        %v1281 = vrot.slane %v1279, 4
        %v1282 = vor.u32 %v1281, %v1277
        %v1283 = vrot.slane %v1282, 4
        %v1285 = vshll.u32 %v970, 16
        %v1287 = vrot.slane %v1285, 5
        %v1288 = vsel %vm976, %v1283, %v1287
        %v1290 = vshrl.u32 %v952, 16
        %v1292 = vrot.slane %v1290, 4
        %v1293 = vshll.u32 %v952, 16
        %v1295 = vrot.slane %v1293, 5
        %v1296 = vor.u32 %v1292, %v1295
        %v1297 = vrot.slane %v1296, 4
        %v1299 = vshll.u32 %v953, 16
        %v1301 = vrot.slane %v1299, 5
        %v1302 = vsel %vm976, %v1297, %v1301
        %v1303 = vshrl.u32 %v953, 16
        %v1305 = vrot.slane %v1303, 4
        %v1306 = vor.u32 %v1305, %v1301
        %v1307 = vrot.slane %v1306, 4
        %v1309 = vshll.u32 %v971, 16
        %v1311 = vrot.slane %v1309, 5
        %v1312 = vsel %vm976, %v1307, %v1311
        %v1314 = vshrl.u32 %v954, 16
        %v1316 = vrot.slane %v1314, 4
        %v1317 = vshll.u32 %v954, 16
        %v1319 = vrot.slane %v1317, 5
        %v1320 = vor.u32 %v1316, %v1319
        %v1321 = vrot.slane %v1320, 4
        %v1323 = vshll.u32 %v955, 16
        %v1325 = vrot.slane %v1323, 5
        %v1326 = vsel %vm976, %v1321, %v1325
        %v1327 = vshrl.u32 %v955, 16
        %v1329 = vrot.slane %v1327, 4
        %v1330 = vor.u32 %v1329, %v1325
        %v1331 = vrot.slane %v1330, 4
        %v1333 = vshll.u32 %v972, 16
        %v1335 = vrot.slane %v1333, 5
        %v1336 = vsel %vm976, %v1331, %v1335
        %v1338 = vshrl.u32 %v956, 16
        %v1340 = vrot.slane %v1338, 4
        %v1341 = vshll.u32 %v956, 16
        %v1343 = vrot.slane %v1341, 5
        %v1344 = vor.u32 %v1340, %v1343
        %v1345 = vrot.slane %v1344, 4
        %v1347 = vshll.u32 %v957, 16
        %v1349 = vrot.slane %v1347, 5
        %v1350 = vsel %vm976, %v1345, %v1349
        %v1351 = vshrl.u32 %v957, 16
        %v1353 = vrot.slane %v1351, 4
        %v1354 = vor.u32 %v1353, %v1349
        %v1355 = vrot.slane %v1354, 4
        %v1357 = vshll.u32 %v973, 16
        %v1359 = vrot.slane %v1357, 5
        %v1360 = vsel %vm976, %v1355, %v1359
        %v1361 = vld [vmem:[#allocation2] sm:$0xe]
        %v1362 = vld [vmem:[#allocation2 + $0xc] sm:$0xe]
        %v1363 = vld [vmem:[#allocation2 + $0x18] sm:$0xe]
        %v1364 = vld [vmem:[#allocation2 + $0x24] sm:$0xe]
        %v1365 = vld [vmem:[#allocation2 + $0x30] sm:$0xe]
        %v1366 = vld [vmem:[#allocation2 + $0x3c] sm:$0xe]
        %v1367 = vld [vmem:[#allocation2 + $0x48] sm:$0xe]
        %v1368 = vld [vmem:[#allocation2 + $0x54] sm:$0xe]
        %v1369 = vld [vmem:[#allocation2 + $0x60] sm:$0xe]
        %v1370 = vld [vmem:[#allocation2 + $0x6c] sm:$0xe]
        %v1371 = vld [vmem:[#allocation2 + $0x78] sm:$0xe]
        %v1372 = vld [vmem:[#allocation2 + $0x84] sm:$0xe]
        %v1373 = vld [vmem:[#allocation2 + $0x90] sm:$0xe]
        %v1374 = vld [vmem:[#allocation2 + $0x9c] sm:$0xe]
        %v1375 = vld [vmem:[#allocation2 + $0xa8] sm:$0xe]
        %v1376 = vld [vmem:[#allocation2 + $0xb4] sm:$0xe]
        %vm1425 = vcmask 1042432
        %vm1426 = vcmask 1046532
        %vm1427 = vmor %vm1425, %vm1426
        %v1428 = vrot.slane %v1361, 5
        %v1429 = vrot.slane %v1428, 4
        %v1430 = vrot.slane %v927, 5
        %v1431 = vsel %vm1427, %v1429, %v1430
        %v1432 = vrot.slane %v1430, 4
        %v1433 = vrot.slane %v958, 5
        %v1434 = vsel %vm1427, %v1432, %v1433
        %v1435 = vrot.slane %v1362, 5
        %v1436 = vrot.slane %v1435, 4
        %v1437 = vrot.slane %v929, 5
        %v1438 = vsel %vm1427, %v1436, %v1437
        %v1439 = vrot.slane %v1437, 4
        %v1440 = vrot.slane %v959, 5
        %v1441 = vsel %vm1427, %v1439, %v1440
        %v1442 = vrot.slane %v1363, 5
        %v1443 = vrot.slane %v1442, 4
        %v1444 = vrot.slane %v931, 5
        %v1445 = vsel %vm1427, %v1443, %v1444
        %v1446 = vrot.slane %v1444, 4
        %v1447 = vrot.slane %v960, 5
        %v1448 = vsel %vm1427, %v1446, %v1447
        %v1449 = vrot.slane %v1364, 5
        %v1450 = vrot.slane %v1449, 4
        %v1451 = vrot.slane %v933, 5
        %v1452 = vsel %vm1427, %v1450, %v1451
        %v1453 = vrot.slane %v1451, 4
        %v1454 = vrot.slane %v961, 5
        %v1455 = vsel %vm1427, %v1453, %v1454
        %v1456 = vrot.slane %v1365, 5
        %v1457 = vrot.slane %v1456, 4
        %v1458 = vrot.slane %v935, 5
        %v1459 = vsel %vm1427, %v1457, %v1458
        %v1460 = vrot.slane %v1458, 4
        %v1461 = vrot.slane %v962, 5
        %v1462 = vsel %vm1427, %v1460, %v1461
        %v1463 = vrot.slane %v1366, 5
        %v1464 = vrot.slane %v1463, 4
        %v1465 = vrot.slane %v937, 5
        %v1466 = vsel %vm1427, %v1464, %v1465
        %v1467 = vrot.slane %v1465, 4
        %v1468 = vrot.slane %v963, 5
        %v1469 = vsel %vm1427, %v1467, %v1468
        %v1470 = vrot.slane %v1367, 5
        %v1471 = vrot.slane %v1470, 4
        %v1472 = vrot.slane %v939, 5
        %v1473 = vsel %vm1427, %v1471, %v1472
        %v1474 = vrot.slane %v1472, 4
        %v1475 = vrot.slane %v964, 5
        %v1476 = vsel %vm1427, %v1474, %v1475
        %v1477 = vrot.slane %v1368, 5
        %v1478 = vrot.slane %v1477, 4
        %v1479 = vrot.slane %v941, 5
        %v1480 = vsel %vm1427, %v1478, %v1479
        %v1481 = vrot.slane %v1479, 4
        %v1482 = vrot.slane %v965, 5
        %v1483 = vsel %vm1427, %v1481, %v1482
        %v1484 = vrot.slane %v1369, 5
        %v1485 = vrot.slane %v1484, 4
        %v1486 = vrot.slane %v943, 5
        %v1487 = vsel %vm1427, %v1485, %v1486
        %v1488 = vrot.slane %v1486, 4
        %v1489 = vrot.slane %v966, 5
        %v1490 = vsel %vm1427, %v1488, %v1489
        %v1491 = vrot.slane %v1370, 5
        %v1492 = vrot.slane %v1491, 4
        %v1493 = vrot.slane %v945, 5
        %v1494 = vsel %vm1427, %v1492, %v1493
        %v1495 = vrot.slane %v1493, 4
        %v1496 = vrot.slane %v967, 5
        %v1497 = vsel %vm1427, %v1495, %v1496
        %v1498 = vrot.slane %v1371, 5
        %v1499 = vrot.slane %v1498, 4
        %v1500 = vrot.slane %v947, 5
        %v1501 = vsel %vm1427, %v1499, %v1500
        %v1502 = vrot.slane %v1500, 4
        %v1503 = vrot.slane %v968, 5
        %v1504 = vsel %vm1427, %v1502, %v1503
        %v1505 = vrot.slane %v1372, 5
        %v1506 = vrot.slane %v1505, 4
        %v1507 = vrot.slane %v949, 5
        %v1508 = vsel %vm1427, %v1506, %v1507
        %v1509 = vrot.slane %v1507, 4
        %v1510 = vrot.slane %v969, 5
        %v1511 = vsel %vm1427, %v1509, %v1510
        %v1512 = vrot.slane %v1373, 5
        %v1513 = vrot.slane %v1512, 4
        %v1514 = vrot.slane %v951, 5
        %v1515 = vsel %vm1427, %v1513, %v1514
        %v1516 = vrot.slane %v1514, 4
        %v1517 = vrot.slane %v970, 5
        %v1518 = vsel %vm1427, %v1516, %v1517
        %v1519 = vrot.slane %v1374, 5
        %v1520 = vrot.slane %v1519, 4
        %v1521 = vrot.slane %v953, 5
        %v1522 = vsel %vm1427, %v1520, %v1521
        %v1523 = vrot.slane %v1521, 4
        %v1524 = vrot.slane %v971, 5
        %v1525 = vsel %vm1427, %v1523, %v1524
        %v1526 = vrot.slane %v1375, 5
        %v1527 = vrot.slane %v1526, 4
        %v1528 = vrot.slane %v955, 5
        %v1529 = vsel %vm1427, %v1527, %v1528
        %v1530 = vrot.slane %v1528, 4
        %v1531 = vrot.slane %v972, 5
        %v1532 = vsel %vm1427, %v1530, %v1531
        %v1533 = vrot.slane %v1376, 5
        %v1534 = vrot.slane %v1533, 4
        %v1535 = vrot.slane %v957, 5
        %v1536 = vsel %vm1427, %v1534, %v1535
        %v1537 = vrot.slane %v1535, 4
        %v1538 = vrot.slane %v973, 5
        %v1539 = vsel %vm1427, %v1537, %v1538
        %v1540 = vld [vmem:[%s388] sm:$0xf]
        %v1541 = vld [vmem:[%s388 + $0x4] sm:$0xf]
        %v1542 = vld [vmem:[%s388 + $0xc] sm:$0xf]
        %v1543 = vld [vmem:[%s388 + $0x10] sm:$0xf]
        %v1544 = vld [vmem:[%s388 + $0x18] sm:$0xf]
        %v1545 = vld [vmem:[%s388 + $0x1c] sm:$0xf]
        %v1546 = vld [vmem:[%s388 + $0x24] sm:$0xf]
        %v1547 = vld [vmem:[%s388 + $0x28] sm:$0xf]
        %v1548 = vld [vmem:[%s388 + $0x30] sm:$0xf]
        %v1549 = vld [vmem:[%s388 + $0x34] sm:$0xf]
        %v1550 = vld [vmem:[%s388 + $0x3c] sm:$0xf]
        %v1551 = vld [vmem:[%s388 + $0x40] sm:$0xf]
        %v1552 = vld [vmem:[%s388 + $0x48] sm:$0xf]
        %v1553 = vld [vmem:[%s388 + $0x4c] sm:$0xf]
        %v1554 = vld [vmem:[%s388 + $0x54] sm:$0xf]
        %v1555 = vld [vmem:[%s388 + $0x58] sm:$0xf]
        %v1556 = vld [vmem:[%s388 + $0x60] sm:$0xf]
        %v1557 = vld [vmem:[%s388 + $0x64] sm:$0xf]
        %v1558 = vld [vmem:[%s388 + $0x6c] sm:$0xf]
        %v1559 = vld [vmem:[%s388 + $0x70] sm:$0xf]
        %v1560 = vld [vmem:[%s388 + $0x78] sm:$0xf]
        %v1561 = vld [vmem:[%s388 + $0x7c] sm:$0xf]
        %v1562 = vld [vmem:[%s388 + $0x84] sm:$0xf]
        %v1563 = vld [vmem:[%s388 + $0x88] sm:$0xf]
        %v1564 = vld [vmem:[%s388 + $0x90] sm:$0xf]
        %v1565 = vld [vmem:[%s388 + $0x94] sm:$0xf]
        %v1566 = vld [vmem:[%s388 + $0x9c] sm:$0xf]
        %v1567 = vld [vmem:[%s388 + $0xa0] sm:$0xf]
        %v1568 = vld [vmem:[%s388 + $0xa8] sm:$0xf]
        %v1569 = vld [vmem:[%s388 + $0xac] sm:$0xf]
        %v1570 = vld [vmem:[%s388 + $0xb4] sm:$0xf]
        %v1571 = vld [vmem:[%s388 + $0xb8] sm:$0xf]
        %v1572 = vld [vmem:[%s388 + $0x8] sm:$0x1]
        %v1573 = vld [vmem:[%s388 + $0x14] sm:$0x1]
        %v1574 = vld [vmem:[%s388 + $0x20] sm:$0x1]
        %v1575 = vld [vmem:[%s388 + $0x2c] sm:$0x1]
        %v1576 = vld [vmem:[%s388 + $0x38] sm:$0x1]
        %v1577 = vld [vmem:[%s388 + $0x44] sm:$0x1]
        %v1578 = vld [vmem:[%s388 + $0x50] sm:$0x1]
        %v1579 = vld [vmem:[%s388 + $0x5c] sm:$0x1]
        %v1580 = vld [vmem:[%s388 + $0x68] sm:$0x1]
        %v1581 = vld [vmem:[%s388 + $0x74] sm:$0x1]
        %v1582 = vld [vmem:[%s388 + $0x80] sm:$0x1]
        %v1583 = vld [vmem:[%s388 + $0x8c] sm:$0x1]
        %v1584 = vld [vmem:[%s388 + $0x98] sm:$0x1]
        %v1585 = vld [vmem:[%s388 + $0xa4] sm:$0x1]
        %v1586 = vld [vmem:[%s388 + $0xb0] sm:$0x1]
        %v1587 = vld [vmem:[%s388 + $0xbc] sm:$0x1]
        %v1589 = vshrl.u32 %v1540, 16
        %v1591 = vrot.slane %v1589, 4
        %v1592 = vshll.u32 %v1540, 16
        %v1594 = vrot.slane %v1592, 5
        %v1595 = vor.u32 %v1591, %v1594
        %v1596 = vrot.slane %v1595, 4
        %v1598 = vshll.u32 %v1541, 16
        %v1600 = vrot.slane %v1598, 5
        %v1601 = vsel %vm976, %v1596, %v1600
        %v1602 = vshrl.u32 %v1541, 16
        %v1604 = vrot.slane %v1602, 4
        %v1605 = vor.u32 %v1604, %v1600
        %v1606 = vrot.slane %v1605, 4
        %v1608 = vshll.u32 %v1572, 16
        %v1610 = vrot.slane %v1608, 5
        %v1611 = vsel %vm976, %v1606, %v1610
        %v1613 = vshrl.u32 %v1542, 16
        %v1615 = vrot.slane %v1613, 4
        %v1616 = vshll.u32 %v1542, 16
        %v1618 = vrot.slane %v1616, 5
        %v1619 = vor.u32 %v1615, %v1618
        %v1620 = vrot.slane %v1619, 4
        %v1622 = vshll.u32 %v1543, 16
        %v1624 = vrot.slane %v1622, 5
        %v1625 = vsel %vm976, %v1620, %v1624
        %v1626 = vshrl.u32 %v1543, 16
        %v1628 = vrot.slane %v1626, 4
        %v1629 = vor.u32 %v1628, %v1624
        %v1630 = vrot.slane %v1629, 4
        %v1632 = vshll.u32 %v1573, 16
        %v1634 = vrot.slane %v1632, 5
        %v1635 = vsel %vm976, %v1630, %v1634
        %v1637 = vshrl.u32 %v1544, 16
        %v1639 = vrot.slane %v1637, 4
        %v1640 = vshll.u32 %v1544, 16
        %v1642 = vrot.slane %v1640, 5
        %v1643 = vor.u32 %v1639, %v1642
        %v1644 = vrot.slane %v1643, 4
        %v1646 = vshll.u32 %v1545, 16
        %v1648 = vrot.slane %v1646, 5
        %v1649 = vsel %vm976, %v1644, %v1648
        %v1650 = vshrl.u32 %v1545, 16
        %v1652 = vrot.slane %v1650, 4
        %v1653 = vor.u32 %v1652, %v1648
        %v1654 = vrot.slane %v1653, 4
        %v1656 = vshll.u32 %v1574, 16
        %v1658 = vrot.slane %v1656, 5
        %v1659 = vsel %vm976, %v1654, %v1658
        %v1661 = vshrl.u32 %v1546, 16
        %v1663 = vrot.slane %v1661, 4
        %v1664 = vshll.u32 %v1546, 16
        %v1666 = vrot.slane %v1664, 5
        %v1667 = vor.u32 %v1663, %v1666
        %v1668 = vrot.slane %v1667, 4
        %v1670 = vshll.u32 %v1547, 16
        %v1672 = vrot.slane %v1670, 5
        %v1673 = vsel %vm976, %v1668, %v1672
        %v1674 = vshrl.u32 %v1547, 16
        %v1676 = vrot.slane %v1674, 4
        %v1677 = vor.u32 %v1676, %v1672
        %v1678 = vrot.slane %v1677, 4
        %v1680 = vshll.u32 %v1575, 16
        %v1682 = vrot.slane %v1680, 5
        %v1683 = vsel %vm976, %v1678, %v1682
        %v1685 = vshrl.u32 %v1548, 16
        %v1687 = vrot.slane %v1685, 4
        %v1688 = vshll.u32 %v1548, 16
        %v1690 = vrot.slane %v1688, 5
        %v1691 = vor.u32 %v1687, %v1690
        %v1692 = vrot.slane %v1691, 4
        %v1694 = vshll.u32 %v1549, 16
        %v1696 = vrot.slane %v1694, 5
        %v1697 = vsel %vm976, %v1692, %v1696
        %v1698 = vshrl.u32 %v1549, 16
        %v1700 = vrot.slane %v1698, 4
        %v1701 = vor.u32 %v1700, %v1696
        %v1702 = vrot.slane %v1701, 4
        %v1704 = vshll.u32 %v1576, 16
        %v1706 = vrot.slane %v1704, 5
        %v1707 = vsel %vm976, %v1702, %v1706
        %v1709 = vshrl.u32 %v1550, 16
        %v1711 = vrot.slane %v1709, 4
        %v1712 = vshll.u32 %v1550, 16
        %v1714 = vrot.slane %v1712, 5
        %v1715 = vor.u32 %v1711, %v1714
        %v1716 = vrot.slane %v1715, 4
        %v1718 = vshll.u32 %v1551, 16
        %v1720 = vrot.slane %v1718, 5
        %v1721 = vsel %vm976, %v1716, %v1720
        %v1722 = vshrl.u32 %v1551, 16
        %v1724 = vrot.slane %v1722, 4
        %v1725 = vor.u32 %v1724, %v1720
        %v1726 = vrot.slane %v1725, 4
        %v1728 = vshll.u32 %v1577, 16
        %v1730 = vrot.slane %v1728, 5
        %v1731 = vsel %vm976, %v1726, %v1730
        %v1733 = vshrl.u32 %v1552, 16
        %v1735 = vrot.slane %v1733, 4
        %v1736 = vshll.u32 %v1552, 16
        %v1738 = vrot.slane %v1736, 5
        %v1739 = vor.u32 %v1735, %v1738
        %v1740 = vrot.slane %v1739, 4
        %v1742 = vshll.u32 %v1553, 16
        %v1744 = vrot.slane %v1742, 5
        %v1745 = vsel %vm976, %v1740, %v1744
        %v1746 = vshrl.u32 %v1553, 16
        %v1748 = vrot.slane %v1746, 4
        %v1749 = vor.u32 %v1748, %v1744
        %v1750 = vrot.slane %v1749, 4
        %v1752 = vshll.u32 %v1578, 16
        %v1754 = vrot.slane %v1752, 5
        %v1755 = vsel %vm976, %v1750, %v1754
        %v1757 = vshrl.u32 %v1554, 16
        %v1759 = vrot.slane %v1757, 4
        %v1760 = vshll.u32 %v1554, 16
        %v1762 = vrot.slane %v1760, 5
        %v1763 = vor.u32 %v1759, %v1762
        %v1764 = vrot.slane %v1763, 4
        %v1766 = vshll.u32 %v1555, 16
        %v1768 = vrot.slane %v1766, 5
        %v1769 = vsel %vm976, %v1764, %v1768
        %v1770 = vshrl.u32 %v1555, 16
        %v1772 = vrot.slane %v1770, 4
        %v1773 = vor.u32 %v1772, %v1768
        %v1774 = vrot.slane %v1773, 4
        %v1776 = vshll.u32 %v1579, 16
        %v1778 = vrot.slane %v1776, 5
        %v1779 = vsel %vm976, %v1774, %v1778
        %v1781 = vshrl.u32 %v1556, 16
        %v1783 = vrot.slane %v1781, 4
        %v1784 = vshll.u32 %v1556, 16
        %v1786 = vrot.slane %v1784, 5
        %v1787 = vor.u32 %v1783, %v1786
        %v1788 = vrot.slane %v1787, 4
        %v1790 = vshll.u32 %v1557, 16
        %v1792 = vrot.slane %v1790, 5
        %v1793 = vsel %vm976, %v1788, %v1792
        %v1794 = vshrl.u32 %v1557, 16
        %v1796 = vrot.slane %v1794, 4
        %v1797 = vor.u32 %v1796, %v1792
        %v1798 = vrot.slane %v1797, 4
        %v1800 = vshll.u32 %v1580, 16
        %v1802 = vrot.slane %v1800, 5
        %v1803 = vsel %vm976, %v1798, %v1802
        %v1805 = vshrl.u32 %v1558, 16
        %v1807 = vrot.slane %v1805, 4
        %v1808 = vshll.u32 %v1558, 16
        %v1810 = vrot.slane %v1808, 5
        %v1811 = vor.u32 %v1807, %v1810
        %v1812 = vrot.slane %v1811, 4
        %v1814 = vshll.u32 %v1559, 16
        %v1816 = vrot.slane %v1814, 5
        %v1817 = vsel %vm976, %v1812, %v1816
        %v1818 = vshrl.u32 %v1559, 16
        %v1820 = vrot.slane %v1818, 4
        %v1821 = vor.u32 %v1820, %v1816
        %v1822 = vrot.slane %v1821, 4
        %v1824 = vshll.u32 %v1581, 16
        %v1826 = vrot.slane %v1824, 5
        %v1827 = vsel %vm976, %v1822, %v1826
        %v1829 = vshrl.u32 %v1560, 16
        %v1831 = vrot.slane %v1829, 4
        %v1832 = vshll.u32 %v1560, 16
        %v1834 = vrot.slane %v1832, 5
        %v1835 = vor.u32 %v1831, %v1834
        %v1836 = vrot.slane %v1835, 4
        %v1838 = vshll.u32 %v1561, 16
        %v1840 = vrot.slane %v1838, 5
        %v1841 = vsel %vm976, %v1836, %v1840
        %v1842 = vshrl.u32 %v1561, 16
        %v1844 = vrot.slane %v1842, 4
        %v1845 = vor.u32 %v1844, %v1840
        %v1846 = vrot.slane %v1845, 4
        %v1848 = vshll.u32 %v1582, 16
        %v1850 = vrot.slane %v1848, 5
        %v1851 = vsel %vm976, %v1846, %v1850
        %v1853 = vshrl.u32 %v1562, 16
        %v1855 = vrot.slane %v1853, 4
        %v1856 = vshll.u32 %v1562, 16
        %v1858 = vrot.slane %v1856, 5
        %v1859 = vor.u32 %v1855, %v1858
        %v1860 = vrot.slane %v1859, 4
        %v1862 = vshll.u32 %v1563, 16
        %v1864 = vrot.slane %v1862, 5
        %v1865 = vsel %vm976, %v1860, %v1864
        %v1866 = vshrl.u32 %v1563, 16
        %v1868 = vrot.slane %v1866, 4
        %v1869 = vor.u32 %v1868, %v1864
        %v1870 = vrot.slane %v1869, 4
        %v1872 = vshll.u32 %v1583, 16
        %v1874 = vrot.slane %v1872, 5
        %v1875 = vsel %vm976, %v1870, %v1874
        %v1877 = vshrl.u32 %v1564, 16
        %v1879 = vrot.slane %v1877, 4
        %v1880 = vshll.u32 %v1564, 16
        %v1882 = vrot.slane %v1880, 5
        %v1883 = vor.u32 %v1879, %v1882
        %v1884 = vrot.slane %v1883, 4
        %v1886 = vshll.u32 %v1565, 16
        %v1888 = vrot.slane %v1886, 5
        %v1889 = vsel %vm976, %v1884, %v1888
        %v1890 = vshrl.u32 %v1565, 16
        %v1892 = vrot.slane %v1890, 4
        %v1893 = vor.u32 %v1892, %v1888
        %v1894 = vrot.slane %v1893, 4
        %v1896 = vshll.u32 %v1584, 16
        %v1898 = vrot.slane %v1896, 5
        %v1899 = vsel %vm976, %v1894, %v1898
        %v1901 = vshrl.u32 %v1566, 16
        %v1903 = vrot.slane %v1901, 4
        %v1904 = vshll.u32 %v1566, 16
        %v1906 = vrot.slane %v1904, 5
        %v1907 = vor.u32 %v1903, %v1906
        %v1908 = vrot.slane %v1907, 4
        %v1910 = vshll.u32 %v1567, 16
        %v1912 = vrot.slane %v1910, 5
        %v1913 = vsel %vm976, %v1908, %v1912
        %v1914 = vshrl.u32 %v1567, 16
        %v1916 = vrot.slane %v1914, 4
        %v1917 = vor.u32 %v1916, %v1912
        %v1918 = vrot.slane %v1917, 4
        %v1920 = vshll.u32 %v1585, 16
        %v1922 = vrot.slane %v1920, 5
        %v1923 = vsel %vm976, %v1918, %v1922
        %v1925 = vshrl.u32 %v1568, 16
        %v1927 = vrot.slane %v1925, 4
        %v1928 = vshll.u32 %v1568, 16
        %v1930 = vrot.slane %v1928, 5
        %v1931 = vor.u32 %v1927, %v1930
        %v1932 = vrot.slane %v1931, 4
        %v1934 = vshll.u32 %v1569, 16
        %v1936 = vrot.slane %v1934, 5
        %v1937 = vsel %vm976, %v1932, %v1936
        %v1938 = vshrl.u32 %v1569, 16
        %v1940 = vrot.slane %v1938, 4
        %v1941 = vor.u32 %v1940, %v1936
        %v1942 = vrot.slane %v1941, 4
        %v1944 = vshll.u32 %v1586, 16
        %v1946 = vrot.slane %v1944, 5
        %v1947 = vsel %vm976, %v1942, %v1946
        %v1949 = vshrl.u32 %v1570, 16
        %v1951 = vrot.slane %v1949, 4
        %v1952 = vshll.u32 %v1570, 16
        %v1954 = vrot.slane %v1952, 5
        %v1955 = vor.u32 %v1951, %v1954
        %v1956 = vrot.slane %v1955, 4
        %v1958 = vshll.u32 %v1571, 16
        %v1960 = vrot.slane %v1958, 5
        %v1961 = vsel %vm976, %v1956, %v1960
        %v1962 = vshrl.u32 %v1571, 16
        %v1964 = vrot.slane %v1962, 4
        %v1965 = vor.u32 %v1964, %v1960
        %v1966 = vrot.slane %v1965, 4
        %v1968 = vshll.u32 %v1587, 16
        %v1970 = vrot.slane %v1968, 5
        %v1971 = vsel %vm976, %v1966, %v1970
        %v1972 = vld [vmem:[%s388] sm:$0xe]
        %v1973 = vld [vmem:[%s388 + $0xc] sm:$0xe]
        %v1974 = vld [vmem:[%s388 + $0x18] sm:$0xe]
        %v1975 = vld [vmem:[%s388 + $0x24] sm:$0xe]
        %v1976 = vld [vmem:[%s388 + $0x30] sm:$0xe]
        %v1977 = vld [vmem:[%s388 + $0x3c] sm:$0xe]
        %v1978 = vld [vmem:[%s388 + $0x48] sm:$0xe]
        %v1979 = vld [vmem:[%s388 + $0x54] sm:$0xe]
        %v1980 = vld [vmem:[%s388 + $0x60] sm:$0xe]
        %v1981 = vld [vmem:[%s388 + $0x6c] sm:$0xe]
        %v1982 = vld [vmem:[%s388 + $0x78] sm:$0xe]
        %v1983 = vld [vmem:[%s388 + $0x84] sm:$0xe]
        %v1984 = vld [vmem:[%s388 + $0x90] sm:$0xe]
        %v1985 = vld [vmem:[%s388 + $0x9c] sm:$0xe]
        %v1986 = vld [vmem:[%s388 + $0xa8] sm:$0xe]
        %v1987 = vld [vmem:[%s388 + $0xb4] sm:$0xe]
        %v2036 = vrot.slane %v1972, 5
        %v2037 = vrot.slane %v2036, 4
        %v2038 = vrot.slane %v1541, 5
        %v2039 = vsel %vm1427, %v2037, %v2038
        %v2040 = vrot.slane %v2038, 4
        %v2041 = vrot.slane %v1572, 5
        %v2042 = vsel %vm1427, %v2040, %v2041
        %v2043 = vrot.slane %v1973, 5
        %v2044 = vrot.slane %v2043, 4
        %v2045 = vrot.slane %v1543, 5
        %v2046 = vsel %vm1427, %v2044, %v2045
        %v2047 = vrot.slane %v2045, 4
        %v2048 = vrot.slane %v1573, 5
        %v2049 = vsel %vm1427, %v2047, %v2048
        %v2050 = vrot.slane %v1974, 5
        %v2051 = vrot.slane %v2050, 4
        %v2052 = vrot.slane %v1545, 5
        %v2053 = vsel %vm1427, %v2051, %v2052
        %v2054 = vrot.slane %v2052, 4
        %v2055 = vrot.slane %v1574, 5
        %v2056 = vsel %vm1427, %v2054, %v2055
        %v2057 = vrot.slane %v1975, 5
        %v2058 = vrot.slane %v2057, 4
        %v2059 = vrot.slane %v1547, 5
        %v2060 = vsel %vm1427, %v2058, %v2059
        %v2061 = vrot.slane %v2059, 4
        %v2062 = vrot.slane %v1575, 5
        %v2063 = vsel %vm1427, %v2061, %v2062
        %v2064 = vrot.slane %v1976, 5
        %v2065 = vrot.slane %v2064, 4
        %v2066 = vrot.slane %v1549, 5
        %v2067 = vsel %vm1427, %v2065, %v2066
        %v2068 = vrot.slane %v2066, 4
        %v2069 = vrot.slane %v1576, 5
        %v2070 = vsel %vm1427, %v2068, %v2069
        %v2071 = vrot.slane %v1977, 5
        %v2072 = vrot.slane %v2071, 4
        %v2073 = vrot.slane %v1551, 5
        %v2074 = vsel %vm1427, %v2072, %v2073
        %v2075 = vrot.slane %v2073, 4
        %v2076 = vrot.slane %v1577, 5
        %v2077 = vsel %vm1427, %v2075, %v2076
        %v2078 = vrot.slane %v1978, 5
        %v2079 = vrot.slane %v2078, 4
        %v2080 = vrot.slane %v1553, 5
        %v2081 = vsel %vm1427, %v2079, %v2080
        %v2082 = vrot.slane %v2080, 4
        %v2083 = vrot.slane %v1578, 5
        %v2084 = vsel %vm1427, %v2082, %v2083
        %v2085 = vrot.slane %v1979, 5
        %v2086 = vrot.slane %v2085, 4
        %v2087 = vrot.slane %v1555, 5
        %v2088 = vsel %vm1427, %v2086, %v2087
        %v2089 = vrot.slane %v2087, 4
        %v2090 = vrot.slane %v1579, 5
        %v2091 = vsel %vm1427, %v2089, %v2090
        %v2092 = vrot.slane %v1980, 5
        %v2093 = vrot.slane %v2092, 4
        %v2094 = vrot.slane %v1557, 5
        %v2095 = vsel %vm1427, %v2093, %v2094
        %v2096 = vrot.slane %v2094, 4
        %v2097 = vrot.slane %v1580, 5
        %v2098 = vsel %vm1427, %v2096, %v2097
        %v2099 = vrot.slane %v1981, 5
        %v2100 = vrot.slane %v2099, 4
        %v2101 = vrot.slane %v1559, 5
        %v2102 = vsel %vm1427, %v2100, %v2101
        %v2103 = vrot.slane %v2101, 4
        %v2104 = vrot.slane %v1581, 5
        %v2105 = vsel %vm1427, %v2103, %v2104
        %v2106 = vrot.slane %v1982, 5
        %v2107 = vrot.slane %v2106, 4
        %v2108 = vrot.slane %v1561, 5
        %v2109 = vsel %vm1427, %v2107, %v2108
        %v2110 = vrot.slane %v2108, 4
        %v2111 = vrot.slane %v1582, 5
        %v2112 = vsel %vm1427, %v2110, %v2111
        %v2113 = vrot.slane %v1983, 5
        %v2114 = vrot.slane %v2113, 4
        %v2115 = vrot.slane %v1563, 5
        %v2116 = vsel %vm1427, %v2114, %v2115
        %v2117 = vrot.slane %v2115, 4
        %v2118 = vrot.slane %v1583, 5
        %v2119 = vsel %vm1427, %v2117, %v2118
        %v2120 = vrot.slane %v1984, 5
        %v2121 = vrot.slane %v2120, 4
        %v2122 = vrot.slane %v1565, 5
        %v2123 = vsel %vm1427, %v2121, %v2122
        %v2124 = vrot.slane %v2122, 4
        %v2125 = vrot.slane %v1584, 5
        %v2126 = vsel %vm1427, %v2124, %v2125
        %v2127 = vrot.slane %v1985, 5
        %v2128 = vrot.slane %v2127, 4
        %v2129 = vrot.slane %v1567, 5
        %v2130 = vsel %vm1427, %v2128, %v2129
        %v2131 = vrot.slane %v2129, 4
        %v2132 = vrot.slane %v1585, 5
        %v2133 = vsel %vm1427, %v2131, %v2132
        %v2134 = vrot.slane %v1986, 5
        %v2135 = vrot.slane %v2134, 4
        %v2136 = vrot.slane %v1569, 5
        %v2137 = vsel %vm1427, %v2135, %v2136
        %v2138 = vrot.slane %v2136, 4
        %v2139 = vrot.slane %v1586, 5
        %v2140 = vsel %vm1427, %v2138, %v2139
        %v2141 = vrot.slane %v1987, 5
        %v2142 = vrot.slane %v2141, 4
        %v2143 = vrot.slane %v1571, 5
        %v2144 = vsel %vm1427, %v2142, %v2143
        %v2145 = vrot.slane %v2143, 4
        %v2146 = vrot.slane %v1587, 5
        %v2147 = vsel %vm1427, %v2145, %v2146
        %s2148 = scalar_lea.vmem [#allocation2], 24
        %v2149 = vld [vmem:[%s2148] sm:$0xf]
        %v2150 = vld [vmem:[%s2148 + $0x4] sm:$0xf]
        %v2151 = vld [vmem:[%s2148 + $0xc] sm:$0xf]
        %v2152 = vld [vmem:[%s2148 + $0x10] sm:$0xf]
        %v2153 = vld [vmem:[%s2148 + $0x18] sm:$0xf]
        %v2154 = vld [vmem:[%s2148 + $0x1c] sm:$0xf]
        %v2155 = vld [vmem:[%s2148 + $0x24] sm:$0xf]
        %v2156 = vld [vmem:[%s2148 + $0x28] sm:$0xf]
        %v2157 = vld [vmem:[%s2148 + $0x30] sm:$0xf]
        %v2158 = vld [vmem:[%s2148 + $0x34] sm:$0xf]
        %v2159 = vld [vmem:[%s2148 + $0x3c] sm:$0xf]
        %v2160 = vld [vmem:[%s2148 + $0x40] sm:$0xf]
        %v2161 = vld [vmem:[%s2148 + $0x48] sm:$0xf]
        %v2162 = vld [vmem:[%s2148 + $0x4c] sm:$0xf]
        %v2163 = vld [vmem:[%s2148 + $0x54] sm:$0xf]
        %v2164 = vld [vmem:[%s2148 + $0x58] sm:$0xf]
        %v2165 = vld [vmem:[%s2148 + $0x60] sm:$0xf]
        %v2166 = vld [vmem:[%s2148 + $0x64] sm:$0xf]
        %v2167 = vld [vmem:[%s2148 + $0x6c] sm:$0xf]
        %v2168 = vld [vmem:[%s2148 + $0x70] sm:$0xf]
        %v2169 = vld [vmem:[%s2148 + $0x78] sm:$0xf]
        %v2170 = vld [vmem:[%s2148 + $0x7c] sm:$0xf]
        %v2171 = vld [vmem:[%s2148 + $0x84] sm:$0xf]
        %v2172 = vld [vmem:[%s2148 + $0x88] sm:$0xf]
        %v2173 = vld [vmem:[%s2148 + $0x90] sm:$0xf]
        %v2174 = vld [vmem:[%s2148 + $0x94] sm:$0xf]
        %v2175 = vld [vmem:[%s2148 + $0x9c] sm:$0xf]
        %v2176 = vld [vmem:[%s2148 + $0xa0] sm:$0xf]
        %v2177 = vld [vmem:[%s2148 + $0xa8] sm:$0xf]
        %v2178 = vld [vmem:[%s2148 + $0xac] sm:$0xf]
        %v2179 = vld [vmem:[%s2148 + $0xb4] sm:$0xf]
        %v2180 = vld [vmem:[%s2148 + $0xb8] sm:$0xf]
        %v2181 = vld [vmem:[%s2148 + $0x8] sm:$0x1]
        %v2182 = vld [vmem:[%s2148 + $0x14] sm:$0x1]
        %v2183 = vld [vmem:[%s2148 + $0x20] sm:$0x1]
        %v2184 = vld [vmem:[%s2148 + $0x2c] sm:$0x1]
        %v2185 = vld [vmem:[%s2148 + $0x38] sm:$0x1]
        %v2186 = vld [vmem:[%s2148 + $0x44] sm:$0x1]
        %v2187 = vld [vmem:[%s2148 + $0x50] sm:$0x1]
        %v2188 = vld [vmem:[%s2148 + $0x5c] sm:$0x1]
        %v2189 = vld [vmem:[%s2148 + $0x68] sm:$0x1]
        %v2190 = vld [vmem:[%s2148 + $0x74] sm:$0x1]
        %v2191 = vld [vmem:[%s2148 + $0x80] sm:$0x1]
        %v2192 = vld [vmem:[%s2148 + $0x8c] sm:$0x1]
        %v2193 = vld [vmem:[%s2148 + $0x98] sm:$0x1]
        %v2194 = vld [vmem:[%s2148 + $0xa4] sm:$0x1]
        %v2195 = vld [vmem:[%s2148 + $0xb0] sm:$0x1]
        %v2196 = vld [vmem:[%s2148 + $0xbc] sm:$0x1]
        %v2198 = vshrl.u32 %v2149, 16
        %v2200 = vrot.slane %v2198, 4
        %v2201 = vshll.u32 %v2149, 16
        %v2203 = vrot.slane %v2201, 5
        %v2204 = vor.u32 %v2200, %v2203
        %v2205 = vrot.slane %v2204, 4
        %v2207 = vshll.u32 %v2150, 16
        %v2209 = vrot.slane %v2207, 5
        %v2210 = vsel %vm976, %v2205, %v2209
        %v2211 = vshrl.u32 %v2150, 16
        %v2213 = vrot.slane %v2211, 4
        %v2214 = vor.u32 %v2213, %v2209
        %v2215 = vrot.slane %v2214, 4
        %v2217 = vshll.u32 %v2181, 16
        %v2219 = vrot.slane %v2217, 5
        %v2220 = vsel %vm976, %v2215, %v2219
        %v2222 = vshrl.u32 %v2151, 16
        %v2224 = vrot.slane %v2222, 4
        %v2225 = vshll.u32 %v2151, 16
        %v2227 = vrot.slane %v2225, 5
        %v2228 = vor.u32 %v2224, %v2227
        %v2229 = vrot.slane %v2228, 4
        %v2231 = vshll.u32 %v2152, 16
        %v2233 = vrot.slane %v2231, 5
        %v2234 = vsel %vm976, %v2229, %v2233
        %v2235 = vshrl.u32 %v2152, 16
        %v2237 = vrot.slane %v2235, 4
        %v2238 = vor.u32 %v2237, %v2233
        %v2239 = vrot.slane %v2238, 4
        %v2241 = vshll.u32 %v2182, 16
        %v2243 = vrot.slane %v2241, 5
        %v2244 = vsel %vm976, %v2239, %v2243
        %v2246 = vshrl.u32 %v2153, 16
        %v2248 = vrot.slane %v2246, 4
        %v2249 = vshll.u32 %v2153, 16
        %v2251 = vrot.slane %v2249, 5
        %v2252 = vor.u32 %v2248, %v2251
        %v2253 = vrot.slane %v2252, 4
        %v2255 = vshll.u32 %v2154, 16
        %v2257 = vrot.slane %v2255, 5
        %v2258 = vsel %vm976, %v2253, %v2257
        %v2259 = vshrl.u32 %v2154, 16
        %v2261 = vrot.slane %v2259, 4
        %v2262 = vor.u32 %v2261, %v2257
        %v2263 = vrot.slane %v2262, 4
        %v2265 = vshll.u32 %v2183, 16
        %v2267 = vrot.slane %v2265, 5
        %v2268 = vsel %vm976, %v2263, %v2267
        %v2270 = vshrl.u32 %v2155, 16
        %v2272 = vrot.slane %v2270, 4
        %v2273 = vshll.u32 %v2155, 16
        %v2275 = vrot.slane %v2273, 5
        %v2276 = vor.u32 %v2272, %v2275
        %v2277 = vrot.slane %v2276, 4
        %v2279 = vshll.u32 %v2156, 16
        %v2281 = vrot.slane %v2279, 5
        %v2282 = vsel %vm976, %v2277, %v2281
        %v2283 = vshrl.u32 %v2156, 16
        %v2285 = vrot.slane %v2283, 4
        %v2286 = vor.u32 %v2285, %v2281
        %v2287 = vrot.slane %v2286, 4
        %v2289 = vshll.u32 %v2184, 16
        %v2291 = vrot.slane %v2289, 5
        %v2292 = vsel %vm976, %v2287, %v2291
        %v2294 = vshrl.u32 %v2157, 16
        %v2296 = vrot.slane %v2294, 4
        %v2297 = vshll.u32 %v2157, 16
        %v2299 = vrot.slane %v2297, 5
        %v2300 = vor.u32 %v2296, %v2299
        %v2301 = vrot.slane %v2300, 4
        %v2303 = vshll.u32 %v2158, 16
        %v2305 = vrot.slane %v2303, 5
        %v2306 = vsel %vm976, %v2301, %v2305
        %v2307 = vshrl.u32 %v2158, 16
        %v2309 = vrot.slane %v2307, 4
        %v2310 = vor.u32 %v2309, %v2305
        %v2311 = vrot.slane %v2310, 4
        %v2313 = vshll.u32 %v2185, 16
        %v2315 = vrot.slane %v2313, 5
        %v2316 = vsel %vm976, %v2311, %v2315
        %v2318 = vshrl.u32 %v2159, 16
        %v2320 = vrot.slane %v2318, 4
        %v2321 = vshll.u32 %v2159, 16
        %v2323 = vrot.slane %v2321, 5
        %v2324 = vor.u32 %v2320, %v2323
        %v2325 = vrot.slane %v2324, 4
        %v2327 = vshll.u32 %v2160, 16
        %v2329 = vrot.slane %v2327, 5
        %v2330 = vsel %vm976, %v2325, %v2329
        %v2331 = vshrl.u32 %v2160, 16
        %v2333 = vrot.slane %v2331, 4
        %v2334 = vor.u32 %v2333, %v2329
        %v2335 = vrot.slane %v2334, 4
        %v2337 = vshll.u32 %v2186, 16
        %v2339 = vrot.slane %v2337, 5
        %v2340 = vsel %vm976, %v2335, %v2339
        %v2342 = vshrl.u32 %v2161, 16
        %v2344 = vrot.slane %v2342, 4
        %v2345 = vshll.u32 %v2161, 16
        %v2347 = vrot.slane %v2345, 5
        %v2348 = vor.u32 %v2344, %v2347
        %v2349 = vrot.slane %v2348, 4
        %v2351 = vshll.u32 %v2162, 16
        %v2353 = vrot.slane %v2351, 5
        %v2354 = vsel %vm976, %v2349, %v2353
        %v2355 = vshrl.u32 %v2162, 16
        %v2357 = vrot.slane %v2355, 4
        %v2358 = vor.u32 %v2357, %v2353
        %v2359 = vrot.slane %v2358, 4
        %v2361 = vshll.u32 %v2187, 16
        %v2363 = vrot.slane %v2361, 5
        %v2364 = vsel %vm976, %v2359, %v2363
        %v2366 = vshrl.u32 %v2163, 16
        %v2368 = vrot.slane %v2366, 4
        %v2369 = vshll.u32 %v2163, 16
        %v2371 = vrot.slane %v2369, 5
        %v2372 = vor.u32 %v2368, %v2371
        %v2373 = vrot.slane %v2372, 4
        %v2375 = vshll.u32 %v2164, 16
        %v2377 = vrot.slane %v2375, 5
        %v2378 = vsel %vm976, %v2373, %v2377
        %v2379 = vshrl.u32 %v2164, 16
        %v2381 = vrot.slane %v2379, 4
        %v2382 = vor.u32 %v2381, %v2377
        %v2383 = vrot.slane %v2382, 4
        %v2385 = vshll.u32 %v2188, 16
        %v2387 = vrot.slane %v2385, 5
        %v2388 = vsel %vm976, %v2383, %v2387
        %v2390 = vshrl.u32 %v2165, 16
        %v2392 = vrot.slane %v2390, 4
        %v2393 = vshll.u32 %v2165, 16
        %v2395 = vrot.slane %v2393, 5
        %v2396 = vor.u32 %v2392, %v2395
        %v2397 = vrot.slane %v2396, 4
        %v2399 = vshll.u32 %v2166, 16
        %v2401 = vrot.slane %v2399, 5
        %v2402 = vsel %vm976, %v2397, %v2401
        %v2403 = vshrl.u32 %v2166, 16
        %v2405 = vrot.slane %v2403, 4
        %v2406 = vor.u32 %v2405, %v2401
        %v2407 = vrot.slane %v2406, 4
        %v2409 = vshll.u32 %v2189, 16
        %v2411 = vrot.slane %v2409, 5
        %v2412 = vsel %vm976, %v2407, %v2411
        %v2414 = vshrl.u32 %v2167, 16
        %v2416 = vrot.slane %v2414, 4
        %v2417 = vshll.u32 %v2167, 16
        %v2419 = vrot.slane %v2417, 5
        %v2420 = vor.u32 %v2416, %v2419
        %v2421 = vrot.slane %v2420, 4
        %v2423 = vshll.u32 %v2168, 16
        %v2425 = vrot.slane %v2423, 5
        %v2426 = vsel %vm976, %v2421, %v2425
        %v2427 = vshrl.u32 %v2168, 16
        %v2429 = vrot.slane %v2427, 4
        %v2430 = vor.u32 %v2429, %v2425
        %v2431 = vrot.slane %v2430, 4
        %v2433 = vshll.u32 %v2190, 16
        %v2435 = vrot.slane %v2433, 5
        %v2436 = vsel %vm976, %v2431, %v2435
        %v2438 = vshrl.u32 %v2169, 16
        %v2440 = vrot.slane %v2438, 4
        %v2441 = vshll.u32 %v2169, 16
        %v2443 = vrot.slane %v2441, 5
        %v2444 = vor.u32 %v2440, %v2443
        %v2445 = vrot.slane %v2444, 4
        %v2447 = vshll.u32 %v2170, 16
        %v2449 = vrot.slane %v2447, 5
        %v2450 = vsel %vm976, %v2445, %v2449
        %v2451 = vshrl.u32 %v2170, 16
        %v2453 = vrot.slane %v2451, 4
        %v2454 = vor.u32 %v2453, %v2449
        %v2455 = vrot.slane %v2454, 4
        %v2457 = vshll.u32 %v2191, 16
        %v2459 = vrot.slane %v2457, 5
        %v2460 = vsel %vm976, %v2455, %v2459
        %v2462 = vshrl.u32 %v2171, 16
        %v2464 = vrot.slane %v2462, 4
        %v2465 = vshll.u32 %v2171, 16
        %v2467 = vrot.slane %v2465, 5
        %v2468 = vor.u32 %v2464, %v2467
        %v2469 = vrot.slane %v2468, 4
        %v2471 = vshll.u32 %v2172, 16
        %v2473 = vrot.slane %v2471, 5
        %v2474 = vsel %vm976, %v2469, %v2473
        %v2475 = vshrl.u32 %v2172, 16
        %v2477 = vrot.slane %v2475, 4
        %v2478 = vor.u32 %v2477, %v2473
        %v2479 = vrot.slane %v2478, 4
        %v2481 = vshll.u32 %v2192, 16
        %v2483 = vrot.slane %v2481, 5
        %v2484 = vsel %vm976, %v2479, %v2483
        %v2486 = vshrl.u32 %v2173, 16
        %v2488 = vrot.slane %v2486, 4
        %v2489 = vshll.u32 %v2173, 16
        %v2491 = vrot.slane %v2489, 5
        %v2492 = vor.u32 %v2488, %v2491
        %v2493 = vrot.slane %v2492, 4
        %v2495 = vshll.u32 %v2174, 16
        %v2497 = vrot.slane %v2495, 5
        %v2498 = vsel %vm976, %v2493, %v2497
        %v2499 = vshrl.u32 %v2174, 16
        %v2501 = vrot.slane %v2499, 4
        %v2502 = vor.u32 %v2501, %v2497
        %v2503 = vrot.slane %v2502, 4
        %v2505 = vshll.u32 %v2193, 16
        %v2507 = vrot.slane %v2505, 5
        %v2508 = vsel %vm976, %v2503, %v2507
        %v2510 = vshrl.u32 %v2175, 16
        %v2512 = vrot.slane %v2510, 4
        %v2513 = vshll.u32 %v2175, 16
        %v2515 = vrot.slane %v2513, 5
        %v2516 = vor.u32 %v2512, %v2515
        %v2517 = vrot.slane %v2516, 4
        %v2519 = vshll.u32 %v2176, 16
        %v2521 = vrot.slane %v2519, 5
        %v2522 = vsel %vm976, %v2517, %v2521
        %v2523 = vshrl.u32 %v2176, 16
        %v2525 = vrot.slane %v2523, 4
        %v2526 = vor.u32 %v2525, %v2521
        %v2527 = vrot.slane %v2526, 4
        %v2529 = vshll.u32 %v2194, 16
        %v2531 = vrot.slane %v2529, 5
        %v2532 = vsel %vm976, %v2527, %v2531
        %v2534 = vshrl.u32 %v2177, 16
        %v2536 = vrot.slane %v2534, 4
        %v2537 = vshll.u32 %v2177, 16
        %v2539 = vrot.slane %v2537, 5
        %v2540 = vor.u32 %v2536, %v2539
        %v2541 = vrot.slane %v2540, 4
        %v2543 = vshll.u32 %v2178, 16
        %v2545 = vrot.slane %v2543, 5
        %v2546 = vsel %vm976, %v2541, %v2545
        %v2547 = vshrl.u32 %v2178, 16
        %v2549 = vrot.slane %v2547, 4
        %v2550 = vor.u32 %v2549, %v2545
        %v2551 = vrot.slane %v2550, 4
        %v2553 = vshll.u32 %v2195, 16
        %v2555 = vrot.slane %v2553, 5
        %v2556 = vsel %vm976, %v2551, %v2555
        %v2558 = vshrl.u32 %v2179, 16
        %v2560 = vrot.slane %v2558, 4
        %v2561 = vshll.u32 %v2179, 16
        %v2563 = vrot.slane %v2561, 5
        %v2564 = vor.u32 %v2560, %v2563
        %v2565 = vrot.slane %v2564, 4
        %v2567 = vshll.u32 %v2180, 16
        %v2569 = vrot.slane %v2567, 5
        %v2570 = vsel %vm976, %v2565, %v2569
        %v2571 = vshrl.u32 %v2180, 16
        %v2573 = vrot.slane %v2571, 4
        %v2574 = vor.u32 %v2573, %v2569
        %v2575 = vrot.slane %v2574, 4
        %v2577 = vshll.u32 %v2196, 16
        %v2579 = vrot.slane %v2577, 5
        %v2580 = vsel %vm976, %v2575, %v2579
        %v2581 = vld [vmem:[%s2148] sm:$0xe]
        %v2582 = vld [vmem:[%s2148 + $0xc] sm:$0xe]
        %v2583 = vld [vmem:[%s2148 + $0x18] sm:$0xe]
        %v2584 = vld [vmem:[%s2148 + $0x24] sm:$0xe]
        %v2585 = vld [vmem:[%s2148 + $0x30] sm:$0xe]
        %v2586 = vld [vmem:[%s2148 + $0x3c] sm:$0xe]
        %v2587 = vld [vmem:[%s2148 + $0x48] sm:$0xe]
        %v2588 = vld [vmem:[%s2148 + $0x54] sm:$0xe]
        %v2589 = vld [vmem:[%s2148 + $0x60] sm:$0xe]
        %v2590 = vld [vmem:[%s2148 + $0x6c] sm:$0xe]
        %v2591 = vld [vmem:[%s2148 + $0x78] sm:$0xe]
        %v2592 = vld [vmem:[%s2148 + $0x84] sm:$0xe]
        %v2593 = vld [vmem:[%s2148 + $0x90] sm:$0xe]
        %v2594 = vld [vmem:[%s2148 + $0x9c] sm:$0xe]
        %v2595 = vld [vmem:[%s2148 + $0xa8] sm:$0xe]
        %v2596 = vld [vmem:[%s2148 + $0xb4] sm:$0xe]
        %v2645 = vrot.slane %v2581, 5
        %v2646 = vrot.slane %v2645, 4
        %v2647 = vrot.slane %v2150, 5
        %v2648 = vsel %vm1427, %v2646, %v2647
        %v2649 = vrot.slane %v2647, 4
        %v2650 = vrot.slane %v2181, 5
        %v2651 = vsel %vm1427, %v2649, %v2650
        %v2652 = vrot.slane %v2582, 5
        %v2653 = vrot.slane %v2652, 4
        %v2654 = vrot.slane %v2152, 5
        %v2655 = vsel %vm1427, %v2653, %v2654
        %v2656 = vrot.slane %v2654, 4
        %v2657 = vrot.slane %v2182, 5
        %v2658 = vsel %vm1427, %v2656, %v2657
        %v2659 = vrot.slane %v2583, 5
        %v2660 = vrot.slane %v2659, 4
        %v2661 = vrot.slane %v2154, 5
        %v2662 = vsel %vm1427, %v2660, %v2661
        %v2663 = vrot.slane %v2661, 4
        %v2664 = vrot.slane %v2183, 5
        %v2665 = vsel %vm1427, %v2663, %v2664
        %v2666 = vrot.slane %v2584, 5
        %v2667 = vrot.slane %v2666, 4
        %v2668 = vrot.slane %v2156, 5
        %v2669 = vsel %vm1427, %v2667, %v2668
        %v2670 = vrot.slane %v2668, 4
        %v2671 = vrot.slane %v2184, 5
        %v2672 = vsel %vm1427, %v2670, %v2671
        %v2673 = vrot.slane %v2585, 5
        %v2674 = vrot.slane %v2673, 4
        %v2675 = vrot.slane %v2158, 5
        %v2676 = vsel %vm1427, %v2674, %v2675
        %v2677 = vrot.slane %v2675, 4
        %v2678 = vrot.slane %v2185, 5
        %v2679 = vsel %vm1427, %v2677, %v2678
        %v2680 = vrot.slane %v2586, 5
        %v2681 = vrot.slane %v2680, 4
        %v2682 = vrot.slane %v2160, 5
        %v2683 = vsel %vm1427, %v2681, %v2682
        %v2684 = vrot.slane %v2682, 4
        %v2685 = vrot.slane %v2186, 5
        %v2686 = vsel %vm1427, %v2684, %v2685
        %v2687 = vrot.slane %v2587, 5
        %v2688 = vrot.slane %v2687, 4
        %v2689 = vrot.slane %v2162, 5
        %v2690 = vsel %vm1427, %v2688, %v2689
        %v2691 = vrot.slane %v2689, 4
        %v2692 = vrot.slane %v2187, 5
        %v2693 = vsel %vm1427, %v2691, %v2692
        %v2694 = vrot.slane %v2588, 5
        %v2695 = vrot.slane %v2694, 4
        %v2696 = vrot.slane %v2164, 5
        %v2697 = vsel %vm1427, %v2695, %v2696
        %v2698 = vrot.slane %v2696, 4
        %v2699 = vrot.slane %v2188, 5
        %v2700 = vsel %vm1427, %v2698, %v2699
        %v2701 = vrot.slane %v2589, 5
        %v2702 = vrot.slane %v2701, 4
        %v2703 = vrot.slane %v2166, 5
        %v2704 = vsel %vm1427, %v2702, %v2703
        %v2705 = vrot.slane %v2703, 4
        %v2706 = vrot.slane %v2189, 5
        %v2707 = vsel %vm1427, %v2705, %v2706
        %v2708 = vrot.slane %v2590, 5
        %v2709 = vrot.slane %v2708, 4
        %v2710 = vrot.slane %v2168, 5
        %v2711 = vsel %vm1427, %v2709, %v2710
        %v2712 = vrot.slane %v2710, 4
        %v2713 = vrot.slane %v2190, 5
        %v2714 = vsel %vm1427, %v2712, %v2713
        %v2715 = vrot.slane %v2591, 5
        %v2716 = vrot.slane %v2715, 4
        %v2717 = vrot.slane %v2170, 5
        %v2718 = vsel %vm1427, %v2716, %v2717
        %v2719 = vrot.slane %v2717, 4
        %v2720 = vrot.slane %v2191, 5
        %v2721 = vsel %vm1427, %v2719, %v2720
        %v2722 = vrot.slane %v2592, 5
        %v2723 = vrot.slane %v2722, 4
        %v2724 = vrot.slane %v2172, 5
        %v2725 = vsel %vm1427, %v2723, %v2724
        %v2726 = vrot.slane %v2724, 4
        %v2727 = vrot.slane %v2192, 5
        %v2728 = vsel %vm1427, %v2726, %v2727
        %v2729 = vrot.slane %v2593, 5
        %v2730 = vrot.slane %v2729, 4
        %v2731 = vrot.slane %v2174, 5
        %v2732 = vsel %vm1427, %v2730, %v2731
        %v2733 = vrot.slane %v2731, 4
        %v2734 = vrot.slane %v2193, 5
        %v2735 = vsel %vm1427, %v2733, %v2734
        %v2736 = vrot.slane %v2594, 5
        %v2737 = vrot.slane %v2736, 4
        %v2738 = vrot.slane %v2176, 5
        %v2739 = vsel %vm1427, %v2737, %v2738
        %v2740 = vrot.slane %v2738, 4
        %v2741 = vrot.slane %v2194, 5
        %v2742 = vsel %vm1427, %v2740, %v2741
        %v2743 = vrot.slane %v2595, 5
        %v2744 = vrot.slane %v2743, 4
        %v2745 = vrot.slane %v2178, 5
        %v2746 = vsel %vm1427, %v2744, %v2745
        %v2747 = vrot.slane %v2745, 4
        %v2748 = vrot.slane %v2195, 5
        %v2749 = vsel %vm1427, %v2747, %v2748
        %v2750 = vrot.slane %v2596, 5
        %v2751 = vrot.slane %v2750, 4
        %v2752 = vrot.slane %v2180, 5
        %v2753 = vsel %vm1427, %v2751, %v2752
        %v2754 = vrot.slane %v2752, 4
        %v2755 = vrot.slane %v2196, 5
        %v2756 = vsel %vm1427, %v2754, %v2755
        %v2773 = vunpack.c.l.b16 %v926
        %v2774 = vunpack.c.l.b16 %v927
        %v2775 = vunpack.c.l.b16 %v928
        %v2776 = vunpack.c.l.b16 %v929
        %v2777 = vunpack.c.l.b16 %v930
        %v2778 = vunpack.c.l.b16 %v931
        %v2779 = vunpack.c.l.b16 %v932
        %v2780 = vunpack.c.l.b16 %v933
        %v2781 = vunpack.c.l.b16 %v934
        %v2782 = vunpack.c.l.b16 %v935
        %v2783 = vunpack.c.l.b16 %v936
        %v2784 = vunpack.c.l.b16 %v937
        %v2785 = vunpack.c.l.b16 %v938
        %v2786 = vunpack.c.l.b16 %v939
        %v2787 = vunpack.c.l.b16 %v940
        %v2788 = vunpack.c.l.b16 %v941
        %v2789 = vunpack.c.l.b16 %v942
        %v2790 = vunpack.c.l.b16 %v943
        %v2791 = vunpack.c.l.b16 %v944
        %v2792 = vunpack.c.l.b16 %v945
        %v2793 = vunpack.c.l.b16 %v946
        %v2794 = vunpack.c.l.b16 %v947
        %v2795 = vunpack.c.l.b16 %v948
        %v2796 = vunpack.c.l.b16 %v949
        %v2797 = vunpack.c.l.b16 %v950
        %v2798 = vunpack.c.l.b16 %v951
        %v2799 = vunpack.c.l.b16 %v952
        %v2800 = vunpack.c.l.b16 %v953
        %v2801 = vunpack.c.l.b16 %v954
        %v2802 = vunpack.c.l.b16 %v955
        %v2803 = vunpack.c.l.b16 %v956
        %v2804 = vunpack.c.l.b16 %v957
        %v2805 = vpack.c.b16 %v2774, %v2773
        %v2806 = vpack.c.b16 %v2776, %v2775
        %v2807 = vpack.c.b16 %v2778, %v2777
        %v2808 = vpack.c.b16 %v2780, %v2779
        %v2809 = vpack.c.b16 %v2782, %v2781
        %v2810 = vpack.c.b16 %v2784, %v2783
        %v2811 = vpack.c.b16 %v2786, %v2785
        %v2812 = vpack.c.b16 %v2788, %v2787
        %v2813 = vpack.c.b16 %v2790, %v2789
        %v2814 = vpack.c.b16 %v2792, %v2791
        %v2815 = vpack.c.b16 %v2794, %v2793
        %v2816 = vpack.c.b16 %v2796, %v2795
        %v2817 = vpack.c.b16 %v2798, %v2797
        %v2818 = vpack.c.b16 %v2800, %v2799
        %v2819 = vpack.c.b16 %v2802, %v2801
        %v2820 = vpack.c.b16 %v2804, %v2803
        %v2821 = vunpack.c.l.b16 %v990
        %v2822 = vunpack.c.l.b16 %v1000
        %v2823 = vunpack.c.l.b16 %v1014
        %v2824 = vunpack.c.l.b16 %v1024
        %v2825 = vunpack.c.l.b16 %v1038
        %v2826 = vunpack.c.l.b16 %v1048
        %v2827 = vunpack.c.l.b16 %v1062
        %v2828 = vunpack.c.l.b16 %v1072
        %v2829 = vunpack.c.l.b16 %v1086
        %v2830 = vunpack.c.l.b16 %v1096
        %v2831 = vunpack.c.l.b16 %v1110
        %v2832 = vunpack.c.l.b16 %v1120
        %v2833 = vunpack.c.l.b16 %v1134
        %v2834 = vunpack.c.l.b16 %v1144
        %v2835 = vunpack.c.l.b16 %v1158
        %v2836 = vunpack.c.l.b16 %v1168
        %v2837 = vunpack.c.l.b16 %v1182
        %v2838 = vunpack.c.l.b16 %v1192
        %v2839 = vunpack.c.l.b16 %v1206
        %v2840 = vunpack.c.l.b16 %v1216
        %v2841 = vunpack.c.l.b16 %v1230
        %v2842 = vunpack.c.l.b16 %v1240
        %v2843 = vunpack.c.l.b16 %v1254
        %v2844 = vunpack.c.l.b16 %v1264
        %v2845 = vunpack.c.l.b16 %v1278
        %v2846 = vunpack.c.l.b16 %v1288
        %v2847 = vunpack.c.l.b16 %v1302
        %v2848 = vunpack.c.l.b16 %v1312
        %v2849 = vunpack.c.l.b16 %v1326
        %v2850 = vunpack.c.l.b16 %v1336
        %v2851 = vunpack.c.l.b16 %v1350
        %v2852 = vunpack.c.l.b16 %v1360
        %v2853 = vpack.c.b16 %v2822, %v2821
        %v2854 = vpack.c.b16 %v2824, %v2823
        %v2855 = vpack.c.b16 %v2826, %v2825
        %v2856 = vpack.c.b16 %v2828, %v2827
        %v2857 = vpack.c.b16 %v2830, %v2829
        %v2858 = vpack.c.b16 %v2832, %v2831
        %v2859 = vpack.c.b16 %v2834, %v2833
        %v2860 = vpack.c.b16 %v2836, %v2835
        %v2861 = vpack.c.b16 %v2838, %v2837
        %v2862 = vpack.c.b16 %v2840, %v2839
        %v2863 = vpack.c.b16 %v2842, %v2841
        %v2864 = vpack.c.b16 %v2844, %v2843
        %v2865 = vpack.c.b16 %v2846, %v2845
        %v2866 = vpack.c.b16 %v2848, %v2847
        %v2867 = vpack.c.b16 %v2850, %v2849
        %v2868 = vpack.c.b16 %v2852, %v2851
        %2869 = vrot.lane.b32.xlu0 %v2853, 3
        %v2870 = vpop.permute.xlu0 %2869
        %2871 = vrot.lane.b32.xlu0 %v2854, 3
        %v2872 = vpop.permute.xlu0 %2871
        %2873 = vrot.lane.b32.xlu0 %v2855, 3
        %v2874 = vpop.permute.xlu0 %2873
        %2875 = vrot.lane.b32.xlu0 %v2856, 3
        %v2876 = vpop.permute.xlu0 %2875
        %2877 = vrot.lane.b32.xlu0 %v2857, 3
        %v2878 = vpop.permute.xlu0 %2877
        %2879 = vrot.lane.b32.xlu0 %v2858, 3
        %v2880 = vpop.permute.xlu0 %2879
        %2881 = vrot.lane.b32.xlu0 %v2859, 3
        %v2882 = vpop.permute.xlu0 %2881
        %2883 = vrot.lane.b32.xlu0 %v2860, 3
        %v2884 = vpop.permute.xlu0 %2883
        %2885 = vrot.lane.b32.xlu0 %v2861, 3
        %v2886 = vpop.permute.xlu0 %2885
        %2887 = vrot.lane.b32.xlu0 %v2862, 3
        %v2888 = vpop.permute.xlu0 %2887
        %2889 = vrot.lane.b32.xlu0 %v2863, 3
        %v2890 = vpop.permute.xlu0 %2889
        %2891 = vrot.lane.b32.xlu0 %v2864, 3
        %v2892 = vpop.permute.xlu0 %2891
        %2893 = vrot.lane.b32.xlu0 %v2865, 3
        %v2894 = vpop.permute.xlu0 %2893
        %2895 = vrot.lane.b32.xlu0 %v2866, 3
        %v2896 = vpop.permute.xlu0 %2895
        %2897 = vrot.lane.b32.xlu0 %v2867, 3
        %v2898 = vpop.permute.xlu0 %2897
        %2899 = vrot.lane.b32.xlu0 %v2868, 3
        %v2900 = vpop.permute.xlu0 %2899
        %v2901 = vunpack.c.l.b16 %v1431
        %v2902 = vunpack.c.l.b16 %v1434
        %v2903 = vunpack.c.l.b16 %v1438
        %v2904 = vunpack.c.l.b16 %v1441
        %v2905 = vunpack.c.l.b16 %v1445
        %v2906 = vunpack.c.l.b16 %v1448
        %v2907 = vunpack.c.l.b16 %v1452
        %v2908 = vunpack.c.l.b16 %v1455
        %v2909 = vunpack.c.l.b16 %v1459
        %v2910 = vunpack.c.l.b16 %v1462
        %v2911 = vunpack.c.l.b16 %v1466
        %v2912 = vunpack.c.l.b16 %v1469
        %v2913 = vunpack.c.l.b16 %v1473
        %v2914 = vunpack.c.l.b16 %v1476
        %v2915 = vunpack.c.l.b16 %v1480
        %v2916 = vunpack.c.l.b16 %v1483
        %v2917 = vunpack.c.l.b16 %v1487
        %v2918 = vunpack.c.l.b16 %v1490
        %v2919 = vunpack.c.l.b16 %v1494
        %v2920 = vunpack.c.l.b16 %v1497
        %v2921 = vunpack.c.l.b16 %v1501
        %v2922 = vunpack.c.l.b16 %v1504
        %v2923 = vunpack.c.l.b16 %v1508
        %v2924 = vunpack.c.l.b16 %v1511
        %v2925 = vunpack.c.l.b16 %v1515
        %v2926 = vunpack.c.l.b16 %v1518
        %v2927 = vunpack.c.l.b16 %v1522
        %v2928 = vunpack.c.l.b16 %v1525
        %v2929 = vunpack.c.l.b16 %v1529
        %v2930 = vunpack.c.l.b16 %v1532
        %v2931 = vunpack.c.l.b16 %v1536
        %v2932 = vunpack.c.l.b16 %v1539
        %v2933 = vpack.c.b16 %v2902, %v2901
        %v2934 = vpack.c.b16 %v2904, %v2903
        %v2935 = vpack.c.b16 %v2906, %v2905
        %v2936 = vpack.c.b16 %v2908, %v2907
        %v2937 = vpack.c.b16 %v2910, %v2909
        %v2938 = vpack.c.b16 %v2912, %v2911
        %v2939 = vpack.c.b16 %v2914, %v2913
        %v2940 = vpack.c.b16 %v2916, %v2915
        %v2941 = vpack.c.b16 %v2918, %v2917
        %v2942 = vpack.c.b16 %v2920, %v2919
        %v2943 = vpack.c.b16 %v2922, %v2921
        %v2944 = vpack.c.b16 %v2924, %v2923
        %v2945 = vpack.c.b16 %v2926, %v2925
        %v2946 = vpack.c.b16 %v2928, %v2927
        %v2947 = vpack.c.b16 %v2930, %v2929
        %v2948 = vpack.c.b16 %v2932, %v2931
        %2949 = vrot.lane.b32.xlu0 %v2933, 6
        %v2950 = vpop.permute.xlu0 %2949
        %2951 = vrot.lane.b32.xlu0 %v2934, 6
        %v2952 = vpop.permute.xlu0 %2951
        %2953 = vrot.lane.b32.xlu0 %v2935, 6
        %v2954 = vpop.permute.xlu0 %2953
        %2955 = vrot.lane.b32.xlu0 %v2936, 6
        %v2956 = vpop.permute.xlu0 %2955
        %2957 = vrot.lane.b32.xlu0 %v2937, 6
        %v2958 = vpop.permute.xlu0 %2957
        %2959 = vrot.lane.b32.xlu0 %v2938, 6
        %v2960 = vpop.permute.xlu0 %2959
        %2961 = vrot.lane.b32.xlu0 %v2939, 6
        %v2962 = vpop.permute.xlu0 %2961
        %2963 = vrot.lane.b32.xlu0 %v2940, 6
        %v2964 = vpop.permute.xlu0 %2963
        %2965 = vrot.lane.b32.xlu0 %v2941, 6
        %v2966 = vpop.permute.xlu0 %2965
        %2967 = vrot.lane.b32.xlu0 %v2942, 6
        %v2968 = vpop.permute.xlu0 %2967
        %2969 = vrot.lane.b32.xlu0 %v2943, 6
        %v2970 = vpop.permute.xlu0 %2969
        %2971 = vrot.lane.b32.xlu0 %v2944, 6
        %v2972 = vpop.permute.xlu0 %2971
        %2973 = vrot.lane.b32.xlu0 %v2945, 6
        %v2974 = vpop.permute.xlu0 %2973
        %2975 = vrot.lane.b32.xlu0 %v2946, 6
        %v2976 = vpop.permute.xlu0 %2975
        %2977 = vrot.lane.b32.xlu0 %v2947, 6
        %v2978 = vpop.permute.xlu0 %2977
        %2979 = vrot.lane.b32.xlu0 %v2948, 6
        %v2980 = vpop.permute.xlu0 %2979
        %v2997 = vunpack.c.l.b16 %v1540
        %v2998 = vunpack.c.l.b16 %v1541
        %v2999 = vunpack.c.l.b16 %v1542
        %v3000 = vunpack.c.l.b16 %v1543
        %v3001 = vunpack.c.l.b16 %v1544
        %v3002 = vunpack.c.l.b16 %v1545
        %v3003 = vunpack.c.l.b16 %v1546
        %v3004 = vunpack.c.l.b16 %v1547
        %v3005 = vunpack.c.l.b16 %v1548
        %v3006 = vunpack.c.l.b16 %v1549
        %v3007 = vunpack.c.l.b16 %v1550
        %v3008 = vunpack.c.l.b16 %v1551
        %v3009 = vunpack.c.l.b16 %v1552
        %v3010 = vunpack.c.l.b16 %v1553
        %v3011 = vunpack.c.l.b16 %v1554
        %v3012 = vunpack.c.l.b16 %v1555
        %v3013 = vunpack.c.l.b16 %v1556
        %v3014 = vunpack.c.l.b16 %v1557
        %v3015 = vunpack.c.l.b16 %v1558
        %v3016 = vunpack.c.l.b16 %v1559
        %v3017 = vunpack.c.l.b16 %v1560
        %v3018 = vunpack.c.l.b16 %v1561
        %v3019 = vunpack.c.l.b16 %v1562
        %v3020 = vunpack.c.l.b16 %v1563
        %v3021 = vunpack.c.l.b16 %v1564
        %v3022 = vunpack.c.l.b16 %v1565
        %v3023 = vunpack.c.l.b16 %v1566
        %v3024 = vunpack.c.l.b16 %v1567
        %v3025 = vunpack.c.l.b16 %v1568
        %v3026 = vunpack.c.l.b16 %v1569
        %v3027 = vunpack.c.l.b16 %v1570
        %v3028 = vunpack.c.l.b16 %v1571
        %v3029 = vpack.c.b16 %v2998, %v2997
        %v3030 = vpack.c.b16 %v3000, %v2999
        %v3031 = vpack.c.b16 %v3002, %v3001
        %v3032 = vpack.c.b16 %v3004, %v3003
        %v3033 = vpack.c.b16 %v3006, %v3005
        %v3034 = vpack.c.b16 %v3008, %v3007
        %v3035 = vpack.c.b16 %v3010, %v3009
        %v3036 = vpack.c.b16 %v3012, %v3011
        %v3037 = vpack.c.b16 %v3014, %v3013
        %v3038 = vpack.c.b16 %v3016, %v3015
        %v3039 = vpack.c.b16 %v3018, %v3017
        %v3040 = vpack.c.b16 %v3020, %v3019
        %v3041 = vpack.c.b16 %v3022, %v3021
        %v3042 = vpack.c.b16 %v3024, %v3023
        %v3043 = vpack.c.b16 %v3026, %v3025
        %v3044 = vpack.c.b16 %v3028, %v3027
        %3045 = vrot.lane.b32.xlu0 %v3029, 9
        %v3046 = vpop.permute.xlu0 %3045
        %3047 = vrot.lane.b32.xlu0 %v3030, 9
        %v3048 = vpop.permute.xlu0 %3047
        %3049 = vrot.lane.b32.xlu0 %v3031, 9
        %v3050 = vpop.permute.xlu0 %3049
        %3051 = vrot.lane.b32.xlu0 %v3032, 9
        %v3052 = vpop.permute.xlu0 %3051
        %3053 = vrot.lane.b32.xlu0 %v3033, 9
        %v3054 = vpop.permute.xlu0 %3053
        %3055 = vrot.lane.b32.xlu0 %v3034, 9
        %v3056 = vpop.permute.xlu0 %3055
        %3057 = vrot.lane.b32.xlu0 %v3035, 9
        %v3058 = vpop.permute.xlu0 %3057
        %3059 = vrot.lane.b32.xlu0 %v3036, 9
        %v3060 = vpop.permute.xlu0 %3059
        %3061 = vrot.lane.b32.xlu0 %v3037, 9
        %v3062 = vpop.permute.xlu0 %3061
        %3063 = vrot.lane.b32.xlu0 %v3038, 9
        %v3064 = vpop.permute.xlu0 %3063
        %3065 = vrot.lane.b32.xlu0 %v3039, 9
        %v3066 = vpop.permute.xlu0 %3065
        %3067 = vrot.lane.b32.xlu0 %v3040, 9
        %v3068 = vpop.permute.xlu0 %3067
        %3069 = vrot.lane.b32.xlu0 %v3041, 9
        %v3070 = vpop.permute.xlu0 %3069
        %3071 = vrot.lane.b32.xlu0 %v3042, 9
        %v3072 = vpop.permute.xlu0 %3071
        %3073 = vrot.lane.b32.xlu0 %v3043, 9
        %v3074 = vpop.permute.xlu0 %3073
        %3075 = vrot.lane.b32.xlu0 %v3044, 9
        %v3076 = vpop.permute.xlu0 %3075
        %v3077 = vunpack.c.l.b16 %v1601
        %v3078 = vunpack.c.l.b16 %v1611
        %v3079 = vunpack.c.l.b16 %v1625
        %v3080 = vunpack.c.l.b16 %v1635
        %v3081 = vunpack.c.l.b16 %v1649
        %v3082 = vunpack.c.l.b16 %v1659
        %v3083 = vunpack.c.l.b16 %v1673
        %v3084 = vunpack.c.l.b16 %v1683
        %v3085 = vunpack.c.l.b16 %v1697
        %v3086 = vunpack.c.l.b16 %v1707
        %v3087 = vunpack.c.l.b16 %v1721
        %v3088 = vunpack.c.l.b16 %v1731
        %v3089 = vunpack.c.l.b16 %v1745
        %v3090 = vunpack.c.l.b16 %v1755
        %v3091 = vunpack.c.l.b16 %v1769
        %v3092 = vunpack.c.l.b16 %v1779
        %v3093 = vunpack.c.l.b16 %v1793
        %v3094 = vunpack.c.l.b16 %v1803
        %v3095 = vunpack.c.l.b16 %v1817
        %v3096 = vunpack.c.l.b16 %v1827
        %v3097 = vunpack.c.l.b16 %v1841
        %v3098 = vunpack.c.l.b16 %v1851
        %v3099 = vunpack.c.l.b16 %v1865
        %v3100 = vunpack.c.l.b16 %v1875
        %v3101 = vunpack.c.l.b16 %v1889
        %v3102 = vunpack.c.l.b16 %v1899
        %v3103 = vunpack.c.l.b16 %v1913
        %v3104 = vunpack.c.l.b16 %v1923
        %v3105 = vunpack.c.l.b16 %v1937
        %v3106 = vunpack.c.l.b16 %v1947
        %v3107 = vunpack.c.l.b16 %v1961
        %v3108 = vunpack.c.l.b16 %v1971
        %v3109 = vpack.c.b16 %v3078, %v3077
        %v3110 = vpack.c.b16 %v3080, %v3079
        %v3111 = vpack.c.b16 %v3082, %v3081
        %v3112 = vpack.c.b16 %v3084, %v3083
        %v3113 = vpack.c.b16 %v3086, %v3085
        %v3114 = vpack.c.b16 %v3088, %v3087
        %v3115 = vpack.c.b16 %v3090, %v3089
        %v3116 = vpack.c.b16 %v3092, %v3091
        %v3117 = vpack.c.b16 %v3094, %v3093
        %v3118 = vpack.c.b16 %v3096, %v3095
        %v3119 = vpack.c.b16 %v3098, %v3097
        %v3120 = vpack.c.b16 %v3100, %v3099
        %v3121 = vpack.c.b16 %v3102, %v3101
        %v3122 = vpack.c.b16 %v3104, %v3103
        %v3123 = vpack.c.b16 %v3106, %v3105
        %v3124 = vpack.c.b16 %v3108, %v3107
        %3125 = vrot.lane.b32.xlu0 %v3109, 12
        %v3126 = vpop.permute.xlu0 %3125
        %3127 = vrot.lane.b32.xlu0 %v3110, 12
        %v3128 = vpop.permute.xlu0 %3127
        %3129 = vrot.lane.b32.xlu0 %v3111, 12
        %v3130 = vpop.permute.xlu0 %3129
        %3131 = vrot.lane.b32.xlu0 %v3112, 12
        %v3132 = vpop.permute.xlu0 %3131
        %3133 = vrot.lane.b32.xlu0 %v3113, 12
        %v3134 = vpop.permute.xlu0 %3133
        %3135 = vrot.lane.b32.xlu0 %v3114, 12
        %v3136 = vpop.permute.xlu0 %3135
        %3137 = vrot.lane.b32.xlu0 %v3115, 12
        %v3138 = vpop.permute.xlu0 %3137
        %3139 = vrot.lane.b32.xlu0 %v3116, 12
        %v3140 = vpop.permute.xlu0 %3139
        %3141 = vrot.lane.b32.xlu0 %v3117, 12
        %v3142 = vpop.permute.xlu0 %3141
        %3143 = vrot.lane.b32.xlu0 %v3118, 12
        %v3144 = vpop.permute.xlu0 %3143
        %3145 = vrot.lane.b32.xlu0 %v3119, 12
        %v3146 = vpop.permute.xlu0 %3145
        %3147 = vrot.lane.b32.xlu0 %v3120, 12
        %v3148 = vpop.permute.xlu0 %3147
        %3149 = vrot.lane.b32.xlu0 %v3121, 12
        %v3150 = vpop.permute.xlu0 %3149
        %3151 = vrot.lane.b32.xlu0 %v3122, 12
        %v3152 = vpop.permute.xlu0 %3151
        %3153 = vrot.lane.b32.xlu0 %v3123, 12
        %v3154 = vpop.permute.xlu0 %3153
        %3155 = vrot.lane.b32.xlu0 %v3124, 12
        %v3156 = vpop.permute.xlu0 %3155
        %v3157 = vunpack.c.l.b16 %v2039
        %v3158 = vunpack.c.l.b16 %v2042
        %v3159 = vunpack.c.l.b16 %v2046
        %v3160 = vunpack.c.l.b16 %v2049
        %v3161 = vunpack.c.l.b16 %v2053
        %v3162 = vunpack.c.l.b16 %v2056
        %v3163 = vunpack.c.l.b16 %v2060
        %v3164 = vunpack.c.l.b16 %v2063
        %v3165 = vunpack.c.l.b16 %v2067
        %v3166 = vunpack.c.l.b16 %v2070
        %v3167 = vunpack.c.l.b16 %v2074
        %v3168 = vunpack.c.l.b16 %v2077
        %v3169 = vunpack.c.l.b16 %v2081
        %v3170 = vunpack.c.l.b16 %v2084
        %v3171 = vunpack.c.l.b16 %v2088
        %v3172 = vunpack.c.l.b16 %v2091
        %v3173 = vunpack.c.l.b16 %v2095
        %v3174 = vunpack.c.l.b16 %v2098
        %v3175 = vunpack.c.l.b16 %v2102
        %v3176 = vunpack.c.l.b16 %v2105
        %v3177 = vunpack.c.l.b16 %v2109
        %v3178 = vunpack.c.l.b16 %v2112
        %v3179 = vunpack.c.l.b16 %v2116
        %v3180 = vunpack.c.l.b16 %v2119
        %v3181 = vunpack.c.l.b16 %v2123
        %v3182 = vunpack.c.l.b16 %v2126
        %v3183 = vunpack.c.l.b16 %v2130
        %v3184 = vunpack.c.l.b16 %v2133
        %v3185 = vunpack.c.l.b16 %v2137
        %v3186 = vunpack.c.l.b16 %v2140
        %v3187 = vunpack.c.l.b16 %v2144
        %v3188 = vunpack.c.l.b16 %v2147
        %v3189 = vpack.c.b16 %v3158, %v3157
        %v3190 = vpack.c.b16 %v3160, %v3159
        %v3191 = vpack.c.b16 %v3162, %v3161
        %v3192 = vpack.c.b16 %v3164, %v3163
        %v3193 = vpack.c.b16 %v3166, %v3165
        %v3194 = vpack.c.b16 %v3168, %v3167
        %v3195 = vpack.c.b16 %v3170, %v3169
        %v3196 = vpack.c.b16 %v3172, %v3171
        %v3197 = vpack.c.b16 %v3174, %v3173
        %v3198 = vpack.c.b16 %v3176, %v3175
        %v3199 = vpack.c.b16 %v3178, %v3177
        %v3200 = vpack.c.b16 %v3180, %v3179
        %v3201 = vpack.c.b16 %v3182, %v3181
        %v3202 = vpack.c.b16 %v3184, %v3183
        %v3203 = vpack.c.b16 %v3186, %v3185
        %v3204 = vpack.c.b16 %v3188, %v3187
        %3205 = vrot.lane.b32.xlu0 %v3189, 15
        %v3206 = vpop.permute.xlu0 %3205
        %3207 = vrot.lane.b32.xlu0 %v3190, 15
        %v3208 = vpop.permute.xlu0 %3207
        %3209 = vrot.lane.b32.xlu0 %v3191, 15
        %v3210 = vpop.permute.xlu0 %3209
        %3211 = vrot.lane.b32.xlu0 %v3192, 15
        %v3212 = vpop.permute.xlu0 %3211
        %3213 = vrot.lane.b32.xlu0 %v3193, 15
        %v3214 = vpop.permute.xlu0 %3213
        %3215 = vrot.lane.b32.xlu0 %v3194, 15
        %v3216 = vpop.permute.xlu0 %3215
        %3217 = vrot.lane.b32.xlu0 %v3195, 15
        %v3218 = vpop.permute.xlu0 %3217
        %3219 = vrot.lane.b32.xlu0 %v3196, 15
        %v3220 = vpop.permute.xlu0 %3219
        %3221 = vrot.lane.b32.xlu0 %v3197, 15
        %v3222 = vpop.permute.xlu0 %3221
        %3223 = vrot.lane.b32.xlu0 %v3198, 15
        %v3224 = vpop.permute.xlu0 %3223
        %3225 = vrot.lane.b32.xlu0 %v3199, 15
        %v3226 = vpop.permute.xlu0 %3225
        %3227 = vrot.lane.b32.xlu0 %v3200, 15
        %v3228 = vpop.permute.xlu0 %3227
        %3229 = vrot.lane.b32.xlu0 %v3201, 15
        %v3230 = vpop.permute.xlu0 %3229
        %3231 = vrot.lane.b32.xlu0 %v3202, 15
        %v3232 = vpop.permute.xlu0 %3231
        %3233 = vrot.lane.b32.xlu0 %v3203, 15
        %v3234 = vpop.permute.xlu0 %3233
        %3235 = vrot.lane.b32.xlu0 %v3204, 15
        %v3236 = vpop.permute.xlu0 %3235
        %v3253 = vunpack.c.l.b16 %v2149
        %v3254 = vunpack.c.l.b16 %v2150
        %v3255 = vunpack.c.l.b16 %v2151
        %v3256 = vunpack.c.l.b16 %v2152
        %v3257 = vunpack.c.l.b16 %v2153
        %v3258 = vunpack.c.l.b16 %v2154
        %v3259 = vunpack.c.l.b16 %v2155
        %v3260 = vunpack.c.l.b16 %v2156
        %v3261 = vunpack.c.l.b16 %v2157
        %v3262 = vunpack.c.l.b16 %v2158
        %v3263 = vunpack.c.l.b16 %v2159
        %v3264 = vunpack.c.l.b16 %v2160
        %v3265 = vunpack.c.l.b16 %v2161
        %v3266 = vunpack.c.l.b16 %v2162
        %v3267 = vunpack.c.l.b16 %v2163
        %v3268 = vunpack.c.l.b16 %v2164
        %v3269 = vunpack.c.l.b16 %v2165
        %v3270 = vunpack.c.l.b16 %v2166
        %v3271 = vunpack.c.l.b16 %v2167
        %v3272 = vunpack.c.l.b16 %v2168
        %v3273 = vunpack.c.l.b16 %v2169
        %v3274 = vunpack.c.l.b16 %v2170
        %v3275 = vunpack.c.l.b16 %v2171
        %v3276 = vunpack.c.l.b16 %v2172
        %v3277 = vunpack.c.l.b16 %v2173
        %v3278 = vunpack.c.l.b16 %v2174
        %v3279 = vunpack.c.l.b16 %v2175
        %v3280 = vunpack.c.l.b16 %v2176
        %v3281 = vunpack.c.l.b16 %v2177
        %v3282 = vunpack.c.l.b16 %v2178
        %v3283 = vunpack.c.l.b16 %v2179
        %v3284 = vunpack.c.l.b16 %v2180
        %v3285 = vpack.c.b16 %v3254, %v3253
        %v3286 = vpack.c.b16 %v3256, %v3255
        %v3287 = vpack.c.b16 %v3258, %v3257
        %v3288 = vpack.c.b16 %v3260, %v3259
        %v3289 = vpack.c.b16 %v3262, %v3261
        %v3290 = vpack.c.b16 %v3264, %v3263
        %v3291 = vpack.c.b16 %v3266, %v3265
        %v3292 = vpack.c.b16 %v3268, %v3267
        %v3293 = vpack.c.b16 %v3270, %v3269
        %v3294 = vpack.c.b16 %v3272, %v3271
        %v3295 = vpack.c.b16 %v3274, %v3273
        %v3296 = vpack.c.b16 %v3276, %v3275
        %v3297 = vpack.c.b16 %v3278, %v3277
        %v3298 = vpack.c.b16 %v3280, %v3279
        %v3299 = vpack.c.b16 %v3282, %v3281
        %v3300 = vpack.c.b16 %v3284, %v3283
        %3301 = vrot.lane.b32.xlu0 %v3285, 18
        %v3302 = vpop.permute.xlu0 %3301
        %3303 = vrot.lane.b32.xlu0 %v3286, 18
        %v3304 = vpop.permute.xlu0 %3303
        %3305 = vrot.lane.b32.xlu0 %v3287, 18
        %v3306 = vpop.permute.xlu0 %3305
        %3307 = vrot.lane.b32.xlu0 %v3288, 18
        %v3308 = vpop.permute.xlu0 %3307
        %3309 = vrot.lane.b32.xlu0 %v3289, 18
        %v3310 = vpop.permute.xlu0 %3309
        %3311 = vrot.lane.b32.xlu0 %v3290, 18
        %v3312 = vpop.permute.xlu0 %3311
        %3313 = vrot.lane.b32.xlu0 %v3291, 18
        %v3314 = vpop.permute.xlu0 %3313
        %3315 = vrot.lane.b32.xlu0 %v3292, 18
        %v3316 = vpop.permute.xlu0 %3315
        %3317 = vrot.lane.b32.xlu0 %v3293, 18
        %v3318 = vpop.permute.xlu0 %3317
        %3319 = vrot.lane.b32.xlu0 %v3294, 18
        %v3320 = vpop.permute.xlu0 %3319
        %3321 = vrot.lane.b32.xlu0 %v3295, 18
        %v3322 = vpop.permute.xlu0 %3321
        %3323 = vrot.lane.b32.xlu0 %v3296, 18
        %v3324 = vpop.permute.xlu0 %3323
        %3325 = vrot.lane.b32.xlu0 %v3297, 18
        %v3326 = vpop.permute.xlu0 %3325
        %3327 = vrot.lane.b32.xlu0 %v3298, 18
        %v3328 = vpop.permute.xlu0 %3327
        %3329 = vrot.lane.b32.xlu0 %v3299, 18
        %v3330 = vpop.permute.xlu0 %3329
        %3331 = vrot.lane.b32.xlu0 %v3300, 18
        %v3332 = vpop.permute.xlu0 %3331
        %v3333 = vunpack.c.l.b16 %v2210
        %v3334 = vunpack.c.l.b16 %v2220
        %v3335 = vunpack.c.l.b16 %v2234
        %v3336 = vunpack.c.l.b16 %v2244
        %v3337 = vunpack.c.l.b16 %v2258
        %v3338 = vunpack.c.l.b16 %v2268
        %v3339 = vunpack.c.l.b16 %v2282
        %v3340 = vunpack.c.l.b16 %v2292
        %v3341 = vunpack.c.l.b16 %v2306
        %v3342 = vunpack.c.l.b16 %v2316
        %v3343 = vunpack.c.l.b16 %v2330
        %v3344 = vunpack.c.l.b16 %v2340
        %v3345 = vunpack.c.l.b16 %v2354
        %v3346 = vunpack.c.l.b16 %v2364
        %v3347 = vunpack.c.l.b16 %v2378
        %v3348 = vunpack.c.l.b16 %v2388
        %v3349 = vunpack.c.l.b16 %v2402
        %v3350 = vunpack.c.l.b16 %v2412
        %v3351 = vunpack.c.l.b16 %v2426
        %v3352 = vunpack.c.l.b16 %v2436
        %v3353 = vunpack.c.l.b16 %v2450
        %v3354 = vunpack.c.l.b16 %v2460
        %v3355 = vunpack.c.l.b16 %v2474
        %v3356 = vunpack.c.l.b16 %v2484
        %v3357 = vunpack.c.l.b16 %v2498
        %v3358 = vunpack.c.l.b16 %v2508
        %v3359 = vunpack.c.l.b16 %v2522
        %v3360 = vunpack.c.l.b16 %v2532
        %v3361 = vunpack.c.l.b16 %v2546
        %v3362 = vunpack.c.l.b16 %v2556
        %v3363 = vunpack.c.l.b16 %v2570
        %v3364 = vunpack.c.l.b16 %v2580
        %v3365 = vpack.c.b16 %v3334, %v3333
        %v3366 = vpack.c.b16 %v3336, %v3335
        %v3367 = vpack.c.b16 %v3338, %v3337
        %v3368 = vpack.c.b16 %v3340, %v3339
        %v3369 = vpack.c.b16 %v3342, %v3341
        %v3370 = vpack.c.b16 %v3344, %v3343
        %v3371 = vpack.c.b16 %v3346, %v3345
        %v3372 = vpack.c.b16 %v3348, %v3347
        %v3373 = vpack.c.b16 %v3350, %v3349
        %v3374 = vpack.c.b16 %v3352, %v3351
        %v3375 = vpack.c.b16 %v3354, %v3353
        %v3376 = vpack.c.b16 %v3356, %v3355
        %v3377 = vpack.c.b16 %v3358, %v3357
        %v3378 = vpack.c.b16 %v3360, %v3359
        %v3379 = vpack.c.b16 %v3362, %v3361
        %v3380 = vpack.c.b16 %v3364, %v3363
        %3381 = vrot.lane.b32.xlu0 %v3365, 21
        %v3382 = vpop.permute.xlu0 %3381
        %3383 = vrot.lane.b32.xlu0 %v3366, 21
        %v3384 = vpop.permute.xlu0 %3383
        %3385 = vrot.lane.b32.xlu0 %v3367, 21
        %v3386 = vpop.permute.xlu0 %3385
        %3387 = vrot.lane.b32.xlu0 %v3368, 21
        %v3388 = vpop.permute.xlu0 %3387
        %3389 = vrot.lane.b32.xlu0 %v3369, 21
        %v3390 = vpop.permute.xlu0 %3389
        %3391 = vrot.lane.b32.xlu0 %v3370, 21
        %v3392 = vpop.permute.xlu0 %3391
        %3393 = vrot.lane.b32.xlu0 %v3371, 21
        %v3394 = vpop.permute.xlu0 %3393
        %3395 = vrot.lane.b32.xlu0 %v3372, 21
        %v3396 = vpop.permute.xlu0 %3395
        %3397 = vrot.lane.b32.xlu0 %v3373, 21
        %v3398 = vpop.permute.xlu0 %3397
        %3399 = vrot.lane.b32.xlu0 %v3374, 21
        %v3400 = vpop.permute.xlu0 %3399
        %3401 = vrot.lane.b32.xlu0 %v3375, 21
        %v3402 = vpop.permute.xlu0 %3401
        %3403 = vrot.lane.b32.xlu0 %v3376, 21
        %v3404 = vpop.permute.xlu0 %3403
        %3405 = vrot.lane.b32.xlu0 %v3377, 21
        %v3406 = vpop.permute.xlu0 %3405
        %3407 = vrot.lane.b32.xlu0 %v3378, 21
        %v3408 = vpop.permute.xlu0 %3407
        %3409 = vrot.lane.b32.xlu0 %v3379, 21
        %v3410 = vpop.permute.xlu0 %3409
        %3411 = vrot.lane.b32.xlu0 %v3380, 21
        %v3412 = vpop.permute.xlu0 %3411
        %v3413 = vunpack.c.l.b16 %v2648
        %v3414 = vunpack.c.l.b16 %v2651
        %v3415 = vunpack.c.l.b16 %v2655
        %v3416 = vunpack.c.l.b16 %v2658
        %v3417 = vunpack.c.l.b16 %v2662
        %v3418 = vunpack.c.l.b16 %v2665
        %v3419 = vunpack.c.l.b16 %v2669
        %v3420 = vunpack.c.l.b16 %v2672
        %v3421 = vunpack.c.l.b16 %v2676
        %v3422 = vunpack.c.l.b16 %v2679
        %v3423 = vunpack.c.l.b16 %v2683
        %v3424 = vunpack.c.l.b16 %v2686
        %v3425 = vunpack.c.l.b16 %v2690
        %v3426 = vunpack.c.l.b16 %v2693
        %v3427 = vunpack.c.l.b16 %v2697
        %v3428 = vunpack.c.l.b16 %v2700
        %v3429 = vunpack.c.l.b16 %v2704
        %v3430 = vunpack.c.l.b16 %v2707
        %v3431 = vunpack.c.l.b16 %v2711
        %v3432 = vunpack.c.l.b16 %v2714
        %v3433 = vunpack.c.l.b16 %v2718
        %v3434 = vunpack.c.l.b16 %v2721
        %v3435 = vunpack.c.l.b16 %v2725
        %v3436 = vunpack.c.l.b16 %v2728
        %v3437 = vunpack.c.l.b16 %v2732
        %v3438 = vunpack.c.l.b16 %v2735
        %v3439 = vunpack.c.l.b16 %v2739
        %v3440 = vunpack.c.l.b16 %v2742
        %v3441 = vunpack.c.l.b16 %v2746
        %v3442 = vunpack.c.l.b16 %v2749
        %v3443 = vunpack.c.l.b16 %v2753
        %v3444 = vunpack.c.l.b16 %v2756
        %v3445 = vpack.c.b16 %v3414, %v3413
        %v3446 = vpack.c.b16 %v3416, %v3415
        %v3447 = vpack.c.b16 %v3418, %v3417
        %v3448 = vpack.c.b16 %v3420, %v3419
        %v3449 = vpack.c.b16 %v3422, %v3421
        %v3450 = vpack.c.b16 %v3424, %v3423
        %v3451 = vpack.c.b16 %v3426, %v3425
        %v3452 = vpack.c.b16 %v3428, %v3427
        %v3453 = vpack.c.b16 %v3430, %v3429
        %v3454 = vpack.c.b16 %v3432, %v3431
        %v3455 = vpack.c.b16 %v3434, %v3433
        %v3456 = vpack.c.b16 %v3436, %v3435
        %v3457 = vpack.c.b16 %v3438, %v3437
        %v3458 = vpack.c.b16 %v3440, %v3439
        %v3459 = vpack.c.b16 %v3442, %v3441
        %v3460 = vpack.c.b16 %v3444, %v3443
        %3461 = vrot.lane.b32.xlu0 %v3445, 24
        %v3462 = vpop.permute.xlu0 %3461
        %3463 = vrot.lane.b32.xlu0 %v3446, 24
        %v3464 = vpop.permute.xlu0 %3463
        %3465 = vrot.lane.b32.xlu0 %v3447, 24
        %v3466 = vpop.permute.xlu0 %3465
        %3467 = vrot.lane.b32.xlu0 %v3448, 24
        %v3468 = vpop.permute.xlu0 %3467
        %3469 = vrot.lane.b32.xlu0 %v3449, 24
        %v3470 = vpop.permute.xlu0 %3469
        %3471 = vrot.lane.b32.xlu0 %v3450, 24
        %v3472 = vpop.permute.xlu0 %3471
        %3473 = vrot.lane.b32.xlu0 %v3451, 24
        %v3474 = vpop.permute.xlu0 %3473
        %3475 = vrot.lane.b32.xlu0 %v3452, 24
        %v3476 = vpop.permute.xlu0 %3475
        %3477 = vrot.lane.b32.xlu0 %v3453, 24
        %v3478 = vpop.permute.xlu0 %3477
        %3479 = vrot.lane.b32.xlu0 %v3454, 24
        %v3480 = vpop.permute.xlu0 %3479
        %3481 = vrot.lane.b32.xlu0 %v3455, 24
        %v3482 = vpop.permute.xlu0 %3481
        %3483 = vrot.lane.b32.xlu0 %v3456, 24
        %v3484 = vpop.permute.xlu0 %3483
        %3485 = vrot.lane.b32.xlu0 %v3457, 24
        %v3486 = vpop.permute.xlu0 %3485
        %3487 = vrot.lane.b32.xlu0 %v3458, 24
        %v3488 = vpop.permute.xlu0 %3487
        %3489 = vrot.lane.b32.xlu0 %v3459, 24
        %v3490 = vpop.permute.xlu0 %3489
        %3491 = vrot.lane.b32.xlu0 %v3460, 24
        %v3492 = vpop.permute.xlu0 %3491
        %vm3493 = vcmask 23552
        %v3496 = vsel %vm3493, %v2805, %v2870
        %v3499 = vsel %vm3493, %v2806, %v2872
        %v3502 = vsel %vm3493, %v2807, %v2874
        %v3505 = vsel %vm3493, %v2808, %v2876
        %v3508 = vsel %vm3493, %v2809, %v2878
        %v3511 = vsel %vm3493, %v2810, %v2880
        %v3514 = vsel %vm3493, %v2811, %v2882
        %v3517 = vsel %vm3493, %v2812, %v2884
        %v3520 = vsel %vm3493, %v2813, %v2886
        %v3523 = vsel %vm3493, %v2814, %v2888
        %v3526 = vsel %vm3493, %v2815, %v2890
        %v3529 = vsel %vm3493, %v2816, %v2892
        %v3532 = vsel %vm3493, %v2817, %v2894
        %v3535 = vsel %vm3493, %v2818, %v2896
        %v3538 = vsel %vm3493, %v2819, %v2898
        %v3541 = vsel %vm3493, %v2820, %v2900
        %vm3542 = vcmask 48128
        %v3544 = vsel %vm3542, %v3496, %v2950
        %v3546 = vsel %vm3542, %v3499, %v2952
        %v3548 = vsel %vm3542, %v3502, %v2954
        %v3550 = vsel %vm3542, %v3505, %v2956
        %v3552 = vsel %vm3542, %v3508, %v2958
        %v3554 = vsel %vm3542, %v3511, %v2960
        %v3556 = vsel %vm3542, %v3514, %v2962
        %v3558 = vsel %vm3542, %v3517, %v2964
        %v3560 = vsel %vm3542, %v3520, %v2966
        %v3562 = vsel %vm3542, %v3523, %v2968
        %v3564 = vsel %vm3542, %v3526, %v2970
        %v3566 = vsel %vm3542, %v3529, %v2972
        %v3568 = vsel %vm3542, %v3532, %v2974
        %v3570 = vsel %vm3542, %v3535, %v2976
        %v3572 = vsel %vm3542, %v3538, %v2978
        %v3574 = vsel %vm3542, %v3541, %v2980
        %vm3575 = vcmask 72704
        %v3577 = vsel %vm3575, %v3544, %v3046
        %v3579 = vsel %vm3575, %v3546, %v3048
        %v3581 = vsel %vm3575, %v3548, %v3050
        %v3583 = vsel %vm3575, %v3550, %v3052
        %v3585 = vsel %vm3575, %v3552, %v3054
        %v3587 = vsel %vm3575, %v3554, %v3056
        %v3589 = vsel %vm3575, %v3556, %v3058
        %v3591 = vsel %vm3575, %v3558, %v3060
        %v3593 = vsel %vm3575, %v3560, %v3062
        %v3595 = vsel %vm3575, %v3562, %v3064
        %v3597 = vsel %vm3575, %v3564, %v3066
        %v3599 = vsel %vm3575, %v3566, %v3068
        %v3601 = vsel %vm3575, %v3568, %v3070
        %v3603 = vsel %vm3575, %v3570, %v3072
        %v3605 = vsel %vm3575, %v3572, %v3074
        %v3607 = vsel %vm3575, %v3574, %v3076
        %vm3608 = vcmask 97280
        %v3610 = vsel %vm3608, %v3577, %v3126
        %v3612 = vsel %vm3608, %v3579, %v3128
        %v3614 = vsel %vm3608, %v3581, %v3130
        %v3616 = vsel %vm3608, %v3583, %v3132
        %v3618 = vsel %vm3608, %v3585, %v3134
        %v3620 = vsel %vm3608, %v3587, %v3136
        %v3622 = vsel %vm3608, %v3589, %v3138
        %v3624 = vsel %vm3608, %v3591, %v3140
        %v3626 = vsel %vm3608, %v3593, %v3142
        %v3628 = vsel %vm3608, %v3595, %v3144
        %v3630 = vsel %vm3608, %v3597, %v3146
        %v3632 = vsel %vm3608, %v3599, %v3148
        %v3634 = vsel %vm3608, %v3601, %v3150
        %v3636 = vsel %vm3608, %v3603, %v3152
        %v3638 = vsel %vm3608, %v3605, %v3154
        %v3640 = vsel %vm3608, %v3607, %v3156
        %vm3641 = vcmask 121856
        %v3643 = vsel %vm3641, %v3610, %v3206
        %v3645 = vsel %vm3641, %v3612, %v3208
        %v3647 = vsel %vm3641, %v3614, %v3210
        %v3649 = vsel %vm3641, %v3616, %v3212
        %v3651 = vsel %vm3641, %v3618, %v3214
        %v3653 = vsel %vm3641, %v3620, %v3216
        %v3655 = vsel %vm3641, %v3622, %v3218
        %v3657 = vsel %vm3641, %v3624, %v3220
        %v3659 = vsel %vm3641, %v3626, %v3222
        %v3661 = vsel %vm3641, %v3628, %v3224
        %v3663 = vsel %vm3641, %v3630, %v3226
        %v3665 = vsel %vm3641, %v3632, %v3228
        %v3667 = vsel %vm3641, %v3634, %v3230
        %v3669 = vsel %vm3641, %v3636, %v3232
        %v3671 = vsel %vm3641, %v3638, %v3234
        %v3673 = vsel %vm3641, %v3640, %v3236
        %vm3674 = vcmask 146432
        %v3676 = vsel %vm3674, %v3643, %v3302
        %v3678 = vsel %vm3674, %v3645, %v3304
        %v3680 = vsel %vm3674, %v3647, %v3306
        %v3682 = vsel %vm3674, %v3649, %v3308
        %v3684 = vsel %vm3674, %v3651, %v3310
        %v3686 = vsel %vm3674, %v3653, %v3312
        %v3688 = vsel %vm3674, %v3655, %v3314
        %v3690 = vsel %vm3674, %v3657, %v3316
        %v3692 = vsel %vm3674, %v3659, %v3318
        %v3694 = vsel %vm3674, %v3661, %v3320
        %v3696 = vsel %vm3674, %v3663, %v3322
        %v3698 = vsel %vm3674, %v3665, %v3324
        %v3700 = vsel %vm3674, %v3667, %v3326
        %v3702 = vsel %vm3674, %v3669, %v3328
        %v3704 = vsel %vm3674, %v3671, %v3330
        %v3706 = vsel %vm3674, %v3673, %v3332
        %vm3707 = vcmask 171008
        %v3709 = vsel %vm3707, %v3676, %v3382
        %v3711 = vsel %vm3707, %v3678, %v3384
        %v3713 = vsel %vm3707, %v3680, %v3386
        %v3715 = vsel %vm3707, %v3682, %v3388
        %v3717 = vsel %vm3707, %v3684, %v3390
        %v3719 = vsel %vm3707, %v3686, %v3392
        %v3721 = vsel %vm3707, %v3688, %v3394
        %v3723 = vsel %vm3707, %v3690, %v3396
        %v3725 = vsel %vm3707, %v3692, %v3398
        %v3727 = vsel %vm3707, %v3694, %v3400
        %v3729 = vsel %vm3707, %v3696, %v3402
        %v3731 = vsel %vm3707, %v3698, %v3404
        %v3733 = vsel %vm3707, %v3700, %v3406
        %v3735 = vsel %vm3707, %v3702, %v3408
        %v3737 = vsel %vm3707, %v3704, %v3410
        %v3739 = vsel %vm3707, %v3706, %v3412
        %vm3740 = vcmask 195584
        %v3742 = vsel %vm3740, %v3709, %v3462
        %v3744 = vsel %vm3740, %v3711, %v3464
        %v3746 = vsel %vm3740, %v3713, %v3466
        %v3748 = vsel %vm3740, %v3715, %v3468
        %v3750 = vsel %vm3740, %v3717, %v3470
        %v3752 = vsel %vm3740, %v3719, %v3472
        %v3754 = vsel %vm3740, %v3721, %v3474
        %v3756 = vsel %vm3740, %v3723, %v3476
        %v3758 = vsel %vm3740, %v3725, %v3478
        %v3760 = vsel %vm3740, %v3727, %v3480
        %v3762 = vsel %vm3740, %v3729, %v3482
        %v3764 = vsel %vm3740, %v3731, %v3484
        %v3766 = vsel %vm3740, %v3733, %v3486
        %v3768 = vsel %vm3740, %v3735, %v3488
        %v3770 = vsel %vm3740, %v3737, %v3490
        %v3772 = vsel %vm3740, %v3739, %v3492
        %v3773 = vld [vmem:[%s1] sm:$0xf]
        %v3774 = vld [vmem:[%s1 + $0x4] sm:$0xf]
        %v3775 = vld [vmem:[%s1 + $0x8] sm:$0xf]
        %v3776 = vld [vmem:[%s1 + $0xc] sm:$0x3]
        %v3777 = vld [vmem:[%s2] sm:$0x1]
        %v3779 = vlaneseq
        %v3780 = vshrl.u32 %v3779, 7
        %v3781 = vsub.s32 0, %v3780
        %v3782 = vrot.slane %v3777, %v3781
        %v3788 = vunpack.c.l.b16 %v3773
        %v3789 = vunpack.c.l.b16 %v3774
        %v3790 = vunpack.c.l.b16 %v3775
        %v3791 = vunpack.c.l.b16 %v3776
        %v3792 = vpack.c.b16 %v3789, %v3788
        %v3793 = vpack.c.b16 %v3791, %v3790
        %vm3795 = vcmask 220160
        %v3796 = vsel %vm3795, %v3742, 0
        %v3798 = vsel %vm3795, %v3744, 0
        %v3800 = vsel %vm3795, %v3746, 0
        %v3802 = vsel %vm3795, %v3748, 0
        %v3804 = vsel %vm3795, %v3750, 0
        %v3806 = vsel %vm3795, %v3752, 0
        %v3808 = vsel %vm3795, %v3754, 0
        %v3810 = vsel %vm3795, %v3756, 0
        %v3812 = vsel %vm3795, %v3758, 0
        %v3814 = vsel %vm3795, %v3760, 0
        %v3816 = vsel %vm3795, %v3762, 0
        %v3818 = vsel %vm3795, %v3764, 0
        %v3820 = vsel %vm3795, %v3766, 0
        %v3822 = vsel %vm3795, %v3768, 0
        %v3824 = vsel %vm3795, %v3770, 0
        %v3826 = vsel %vm3795, %v3772, 0
        %vm3828 = vcmask 1044480
        %vm3829 = vcmask 1045504
        %v3830 = vsel %vm3828, 4294967295, 65535
        %v3831 = vsel %vm3829, %v3830, 0
        %v3833 = vand.u32 %v3793, %v3831
        %3835 = vmatprep.subr.bf16.mxu0 0
        %3836 = vmatpush1.bf16.msra.mxu0 %v3792
        %3837 = vmatprep.subr.bf16.mxu0 0
        %3838 = vmatpush1.bf16.msra.mxu0 %v3833
        %3839 = vmatprep.subr.bf16.mxu0 0
        %3840 = vmatpush1.bf16.msra.mxu0 0
        %3841 = vmatprep.subr.bf16.mxu0 0
        %3842 = vmatpush1.bf16.msra.mxu0 0
        %3843 = vmatprep.subr.bf16.mxu0 0
        %3844 = vmatpush1.bf16.msra.mxu0 0
        %3845 = vmatprep.subr.bf16.mxu0 0
        %3846 = vmatpush1.bf16.msra.mxu0 0
        %3847 = vmatprep.subr.bf16.mxu0 0
        %3848 = vmatpush1.bf16.msra.mxu0 0
        %3849 = vmatprep.subr.bf16.mxu0 0
        %3850 = vmatpush1.bf16.msra.mxu0 0
        %3851 = vmatprep.subr.bf16.mxu0 0
        %3852 = vmatpush1.bf16.msra.mxu0 0
        %3853 = vmatprep.subr.bf16.mxu0 0
        %3854 = vmatpush1.bf16.msra.mxu0 0
        %3855 = vmatprep.subr.bf16.mxu0 0
        %3856 = vmatpush1.bf16.msra.mxu0 0
        %3857 = vmatprep.subr.bf16.mxu0 0
        %3858 = vmatpush1.bf16.msra.mxu0 0
        %3859 = vmatprep.subr.bf16.mxu0 0
        %3860 = vmatpush1.bf16.msra.mxu0 0
        %3861 = vmatprep.subr.bf16.mxu0 0
        %3862 = vmatpush1.bf16.msra.mxu0 0
        %3863 = vmatprep.subr.bf16.mxu0 0
        %3864 = vmatpush1.bf16.msra.mxu0 0
        %3865 = vmatprep.subr.bf16.mxu0 0
        %3866 = vmatpush1.bf16.msra.mxu0 0
        %3867 = vmatprep.mubr.bf16.mxu0 0
        %3868 = vmatmul.mubr.bf16.gmra.mrb[0].mxu0 %v3796
        %v3869 = vpop.f32.mrb[0].mxu0
        %v3870 = vadd.f32 %v3782, %v3869
        %v3871 = vpop.f32.mrb[0].mxu0
        %v3872 = vpop.f32.mrb[0].mxu0
        %v3873 = vadd.f32 %v3782, %v3872
        %v3874 = vpop.f32.mrb[0].mxu0
        %3875 = vmatprep.mubr.bf16.mxu0 0
        %3876 = vmatmul.mubr.bf16.gmra.mrb[0].mxu0 %v3798
        %v3877 = vpop.f32.mrb[0].mxu0
        %v3878 = vadd.f32 %v3782, %v3877
        %v3879 = vpop.f32.mrb[0].mxu0
        %v3880 = vpop.f32.mrb[0].mxu0
        %v3881 = vadd.f32 %v3782, %v3880
        %v3882 = vpop.f32.mrb[0].mxu0
        %3883 = vmatprep.mubr.bf16.mxu0 0
        %3884 = vmatmul.mubr.bf16.gmra.mrb[0].mxu0 %v3800
        %v3885 = vpop.f32.mrb[0].mxu0
        %v3886 = vadd.f32 %v3782, %v3885
        %v3887 = vpop.f32.mrb[0].mxu0
        %v3888 = vpop.f32.mrb[0].mxu0
        %v3889 = vadd.f32 %v3782, %v3888
        %v3890 = vpop.f32.mrb[0].mxu0
        %3891 = vmatprep.mubr.bf16.mxu0 0
        %3892 = vmatmul.mubr.bf16.gmra.mrb[0].mxu0 %v3802
        %v3893 = vpop.f32.mrb[0].mxu0
        %v3894 = vadd.f32 %v3782, %v3893
        %v3895 = vpop.f32.mrb[0].mxu0
        %v3896 = vpop.f32.mrb[0].mxu0
        %v3897 = vadd.f32 %v3782, %v3896
        %v3898 = vpop.f32.mrb[0].mxu0
        %3899 = vmatprep.mubr.bf16.mxu0 0
        %3900 = vmatmul.mubr.bf16.gmra.mrb[0].mxu0 %v3804
        %v3901 = vpop.f32.mrb[0].mxu0
        %v3902 = vadd.f32 %v3782, %v3901
        %v3903 = vpop.f32.mrb[0].mxu0
        %v3904 = vpop.f32.mrb[0].mxu0
        %v3905 = vadd.f32 %v3782, %v3904
        %v3906 = vpop.f32.mrb[0].mxu0
        %3907 = vmatprep.mubr.bf16.mxu0 0
        %3908 = vmatmul.mubr.bf16.gmra.mrb[0].mxu0 %v3806
        %v3909 = vpop.f32.mrb[0].mxu0
        %v3910 = vadd.f32 %v3782, %v3909
        %v3911 = vpop.f32.mrb[0].mxu0
        %v3912 = vpop.f32.mrb[0].mxu0
        %v3913 = vadd.f32 %v3782, %v3912
        %v3914 = vpop.f32.mrb[0].mxu0
        %3915 = vmatprep.mubr.bf16.mxu0 0
        %3916 = vmatmul.mubr.bf16.gmra.mrb[0].mxu0 %v3808
        %v3917 = vpop.f32.mrb[0].mxu0
        %v3918 = vadd.f32 %v3782, %v3917
        %v3919 = vpop.f32.mrb[0].mxu0
        %v3920 = vpop.f32.mrb[0].mxu0
        %v3921 = vadd.f32 %v3782, %v3920
        %v3922 = vpop.f32.mrb[0].mxu0
        %3923 = vmatprep.mubr.bf16.mxu0 0
        %3924 = vmatmul.mubr.bf16.gmra.mrb[0].mxu0 %v3810
        %v3925 = vpop.f32.mrb[0].mxu0
        %v3926 = vadd.f32 %v3782, %v3925
        %v3927 = vpop.f32.mrb[0].mxu0
        %v3928 = vpop.f32.mrb[0].mxu0
        %v3929 = vadd.f32 %v3782, %v3928
        %v3930 = vpop.f32.mrb[0].mxu0
        %3931 = vmatprep.mubr.bf16.mxu0 0
        %3932 = vmatmul.mubr.bf16.gmra.mrb[0].mxu0 %v3812
        %v3933 = vpop.f32.mrb[0].mxu0
        %v3934 = vadd.f32 %v3782, %v3933
        %v3935 = vpop.f32.mrb[0].mxu0
        %v3936 = vpop.f32.mrb[0].mxu0
        %v3937 = vadd.f32 %v3782, %v3936
        %v3938 = vpop.f32.mrb[0].mxu0
        %3939 = vmatprep.mubr.bf16.mxu0 0
        %3940 = vmatmul.mubr.bf16.gmra.mrb[0].mxu0 %v3814
        %v3941 = vpop.f32.mrb[0].mxu0
        %v3942 = vadd.f32 %v3782, %v3941
        %v3943 = vpop.f32.mrb[0].mxu0
        %v3944 = vpop.f32.mrb[0].mxu0
        %v3945 = vadd.f32 %v3782, %v3944
        %v3946 = vpop.f32.mrb[0].mxu0
        %3947 = vmatprep.mubr.bf16.mxu0 0
        %3948 = vmatmul.mubr.bf16.gmra.mrb[0].mxu0 %v3816
        %v3949 = vpop.f32.mrb[0].mxu0
        %v3950 = vadd.f32 %v3782, %v3949
        %v3951 = vpop.f32.mrb[0].mxu0
        %v3952 = vpop.f32.mrb[0].mxu0
        %v3953 = vadd.f32 %v3782, %v3952
        %v3954 = vpop.f32.mrb[0].mxu0
        %3955 = vmatprep.mubr.bf16.mxu0 0
        %3956 = vmatmul.mubr.bf16.gmra.mrb[0].mxu0 %v3818
        %v3957 = vpop.f32.mrb[0].mxu0
        %v3958 = vadd.f32 %v3782, %v3957
        %v3959 = vpop.f32.mrb[0].mxu0
        %v3960 = vpop.f32.mrb[0].mxu0
        %v3961 = vadd.f32 %v3782, %v3960
        %v3962 = vpop.f32.mrb[0].mxu0
        %3963 = vmatprep.mubr.bf16.mxu0 0
        %3964 = vmatmul.mubr.bf16.gmra.mrb[0].mxu0 %v3820
        %v3965 = vpop.f32.mrb[0].mxu0
        %v3966 = vadd.f32 %v3782, %v3965
        %v3967 = vpop.f32.mrb[0].mxu0
        %v3968 = vpop.f32.mrb[0].mxu0
        %v3969 = vadd.f32 %v3782, %v3968
        %v3970 = vpop.f32.mrb[0].mxu0
        %3971 = vmatprep.mubr.bf16.mxu0 0
        %3972 = vmatmul.mubr.bf16.gmra.mrb[0].mxu0 %v3822
        %v3973 = vpop.f32.mrb[0].mxu0
        %v3974 = vadd.f32 %v3782, %v3973
        %v3975 = vpop.f32.mrb[0].mxu0
        %v3976 = vpop.f32.mrb[0].mxu0
        %v3977 = vadd.f32 %v3782, %v3976
        %v3978 = vpop.f32.mrb[0].mxu0
        %3979 = vmatprep.mubr.bf16.mxu0 0
        %3980 = vmatmul.mubr.bf16.gmra.mrb[0].mxu0 %v3824
        %v3981 = vpop.f32.mrb[0].mxu0
        %v3982 = vadd.f32 %v3782, %v3981
        %v3983 = vpop.f32.mrb[0].mxu0
        %v3984 = vpop.f32.mrb[0].mxu0
        %v3985 = vadd.f32 %v3782, %v3984
        %v3986 = vpop.f32.mrb[0].mxu0
        %3987 = vmatprep.mubr.bf16.mxu0 0
        %3988 = vmatmul.mubr.bf16.gmra.mrb[0].mxu0 %v3826
        %v3989 = vpop.f32.mrb[0].mxu0
        %v3990 = vadd.f32 %v3782, %v3989
        %v3991 = vpop.f32.mrb[0].mxu0
        %v3992 = vpop.f32.mrb[0].mxu0
        %v3993 = vadd.f32 %v3782, %v3992
        %v3994 = vpop.f32.mrb[0].mxu0
        %3995 = vdwg.mxu0
        %v3996 = vmax.f32 %v3870, 0.0
        %v3997 = vmax.f32 %v3873, 0.0
        %v3998 = vmax.f32 %v3878, 0.0
        %v3999 = vmax.f32 %v3881, 0.0
        %v4000 = vmax.f32 %v3886, 0.0
        %v4001 = vmax.f32 %v3889, 0.0
        %v4002 = vmax.f32 %v3894, 0.0
        %v4003 = vmax.f32 %v3897, 0.0
        %v4004 = vmax.f32 %v3902, 0.0
        %v4005 = vmax.f32 %v3905, 0.0
        %v4006 = vmax.f32 %v3910, 0.0
        %v4007 = vmax.f32 %v3913, 0.0
        %v4008 = vmax.f32 %v3918, 0.0
        %v4009 = vmax.f32 %v3921, 0.0
        %v4010 = vmax.f32 %v3926, 0.0
        %v4011 = vmax.f32 %v3929, 0.0
        %v4012 = vmax.f32 %v3934, 0.0
        %v4013 = vmax.f32 %v3937, 0.0
        %v4014 = vmax.f32 %v3942, 0.0
        %v4015 = vmax.f32 %v3945, 0.0
        %v4016 = vmax.f32 %v3950, 0.0
        %v4017 = vmax.f32 %v3953, 0.0
        %v4018 = vmax.f32 %v3958, 0.0
        %v4019 = vmax.f32 %v3961, 0.0
        %v4020 = vmax.f32 %v3966, 0.0
        %v4021 = vmax.f32 %v3969, 0.0
        %v4022 = vmax.f32 %v3974, 0.0
        %v4023 = vmax.f32 %v3977, 0.0
        %v4024 = vmax.f32 %v3982, 0.0
        %v4025 = vmax.f32 %v3985, 0.0
        %v4026 = vmax.f32 %v3990, 0.0
        %v4027 = vmax.f32 %v3993, 0.0
        %v4060 = vcombine.high %v3996, %v3996
        %v4062 = vunpack.c.l.s4 1983009808
        %v4063 = vunpack.c.0.s8 %v4062
        %v4064 = vlaneseq
        %v4065 = vshrl.u32 %v4064, 7
        %v4066 = vsub.s32 %v4063, %v4065
        %v4067 = vrot.slane %v3996, %v4066
        %v4069 = vunpack.c.l.s4 1983009808
        %v4070 = vunpack.c.0.s8 %v4069
        %v4071 = vlaneseq
        %v4072 = vshrl.u32 %v4071, 7
        %v4073 = vsub.s32 %v4070, %v4072
        %v4074 = vrot.slane %v4060, %v4073
        %v4075 = vcombine.high %v4067, %v4067
        %v4076 = vcombine.high %v4074, %v4074
        %v4077 = vcombine.high %v3997, %v3997
        %v4079 = vunpack.c.l.s4 1983009808
        %v4080 = vunpack.c.0.s8 %v4079
        %v4081 = vlaneseq
        %v4082 = vshrl.u32 %v4081, 7
        %v4083 = vsub.s32 %v4080, %v4082
        %v4084 = vrot.slane %v3997, %v4083
        %v4086 = vunpack.c.l.s4 1983009808
        %v4087 = vunpack.c.0.s8 %v4086
        %v4088 = vlaneseq
        %v4089 = vshrl.u32 %v4088, 7
        %v4090 = vsub.s32 %v4087, %v4089
        %v4091 = vrot.slane %v4077, %v4090
        %v4092 = vcombine.high %v4084, %v4084
        %v4093 = vcombine.high %v4091, %v4091
        %v4094 = vcombine.high %v3998, %v3998
        %v4096 = vunpack.c.l.s4 1983009808
        %v4097 = vunpack.c.0.s8 %v4096
        %v4098 = vlaneseq
        %v4099 = vshrl.u32 %v4098, 7
        %v4100 = vsub.s32 %v4097, %v4099
        %v4101 = vrot.slane %v3998, %v4100
        %v4103 = vunpack.c.l.s4 1983009808
        %v4104 = vunpack.c.0.s8 %v4103
        %v4105 = vlaneseq
        %v4106 = vshrl.u32 %v4105, 7
        %v4107 = vsub.s32 %v4104, %v4106
        %v4108 = vrot.slane %v4094, %v4107
        %v4109 = vcombine.high %v4101, %v4101
        %v4110 = vcombine.high %v4108, %v4108
        %v4111 = vcombine.high %v3999, %v3999
        %v4113 = vunpack.c.l.s4 1983009808
        %v4114 = vunpack.c.0.s8 %v4113
        %v4115 = vlaneseq
        %v4116 = vshrl.u32 %v4115, 7
        %v4117 = vsub.s32 %v4114, %v4116
        %v4118 = vrot.slane %v3999, %v4117
        %v4120 = vunpack.c.l.s4 1983009808
        %v4121 = vunpack.c.0.s8 %v4120
        %v4122 = vlaneseq
        %v4123 = vshrl.u32 %v4122, 7
        %v4124 = vsub.s32 %v4121, %v4123
        %v4125 = vrot.slane %v4111, %v4124
        %v4126 = vcombine.high %v4118, %v4118
        %v4127 = vcombine.high %v4125, %v4125
        %v4128 = vcombine.high %v4000, %v4000
        %v4130 = vunpack.c.l.s4 1983009808
        %v4131 = vunpack.c.0.s8 %v4130
        %v4132 = vlaneseq
        %v4133 = vshrl.u32 %v4132, 7
        %v4134 = vsub.s32 %v4131, %v4133
        %v4135 = vrot.slane %v4000, %v4134
        %v4137 = vunpack.c.l.s4 1983009808
        %v4138 = vunpack.c.0.s8 %v4137
        %v4139 = vlaneseq
        %v4140 = vshrl.u32 %v4139, 7
        %v4141 = vsub.s32 %v4138, %v4140
        %v4142 = vrot.slane %v4128, %v4141
        %v4143 = vcombine.high %v4135, %v4135
        %v4144 = vcombine.high %v4142, %v4142
        %v4145 = vcombine.high %v4001, %v4001
        %v4147 = vunpack.c.l.s4 1983009808
        %v4148 = vunpack.c.0.s8 %v4147
        %v4149 = vlaneseq
        %v4150 = vshrl.u32 %v4149, 7
        %v4151 = vsub.s32 %v4148, %v4150
        %v4152 = vrot.slane %v4001, %v4151
        %v4154 = vunpack.c.l.s4 1983009808
        %v4155 = vunpack.c.0.s8 %v4154
        %v4156 = vlaneseq
        %v4157 = vshrl.u32 %v4156, 7
        %v4158 = vsub.s32 %v4155, %v4157
        %v4159 = vrot.slane %v4145, %v4158
        %v4160 = vcombine.high %v4152, %v4152
        %v4161 = vcombine.high %v4159, %v4159
        %v4162 = vcombine.high %v4002, %v4002
        %v4164 = vunpack.c.l.s4 1983009808
        %v4165 = vunpack.c.0.s8 %v4164
        %v4166 = vlaneseq
        %v4167 = vshrl.u32 %v4166, 7
        %v4168 = vsub.s32 %v4165, %v4167
        %v4169 = vrot.slane %v4002, %v4168
        %v4171 = vunpack.c.l.s4 1983009808
        %v4172 = vunpack.c.0.s8 %v4171
        %v4173 = vlaneseq
        %v4174 = vshrl.u32 %v4173, 7
        %v4175 = vsub.s32 %v4172, %v4174
        %v4176 = vrot.slane %v4162, %v4175
        %v4177 = vcombine.high %v4169, %v4169
        %v4178 = vcombine.high %v4176, %v4176
        %v4179 = vcombine.high %v4003, %v4003
        %v4181 = vunpack.c.l.s4 1983009808
        %v4182 = vunpack.c.0.s8 %v4181
        %v4183 = vlaneseq
        %v4184 = vshrl.u32 %v4183, 7
        %v4185 = vsub.s32 %v4182, %v4184
        %v4186 = vrot.slane %v4003, %v4185
        %v4188 = vunpack.c.l.s4 1983009808
        %v4189 = vunpack.c.0.s8 %v4188
        %v4190 = vlaneseq
        %v4191 = vshrl.u32 %v4190, 7
        %v4192 = vsub.s32 %v4189, %v4191
        %v4193 = vrot.slane %v4179, %v4192
        %v4194 = vcombine.high %v4186, %v4186
        %v4195 = vcombine.high %v4193, %v4193
        %v4196 = vcombine.high %v4004, %v4004
        %v4198 = vunpack.c.l.s4 1983009808
        %v4199 = vunpack.c.0.s8 %v4198
        %v4200 = vlaneseq
        %v4201 = vshrl.u32 %v4200, 7
        %v4202 = vsub.s32 %v4199, %v4201
        %v4203 = vrot.slane %v4004, %v4202
        %v4205 = vunpack.c.l.s4 1983009808
        %v4206 = vunpack.c.0.s8 %v4205
        %v4207 = vlaneseq
        %v4208 = vshrl.u32 %v4207, 7
        %v4209 = vsub.s32 %v4206, %v4208
        %v4210 = vrot.slane %v4196, %v4209
        %v4211 = vcombine.high %v4203, %v4203
        %v4212 = vcombine.high %v4210, %v4210
        %v4213 = vcombine.high %v4005, %v4005
        %v4215 = vunpack.c.l.s4 1983009808
        %v4216 = vunpack.c.0.s8 %v4215
        %v4217 = vlaneseq
        %v4218 = vshrl.u32 %v4217, 7
        %v4219 = vsub.s32 %v4216, %v4218
        %v4220 = vrot.slane %v4005, %v4219
        %v4222 = vunpack.c.l.s4 1983009808
        %v4223 = vunpack.c.0.s8 %v4222
        %v4224 = vlaneseq
        %v4225 = vshrl.u32 %v4224, 7
        %v4226 = vsub.s32 %v4223, %v4225
        %v4227 = vrot.slane %v4213, %v4226
        %v4228 = vcombine.high %v4220, %v4220
        %v4229 = vcombine.high %v4227, %v4227
        %v4230 = vcombine.high %v4006, %v4006
        %v4232 = vunpack.c.l.s4 1983009808
        %v4233 = vunpack.c.0.s8 %v4232
        %v4234 = vlaneseq
        %v4235 = vshrl.u32 %v4234, 7
        %v4236 = vsub.s32 %v4233, %v4235
        %v4237 = vrot.slane %v4006, %v4236
        %v4239 = vunpack.c.l.s4 1983009808
        %v4240 = vunpack.c.0.s8 %v4239
        %v4241 = vlaneseq
        %v4242 = vshrl.u32 %v4241, 7
        %v4243 = vsub.s32 %v4240, %v4242
        %v4244 = vrot.slane %v4230, %v4243
        %v4245 = vcombine.high %v4237, %v4237
        %v4246 = vcombine.high %v4244, %v4244
        %v4247 = vcombine.high %v4007, %v4007
        %v4249 = vunpack.c.l.s4 1983009808
        %v4250 = vunpack.c.0.s8 %v4249
        %v4251 = vlaneseq
        %v4252 = vshrl.u32 %v4251, 7
        %v4253 = vsub.s32 %v4250, %v4252
        %v4254 = vrot.slane %v4007, %v4253
        %v4256 = vunpack.c.l.s4 1983009808
        %v4257 = vunpack.c.0.s8 %v4256
        %v4258 = vlaneseq
        %v4259 = vshrl.u32 %v4258, 7
        %v4260 = vsub.s32 %v4257, %v4259
        %v4261 = vrot.slane %v4247, %v4260
        %v4262 = vcombine.high %v4254, %v4254
        %v4263 = vcombine.high %v4261, %v4261
        %v4264 = vcombine.high %v4008, %v4008
        %v4266 = vunpack.c.l.s4 1983009808
        %v4267 = vunpack.c.0.s8 %v4266
        %v4268 = vlaneseq
        %v4269 = vshrl.u32 %v4268, 7
        %v4270 = vsub.s32 %v4267, %v4269
        %v4271 = vrot.slane %v4008, %v4270
        %v4273 = vunpack.c.l.s4 1983009808
        %v4274 = vunpack.c.0.s8 %v4273
        %v4275 = vlaneseq
        %v4276 = vshrl.u32 %v4275, 7
        %v4277 = vsub.s32 %v4274, %v4276
        %v4278 = vrot.slane %v4264, %v4277
        %v4279 = vcombine.high %v4271, %v4271
        %v4280 = vcombine.high %v4278, %v4278
        %v4281 = vcombine.high %v4009, %v4009
        %v4283 = vunpack.c.l.s4 1983009808
        %v4284 = vunpack.c.0.s8 %v4283
        %v4285 = vlaneseq
        %v4286 = vshrl.u32 %v4285, 7
        %v4287 = vsub.s32 %v4284, %v4286
        %v4288 = vrot.slane %v4009, %v4287
        %v4290 = vunpack.c.l.s4 1983009808
        %v4291 = vunpack.c.0.s8 %v4290
        %v4292 = vlaneseq
        %v4293 = vshrl.u32 %v4292, 7
        %v4294 = vsub.s32 %v4291, %v4293
        %v4295 = vrot.slane %v4281, %v4294
        %v4296 = vcombine.high %v4288, %v4288
        %v4297 = vcombine.high %v4295, %v4295
        %v4298 = vcombine.high %v4010, %v4010
        %v4300 = vunpack.c.l.s4 1983009808
        %v4301 = vunpack.c.0.s8 %v4300
        %v4302 = vlaneseq
        %v4303 = vshrl.u32 %v4302, 7
        %v4304 = vsub.s32 %v4301, %v4303
        %v4305 = vrot.slane %v4010, %v4304
        %v4307 = vunpack.c.l.s4 1983009808
        %v4308 = vunpack.c.0.s8 %v4307
        %v4309 = vlaneseq
        %v4310 = vshrl.u32 %v4309, 7
        %v4311 = vsub.s32 %v4308, %v4310
        %v4312 = vrot.slane %v4298, %v4311
        %v4313 = vcombine.high %v4305, %v4305
        %v4314 = vcombine.high %v4312, %v4312
        %v4315 = vcombine.high %v4011, %v4011
        %v4317 = vunpack.c.l.s4 1983009808
        %v4318 = vunpack.c.0.s8 %v4317
        %v4319 = vlaneseq
        %v4320 = vshrl.u32 %v4319, 7
        %v4321 = vsub.s32 %v4318, %v4320
        %v4322 = vrot.slane %v4011, %v4321
        %v4324 = vunpack.c.l.s4 1983009808
        %v4325 = vunpack.c.0.s8 %v4324
        %v4326 = vlaneseq
        %v4327 = vshrl.u32 %v4326, 7
        %v4328 = vsub.s32 %v4325, %v4327
        %v4329 = vrot.slane %v4315, %v4328
        %v4330 = vcombine.high %v4322, %v4322
        %v4331 = vcombine.high %v4329, %v4329
        %v4332 = vcombine.high %v4012, %v4012
        %v4334 = vunpack.c.l.s4 1983009808
        %v4335 = vunpack.c.0.s8 %v4334
        %v4336 = vlaneseq
        %v4337 = vshrl.u32 %v4336, 7
        %v4338 = vsub.s32 %v4335, %v4337
        %v4339 = vrot.slane %v4012, %v4338
        %v4341 = vunpack.c.l.s4 1983009808
        %v4342 = vunpack.c.0.s8 %v4341
        %v4343 = vlaneseq
        %v4344 = vshrl.u32 %v4343, 7
        %v4345 = vsub.s32 %v4342, %v4344
        %v4346 = vrot.slane %v4332, %v4345
        %v4347 = vcombine.high %v4339, %v4339
        %v4348 = vcombine.high %v4346, %v4346
        %v4349 = vcombine.high %v4013, %v4013
        %v4351 = vunpack.c.l.s4 1983009808
        %v4352 = vunpack.c.0.s8 %v4351
        %v4353 = vlaneseq
        %v4354 = vshrl.u32 %v4353, 7
        %v4355 = vsub.s32 %v4352, %v4354
        %v4356 = vrot.slane %v4013, %v4355
        %v4358 = vunpack.c.l.s4 1983009808
        %v4359 = vunpack.c.0.s8 %v4358
        %v4360 = vlaneseq
        %v4361 = vshrl.u32 %v4360, 7
        %v4362 = vsub.s32 %v4359, %v4361
        %v4363 = vrot.slane %v4349, %v4362
        %v4364 = vcombine.high %v4356, %v4356
        %v4365 = vcombine.high %v4363, %v4363
        %v4366 = vcombine.high %v4014, %v4014
        %v4368 = vunpack.c.l.s4 1983009808
        %v4369 = vunpack.c.0.s8 %v4368
        %v4370 = vlaneseq
        %v4371 = vshrl.u32 %v4370, 7
        %v4372 = vsub.s32 %v4369, %v4371
        %v4373 = vrot.slane %v4014, %v4372
        %v4375 = vunpack.c.l.s4 1983009808
        %v4376 = vunpack.c.0.s8 %v4375
        %v4377 = vlaneseq
        %v4378 = vshrl.u32 %v4377, 7
        %v4379 = vsub.s32 %v4376, %v4378
        %v4380 = vrot.slane %v4366, %v4379
        %v4381 = vcombine.high %v4373, %v4373
        %v4382 = vcombine.high %v4380, %v4380
        %v4383 = vcombine.high %v4015, %v4015
        %v4385 = vunpack.c.l.s4 1983009808
        %v4386 = vunpack.c.0.s8 %v4385
        %v4387 = vlaneseq
        %v4388 = vshrl.u32 %v4387, 7
        %v4389 = vsub.s32 %v4386, %v4388
        %v4390 = vrot.slane %v4015, %v4389
        %v4392 = vunpack.c.l.s4 1983009808
        %v4393 = vunpack.c.0.s8 %v4392
        %v4394 = vlaneseq
        %v4395 = vshrl.u32 %v4394, 7
        %v4396 = vsub.s32 %v4393, %v4395
        %v4397 = vrot.slane %v4383, %v4396
        %v4398 = vcombine.high %v4390, %v4390
        %v4399 = vcombine.high %v4397, %v4397
        %v4400 = vcombine.high %v4016, %v4016
        %v4402 = vunpack.c.l.s4 1983009808
        %v4403 = vunpack.c.0.s8 %v4402
        %v4404 = vlaneseq
        %v4405 = vshrl.u32 %v4404, 7
        %v4406 = vsub.s32 %v4403, %v4405
        %v4407 = vrot.slane %v4016, %v4406
        %v4409 = vunpack.c.l.s4 1983009808
        %v4410 = vunpack.c.0.s8 %v4409
        %v4411 = vlaneseq
        %v4412 = vshrl.u32 %v4411, 7
        %v4413 = vsub.s32 %v4410, %v4412
        %v4414 = vrot.slane %v4400, %v4413
        %v4415 = vcombine.high %v4407, %v4407
        %v4416 = vcombine.high %v4414, %v4414
        %v4417 = vcombine.high %v4017, %v4017
        %v4419 = vunpack.c.l.s4 1983009808
        %v4420 = vunpack.c.0.s8 %v4419
        %v4421 = vlaneseq
        %v4422 = vshrl.u32 %v4421, 7
        %v4423 = vsub.s32 %v4420, %v4422
        %v4424 = vrot.slane %v4017, %v4423
        %v4426 = vunpack.c.l.s4 1983009808
        %v4427 = vunpack.c.0.s8 %v4426
        %v4428 = vlaneseq
        %v4429 = vshrl.u32 %v4428, 7
        %v4430 = vsub.s32 %v4427, %v4429
        %v4431 = vrot.slane %v4417, %v4430
        %v4432 = vcombine.high %v4424, %v4424
        %v4433 = vcombine.high %v4431, %v4431
        %v4434 = vcombine.high %v4018, %v4018
        %v4436 = vunpack.c.l.s4 1983009808
        %v4437 = vunpack.c.0.s8 %v4436
        %v4438 = vlaneseq
        %v4439 = vshrl.u32 %v4438, 7
        %v4440 = vsub.s32 %v4437, %v4439
        %v4441 = vrot.slane %v4018, %v4440
        %v4443 = vunpack.c.l.s4 1983009808
        %v4444 = vunpack.c.0.s8 %v4443
        %v4445 = vlaneseq
        %v4446 = vshrl.u32 %v4445, 7
        %v4447 = vsub.s32 %v4444, %v4446
        %v4448 = vrot.slane %v4434, %v4447
        %v4449 = vcombine.high %v4441, %v4441
        %v4450 = vcombine.high %v4448, %v4448
        %v4451 = vcombine.high %v4019, %v4019
        %v4453 = vunpack.c.l.s4 1983009808
        %v4454 = vunpack.c.0.s8 %v4453
        %v4455 = vlaneseq
        %v4456 = vshrl.u32 %v4455, 7
        %v4457 = vsub.s32 %v4454, %v4456
        %v4458 = vrot.slane %v4019, %v4457
        %v4460 = vunpack.c.l.s4 1983009808
        %v4461 = vunpack.c.0.s8 %v4460
        %v4462 = vlaneseq
        %v4463 = vshrl.u32 %v4462, 7
        %v4464 = vsub.s32 %v4461, %v4463
        %v4465 = vrot.slane %v4451, %v4464
        %v4466 = vcombine.high %v4458, %v4458
        %v4467 = vcombine.high %v4465, %v4465
        %v4468 = vcombine.high %v4020, %v4020
        %v4470 = vunpack.c.l.s4 1983009808
        %v4471 = vunpack.c.0.s8 %v4470
        %v4472 = vlaneseq
        %v4473 = vshrl.u32 %v4472, 7
        %v4474 = vsub.s32 %v4471, %v4473
        %v4475 = vrot.slane %v4020, %v4474
        %v4477 = vunpack.c.l.s4 1983009808
        %v4478 = vunpack.c.0.s8 %v4477
        %v4479 = vlaneseq
        %v4480 = vshrl.u32 %v4479, 7
        %v4481 = vsub.s32 %v4478, %v4480
        %v4482 = vrot.slane %v4468, %v4481
        %v4483 = vcombine.high %v4475, %v4475
        %v4484 = vcombine.high %v4482, %v4482
        %v4485 = vcombine.high %v4021, %v4021
        %v4487 = vunpack.c.l.s4 1983009808
        %v4488 = vunpack.c.0.s8 %v4487
        %v4489 = vlaneseq
        %v4490 = vshrl.u32 %v4489, 7
        %v4491 = vsub.s32 %v4488, %v4490
        %v4492 = vrot.slane %v4021, %v4491
        %v4494 = vunpack.c.l.s4 1983009808
        %v4495 = vunpack.c.0.s8 %v4494
        %v4496 = vlaneseq
        %v4497 = vshrl.u32 %v4496, 7
        %v4498 = vsub.s32 %v4495, %v4497
        %v4499 = vrot.slane %v4485, %v4498
        %v4500 = vcombine.high %v4492, %v4492
        %v4501 = vcombine.high %v4499, %v4499
        %v4502 = vcombine.high %v4022, %v4022
        %v4504 = vunpack.c.l.s4 1983009808
        %v4505 = vunpack.c.0.s8 %v4504
        %v4506 = vlaneseq
        %v4507 = vshrl.u32 %v4506, 7
        %v4508 = vsub.s32 %v4505, %v4507
        %v4509 = vrot.slane %v4022, %v4508
        %v4511 = vunpack.c.l.s4 1983009808
        %v4512 = vunpack.c.0.s8 %v4511
        %v4513 = vlaneseq
        %v4514 = vshrl.u32 %v4513, 7
        %v4515 = vsub.s32 %v4512, %v4514
        %v4516 = vrot.slane %v4502, %v4515
        %v4517 = vcombine.high %v4509, %v4509
        %v4518 = vcombine.high %v4516, %v4516
        %v4519 = vcombine.high %v4023, %v4023
        %v4521 = vunpack.c.l.s4 1983009808
        %v4522 = vunpack.c.0.s8 %v4521
        %v4523 = vlaneseq
        %v4524 = vshrl.u32 %v4523, 7
        %v4525 = vsub.s32 %v4522, %v4524
        %v4526 = vrot.slane %v4023, %v4525
        %v4528 = vunpack.c.l.s4 1983009808
        %v4529 = vunpack.c.0.s8 %v4528
        %v4530 = vlaneseq
        %v4531 = vshrl.u32 %v4530, 7
        %v4532 = vsub.s32 %v4529, %v4531
        %v4533 = vrot.slane %v4519, %v4532
        %v4534 = vcombine.high %v4526, %v4526
        %v4535 = vcombine.high %v4533, %v4533
        %v4536 = vcombine.high %v4024, %v4024
        %v4538 = vunpack.c.l.s4 1983009808
        %v4539 = vunpack.c.0.s8 %v4538
        %v4540 = vlaneseq
        %v4541 = vshrl.u32 %v4540, 7
        %v4542 = vsub.s32 %v4539, %v4541
        %v4543 = vrot.slane %v4024, %v4542
        %v4545 = vunpack.c.l.s4 1983009808
        %v4546 = vunpack.c.0.s8 %v4545
        %v4547 = vlaneseq
        %v4548 = vshrl.u32 %v4547, 7
        %v4549 = vsub.s32 %v4546, %v4548
        %v4550 = vrot.slane %v4536, %v4549
        %v4551 = vcombine.high %v4543, %v4543
        %v4552 = vcombine.high %v4550, %v4550
        %v4553 = vcombine.high %v4025, %v4025
        %v4555 = vunpack.c.l.s4 1983009808
        %v4556 = vunpack.c.0.s8 %v4555
        %v4557 = vlaneseq
        %v4558 = vshrl.u32 %v4557, 7
        %v4559 = vsub.s32 %v4556, %v4558
        %v4560 = vrot.slane %v4025, %v4559
        %v4562 = vunpack.c.l.s4 1983009808
        %v4563 = vunpack.c.0.s8 %v4562
        %v4564 = vlaneseq
        %v4565 = vshrl.u32 %v4564, 7
        %v4566 = vsub.s32 %v4563, %v4565
        %v4567 = vrot.slane %v4553, %v4566
        %v4568 = vcombine.high %v4560, %v4560
        %v4569 = vcombine.high %v4567, %v4567
        %v4570 = vcombine.high %v4026, %v4026
        %v4572 = vunpack.c.l.s4 1983009808
        %v4573 = vunpack.c.0.s8 %v4572
        %v4574 = vlaneseq
        %v4575 = vshrl.u32 %v4574, 7
        %v4576 = vsub.s32 %v4573, %v4575
        %v4577 = vrot.slane %v4026, %v4576
        %v4579 = vunpack.c.l.s4 1983009808
        %v4580 = vunpack.c.0.s8 %v4579
        %v4581 = vlaneseq
        %v4582 = vshrl.u32 %v4581, 7
        %v4583 = vsub.s32 %v4580, %v4582
        %v4584 = vrot.slane %v4570, %v4583
        %v4585 = vcombine.high %v4577, %v4577
        %v4586 = vcombine.high %v4584, %v4584
        %v4587 = vcombine.high %v4027, %v4027
        %v4589 = vunpack.c.l.s4 1983009808
        %v4590 = vunpack.c.0.s8 %v4589
        %v4591 = vlaneseq
        %v4592 = vshrl.u32 %v4591, 7
        %v4593 = vsub.s32 %v4590, %v4592
        %v4594 = vrot.slane %v4027, %v4593
        %v4596 = vunpack.c.l.s4 1983009808
        %v4597 = vunpack.c.0.s8 %v4596
        %v4598 = vlaneseq
        %v4599 = vshrl.u32 %v4598, 7
        %v4600 = vsub.s32 %v4597, %v4599
        %v4601 = vrot.slane %v4587, %v4600
        %v4602 = vcombine.high %v4594, %v4594
        %v4603 = vcombine.high %v4601, %v4601
        %vm4732 = vcmask 517120
        %v4733 = vsel %vm4732, %v4067, -inf
        %v4734 = vrot.slane %v4733, 4
        %v4735 = vmax.f32 %v4733, %v4734
        %v4736 = vrot.slane %v4735, 2
        %v4737 = vmax.f32 %v4735, %v4736
        %v4738 = vrot.slane %v4737, 1
        %v4739 = vmax.f32 %v4737, %v4738
        %v4740 = vsel %vm4732, %v4075, -inf
        %v4741 = vrot.slane %v4740, 4
        %v4742 = vmax.f32 %v4740, %v4741
        %v4743 = vrot.slane %v4742, 2
        %v4744 = vmax.f32 %v4742, %v4743
        %v4745 = vrot.slane %v4744, 1
        %v4746 = vmax.f32 %v4744, %v4745
        %v4747 = vsel %vm4732, %v4074, -inf
        %v4748 = vrot.slane %v4747, 4
        %v4749 = vmax.f32 %v4747, %v4748
        %v4750 = vrot.slane %v4749, 2
        %v4751 = vmax.f32 %v4749, %v4750
        %v4752 = vrot.slane %v4751, 1
        %v4753 = vmax.f32 %v4751, %v4752
        %v4754 = vsel %vm4732, %v4076, -inf
        %v4755 = vrot.slane %v4754, 4
        %v4756 = vmax.f32 %v4754, %v4755
        %v4757 = vrot.slane %v4756, 2
        %v4758 = vmax.f32 %v4756, %v4757
        %v4759 = vrot.slane %v4758, 1
        %v4760 = vmax.f32 %v4758, %v4759
        %v4761 = vsel %vm4732, %v4084, -inf
        %v4762 = vrot.slane %v4761, 4
        %v4763 = vmax.f32 %v4761, %v4762
        %v4764 = vrot.slane %v4763, 2
        %v4765 = vmax.f32 %v4763, %v4764
        %v4766 = vrot.slane %v4765, 1
        %v4767 = vmax.f32 %v4765, %v4766
        %v4768 = vsel %vm4732, %v4092, -inf
        %v4769 = vrot.slane %v4768, 4
        %v4770 = vmax.f32 %v4768, %v4769
        %v4771 = vrot.slane %v4770, 2
        %v4772 = vmax.f32 %v4770, %v4771
        %v4773 = vrot.slane %v4772, 1
        %v4774 = vmax.f32 %v4772, %v4773
        %v4775 = vsel %vm4732, %v4091, -inf
        %v4776 = vrot.slane %v4775, 4
        %v4777 = vmax.f32 %v4775, %v4776
        %v4778 = vrot.slane %v4777, 2
        %v4779 = vmax.f32 %v4777, %v4778
        %v4780 = vrot.slane %v4779, 1
        %v4781 = vmax.f32 %v4779, %v4780
        %v4782 = vsel %vm4732, %v4093, -inf
        %v4783 = vrot.slane %v4782, 4
        %v4784 = vmax.f32 %v4782, %v4783
        %v4785 = vrot.slane %v4784, 2
        %v4786 = vmax.f32 %v4784, %v4785
        %v4787 = vrot.slane %v4786, 1
        %v4788 = vmax.f32 %v4786, %v4787
        %v4789 = vsel %vm4732, %v4101, -inf
        %v4790 = vrot.slane %v4789, 4
        %v4791 = vmax.f32 %v4789, %v4790
        %v4792 = vrot.slane %v4791, 2
        %v4793 = vmax.f32 %v4791, %v4792
        %v4794 = vrot.slane %v4793, 1
        %v4795 = vmax.f32 %v4793, %v4794
        %v4796 = vsel %vm4732, %v4109, -inf
        %v4797 = vrot.slane %v4796, 4
        %v4798 = vmax.f32 %v4796, %v4797
        %v4799 = vrot.slane %v4798, 2
        %v4800 = vmax.f32 %v4798, %v4799
        %v4801 = vrot.slane %v4800, 1
        %v4802 = vmax.f32 %v4800, %v4801
        %v4803 = vsel %vm4732, %v4108, -inf
        %v4804 = vrot.slane %v4803, 4
        %v4805 = vmax.f32 %v4803, %v4804
        %v4806 = vrot.slane %v4805, 2
        %v4807 = vmax.f32 %v4805, %v4806
        %v4808 = vrot.slane %v4807, 1
        %v4809 = vmax.f32 %v4807, %v4808
        %v4810 = vsel %vm4732, %v4110, -inf
        %v4811 = vrot.slane %v4810, 4
        %v4812 = vmax.f32 %v4810, %v4811
        %v4813 = vrot.slane %v4812, 2
        %v4814 = vmax.f32 %v4812, %v4813
        %v4815 = vrot.slane %v4814, 1
        %v4816 = vmax.f32 %v4814, %v4815
        %v4817 = vsel %vm4732, %v4118, -inf
        %v4818 = vrot.slane %v4817, 4
        %v4819 = vmax.f32 %v4817, %v4818
        %v4820 = vrot.slane %v4819, 2
        %v4821 = vmax.f32 %v4819, %v4820
        %v4822 = vrot.slane %v4821, 1
        %v4823 = vmax.f32 %v4821, %v4822
        %v4824 = vsel %vm4732, %v4126, -inf
        %v4825 = vrot.slane %v4824, 4
        %v4826 = vmax.f32 %v4824, %v4825
        %v4827 = vrot.slane %v4826, 2
        %v4828 = vmax.f32 %v4826, %v4827
        %v4829 = vrot.slane %v4828, 1
        %v4830 = vmax.f32 %v4828, %v4829
        %v4831 = vsel %vm4732, %v4125, -inf
        %v4832 = vrot.slane %v4831, 4
        %v4833 = vmax.f32 %v4831, %v4832
        %v4834 = vrot.slane %v4833, 2
        %v4835 = vmax.f32 %v4833, %v4834
        %v4836 = vrot.slane %v4835, 1
        %v4837 = vmax.f32 %v4835, %v4836
        %v4838 = vsel %vm4732, %v4127, -inf
        %v4839 = vrot.slane %v4838, 4
        %v4840 = vmax.f32 %v4838, %v4839
        %v4841 = vrot.slane %v4840, 2
        %v4842 = vmax.f32 %v4840, %v4841
        %v4843 = vrot.slane %v4842, 1
        %v4844 = vmax.f32 %v4842, %v4843
        %v4845 = vsel %vm4732, %v4135, -inf
        %v4846 = vrot.slane %v4845, 4
        %v4847 = vmax.f32 %v4845, %v4846
        %v4848 = vrot.slane %v4847, 2
        %v4849 = vmax.f32 %v4847, %v4848
        %v4850 = vrot.slane %v4849, 1
        %v4851 = vmax.f32 %v4849, %v4850
        %v4852 = vsel %vm4732, %v4143, -inf
        %v4853 = vrot.slane %v4852, 4
        %v4854 = vmax.f32 %v4852, %v4853
        %v4855 = vrot.slane %v4854, 2
        %v4856 = vmax.f32 %v4854, %v4855
        %v4857 = vrot.slane %v4856, 1
        %v4858 = vmax.f32 %v4856, %v4857
        %v4859 = vsel %vm4732, %v4142, -inf
        %v4860 = vrot.slane %v4859, 4
        %v4861 = vmax.f32 %v4859, %v4860
        %v4862 = vrot.slane %v4861, 2
        %v4863 = vmax.f32 %v4861, %v4862
        %v4864 = vrot.slane %v4863, 1
        %v4865 = vmax.f32 %v4863, %v4864
        %v4866 = vsel %vm4732, %v4144, -inf
        %v4867 = vrot.slane %v4866, 4
        %v4868 = vmax.f32 %v4866, %v4867
        %v4869 = vrot.slane %v4868, 2
        %v4870 = vmax.f32 %v4868, %v4869
        %v4871 = vrot.slane %v4870, 1
        %v4872 = vmax.f32 %v4870, %v4871
        %v4873 = vsel %vm4732, %v4152, -inf
        %v4874 = vrot.slane %v4873, 4
        %v4875 = vmax.f32 %v4873, %v4874
        %v4876 = vrot.slane %v4875, 2
        %v4877 = vmax.f32 %v4875, %v4876
        %v4878 = vrot.slane %v4877, 1
        %v4879 = vmax.f32 %v4877, %v4878
        %v4880 = vsel %vm4732, %v4160, -inf
        %v4881 = vrot.slane %v4880, 4
        %v4882 = vmax.f32 %v4880, %v4881
        %v4883 = vrot.slane %v4882, 2
        %v4884 = vmax.f32 %v4882, %v4883
        %v4885 = vrot.slane %v4884, 1
        %v4886 = vmax.f32 %v4884, %v4885
        %v4887 = vsel %vm4732, %v4159, -inf
        %v4888 = vrot.slane %v4887, 4
        %v4889 = vmax.f32 %v4887, %v4888
        %v4890 = vrot.slane %v4889, 2
        %v4891 = vmax.f32 %v4889, %v4890
        %v4892 = vrot.slane %v4891, 1
        %v4893 = vmax.f32 %v4891, %v4892
        %v4894 = vsel %vm4732, %v4161, -inf
        %v4895 = vrot.slane %v4894, 4
        %v4896 = vmax.f32 %v4894, %v4895
        %v4897 = vrot.slane %v4896, 2
        %v4898 = vmax.f32 %v4896, %v4897
        %v4899 = vrot.slane %v4898, 1
        %v4900 = vmax.f32 %v4898, %v4899
        %v4901 = vsel %vm4732, %v4169, -inf
        %v4902 = vrot.slane %v4901, 4
        %v4903 = vmax.f32 %v4901, %v4902
        %v4904 = vrot.slane %v4903, 2
        %v4905 = vmax.f32 %v4903, %v4904
        %v4906 = vrot.slane %v4905, 1
        %v4907 = vmax.f32 %v4905, %v4906
        %v4908 = vsel %vm4732, %v4177, -inf
        %v4909 = vrot.slane %v4908, 4
        %v4910 = vmax.f32 %v4908, %v4909
        %v4911 = vrot.slane %v4910, 2
        %v4912 = vmax.f32 %v4910, %v4911
        %v4913 = vrot.slane %v4912, 1
        %v4914 = vmax.f32 %v4912, %v4913
        %v4915 = vsel %vm4732, %v4176, -inf
        %v4916 = vrot.slane %v4915, 4
        %v4917 = vmax.f32 %v4915, %v4916
        %v4918 = vrot.slane %v4917, 2
        %v4919 = vmax.f32 %v4917, %v4918
        %v4920 = vrot.slane %v4919, 1
        %v4921 = vmax.f32 %v4919, %v4920
        %v4922 = vsel %vm4732, %v4178, -inf
        %v4923 = vrot.slane %v4922, 4
        %v4924 = vmax.f32 %v4922, %v4923
        %v4925 = vrot.slane %v4924, 2
        %v4926 = vmax.f32 %v4924, %v4925
        %v4927 = vrot.slane %v4926, 1
        %v4928 = vmax.f32 %v4926, %v4927
        %v4929 = vsel %vm4732, %v4186, -inf
        %v4930 = vrot.slane %v4929, 4
        %v4931 = vmax.f32 %v4929, %v4930
        %v4932 = vrot.slane %v4931, 2
        %v4933 = vmax.f32 %v4931, %v4932
        %v4934 = vrot.slane %v4933, 1
        %v4935 = vmax.f32 %v4933, %v4934
        %v4936 = vsel %vm4732, %v4194, -inf
        %v4937 = vrot.slane %v4936, 4
        %v4938 = vmax.f32 %v4936, %v4937
        %v4939 = vrot.slane %v4938, 2
        %v4940 = vmax.f32 %v4938, %v4939
        %v4941 = vrot.slane %v4940, 1
        %v4942 = vmax.f32 %v4940, %v4941
        %v4943 = vsel %vm4732, %v4193, -inf
        %v4944 = vrot.slane %v4943, 4
        %v4945 = vmax.f32 %v4943, %v4944
        %v4946 = vrot.slane %v4945, 2
        %v4947 = vmax.f32 %v4945, %v4946
        %v4948 = vrot.slane %v4947, 1
        %v4949 = vmax.f32 %v4947, %v4948
        %v4950 = vsel %vm4732, %v4195, -inf
        %v4951 = vrot.slane %v4950, 4
        %v4952 = vmax.f32 %v4950, %v4951
        %v4953 = vrot.slane %v4952, 2
        %v4954 = vmax.f32 %v4952, %v4953
        %v4955 = vrot.slane %v4954, 1
        %v4956 = vmax.f32 %v4954, %v4955
        %v4957 = vsel %vm4732, %v4203, -inf
        %v4958 = vrot.slane %v4957, 4
        %v4959 = vmax.f32 %v4957, %v4958
        %v4960 = vrot.slane %v4959, 2
        %v4961 = vmax.f32 %v4959, %v4960
        %v4962 = vrot.slane %v4961, 1
        %v4963 = vmax.f32 %v4961, %v4962
        %v4964 = vsel %vm4732, %v4211, -inf
        %v4965 = vrot.slane %v4964, 4
        %v4966 = vmax.f32 %v4964, %v4965
        %v4967 = vrot.slane %v4966, 2
        %v4968 = vmax.f32 %v4966, %v4967
        %v4969 = vrot.slane %v4968, 1
        %v4970 = vmax.f32 %v4968, %v4969
        %v4971 = vsel %vm4732, %v4210, -inf
        %v4972 = vrot.slane %v4971, 4
        %v4973 = vmax.f32 %v4971, %v4972
        %v4974 = vrot.slane %v4973, 2
        %v4975 = vmax.f32 %v4973, %v4974
        %v4976 = vrot.slane %v4975, 1
        %v4977 = vmax.f32 %v4975, %v4976
        %v4978 = vsel %vm4732, %v4212, -inf
        %v4979 = vrot.slane %v4978, 4
        %v4980 = vmax.f32 %v4978, %v4979
        %v4981 = vrot.slane %v4980, 2
        %v4982 = vmax.f32 %v4980, %v4981
        %v4983 = vrot.slane %v4982, 1
        %v4984 = vmax.f32 %v4982, %v4983
        %v4985 = vsel %vm4732, %v4220, -inf
        %v4986 = vrot.slane %v4985, 4
        %v4987 = vmax.f32 %v4985, %v4986
        %v4988 = vrot.slane %v4987, 2
        %v4989 = vmax.f32 %v4987, %v4988
        %v4990 = vrot.slane %v4989, 1
        %v4991 = vmax.f32 %v4989, %v4990
        %v4992 = vsel %vm4732, %v4228, -inf
        %v4993 = vrot.slane %v4992, 4
        %v4994 = vmax.f32 %v4992, %v4993
        %v4995 = vrot.slane %v4994, 2
        %v4996 = vmax.f32 %v4994, %v4995
        %v4997 = vrot.slane %v4996, 1
        %v4998 = vmax.f32 %v4996, %v4997
        %v4999 = vsel %vm4732, %v4227, -inf
        %v5000 = vrot.slane %v4999, 4
        %v5001 = vmax.f32 %v4999, %v5000
        %v5002 = vrot.slane %v5001, 2
        %v5003 = vmax.f32 %v5001, %v5002
        %v5004 = vrot.slane %v5003, 1
        %v5005 = vmax.f32 %v5003, %v5004
        %v5006 = vsel %vm4732, %v4229, -inf
        %v5007 = vrot.slane %v5006, 4
        %v5008 = vmax.f32 %v5006, %v5007
        %v5009 = vrot.slane %v5008, 2
        %v5010 = vmax.f32 %v5008, %v5009
        %v5011 = vrot.slane %v5010, 1
        %v5012 = vmax.f32 %v5010, %v5011
        %v5013 = vsel %vm4732, %v4237, -inf
        %v5014 = vrot.slane %v5013, 4
        %v5015 = vmax.f32 %v5013, %v5014
        %v5016 = vrot.slane %v5015, 2
        %v5017 = vmax.f32 %v5015, %v5016
        %v5018 = vrot.slane %v5017, 1
        %v5019 = vmax.f32 %v5017, %v5018
        %v5020 = vsel %vm4732, %v4245, -inf
        %v5021 = vrot.slane %v5020, 4
        %v5022 = vmax.f32 %v5020, %v5021
        %v5023 = vrot.slane %v5022, 2
        %v5024 = vmax.f32 %v5022, %v5023
        %v5025 = vrot.slane %v5024, 1
        %v5026 = vmax.f32 %v5024, %v5025
        %v5027 = vsel %vm4732, %v4244, -inf
        %v5028 = vrot.slane %v5027, 4
        %v5029 = vmax.f32 %v5027, %v5028
        %v5030 = vrot.slane %v5029, 2
        %v5031 = vmax.f32 %v5029, %v5030
        %v5032 = vrot.slane %v5031, 1
        %v5033 = vmax.f32 %v5031, %v5032
        %v5034 = vsel %vm4732, %v4246, -inf
        %v5035 = vrot.slane %v5034, 4
        %v5036 = vmax.f32 %v5034, %v5035
        %v5037 = vrot.slane %v5036, 2
        %v5038 = vmax.f32 %v5036, %v5037
        %v5039 = vrot.slane %v5038, 1
        %v5040 = vmax.f32 %v5038, %v5039
        %v5041 = vsel %vm4732, %v4254, -inf
        %v5042 = vrot.slane %v5041, 4
        %v5043 = vmax.f32 %v5041, %v5042
        %v5044 = vrot.slane %v5043, 2
        %v5045 = vmax.f32 %v5043, %v5044
        %v5046 = vrot.slane %v5045, 1
        %v5047 = vmax.f32 %v5045, %v5046
        %v5048 = vsel %vm4732, %v4262, -inf
        %v5049 = vrot.slane %v5048, 4
        %v5050 = vmax.f32 %v5048, %v5049
        %v5051 = vrot.slane %v5050, 2
        %v5052 = vmax.f32 %v5050, %v5051
        %v5053 = vrot.slane %v5052, 1
        %v5054 = vmax.f32 %v5052, %v5053
        %v5055 = vsel %vm4732, %v4261, -inf
        %v5056 = vrot.slane %v5055, 4
        %v5057 = vmax.f32 %v5055, %v5056
        %v5058 = vrot.slane %v5057, 2
        %v5059 = vmax.f32 %v5057, %v5058
        %v5060 = vrot.slane %v5059, 1
        %v5061 = vmax.f32 %v5059, %v5060
        %v5062 = vsel %vm4732, %v4263, -inf
        %v5063 = vrot.slane %v5062, 4
        %v5064 = vmax.f32 %v5062, %v5063
        %v5065 = vrot.slane %v5064, 2
        %v5066 = vmax.f32 %v5064, %v5065
        %v5067 = vrot.slane %v5066, 1
        %v5068 = vmax.f32 %v5066, %v5067
        %v5069 = vsel %vm4732, %v4271, -inf
        %v5070 = vrot.slane %v5069, 4
        %v5071 = vmax.f32 %v5069, %v5070
        %v5072 = vrot.slane %v5071, 2
        %v5073 = vmax.f32 %v5071, %v5072
        %v5074 = vrot.slane %v5073, 1
        %v5075 = vmax.f32 %v5073, %v5074
        %v5076 = vsel %vm4732, %v4279, -inf
        %v5077 = vrot.slane %v5076, 4
        %v5078 = vmax.f32 %v5076, %v5077
        %v5079 = vrot.slane %v5078, 2
        %v5080 = vmax.f32 %v5078, %v5079
        %v5081 = vrot.slane %v5080, 1
        %v5082 = vmax.f32 %v5080, %v5081
        %v5083 = vsel %vm4732, %v4278, -inf
        %v5084 = vrot.slane %v5083, 4
        %v5085 = vmax.f32 %v5083, %v5084
        %v5086 = vrot.slane %v5085, 2
        %v5087 = vmax.f32 %v5085, %v5086
        %v5088 = vrot.slane %v5087, 1
        %v5089 = vmax.f32 %v5087, %v5088
        %v5090 = vsel %vm4732, %v4280, -inf
        %v5091 = vrot.slane %v5090, 4
        %v5092 = vmax.f32 %v5090, %v5091
        %v5093 = vrot.slane %v5092, 2
        %v5094 = vmax.f32 %v5092, %v5093
        %v5095 = vrot.slane %v5094, 1
        %v5096 = vmax.f32 %v5094, %v5095
        %v5097 = vsel %vm4732, %v4288, -inf
        %v5098 = vrot.slane %v5097, 4
        %v5099 = vmax.f32 %v5097, %v5098
        %v5100 = vrot.slane %v5099, 2
        %v5101 = vmax.f32 %v5099, %v5100
        %v5102 = vrot.slane %v5101, 1
        %v5103 = vmax.f32 %v5101, %v5102
        %v5104 = vsel %vm4732, %v4296, -inf
        %v5105 = vrot.slane %v5104, 4
        %v5106 = vmax.f32 %v5104, %v5105
        %v5107 = vrot.slane %v5106, 2
        %v5108 = vmax.f32 %v5106, %v5107
        %v5109 = vrot.slane %v5108, 1
        %v5110 = vmax.f32 %v5108, %v5109
        %v5111 = vsel %vm4732, %v4295, -inf
        %v5112 = vrot.slane %v5111, 4
        %v5113 = vmax.f32 %v5111, %v5112
        %v5114 = vrot.slane %v5113, 2
        %v5115 = vmax.f32 %v5113, %v5114
        %v5116 = vrot.slane %v5115, 1
        %v5117 = vmax.f32 %v5115, %v5116
        %v5118 = vsel %vm4732, %v4297, -inf
        %v5119 = vrot.slane %v5118, 4
        %v5120 = vmax.f32 %v5118, %v5119
        %v5121 = vrot.slane %v5120, 2
        %v5122 = vmax.f32 %v5120, %v5121
        %v5123 = vrot.slane %v5122, 1
        %v5124 = vmax.f32 %v5122, %v5123
        %v5125 = vsel %vm4732, %v4305, -inf
        %v5126 = vrot.slane %v5125, 4
        %v5127 = vmax.f32 %v5125, %v5126
        %v5128 = vrot.slane %v5127, 2
        %v5129 = vmax.f32 %v5127, %v5128
        %v5130 = vrot.slane %v5129, 1
        %v5131 = vmax.f32 %v5129, %v5130
        %v5132 = vsel %vm4732, %v4313, -inf
        %v5133 = vrot.slane %v5132, 4
        %v5134 = vmax.f32 %v5132, %v5133
        %v5135 = vrot.slane %v5134, 2
        %v5136 = vmax.f32 %v5134, %v5135
        %v5137 = vrot.slane %v5136, 1
        %v5138 = vmax.f32 %v5136, %v5137
        %v5139 = vsel %vm4732, %v4312, -inf
        %v5140 = vrot.slane %v5139, 4
        %v5141 = vmax.f32 %v5139, %v5140
        %v5142 = vrot.slane %v5141, 2
        %v5143 = vmax.f32 %v5141, %v5142
        %v5144 = vrot.slane %v5143, 1
        %v5145 = vmax.f32 %v5143, %v5144
        %v5146 = vsel %vm4732, %v4314, -inf
        %v5147 = vrot.slane %v5146, 4
        %v5148 = vmax.f32 %v5146, %v5147
        %v5149 = vrot.slane %v5148, 2
        %v5150 = vmax.f32 %v5148, %v5149
        %v5151 = vrot.slane %v5150, 1
        %v5152 = vmax.f32 %v5150, %v5151
        %v5153 = vsel %vm4732, %v4322, -inf
        %v5154 = vrot.slane %v5153, 4
        %v5155 = vmax.f32 %v5153, %v5154
        %v5156 = vrot.slane %v5155, 2
        %v5157 = vmax.f32 %v5155, %v5156
        %v5158 = vrot.slane %v5157, 1
        %v5159 = vmax.f32 %v5157, %v5158
        %v5160 = vsel %vm4732, %v4330, -inf
        %v5161 = vrot.slane %v5160, 4
        %v5162 = vmax.f32 %v5160, %v5161
        %v5163 = vrot.slane %v5162, 2
        %v5164 = vmax.f32 %v5162, %v5163
        %v5165 = vrot.slane %v5164, 1
        %v5166 = vmax.f32 %v5164, %v5165
        %v5167 = vsel %vm4732, %v4329, -inf
        %v5168 = vrot.slane %v5167, 4
        %v5169 = vmax.f32 %v5167, %v5168
        %v5170 = vrot.slane %v5169, 2
        %v5171 = vmax.f32 %v5169, %v5170
        %v5172 = vrot.slane %v5171, 1
        %v5173 = vmax.f32 %v5171, %v5172
        %v5174 = vsel %vm4732, %v4331, -inf
        %v5175 = vrot.slane %v5174, 4
        %v5176 = vmax.f32 %v5174, %v5175
        %v5177 = vrot.slane %v5176, 2
        %v5178 = vmax.f32 %v5176, %v5177
        %v5179 = vrot.slane %v5178, 1
        %v5180 = vmax.f32 %v5178, %v5179
        %v5181 = vsel %vm4732, %v4339, -inf
        %v5182 = vrot.slane %v5181, 4
        %v5183 = vmax.f32 %v5181, %v5182
        %v5184 = vrot.slane %v5183, 2
        %v5185 = vmax.f32 %v5183, %v5184
        %v5186 = vrot.slane %v5185, 1
        %v5187 = vmax.f32 %v5185, %v5186
        %v5188 = vsel %vm4732, %v4347, -inf
        %v5189 = vrot.slane %v5188, 4
        %v5190 = vmax.f32 %v5188, %v5189
        %v5191 = vrot.slane %v5190, 2
        %v5192 = vmax.f32 %v5190, %v5191
        %v5193 = vrot.slane %v5192, 1
        %v5194 = vmax.f32 %v5192, %v5193
        %v5195 = vsel %vm4732, %v4346, -inf
        %v5196 = vrot.slane %v5195, 4
        %v5197 = vmax.f32 %v5195, %v5196
        %v5198 = vrot.slane %v5197, 2
        %v5199 = vmax.f32 %v5197, %v5198
        %v5200 = vrot.slane %v5199, 1
        %v5201 = vmax.f32 %v5199, %v5200
        %v5202 = vsel %vm4732, %v4348, -inf
        %v5203 = vrot.slane %v5202, 4
        %v5204 = vmax.f32 %v5202, %v5203
        %v5205 = vrot.slane %v5204, 2
        %v5206 = vmax.f32 %v5204, %v5205
        %v5207 = vrot.slane %v5206, 1
        %v5208 = vmax.f32 %v5206, %v5207
        %v5209 = vsel %vm4732, %v4356, -inf
        %v5210 = vrot.slane %v5209, 4
        %v5211 = vmax.f32 %v5209, %v5210
        %v5212 = vrot.slane %v5211, 2
        %v5213 = vmax.f32 %v5211, %v5212
        %v5214 = vrot.slane %v5213, 1
        %v5215 = vmax.f32 %v5213, %v5214
        %v5216 = vsel %vm4732, %v4364, -inf
        %v5217 = vrot.slane %v5216, 4
        %v5218 = vmax.f32 %v5216, %v5217
        %v5219 = vrot.slane %v5218, 2
        %v5220 = vmax.f32 %v5218, %v5219
        %v5221 = vrot.slane %v5220, 1
        %v5222 = vmax.f32 %v5220, %v5221
        %v5223 = vsel %vm4732, %v4363, -inf
        %v5224 = vrot.slane %v5223, 4
        %v5225 = vmax.f32 %v5223, %v5224
        %v5226 = vrot.slane %v5225, 2
        %v5227 = vmax.f32 %v5225, %v5226
        %v5228 = vrot.slane %v5227, 1
        %v5229 = vmax.f32 %v5227, %v5228
        %v5230 = vsel %vm4732, %v4365, -inf
        %v5231 = vrot.slane %v5230, 4
        %v5232 = vmax.f32 %v5230, %v5231
        %v5233 = vrot.slane %v5232, 2
        %v5234 = vmax.f32 %v5232, %v5233
        %v5235 = vrot.slane %v5234, 1
        %v5236 = vmax.f32 %v5234, %v5235
        %v5237 = vsel %vm4732, %v4373, -inf
        %v5238 = vrot.slane %v5237, 4
        %v5239 = vmax.f32 %v5237, %v5238
        %v5240 = vrot.slane %v5239, 2
        %v5241 = vmax.f32 %v5239, %v5240
        %v5242 = vrot.slane %v5241, 1
        %v5243 = vmax.f32 %v5241, %v5242
        %v5244 = vsel %vm4732, %v4381, -inf
        %v5245 = vrot.slane %v5244, 4
        %v5246 = vmax.f32 %v5244, %v5245
        %v5247 = vrot.slane %v5246, 2
        %v5248 = vmax.f32 %v5246, %v5247
        %v5249 = vrot.slane %v5248, 1
        %v5250 = vmax.f32 %v5248, %v5249
        %v5251 = vsel %vm4732, %v4380, -inf
        %v5252 = vrot.slane %v5251, 4
        %v5253 = vmax.f32 %v5251, %v5252
        %v5254 = vrot.slane %v5253, 2
        %v5255 = vmax.f32 %v5253, %v5254
        %v5256 = vrot.slane %v5255, 1
        %v5257 = vmax.f32 %v5255, %v5256
        %v5258 = vsel %vm4732, %v4382, -inf
        %v5259 = vrot.slane %v5258, 4
        %v5260 = vmax.f32 %v5258, %v5259
        %v5261 = vrot.slane %v5260, 2
        %v5262 = vmax.f32 %v5260, %v5261
        %v5263 = vrot.slane %v5262, 1
        %v5264 = vmax.f32 %v5262, %v5263
        %v5265 = vsel %vm4732, %v4390, -inf
        %v5266 = vrot.slane %v5265, 4
        %v5267 = vmax.f32 %v5265, %v5266
        %v5268 = vrot.slane %v5267, 2
        %v5269 = vmax.f32 %v5267, %v5268
        %v5270 = vrot.slane %v5269, 1
        %v5271 = vmax.f32 %v5269, %v5270
        %v5272 = vsel %vm4732, %v4398, -inf
        %v5273 = vrot.slane %v5272, 4
        %v5274 = vmax.f32 %v5272, %v5273
        %v5275 = vrot.slane %v5274, 2
        %v5276 = vmax.f32 %v5274, %v5275
        %v5277 = vrot.slane %v5276, 1
        %v5278 = vmax.f32 %v5276, %v5277
        %v5279 = vsel %vm4732, %v4397, -inf
        %v5280 = vrot.slane %v5279, 4
        %v5281 = vmax.f32 %v5279, %v5280
        %v5282 = vrot.slane %v5281, 2
        %v5283 = vmax.f32 %v5281, %v5282
        %v5284 = vrot.slane %v5283, 1
        %v5285 = vmax.f32 %v5283, %v5284
        %v5286 = vsel %vm4732, %v4399, -inf
        %v5287 = vrot.slane %v5286, 4
        %v5288 = vmax.f32 %v5286, %v5287
        %v5289 = vrot.slane %v5288, 2
        %v5290 = vmax.f32 %v5288, %v5289
        %v5291 = vrot.slane %v5290, 1
        %v5292 = vmax.f32 %v5290, %v5291
        %v5293 = vsel %vm4732, %v4407, -inf
        %v5294 = vrot.slane %v5293, 4
        %v5295 = vmax.f32 %v5293, %v5294
        %v5296 = vrot.slane %v5295, 2
        %v5297 = vmax.f32 %v5295, %v5296
        %v5298 = vrot.slane %v5297, 1
        %v5299 = vmax.f32 %v5297, %v5298
        %v5300 = vsel %vm4732, %v4415, -inf
        %v5301 = vrot.slane %v5300, 4
        %v5302 = vmax.f32 %v5300, %v5301
        %v5303 = vrot.slane %v5302, 2
        %v5304 = vmax.f32 %v5302, %v5303
        %v5305 = vrot.slane %v5304, 1
        %v5306 = vmax.f32 %v5304, %v5305
        %v5307 = vsel %vm4732, %v4414, -inf
        %v5308 = vrot.slane %v5307, 4
        %v5309 = vmax.f32 %v5307, %v5308
        %v5310 = vrot.slane %v5309, 2
        %v5311 = vmax.f32 %v5309, %v5310
        %v5312 = vrot.slane %v5311, 1
        %v5313 = vmax.f32 %v5311, %v5312
        %v5314 = vsel %vm4732, %v4416, -inf
        %v5315 = vrot.slane %v5314, 4
        %v5316 = vmax.f32 %v5314, %v5315
        %v5317 = vrot.slane %v5316, 2
        %v5318 = vmax.f32 %v5316, %v5317
        %v5319 = vrot.slane %v5318, 1
        %v5320 = vmax.f32 %v5318, %v5319
        %v5321 = vsel %vm4732, %v4424, -inf
        %v5322 = vrot.slane %v5321, 4
        %v5323 = vmax.f32 %v5321, %v5322
        %v5324 = vrot.slane %v5323, 2
        %v5325 = vmax.f32 %v5323, %v5324
        %v5326 = vrot.slane %v5325, 1
        %v5327 = vmax.f32 %v5325, %v5326
        %v5328 = vsel %vm4732, %v4432, -inf
        %v5329 = vrot.slane %v5328, 4
        %v5330 = vmax.f32 %v5328, %v5329
        %v5331 = vrot.slane %v5330, 2
        %v5332 = vmax.f32 %v5330, %v5331
        %v5333 = vrot.slane %v5332, 1
        %v5334 = vmax.f32 %v5332, %v5333
        %v5335 = vsel %vm4732, %v4431, -inf
        %v5336 = vrot.slane %v5335, 4
        %v5337 = vmax.f32 %v5335, %v5336
        %v5338 = vrot.slane %v5337, 2
        %v5339 = vmax.f32 %v5337, %v5338
        %v5340 = vrot.slane %v5339, 1
        %v5341 = vmax.f32 %v5339, %v5340
        %v5342 = vsel %vm4732, %v4433, -inf
        %v5343 = vrot.slane %v5342, 4
        %v5344 = vmax.f32 %v5342, %v5343
        %v5345 = vrot.slane %v5344, 2
        %v5346 = vmax.f32 %v5344, %v5345
        %v5347 = vrot.slane %v5346, 1
        %v5348 = vmax.f32 %v5346, %v5347
        %v5349 = vsel %vm4732, %v4441, -inf
        %v5350 = vrot.slane %v5349, 4
        %v5351 = vmax.f32 %v5349, %v5350
        %v5352 = vrot.slane %v5351, 2
        %v5353 = vmax.f32 %v5351, %v5352
        %v5354 = vrot.slane %v5353, 1
        %v5355 = vmax.f32 %v5353, %v5354
        %v5356 = vsel %vm4732, %v4449, -inf
        %v5357 = vrot.slane %v5356, 4
        %v5358 = vmax.f32 %v5356, %v5357
        %v5359 = vrot.slane %v5358, 2
        %v5360 = vmax.f32 %v5358, %v5359
        %v5361 = vrot.slane %v5360, 1
        %v5362 = vmax.f32 %v5360, %v5361
        %v5363 = vsel %vm4732, %v4448, -inf
        %v5364 = vrot.slane %v5363, 4
        %v5365 = vmax.f32 %v5363, %v5364
        %v5366 = vrot.slane %v5365, 2
        %v5367 = vmax.f32 %v5365, %v5366
        %v5368 = vrot.slane %v5367, 1
        %v5369 = vmax.f32 %v5367, %v5368
        %v5370 = vsel %vm4732, %v4450, -inf
        %v5371 = vrot.slane %v5370, 4
        %v5372 = vmax.f32 %v5370, %v5371
        %v5373 = vrot.slane %v5372, 2
        %v5374 = vmax.f32 %v5372, %v5373
        %v5375 = vrot.slane %v5374, 1
        %v5376 = vmax.f32 %v5374, %v5375
        %v5377 = vsel %vm4732, %v4458, -inf
        %v5378 = vrot.slane %v5377, 4
        %v5379 = vmax.f32 %v5377, %v5378
        %v5380 = vrot.slane %v5379, 2
        %v5381 = vmax.f32 %v5379, %v5380
        %v5382 = vrot.slane %v5381, 1
        %v5383 = vmax.f32 %v5381, %v5382
        %v5384 = vsel %vm4732, %v4466, -inf
        %v5385 = vrot.slane %v5384, 4
        %v5386 = vmax.f32 %v5384, %v5385
        %v5387 = vrot.slane %v5386, 2
        %v5388 = vmax.f32 %v5386, %v5387
        %v5389 = vrot.slane %v5388, 1
        %v5390 = vmax.f32 %v5388, %v5389
        %v5391 = vsel %vm4732, %v4465, -inf
        %v5392 = vrot.slane %v5391, 4
        %v5393 = vmax.f32 %v5391, %v5392
        %v5394 = vrot.slane %v5393, 2
        %v5395 = vmax.f32 %v5393, %v5394
        %v5396 = vrot.slane %v5395, 1
        %v5397 = vmax.f32 %v5395, %v5396
        %v5398 = vsel %vm4732, %v4467, -inf
        %v5399 = vrot.slane %v5398, 4
        %v5400 = vmax.f32 %v5398, %v5399
        %v5401 = vrot.slane %v5400, 2
        %v5402 = vmax.f32 %v5400, %v5401
        %v5403 = vrot.slane %v5402, 1
        %v5404 = vmax.f32 %v5402, %v5403
        %v5405 = vsel %vm4732, %v4475, -inf
        %v5406 = vrot.slane %v5405, 4
        %v5407 = vmax.f32 %v5405, %v5406
        %v5408 = vrot.slane %v5407, 2
        %v5409 = vmax.f32 %v5407, %v5408
        %v5410 = vrot.slane %v5409, 1
        %v5411 = vmax.f32 %v5409, %v5410
        %v5412 = vsel %vm4732, %v4483, -inf
        %v5413 = vrot.slane %v5412, 4
        %v5414 = vmax.f32 %v5412, %v5413
        %v5415 = vrot.slane %v5414, 2
        %v5416 = vmax.f32 %v5414, %v5415
        %v5417 = vrot.slane %v5416, 1
        %v5418 = vmax.f32 %v5416, %v5417
        %v5419 = vsel %vm4732, %v4482, -inf
        %v5420 = vrot.slane %v5419, 4
        %v5421 = vmax.f32 %v5419, %v5420
        %v5422 = vrot.slane %v5421, 2
        %v5423 = vmax.f32 %v5421, %v5422
        %v5424 = vrot.slane %v5423, 1
        %v5425 = vmax.f32 %v5423, %v5424
        %v5426 = vsel %vm4732, %v4484, -inf
        %v5427 = vrot.slane %v5426, 4
        %v5428 = vmax.f32 %v5426, %v5427
        %v5429 = vrot.slane %v5428, 2
        %v5430 = vmax.f32 %v5428, %v5429
        %v5431 = vrot.slane %v5430, 1
        %v5432 = vmax.f32 %v5430, %v5431
        %v5433 = vsel %vm4732, %v4492, -inf
        %v5434 = vrot.slane %v5433, 4
        %v5435 = vmax.f32 %v5433, %v5434
        %v5436 = vrot.slane %v5435, 2
        %v5437 = vmax.f32 %v5435, %v5436
        %v5438 = vrot.slane %v5437, 1
        %v5439 = vmax.f32 %v5437, %v5438
        %v5440 = vsel %vm4732, %v4500, -inf
        %v5441 = vrot.slane %v5440, 4
        %v5442 = vmax.f32 %v5440, %v5441
        %v5443 = vrot.slane %v5442, 2
        %v5444 = vmax.f32 %v5442, %v5443
        %v5445 = vrot.slane %v5444, 1
        %v5446 = vmax.f32 %v5444, %v5445
        %v5447 = vsel %vm4732, %v4499, -inf
        %v5448 = vrot.slane %v5447, 4
        %v5449 = vmax.f32 %v5447, %v5448
        %v5450 = vrot.slane %v5449, 2
        %v5451 = vmax.f32 %v5449, %v5450
        %v5452 = vrot.slane %v5451, 1
        %v5453 = vmax.f32 %v5451, %v5452
        %v5454 = vsel %vm4732, %v4501, -inf
        %v5455 = vrot.slane %v5454, 4
        %v5456 = vmax.f32 %v5454, %v5455
        %v5457 = vrot.slane %v5456, 2
        %v5458 = vmax.f32 %v5456, %v5457
        %v5459 = vrot.slane %v5458, 1
        %v5460 = vmax.f32 %v5458, %v5459
        %v5461 = vsel %vm4732, %v4509, -inf
        %v5462 = vrot.slane %v5461, 4
        %v5463 = vmax.f32 %v5461, %v5462
        %v5464 = vrot.slane %v5463, 2
        %v5465 = vmax.f32 %v5463, %v5464
        %v5466 = vrot.slane %v5465, 1
        %v5467 = vmax.f32 %v5465, %v5466
        %v5468 = vsel %vm4732, %v4517, -inf
        %v5469 = vrot.slane %v5468, 4
        %v5470 = vmax.f32 %v5468, %v5469
        %v5471 = vrot.slane %v5470, 2
        %v5472 = vmax.f32 %v5470, %v5471
        %v5473 = vrot.slane %v5472, 1
        %v5474 = vmax.f32 %v5472, %v5473
        %v5475 = vsel %vm4732, %v4516, -inf
        %v5476 = vrot.slane %v5475, 4
        %v5477 = vmax.f32 %v5475, %v5476
        %v5478 = vrot.slane %v5477, 2
        %v5479 = vmax.f32 %v5477, %v5478
        %v5480 = vrot.slane %v5479, 1
        %v5481 = vmax.f32 %v5479, %v5480
        %v5482 = vsel %vm4732, %v4518, -inf
        %v5483 = vrot.slane %v5482, 4
        %v5484 = vmax.f32 %v5482, %v5483
        %v5485 = vrot.slane %v5484, 2
        %v5486 = vmax.f32 %v5484, %v5485
        %v5487 = vrot.slane %v5486, 1
        %v5488 = vmax.f32 %v5486, %v5487
        %v5489 = vsel %vm4732, %v4526, -inf
        %v5490 = vrot.slane %v5489, 4
        %v5491 = vmax.f32 %v5489, %v5490
        %v5492 = vrot.slane %v5491, 2
        %v5493 = vmax.f32 %v5491, %v5492
        %v5494 = vrot.slane %v5493, 1
        %v5495 = vmax.f32 %v5493, %v5494
        %v5496 = vsel %vm4732, %v4534, -inf
        %v5497 = vrot.slane %v5496, 4
        %v5498 = vmax.f32 %v5496, %v5497
        %v5499 = vrot.slane %v5498, 2
        %v5500 = vmax.f32 %v5498, %v5499
        %v5501 = vrot.slane %v5500, 1
        %v5502 = vmax.f32 %v5500, %v5501
        %v5503 = vsel %vm4732, %v4533, -inf
        %v5504 = vrot.slane %v5503, 4
        %v5505 = vmax.f32 %v5503, %v5504
        %v5506 = vrot.slane %v5505, 2
        %v5507 = vmax.f32 %v5505, %v5506
        %v5508 = vrot.slane %v5507, 1
        %v5509 = vmax.f32 %v5507, %v5508
        %v5510 = vsel %vm4732, %v4535, -inf
        %v5511 = vrot.slane %v5510, 4
        %v5512 = vmax.f32 %v5510, %v5511
        %v5513 = vrot.slane %v5512, 2
        %v5514 = vmax.f32 %v5512, %v5513
        %v5515 = vrot.slane %v5514, 1
        %v5516 = vmax.f32 %v5514, %v5515
        %v5517 = vsel %vm4732, %v4543, -inf
        %v5518 = vrot.slane %v5517, 4
        %v5519 = vmax.f32 %v5517, %v5518
        %v5520 = vrot.slane %v5519, 2
        %v5521 = vmax.f32 %v5519, %v5520
        %v5522 = vrot.slane %v5521, 1
        %v5523 = vmax.f32 %v5521, %v5522
        %v5524 = vsel %vm4732, %v4551, -inf
        %v5525 = vrot.slane %v5524, 4
        %v5526 = vmax.f32 %v5524, %v5525
        %v5527 = vrot.slane %v5526, 2
        %v5528 = vmax.f32 %v5526, %v5527
        %v5529 = vrot.slane %v5528, 1
        %v5530 = vmax.f32 %v5528, %v5529
        %v5531 = vsel %vm4732, %v4550, -inf
        %v5532 = vrot.slane %v5531, 4
        %v5533 = vmax.f32 %v5531, %v5532
        %v5534 = vrot.slane %v5533, 2
        %v5535 = vmax.f32 %v5533, %v5534
        %v5536 = vrot.slane %v5535, 1
        %v5537 = vmax.f32 %v5535, %v5536
        %v5538 = vsel %vm4732, %v4552, -inf
        %v5539 = vrot.slane %v5538, 4
        %v5540 = vmax.f32 %v5538, %v5539
        %v5541 = vrot.slane %v5540, 2
        %v5542 = vmax.f32 %v5540, %v5541
        %v5543 = vrot.slane %v5542, 1
        %v5544 = vmax.f32 %v5542, %v5543
        %v5545 = vsel %vm4732, %v4560, -inf
        %v5546 = vrot.slane %v5545, 4
        %v5547 = vmax.f32 %v5545, %v5546
        %v5548 = vrot.slane %v5547, 2
        %v5549 = vmax.f32 %v5547, %v5548
        %v5550 = vrot.slane %v5549, 1
        %v5551 = vmax.f32 %v5549, %v5550
        %v5552 = vsel %vm4732, %v4568, -inf
        %v5553 = vrot.slane %v5552, 4
        %v5554 = vmax.f32 %v5552, %v5553
        %v5555 = vrot.slane %v5554, 2
        %v5556 = vmax.f32 %v5554, %v5555
        %v5557 = vrot.slane %v5556, 1
        %v5558 = vmax.f32 %v5556, %v5557
        %v5559 = vsel %vm4732, %v4567, -inf
        %v5560 = vrot.slane %v5559, 4
        %v5561 = vmax.f32 %v5559, %v5560
        %v5562 = vrot.slane %v5561, 2
        %v5563 = vmax.f32 %v5561, %v5562
        %v5564 = vrot.slane %v5563, 1
        %v5565 = vmax.f32 %v5563, %v5564
        %v5566 = vsel %vm4732, %v4569, -inf
        %v5567 = vrot.slane %v5566, 4
        %v5568 = vmax.f32 %v5566, %v5567
        %v5569 = vrot.slane %v5568, 2
        %v5570 = vmax.f32 %v5568, %v5569
        %v5571 = vrot.slane %v5570, 1
        %v5572 = vmax.f32 %v5570, %v5571
        %v5573 = vsel %vm4732, %v4577, -inf
        %v5574 = vrot.slane %v5573, 4
        %v5575 = vmax.f32 %v5573, %v5574
        %v5576 = vrot.slane %v5575, 2
        %v5577 = vmax.f32 %v5575, %v5576
        %v5578 = vrot.slane %v5577, 1
        %v5579 = vmax.f32 %v5577, %v5578
        %v5580 = vsel %vm4732, %v4585, -inf
        %v5581 = vrot.slane %v5580, 4
        %v5582 = vmax.f32 %v5580, %v5581
        %v5583 = vrot.slane %v5582, 2
        %v5584 = vmax.f32 %v5582, %v5583
        %v5585 = vrot.slane %v5584, 1
        %v5586 = vmax.f32 %v5584, %v5585
        %v5587 = vsel %vm4732, %v4584, -inf
        %v5588 = vrot.slane %v5587, 4
        %v5589 = vmax.f32 %v5587, %v5588
        %v5590 = vrot.slane %v5589, 2
        %v5591 = vmax.f32 %v5589, %v5590
        %v5592 = vrot.slane %v5591, 1
        %v5593 = vmax.f32 %v5591, %v5592
        %v5594 = vsel %vm4732, %v4586, -inf
        %v5595 = vrot.slane %v5594, 4
        %v5596 = vmax.f32 %v5594, %v5595
        %v5597 = vrot.slane %v5596, 2
        %v5598 = vmax.f32 %v5596, %v5597
        %v5599 = vrot.slane %v5598, 1
        %v5600 = vmax.f32 %v5598, %v5599
        %v5601 = vsel %vm4732, %v4594, -inf
        %v5602 = vrot.slane %v5601, 4
        %v5603 = vmax.f32 %v5601, %v5602
        %v5604 = vrot.slane %v5603, 2
        %v5605 = vmax.f32 %v5603, %v5604
        %v5606 = vrot.slane %v5605, 1
        %v5607 = vmax.f32 %v5605, %v5606
        %v5608 = vsel %vm4732, %v4602, -inf
        %v5609 = vrot.slane %v5608, 4
        %v5610 = vmax.f32 %v5608, %v5609
        %v5611 = vrot.slane %v5610, 2
        %v5612 = vmax.f32 %v5610, %v5611
        %v5613 = vrot.slane %v5612, 1
        %v5614 = vmax.f32 %v5612, %v5613
        %v5615 = vsel %vm4732, %v4601, -inf
        %v5616 = vrot.slane %v5615, 4
        %v5617 = vmax.f32 %v5615, %v5616
        %v5618 = vrot.slane %v5617, 2
        %v5619 = vmax.f32 %v5617, %v5618
        %v5620 = vrot.slane %v5619, 1
        %v5621 = vmax.f32 %v5619, %v5620
        %v5622 = vsel %vm4732, %v4603, -inf
        %v5623 = vrot.slane %v5622, 4
        %v5624 = vmax.f32 %v5622, %v5623
        %v5625 = vrot.slane %v5624, 2
        %v5626 = vmax.f32 %v5624, %v5625
        %v5627 = vrot.slane %v5626, 1
        %v5628 = vmax.f32 %v5626, %v5627
        %vm5629 = vcmask 523264
        %v5630 = vsel %vm5629, %v4739, -inf
        %v5631 = vsel %vm5629, %v4795, -inf
        %v5632 = vmax.f32 %v5630, %v5631
        %v5633 = vsel %vm5629, %v4746, -inf
        %v5634 = vsel %vm5629, %v4802, -inf
        %v5635 = vmax.f32 %v5633, %v5634
        %v5636 = vsel %vm5629, %v4753, -inf
        %v5637 = vsel %vm5629, %v4809, -inf
        %v5638 = vmax.f32 %v5636, %v5637
        %v5639 = vsel %vm5629, %v4760, -inf
        %v5640 = vsel %vm5629, %v4816, -inf
        %v5641 = vmax.f32 %v5639, %v5640
        %v5642 = vsel %vm5629, %v4767, -inf
        %v5643 = vsel %vm5629, %v4823, -inf
        %v5644 = vmax.f32 %v5642, %v5643
        %v5645 = vsel %vm5629, %v4774, -inf
        %v5646 = vsel %vm5629, %v4830, -inf
        %v5647 = vmax.f32 %v5645, %v5646
        %v5648 = vsel %vm5629, %v4781, -inf
        %v5649 = vsel %vm5629, %v4837, -inf
        %v5650 = vmax.f32 %v5648, %v5649
        %v5651 = vsel %vm5629, %v4788, -inf
        %v5652 = vsel %vm5629, %v4844, -inf
        %v5653 = vmax.f32 %v5651, %v5652
        %v5654 = vsel %vm5629, %v4851, -inf
        %v5655 = vsel %vm5629, %v4907, -inf
        %v5656 = vmax.f32 %v5654, %v5655
        %v5657 = vsel %vm5629, %v4858, -inf
        %v5658 = vsel %vm5629, %v4914, -inf
        %v5659 = vmax.f32 %v5657, %v5658
        %v5660 = vsel %vm5629, %v4865, -inf
        %v5661 = vsel %vm5629, %v4921, -inf
        %v5662 = vmax.f32 %v5660, %v5661
        %v5663 = vsel %vm5629, %v4872, -inf
        %v5664 = vsel %vm5629, %v4928, -inf
        %v5665 = vmax.f32 %v5663, %v5664
        %v5666 = vsel %vm5629, %v4879, -inf
        %v5667 = vsel %vm5629, %v4935, -inf
        %v5668 = vmax.f32 %v5666, %v5667
        %v5669 = vsel %vm5629, %v4886, -inf
        %v5670 = vsel %vm5629, %v4942, -inf
        %v5671 = vmax.f32 %v5669, %v5670
        %v5672 = vsel %vm5629, %v4893, -inf
        %v5673 = vsel %vm5629, %v4949, -inf
        %v5674 = vmax.f32 %v5672, %v5673
        %v5675 = vsel %vm5629, %v4900, -inf
        %v5676 = vsel %vm5629, %v4956, -inf
        %v5677 = vmax.f32 %v5675, %v5676
        %v5678 = vsel %vm5629, %v4963, -inf
        %v5679 = vsel %vm5629, %v5019, -inf
        %v5680 = vmax.f32 %v5678, %v5679
        %v5681 = vsel %vm5629, %v4970, -inf
        %v5682 = vsel %vm5629, %v5026, -inf
        %v5683 = vmax.f32 %v5681, %v5682
        %v5684 = vsel %vm5629, %v4977, -inf
        %v5685 = vsel %vm5629, %v5033, -inf
        %v5686 = vmax.f32 %v5684, %v5685
        %v5687 = vsel %vm5629, %v4984, -inf
        %v5688 = vsel %vm5629, %v5040, -inf
        %v5689 = vmax.f32 %v5687, %v5688
        %v5690 = vsel %vm5629, %v4991, -inf
        %v5691 = vsel %vm5629, %v5047, -inf
        %v5692 = vmax.f32 %v5690, %v5691
        %v5693 = vsel %vm5629, %v4998, -inf
        %v5694 = vsel %vm5629, %v5054, -inf
        %v5695 = vmax.f32 %v5693, %v5694
        %v5696 = vsel %vm5629, %v5005, -inf
        %v5697 = vsel %vm5629, %v5061, -inf
        %v5698 = vmax.f32 %v5696, %v5697
        %v5699 = vsel %vm5629, %v5012, -inf
        %v5700 = vsel %vm5629, %v5068, -inf
        %v5701 = vmax.f32 %v5699, %v5700
        %v5702 = vsel %vm5629, %v5075, -inf
        %v5703 = vsel %vm5629, %v5131, -inf
        %v5704 = vmax.f32 %v5702, %v5703
        %v5705 = vsel %vm5629, %v5082, -inf
        %v5706 = vsel %vm5629, %v5138, -inf
        %v5707 = vmax.f32 %v5705, %v5706
        %v5708 = vsel %vm5629, %v5089, -inf
        %v5709 = vsel %vm5629, %v5145, -inf
        %v5710 = vmax.f32 %v5708, %v5709
        %v5711 = vsel %vm5629, %v5096, -inf
        %v5712 = vsel %vm5629, %v5152, -inf
        %v5713 = vmax.f32 %v5711, %v5712
        %v5714 = vsel %vm5629, %v5103, -inf
        %v5715 = vsel %vm5629, %v5159, -inf
        %v5716 = vmax.f32 %v5714, %v5715
        %v5717 = vsel %vm5629, %v5110, -inf
        %v5718 = vsel %vm5629, %v5166, -inf
        %v5719 = vmax.f32 %v5717, %v5718
        %v5720 = vsel %vm5629, %v5117, -inf
        %v5721 = vsel %vm5629, %v5173, -inf
        %v5722 = vmax.f32 %v5720, %v5721
        %v5723 = vsel %vm5629, %v5124, -inf
        %v5724 = vsel %vm5629, %v5180, -inf
        %v5725 = vmax.f32 %v5723, %v5724
        %v5726 = vsel %vm5629, %v5187, -inf
        %v5727 = vsel %vm5629, %v5243, -inf
        %v5728 = vmax.f32 %v5726, %v5727
        %v5729 = vsel %vm5629, %v5194, -inf
        %v5730 = vsel %vm5629, %v5250, -inf
        %v5731 = vmax.f32 %v5729, %v5730
        %v5732 = vsel %vm5629, %v5201, -inf
        %v5733 = vsel %vm5629, %v5257, -inf
        %v5734 = vmax.f32 %v5732, %v5733
        %v5735 = vsel %vm5629, %v5208, -inf
        %v5736 = vsel %vm5629, %v5264, -inf
        %v5737 = vmax.f32 %v5735, %v5736
        %v5738 = vsel %vm5629, %v5215, -inf
        %v5739 = vsel %vm5629, %v5271, -inf
        %v5740 = vmax.f32 %v5738, %v5739
        %v5741 = vsel %vm5629, %v5222, -inf
        %v5742 = vsel %vm5629, %v5278, -inf
        %v5743 = vmax.f32 %v5741, %v5742
        %v5744 = vsel %vm5629, %v5229, -inf
        %v5745 = vsel %vm5629, %v5285, -inf
        %v5746 = vmax.f32 %v5744, %v5745
        %v5747 = vsel %vm5629, %v5236, -inf
        %v5748 = vsel %vm5629, %v5292, -inf
        %v5749 = vmax.f32 %v5747, %v5748
        %v5750 = vsel %vm5629, %v5299, -inf
        %v5751 = vsel %vm5629, %v5355, -inf
        %v5752 = vmax.f32 %v5750, %v5751
        %v5753 = vsel %vm5629, %v5306, -inf
        %v5754 = vsel %vm5629, %v5362, -inf
        %v5755 = vmax.f32 %v5753, %v5754
        %v5756 = vsel %vm5629, %v5313, -inf
        %v5757 = vsel %vm5629, %v5369, -inf
        %v5758 = vmax.f32 %v5756, %v5757
        %v5759 = vsel %vm5629, %v5320, -inf
        %v5760 = vsel %vm5629, %v5376, -inf
        %v5761 = vmax.f32 %v5759, %v5760
        %v5762 = vsel %vm5629, %v5327, -inf
        %v5763 = vsel %vm5629, %v5383, -inf
        %v5764 = vmax.f32 %v5762, %v5763
        %v5765 = vsel %vm5629, %v5334, -inf
        %v5766 = vsel %vm5629, %v5390, -inf
        %v5767 = vmax.f32 %v5765, %v5766
        %v5768 = vsel %vm5629, %v5341, -inf
        %v5769 = vsel %vm5629, %v5397, -inf
        %v5770 = vmax.f32 %v5768, %v5769
        %v5771 = vsel %vm5629, %v5348, -inf
        %v5772 = vsel %vm5629, %v5404, -inf
        %v5773 = vmax.f32 %v5771, %v5772
        %v5774 = vsel %vm5629, %v5411, -inf
        %v5775 = vsel %vm5629, %v5467, -inf
        %v5776 = vmax.f32 %v5774, %v5775
        %v5777 = vsel %vm5629, %v5418, -inf
        %v5778 = vsel %vm5629, %v5474, -inf
        %v5779 = vmax.f32 %v5777, %v5778
        %v5780 = vsel %vm5629, %v5425, -inf
        %v5781 = vsel %vm5629, %v5481, -inf
        %v5782 = vmax.f32 %v5780, %v5781
        %v5783 = vsel %vm5629, %v5432, -inf
        %v5784 = vsel %vm5629, %v5488, -inf
        %v5785 = vmax.f32 %v5783, %v5784
        %v5786 = vsel %vm5629, %v5439, -inf
        %v5787 = vsel %vm5629, %v5495, -inf
        %v5788 = vmax.f32 %v5786, %v5787
        %v5789 = vsel %vm5629, %v5446, -inf
        %v5790 = vsel %vm5629, %v5502, -inf
        %v5791 = vmax.f32 %v5789, %v5790
        %v5792 = vsel %vm5629, %v5453, -inf
        %v5793 = vsel %vm5629, %v5509, -inf
        %v5794 = vmax.f32 %v5792, %v5793
        %v5795 = vsel %vm5629, %v5460, -inf
        %v5796 = vsel %vm5629, %v5516, -inf
        %v5797 = vmax.f32 %v5795, %v5796
        %v5798 = vsel %vm5629, %v5523, -inf
        %v5799 = vsel %vm5629, %v5579, -inf
        %v5800 = vmax.f32 %v5798, %v5799
        %v5801 = vsel %vm5629, %v5530, -inf
        %v5802 = vsel %vm5629, %v5586, -inf
        %v5803 = vmax.f32 %v5801, %v5802
        %v5804 = vsel %vm5629, %v5537, -inf
        %v5805 = vsel %vm5629, %v5593, -inf
        %v5806 = vmax.f32 %v5804, %v5805
        %v5807 = vsel %vm5629, %v5544, -inf
        %v5808 = vsel %vm5629, %v5600, -inf
        %v5809 = vmax.f32 %v5807, %v5808
        %v5810 = vsel %vm5629, %v5551, -inf
        %v5811 = vsel %vm5629, %v5607, -inf
        %v5812 = vmax.f32 %v5810, %v5811
        %v5813 = vsel %vm5629, %v5558, -inf
        %v5814 = vsel %vm5629, %v5614, -inf
        %v5815 = vmax.f32 %v5813, %v5814
        %v5816 = vsel %vm5629, %v5565, -inf
        %v5817 = vsel %vm5629, %v5621, -inf
        %v5818 = vmax.f32 %v5816, %v5817
        %v5819 = vsel %vm5629, %v5572, -inf
        %v5820 = vsel %vm5629, %v5628, -inf
        %v5821 = vmax.f32 %v5819, %v5820
        %v5822 = vpack.c.bf16 %v5632, %v5632
        %v5823 = vpack.c.bf16 %v5635, %v5635
        %v5824 = vpack.c.bf16 %v5638, %v5638
        %v5825 = vpack.c.bf16 %v5641, %v5641
        %v5826 = vpack.c.bf16 %v5644, %v5644
        %v5827 = vpack.c.bf16 %v5647, %v5647
        %v5828 = vpack.c.bf16 %v5650, %v5650
        %v5829 = vpack.c.bf16 %v5653, %v5653
        %v5830 = vpack.c.bf16 %v5656, %v5656
        %v5831 = vpack.c.bf16 %v5659, %v5659
        %v5832 = vpack.c.bf16 %v5662, %v5662
        %v5833 = vpack.c.bf16 %v5665, %v5665
        %v5834 = vpack.c.bf16 %v5668, %v5668
        %v5835 = vpack.c.bf16 %v5671, %v5671
        %v5836 = vpack.c.bf16 %v5674, %v5674
        %v5837 = vpack.c.bf16 %v5677, %v5677
        %v5838 = vpack.c.bf16 %v5680, %v5680
        %v5839 = vpack.c.bf16 %v5683, %v5683
        %v5840 = vpack.c.bf16 %v5686, %v5686
        %v5841 = vpack.c.bf16 %v5689, %v5689
        %v5842 = vpack.c.bf16 %v5692, %v5692
        %v5843 = vpack.c.bf16 %v5695, %v5695
        %v5844 = vpack.c.bf16 %v5698, %v5698
        %v5845 = vpack.c.bf16 %v5701, %v5701
        %v5846 = vpack.c.bf16 %v5704, %v5704
        %v5847 = vpack.c.bf16 %v5707, %v5707
        %v5848 = vpack.c.bf16 %v5710, %v5710
        %v5849 = vpack.c.bf16 %v5713, %v5713
        %v5850 = vpack.c.bf16 %v5716, %v5716
        %v5851 = vpack.c.bf16 %v5719, %v5719
        %v5852 = vpack.c.bf16 %v5722, %v5722
        %v5853 = vpack.c.bf16 %v5725, %v5725
        %v5854 = vpack.c.bf16 %v5728, %v5728
        %v5855 = vpack.c.bf16 %v5731, %v5731
        %v5856 = vpack.c.bf16 %v5734, %v5734
        %v5857 = vpack.c.bf16 %v5737, %v5737
        %v5858 = vpack.c.bf16 %v5740, %v5740
        %v5859 = vpack.c.bf16 %v5743, %v5743
        %v5860 = vpack.c.bf16 %v5746, %v5746
        %v5861 = vpack.c.bf16 %v5749, %v5749
        %v5862 = vpack.c.bf16 %v5752, %v5752
        %v5863 = vpack.c.bf16 %v5755, %v5755
        %v5864 = vpack.c.bf16 %v5758, %v5758
        %v5865 = vpack.c.bf16 %v5761, %v5761
        %v5866 = vpack.c.bf16 %v5764, %v5764
        %v5867 = vpack.c.bf16 %v5767, %v5767
        %v5868 = vpack.c.bf16 %v5770, %v5770
        %v5869 = vpack.c.bf16 %v5773, %v5773
        %v5870 = vpack.c.bf16 %v5776, %v5776
        %v5871 = vpack.c.bf16 %v5779, %v5779
        %v5872 = vpack.c.bf16 %v5782, %v5782
        %v5873 = vpack.c.bf16 %v5785, %v5785
        %v5874 = vpack.c.bf16 %v5788, %v5788
        %v5875 = vpack.c.bf16 %v5791, %v5791
        %v5876 = vpack.c.bf16 %v5794, %v5794
        %v5877 = vpack.c.bf16 %v5797, %v5797
        %v5878 = vpack.c.bf16 %v5800, %v5800
        %v5879 = vpack.c.bf16 %v5803, %v5803
        %v5880 = vpack.c.bf16 %v5806, %v5806
        %v5881 = vpack.c.bf16 %v5809, %v5809
        %v5882 = vpack.c.bf16 %v5812, %v5812
        %v5883 = vpack.c.bf16 %v5815, %v5815
        %v5884 = vpack.c.bf16 %v5818, %v5818
        %v5885 = vpack.c.bf16 %v5821, %v5821
        %vm5886 = vcmask 519168
        %5887 = vst.msk [vmem:[#allocation3] sm:$0xf] %vm5886, 0
        %vm5888 = vcmask 516096
        %5889 = vst.msk [vmem:[#allocation3 + $0x4] sm:$0x1] %vm5888, 0
        %s5890 = scalar_lea.vmem [#allocation3], 72
        %5891 = vst.msk [vmem:[%s5890] sm:$0xf] %vm5886, 0
        %5892 = vst.msk [vmem:[%s5890 + $0x4] sm:$0x1] %vm5888, 0
        %s5893 = scalar_lea.vmem [#allocation3], 8
        %vm5894 = vcmask 516096
        %vm5895 = vmand %vm5894, %vm390
        %v5896 = vld [vmem:[%s5893] sm:$0x1]
        %v5897 = vsel %vm5895, 0, %v5896
        %5898 = vst [vmem:[%s5893] sm:$0x1] %v5897
        %v5899 = vld [vmem:[%s5893 + $0x8] sm:$0x1]
        %v5900 = vsel %vm5895, 0, %v5899
        %5901 = vst [vmem:[%s5893 + $0x8] sm:$0x1] %v5900
        %v5902 = vld [vmem:[%s5893 + $0x10] sm:$0x1]
        %v5903 = vsel %vm5895, 0, %v5902
        %5904 = vst [vmem:[%s5893 + $0x10] sm:$0x1] %v5903
        %v5905 = vld [vmem:[%s5893 + $0x18] sm:$0x1]
        %v5906 = vsel %vm5895, 0, %v5905
        %5907 = vst [vmem:[%s5893 + $0x18] sm:$0x1] %v5906
        %v5908 = vld [vmem:[%s5893 + $0x20] sm:$0x1]
        %v5909 = vsel %vm5895, 0, %v5908
        %5910 = vst [vmem:[%s5893 + $0x20] sm:$0x1] %v5909
        %v5911 = vld [vmem:[%s5893 + $0x28] sm:$0x1]
        %v5912 = vsel %vm5895, 0, %v5911
        %5913 = vst [vmem:[%s5893 + $0x28] sm:$0x1] %v5912
        %v5914 = vld [vmem:[%s5893 + $0x30] sm:$0x1]
        %v5915 = vsel %vm5895, 0, %v5914
        %5916 = vst [vmem:[%s5893 + $0x30] sm:$0x1] %v5915
        %v5917 = vld [vmem:[%s5893 + $0x38] sm:$0x1]
        %v5918 = vsel %vm5895, 0, %v5917
        %5919 = vst [vmem:[%s5893 + $0x38] sm:$0x1] %v5918
        %vm5920 = vmand %vm5894, %vm440
        %v5921 = vld [vmem:[%s5893 + $0x4] sm:$0x1]
        %v5922 = vsel %vm5920, 0, %v5921
        %5923 = vst [vmem:[%s5893 + $0x4] sm:$0x1] %v5922
        %v5924 = vld [vmem:[%s5893 + $0xc] sm:$0x1]
        %v5925 = vsel %vm5920, 0, %v5924
        %5926 = vst [vmem:[%s5893 + $0xc] sm:$0x1] %v5925
        %v5927 = vld [vmem:[%s5893 + $0x14] sm:$0x1]
        %v5928 = vsel %vm5920, 0, %v5927
        %5929 = vst [vmem:[%s5893 + $0x14] sm:$0x1] %v5928
        %v5930 = vld [vmem:[%s5893 + $0x1c] sm:$0x1]
        %v5931 = vsel %vm5920, 0, %v5930
        %5932 = vst [vmem:[%s5893 + $0x1c] sm:$0x1] %v5931
        %v5933 = vld [vmem:[%s5893 + $0x24] sm:$0x1]
        %v5934 = vsel %vm5920, 0, %v5933
        %5935 = vst [vmem:[%s5893 + $0x24] sm:$0x1] %v5934
        %v5936 = vld [vmem:[%s5893 + $0x2c] sm:$0x1]
        %v5937 = vsel %vm5920, 0, %v5936
        %5938 = vst [vmem:[%s5893 + $0x2c] sm:$0x1] %v5937
        %v5939 = vld [vmem:[%s5893 + $0x34] sm:$0x1]
        %v5940 = vsel %vm5920, 0, %v5939
        %5941 = vst [vmem:[%s5893 + $0x34] sm:$0x1] %v5940
        %v5942 = vld [vmem:[%s5893 + $0x3c] sm:$0x1]
        %v5943 = vsel %vm5920, 0, %v5942
        %5944 = vst [vmem:[%s5893 + $0x3c] sm:$0x1] %v5943
        %v6009 = vunpack.c.l.b16 %v5822
        %v6010 = vunpack.c.l.b16 %v5823
        %v6011 = vunpack.c.l.b16 %v5824
        %v6012 = vunpack.c.l.b16 %v5825
        %v6013 = vunpack.c.l.b16 %v5826
        %v6014 = vunpack.c.l.b16 %v5827
        %v6015 = vunpack.c.l.b16 %v5828
        %v6016 = vunpack.c.l.b16 %v5829
        %v6017 = vunpack.c.l.b16 %v5830
        %v6018 = vunpack.c.l.b16 %v5831
        %v6019 = vunpack.c.l.b16 %v5832
        %v6020 = vunpack.c.l.b16 %v5833
        %v6021 = vunpack.c.l.b16 %v5834
        %v6022 = vunpack.c.l.b16 %v5835
        %v6023 = vunpack.c.l.b16 %v5836
        %v6024 = vunpack.c.l.b16 %v5837
        %v6025 = vunpack.c.l.b16 %v5838
        %v6026 = vunpack.c.l.b16 %v5839
        %v6027 = vunpack.c.l.b16 %v5840
        %v6028 = vunpack.c.l.b16 %v5841
        %v6029 = vunpack.c.l.b16 %v5842
        %v6030 = vunpack.c.l.b16 %v5843
        %v6031 = vunpack.c.l.b16 %v5844
        %v6032 = vunpack.c.l.b16 %v5845
        %v6033 = vunpack.c.l.b16 %v5846
        %v6034 = vunpack.c.l.b16 %v5847
        %v6035 = vunpack.c.l.b16 %v5848
        %v6036 = vunpack.c.l.b16 %v5849
        %v6037 = vunpack.c.l.b16 %v5850
        %v6038 = vunpack.c.l.b16 %v5851
        %v6039 = vunpack.c.l.b16 %v5852
        %v6040 = vunpack.c.l.b16 %v5853
        %v6041 = vunpack.c.l.b16 %v5854
        %v6042 = vunpack.c.l.b16 %v5855
        %v6043 = vunpack.c.l.b16 %v5856
        %v6044 = vunpack.c.l.b16 %v5857
        %v6045 = vunpack.c.l.b16 %v5858
        %v6046 = vunpack.c.l.b16 %v5859
        %v6047 = vunpack.c.l.b16 %v5860
        %v6048 = vunpack.c.l.b16 %v5861
        %v6049 = vunpack.c.l.b16 %v5862
        %v6050 = vunpack.c.l.b16 %v5863
        %v6051 = vunpack.c.l.b16 %v5864
        %v6052 = vunpack.c.l.b16 %v5865
        %v6053 = vunpack.c.l.b16 %v5866
        %v6054 = vunpack.c.l.b16 %v5867
        %v6055 = vunpack.c.l.b16 %v5868
        %v6056 = vunpack.c.l.b16 %v5869
        %v6057 = vunpack.c.l.b16 %v5870
        %v6058 = vunpack.c.l.b16 %v5871
        %v6059 = vunpack.c.l.b16 %v5872
        %v6060 = vunpack.c.l.b16 %v5873
        %v6061 = vunpack.c.l.b16 %v5874
        %v6062 = vunpack.c.l.b16 %v5875
        %v6063 = vunpack.c.l.b16 %v5876
        %v6064 = vunpack.c.l.b16 %v5877
        %v6065 = vunpack.c.l.b16 %v5878
        %v6066 = vunpack.c.l.b16 %v5879
        %v6067 = vunpack.c.l.b16 %v5880
        %v6068 = vunpack.c.l.b16 %v5881
        %v6069 = vunpack.c.l.b16 %v5882
        %v6070 = vunpack.c.l.b16 %v5883
        %v6071 = vunpack.c.l.b16 %v5884
        %v6072 = vunpack.c.l.b16 %v5885
        %v6073 = vpack.c.b16 %v6009, %v6009
        %v6074 = vpack.c.b16 %v6010, %v6010
        %v6075 = vpack.c.b16 %v6011, %v6011
        %v6076 = vpack.c.b16 %v6012, %v6012
        %v6077 = vpack.c.b16 %v6013, %v6013
        %v6078 = vpack.c.b16 %v6014, %v6014
        %v6079 = vpack.c.b16 %v6015, %v6015
        %v6080 = vpack.c.b16 %v6016, %v6016
        %v6081 = vpack.c.b16 %v6017, %v6017
        %v6082 = vpack.c.b16 %v6018, %v6018
        %v6083 = vpack.c.b16 %v6019, %v6019
        %v6084 = vpack.c.b16 %v6020, %v6020
        %v6085 = vpack.c.b16 %v6021, %v6021
        %v6086 = vpack.c.b16 %v6022, %v6022
        %v6087 = vpack.c.b16 %v6023, %v6023
        %v6088 = vpack.c.b16 %v6024, %v6024
        %v6089 = vpack.c.b16 %v6025, %v6025
        %v6090 = vpack.c.b16 %v6026, %v6026
        %v6091 = vpack.c.b16 %v6027, %v6027
        %v6092 = vpack.c.b16 %v6028, %v6028
        %v6093 = vpack.c.b16 %v6029, %v6029
        %v6094 = vpack.c.b16 %v6030, %v6030
        %v6095 = vpack.c.b16 %v6031, %v6031
        %v6096 = vpack.c.b16 %v6032, %v6032
        %v6097 = vpack.c.b16 %v6033, %v6033
        %v6098 = vpack.c.b16 %v6034, %v6034
        %v6099 = vpack.c.b16 %v6035, %v6035
        %v6100 = vpack.c.b16 %v6036, %v6036
        %v6101 = vpack.c.b16 %v6037, %v6037
        %v6102 = vpack.c.b16 %v6038, %v6038
        %v6103 = vpack.c.b16 %v6039, %v6039
        %v6104 = vpack.c.b16 %v6040, %v6040
        %v6105 = vpack.c.b16 %v6041, %v6041
        %v6106 = vpack.c.b16 %v6042, %v6042
        %v6107 = vpack.c.b16 %v6043, %v6043
        %v6108 = vpack.c.b16 %v6044, %v6044
        %v6109 = vpack.c.b16 %v6045, %v6045
        %v6110 = vpack.c.b16 %v6046, %v6046
        %v6111 = vpack.c.b16 %v6047, %v6047
        %v6112 = vpack.c.b16 %v6048, %v6048
        %v6113 = vpack.c.b16 %v6049, %v6049
        %v6114 = vpack.c.b16 %v6050, %v6050
        %v6115 = vpack.c.b16 %v6051, %v6051
        %v6116 = vpack.c.b16 %v6052, %v6052
        %v6117 = vpack.c.b16 %v6053, %v6053
        %v6118 = vpack.c.b16 %v6054, %v6054
        %v6119 = vpack.c.b16 %v6055, %v6055
        %v6120 = vpack.c.b16 %v6056, %v6056
        %v6121 = vpack.c.b16 %v6057, %v6057
        %v6122 = vpack.c.b16 %v6058, %v6058
        %v6123 = vpack.c.b16 %v6059, %v6059
        %v6124 = vpack.c.b16 %v6060, %v6060
        %v6125 = vpack.c.b16 %v6061, %v6061
        %v6126 = vpack.c.b16 %v6062, %v6062
        %v6127 = vpack.c.b16 %v6063, %v6063
        %v6128 = vpack.c.b16 %v6064, %v6064
        %v6129 = vpack.c.b16 %v6065, %v6065
        %v6130 = vpack.c.b16 %v6066, %v6066
        %v6131 = vpack.c.b16 %v6067, %v6067
        %v6132 = vpack.c.b16 %v6068, %v6068
        %v6133 = vpack.c.b16 %v6069, %v6069
        %v6134 = vpack.c.b16 %v6070, %v6070
        %v6135 = vpack.c.b16 %v6071, %v6071
        %v6136 = vpack.c.b16 %v6072, %v6072
        %v6137 = vunpack.c.l.b16 %v6073
        %v6138 = vunpack.c.l.b16 %v6074
        %v6139 = vunpack.c.l.b16 %v6075
        %v6140 = vunpack.c.l.b16 %v6076
        %v6141 = vunpack.c.l.b16 %v6077
        %v6142 = vunpack.c.l.b16 %v6078
        %v6143 = vunpack.c.l.b16 %v6079
        %v6144 = vunpack.c.l.b16 %v6080
        %v6145 = vunpack.c.l.b16 %v6081
        %v6146 = vunpack.c.l.b16 %v6082
        %v6147 = vunpack.c.l.b16 %v6083
        %v6148 = vunpack.c.l.b16 %v6084
        %v6149 = vunpack.c.l.b16 %v6085
        %v6150 = vunpack.c.l.b16 %v6086
        %v6151 = vunpack.c.l.b16 %v6087
        %v6152 = vunpack.c.l.b16 %v6088
        %v6153 = vunpack.c.l.b16 %v6089
        %v6154 = vunpack.c.l.b16 %v6090
        %v6155 = vunpack.c.l.b16 %v6091
        %v6156 = vunpack.c.l.b16 %v6092
        %v6157 = vunpack.c.l.b16 %v6093
        %v6158 = vunpack.c.l.b16 %v6094
        %v6159 = vunpack.c.l.b16 %v6095
        %v6160 = vunpack.c.l.b16 %v6096
        %v6161 = vunpack.c.l.b16 %v6097
        %v6162 = vunpack.c.l.b16 %v6098
        %v6163 = vunpack.c.l.b16 %v6099
        %v6164 = vunpack.c.l.b16 %v6100
        %v6165 = vunpack.c.l.b16 %v6101
        %v6166 = vunpack.c.l.b16 %v6102
        %v6167 = vunpack.c.l.b16 %v6103
        %v6168 = vunpack.c.l.b16 %v6104
        %v6169 = vunpack.c.l.b16 %v6105
        %v6170 = vunpack.c.l.b16 %v6106
        %v6171 = vunpack.c.l.b16 %v6107
        %v6172 = vunpack.c.l.b16 %v6108
        %v6173 = vunpack.c.l.b16 %v6109
        %v6174 = vunpack.c.l.b16 %v6110
        %v6175 = vunpack.c.l.b16 %v6111
        %v6176 = vunpack.c.l.b16 %v6112
        %v6177 = vunpack.c.l.b16 %v6113
        %v6178 = vunpack.c.l.b16 %v6114
        %v6179 = vunpack.c.l.b16 %v6115
        %v6180 = vunpack.c.l.b16 %v6116
        %v6181 = vunpack.c.l.b16 %v6117
        %v6182 = vunpack.c.l.b16 %v6118
        %v6183 = vunpack.c.l.b16 %v6119
        %v6184 = vunpack.c.l.b16 %v6120
        %v6185 = vunpack.c.l.b16 %v6121
        %v6186 = vunpack.c.l.b16 %v6122
        %v6187 = vunpack.c.l.b16 %v6123
        %v6188 = vunpack.c.l.b16 %v6124
        %v6189 = vunpack.c.l.b16 %v6125
        %v6190 = vunpack.c.l.b16 %v6126
        %v6191 = vunpack.c.l.b16 %v6127
        %v6192 = vunpack.c.l.b16 %v6128
        %v6193 = vunpack.c.l.b16 %v6129
        %v6194 = vunpack.c.l.b16 %v6130
        %v6195 = vunpack.c.l.b16 %v6131
        %v6196 = vunpack.c.l.b16 %v6132
        %v6197 = vunpack.c.l.b16 %v6133
        %v6198 = vunpack.c.l.b16 %v6134
        %v6199 = vunpack.c.l.b16 %v6135
        %v6200 = vunpack.c.l.b16 %v6136
        %vm6201 = vcmask 1042434
        %v6202 = vsel %vm6201, %v6138, %v6137
        %vm6203 = vcmask 1043459
        %v6204 = vsel %vm6203, %v6139, %v6202
        %vm6205 = vcmask 1044484
        %v6206 = vsel %vm6205, %v6140, %v6204
        %vm6207 = vcmask 1045509
        %v6208 = vsel %vm6207, %v6141, %v6206
        %vm6209 = vcmask 1046534
        %v6210 = vsel %vm6209, %v6142, %v6208
        %vm6211 = vcmask 1047559
        %v6212 = vsel %vm6211, %v6143, %v6210
        %v6213 = vsel %vm6201, %v6146, %v6145
        %v6214 = vsel %vm6203, %v6147, %v6213
        %v6215 = vsel %vm6205, %v6148, %v6214
        %v6216 = vsel %vm6207, %v6149, %v6215
        %v6217 = vsel %vm6209, %v6150, %v6216
        %v6218 = vsel %vm6211, %v6151, %v6217
        %v6219 = vsel %vm6201, %v6154, %v6153
        %v6220 = vsel %vm6203, %v6155, %v6219
        %v6221 = vsel %vm6205, %v6156, %v6220
        %v6222 = vsel %vm6207, %v6157, %v6221
        %v6223 = vsel %vm6209, %v6158, %v6222
        %v6224 = vsel %vm6211, %v6159, %v6223
        %v6225 = vsel %vm6201, %v6162, %v6161
        %v6226 = vsel %vm6203, %v6163, %v6225
        %v6227 = vsel %vm6205, %v6164, %v6226
        %v6228 = vsel %vm6207, %v6165, %v6227
        %v6229 = vsel %vm6209, %v6166, %v6228
        %v6230 = vsel %vm6211, %v6167, %v6229
        %v6231 = vsel %vm6201, %v6170, %v6169
        %v6232 = vsel %vm6203, %v6171, %v6231
        %v6233 = vsel %vm6205, %v6172, %v6232
        %v6234 = vsel %vm6207, %v6173, %v6233
        %v6235 = vsel %vm6209, %v6174, %v6234
        %v6236 = vsel %vm6211, %v6175, %v6235
        %v6237 = vsel %vm6201, %v6178, %v6177
        %v6238 = vsel %vm6203, %v6179, %v6237
        %v6239 = vsel %vm6205, %v6180, %v6238
        %v6240 = vsel %vm6207, %v6181, %v6239
        %v6241 = vsel %vm6209, %v6182, %v6240
        %v6242 = vsel %vm6211, %v6183, %v6241
        %v6243 = vsel %vm6201, %v6186, %v6185
        %v6244 = vsel %vm6203, %v6187, %v6243
        %v6245 = vsel %vm6205, %v6188, %v6244
        %v6246 = vsel %vm6207, %v6189, %v6245
        %v6247 = vsel %vm6209, %v6190, %v6246
        %v6248 = vsel %vm6211, %v6191, %v6247
        %v6249 = vsel %vm6201, %v6194, %v6193
        %v6250 = vsel %vm6203, %v6195, %v6249
        %v6251 = vsel %vm6205, %v6196, %v6250
        %v6252 = vsel %vm6207, %v6197, %v6251
        %v6253 = vsel %vm6209, %v6198, %v6252
        %v6254 = vsel %vm6211, %v6199, %v6253
        %v6255 = vpack.c.b16 %v6212, %v6212
        %v6256 = vpack.c.b16 %v6144, %v6144
        %v6257 = vpack.c.b16 %v6218, %v6218
        %v6258 = vpack.c.b16 %v6152, %v6152
        %v6259 = vpack.c.b16 %v6224, %v6224
        %v6260 = vpack.c.b16 %v6160, %v6160
        %v6261 = vpack.c.b16 %v6230, %v6230
        %v6262 = vpack.c.b16 %v6168, %v6168
        %v6263 = vpack.c.b16 %v6236, %v6236
        %v6264 = vpack.c.b16 %v6176, %v6176
        %v6265 = vpack.c.b16 %v6242, %v6242
        %v6266 = vpack.c.b16 %v6184, %v6184
        %v6267 = vpack.c.b16 %v6248, %v6248
        %v6268 = vpack.c.b16 %v6192, %v6192
        %v6269 = vpack.c.b16 %v6254, %v6254
        %v6270 = vpack.c.b16 %v6200, %v6200
        %vm6287 = vcmask 519168
        %vm6288 = vmand %vm6287, %vm440
        %v6289 = vld [vmem:[%s5893] sm:$0xf]
        %v6290 = vsel %vm6288, %v6255, %v6289
        %6291 = vst [vmem:[%s5893] sm:$0xf] %v6290
        %v6292 = vld [vmem:[%s5893 + $0x4] sm:$0x1]
        %v6293 = vsel %vm5895, %v6256, %v6292
        %6294 = vst [vmem:[%s5893 + $0x4] sm:$0x1] %v6293
        %v6295 = vld [vmem:[%s5893 + $0x8] sm:$0xf]
        %v6296 = vsel %vm6288, %v6257, %v6295
        %6297 = vst [vmem:[%s5893 + $0x8] sm:$0xf] %v6296
        %v6298 = vld [vmem:[%s5893 + $0xc] sm:$0x1]
        %v6299 = vsel %vm5895, %v6258, %v6298
        %6300 = vst [vmem:[%s5893 + $0xc] sm:$0x1] %v6299
        %v6301 = vld [vmem:[%s5893 + $0x10] sm:$0xf]
        %v6302 = vsel %vm6288, %v6259, %v6301
        %6303 = vst [vmem:[%s5893 + $0x10] sm:$0xf] %v6302
        %v6304 = vld [vmem:[%s5893 + $0x14] sm:$0x1]
        %v6305 = vsel %vm5895, %v6260, %v6304
        %6306 = vst [vmem:[%s5893 + $0x14] sm:$0x1] %v6305
        %v6307 = vld [vmem:[%s5893 + $0x18] sm:$0xf]
        %v6308 = vsel %vm6288, %v6261, %v6307
        %6309 = vst [vmem:[%s5893 + $0x18] sm:$0xf] %v6308
        %v6310 = vld [vmem:[%s5893 + $0x1c] sm:$0x1]
        %v6311 = vsel %vm5895, %v6262, %v6310
        %6312 = vst [vmem:[%s5893 + $0x1c] sm:$0x1] %v6311
        %v6313 = vld [vmem:[%s5893 + $0x20] sm:$0xf]
        %v6314 = vsel %vm6288, %v6263, %v6313
        %6315 = vst [vmem:[%s5893 + $0x20] sm:$0xf] %v6314
        %v6316 = vld [vmem:[%s5893 + $0x24] sm:$0x1]
        %v6317 = vsel %vm5895, %v6264, %v6316
        %6318 = vst [vmem:[%s5893 + $0x24] sm:$0x1] %v6317
        %v6319 = vld [vmem:[%s5893 + $0x28] sm:$0xf]
        %v6320 = vsel %vm6288, %v6265, %v6319
        %6321 = vst [vmem:[%s5893 + $0x28] sm:$0xf] %v6320
        %v6322 = vld [vmem:[%s5893 + $0x2c] sm:$0x1]
        %v6323 = vsel %vm5895, %v6266, %v6322
        %6324 = vst [vmem:[%s5893 + $0x2c] sm:$0x1] %v6323
        %v6325 = vld [vmem:[%s5893 + $0x30] sm:$0xf]
        %v6326 = vsel %vm6288, %v6267, %v6325
        %6327 = vst [vmem:[%s5893 + $0x30] sm:$0xf] %v6326
        %v6328 = vld [vmem:[%s5893 + $0x34] sm:$0x1]
        %v6329 = vsel %vm5895, %v6268, %v6328
        %6330 = vst [vmem:[%s5893 + $0x34] sm:$0x1] %v6329
        %v6331 = vld [vmem:[%s5893 + $0x38] sm:$0xf]
        %v6332 = vsel %vm6288, %v6269, %v6331
        %6333 = vst [vmem:[%s5893 + $0x38] sm:$0xf] %v6332
        %v6334 = vld [vmem:[%s5893 + $0x3c] sm:$0x1]
        %v6335 = vsel %vm5895, %v6270, %v6334
        %6336 = vst [vmem:[%s5893 + $0x3c] sm:$0x1] %v6335
        %v6337 = vld [vmem:[#allocation3] sm:$0xf]
        %v6338 = vld [vmem:[#allocation3 + $0x8] sm:$0xf]
        %v6339 = vld [vmem:[#allocation3 + $0x10] sm:$0xf]
        %v6340 = vld [vmem:[#allocation3 + $0x18] sm:$0xf]
        %v6341 = vld [vmem:[#allocation3 + $0x20] sm:$0xf]
        %v6342 = vld [vmem:[#allocation3 + $0x28] sm:$0xf]
        %v6343 = vld [vmem:[#allocation3 + $0x30] sm:$0xf]
        %v6344 = vld [vmem:[#allocation3 + $0x38] sm:$0xf]
        %v6345 = vld [vmem:[#allocation3 + $0x4] sm:$0x1]
        %v6346 = vld [vmem:[#allocation3 + $0xc] sm:$0x1]
        %v6347 = vld [vmem:[#allocation3 + $0x14] sm:$0x1]
        %v6348 = vld [vmem:[#allocation3 + $0x1c] sm:$0x1]
        %v6349 = vld [vmem:[#allocation3 + $0x24] sm:$0x1]
        %v6350 = vld [vmem:[#allocation3 + $0x2c] sm:$0x1]
        %v6351 = vld [vmem:[#allocation3 + $0x34] sm:$0x1]
        %v6352 = vld [vmem:[#allocation3 + $0x3c] sm:$0x1]
        %v6354 = vshrl.u32 %v6337, 16
        %v6356 = vrot.slane %v6354, 4
        %v6357 = vshll.u32 %v6337, 16
        %v6359 = vrot.slane %v6357, 5
        %v6360 = vor.u32 %v6356, %v6359
        %v6361 = vrot.slane %v6360, 4
        %v6363 = vshll.u32 %v6345, 16
        %v6365 = vrot.slane %v6363, 5
        %v6366 = vsel %vm976, %v6361, %v6365
        %v6368 = vshrl.u32 %v6338, 16
        %v6370 = vrot.slane %v6368, 4
        %v6371 = vshll.u32 %v6338, 16
        %v6373 = vrot.slane %v6371, 5
        %v6374 = vor.u32 %v6370, %v6373
        %v6375 = vrot.slane %v6374, 4
        %v6377 = vshll.u32 %v6346, 16
        %v6379 = vrot.slane %v6377, 5
        %v6380 = vsel %vm976, %v6375, %v6379
        %v6382 = vshrl.u32 %v6339, 16
        %v6384 = vrot.slane %v6382, 4
        %v6385 = vshll.u32 %v6339, 16
        %v6387 = vrot.slane %v6385, 5
        %v6388 = vor.u32 %v6384, %v6387
        %v6389 = vrot.slane %v6388, 4
        %v6391 = vshll.u32 %v6347, 16
        %v6393 = vrot.slane %v6391, 5
        %v6394 = vsel %vm976, %v6389, %v6393
        %v6396 = vshrl.u32 %v6340, 16
        %v6398 = vrot.slane %v6396, 4
        %v6399 = vshll.u32 %v6340, 16
        %v6401 = vrot.slane %v6399, 5
        %v6402 = vor.u32 %v6398, %v6401
        %v6403 = vrot.slane %v6402, 4
        %v6405 = vshll.u32 %v6348, 16
        %v6407 = vrot.slane %v6405, 5
        %v6408 = vsel %vm976, %v6403, %v6407
        %v6410 = vshrl.u32 %v6341, 16
        %v6412 = vrot.slane %v6410, 4
        %v6413 = vshll.u32 %v6341, 16
        %v6415 = vrot.slane %v6413, 5
        %v6416 = vor.u32 %v6412, %v6415
        %v6417 = vrot.slane %v6416, 4
        %v6419 = vshll.u32 %v6349, 16
        %v6421 = vrot.slane %v6419, 5
        %v6422 = vsel %vm976, %v6417, %v6421
        %v6424 = vshrl.u32 %v6342, 16
        %v6426 = vrot.slane %v6424, 4
        %v6427 = vshll.u32 %v6342, 16
        %v6429 = vrot.slane %v6427, 5
        %v6430 = vor.u32 %v6426, %v6429
        %v6431 = vrot.slane %v6430, 4
        %v6433 = vshll.u32 %v6350, 16
        %v6435 = vrot.slane %v6433, 5
        %v6436 = vsel %vm976, %v6431, %v6435
        %v6438 = vshrl.u32 %v6343, 16
        %v6440 = vrot.slane %v6438, 4
        %v6441 = vshll.u32 %v6343, 16
        %v6443 = vrot.slane %v6441, 5
        %v6444 = vor.u32 %v6440, %v6443
        %v6445 = vrot.slane %v6444, 4
        %v6447 = vshll.u32 %v6351, 16
        %v6449 = vrot.slane %v6447, 5
        %v6450 = vsel %vm976, %v6445, %v6449
        %v6452 = vshrl.u32 %v6344, 16
        %v6454 = vrot.slane %v6452, 4
        %v6455 = vshll.u32 %v6344, 16
        %v6457 = vrot.slane %v6455, 5
        %v6458 = vor.u32 %v6454, %v6457
        %v6459 = vrot.slane %v6458, 4
        %v6461 = vshll.u32 %v6352, 16
        %v6463 = vrot.slane %v6461, 5
        %v6464 = vsel %vm976, %v6459, %v6463
        %v6465 = vld [vmem:[#allocation3] sm:$0xe]
        %v6466 = vld [vmem:[#allocation3 + $0x8] sm:$0xe]
        %v6467 = vld [vmem:[#allocation3 + $0x10] sm:$0xe]
        %v6468 = vld [vmem:[#allocation3 + $0x18] sm:$0xe]
        %v6469 = vld [vmem:[#allocation3 + $0x20] sm:$0xe]
        %v6470 = vld [vmem:[#allocation3 + $0x28] sm:$0xe]
        %v6471 = vld [vmem:[#allocation3 + $0x30] sm:$0xe]
        %v6472 = vld [vmem:[#allocation3 + $0x38] sm:$0xe]
        %v6489 = vrot.slane %v6465, 5
        %v6490 = vrot.slane %v6489, 4
        %v6491 = vrot.slane %v6345, 5
        %v6492 = vsel %vm1427, %v6490, %v6491
        %v6493 = vrot.slane %v6466, 5
        %v6494 = vrot.slane %v6493, 4
        %v6495 = vrot.slane %v6346, 5
        %v6496 = vsel %vm1427, %v6494, %v6495
        %v6497 = vrot.slane %v6467, 5
        %v6498 = vrot.slane %v6497, 4
        %v6499 = vrot.slane %v6347, 5
        %v6500 = vsel %vm1427, %v6498, %v6499
        %v6501 = vrot.slane %v6468, 5
        %v6502 = vrot.slane %v6501, 4
        %v6503 = vrot.slane %v6348, 5
        %v6504 = vsel %vm1427, %v6502, %v6503
        %v6505 = vrot.slane %v6469, 5
        %v6506 = vrot.slane %v6505, 4
        %v6507 = vrot.slane %v6349, 5
        %v6508 = vsel %vm1427, %v6506, %v6507
        %v6509 = vrot.slane %v6470, 5
        %v6510 = vrot.slane %v6509, 4
        %v6511 = vrot.slane %v6350, 5
        %v6512 = vsel %vm1427, %v6510, %v6511
        %v6513 = vrot.slane %v6471, 5
        %v6514 = vrot.slane %v6513, 4
        %v6515 = vrot.slane %v6351, 5
        %v6516 = vsel %vm1427, %v6514, %v6515
        %v6517 = vrot.slane %v6472, 5
        %v6518 = vrot.slane %v6517, 4
        %v6519 = vrot.slane %v6352, 5
        %v6520 = vsel %vm1427, %v6518, %v6519
        %v6521 = vld [vmem:[%s5893] sm:$0xf]
        %v6522 = vld [vmem:[%s5893 + $0x8] sm:$0xf]
        %v6523 = vld [vmem:[%s5893 + $0x10] sm:$0xf]
        %v6524 = vld [vmem:[%s5893 + $0x18] sm:$0xf]
        %v6525 = vld [vmem:[%s5893 + $0x20] sm:$0xf]
        %v6526 = vld [vmem:[%s5893 + $0x28] sm:$0xf]
        %v6527 = vld [vmem:[%s5893 + $0x30] sm:$0xf]
        %v6528 = vld [vmem:[%s5893 + $0x38] sm:$0xf]
        %v6529 = vld [vmem:[%s5893 + $0x4] sm:$0x1]
        %v6530 = vld [vmem:[%s5893 + $0xc] sm:$0x1]
        %v6531 = vld [vmem:[%s5893 + $0x14] sm:$0x1]
        %v6532 = vld [vmem:[%s5893 + $0x1c] sm:$0x1]
        %v6533 = vld [vmem:[%s5893 + $0x24] sm:$0x1]
        %v6534 = vld [vmem:[%s5893 + $0x2c] sm:$0x1]
        %v6535 = vld [vmem:[%s5893 + $0x34] sm:$0x1]
        %v6536 = vld [vmem:[%s5893 + $0x3c] sm:$0x1]
        %v6538 = vshrl.u32 %v6521, 16
        %v6540 = vrot.slane %v6538, 4
        %v6541 = vshll.u32 %v6521, 16
        %v6543 = vrot.slane %v6541, 5
        %v6544 = vor.u32 %v6540, %v6543
        %v6545 = vrot.slane %v6544, 4
        %v6547 = vshll.u32 %v6529, 16
        %v6549 = vrot.slane %v6547, 5
        %v6550 = vsel %vm976, %v6545, %v6549
        %v6552 = vshrl.u32 %v6522, 16
        %v6554 = vrot.slane %v6552, 4
        %v6555 = vshll.u32 %v6522, 16
        %v6557 = vrot.slane %v6555, 5
        %v6558 = vor.u32 %v6554, %v6557
        %v6559 = vrot.slane %v6558, 4
        %v6561 = vshll.u32 %v6530, 16
        %v6563 = vrot.slane %v6561, 5
        %v6564 = vsel %vm976, %v6559, %v6563
        %v6566 = vshrl.u32 %v6523, 16
        %v6568 = vrot.slane %v6566, 4
        %v6569 = vshll.u32 %v6523, 16
        %v6571 = vrot.slane %v6569, 5
        %v6572 = vor.u32 %v6568, %v6571
        %v6573 = vrot.slane %v6572, 4
        %v6575 = vshll.u32 %v6531, 16
        %v6577 = vrot.slane %v6575, 5
        %v6578 = vsel %vm976, %v6573, %v6577
        %v6580 = vshrl.u32 %v6524, 16
        %v6582 = vrot.slane %v6580, 4
        %v6583 = vshll.u32 %v6524, 16
        %v6585 = vrot.slane %v6583, 5
        %v6586 = vor.u32 %v6582, %v6585
        %v6587 = vrot.slane %v6586, 4
        %v6589 = vshll.u32 %v6532, 16
        %v6591 = vrot.slane %v6589, 5
        %v6592 = vsel %vm976, %v6587, %v6591
        %v6594 = vshrl.u32 %v6525, 16
        %v6596 = vrot.slane %v6594, 4
        %v6597 = vshll.u32 %v6525, 16
        %v6599 = vrot.slane %v6597, 5
        %v6600 = vor.u32 %v6596, %v6599
        %v6601 = vrot.slane %v6600, 4
        %v6603 = vshll.u32 %v6533, 16
        %v6605 = vrot.slane %v6603, 5
        %v6606 = vsel %vm976, %v6601, %v6605
        %v6608 = vshrl.u32 %v6526, 16
        %v6610 = vrot.slane %v6608, 4
        %v6611 = vshll.u32 %v6526, 16
        %v6613 = vrot.slane %v6611, 5
        %v6614 = vor.u32 %v6610, %v6613
        %v6615 = vrot.slane %v6614, 4
        %v6617 = vshll.u32 %v6534, 16
        %v6619 = vrot.slane %v6617, 5
        %v6620 = vsel %vm976, %v6615, %v6619
        %v6622 = vshrl.u32 %v6527, 16
        %v6624 = vrot.slane %v6622, 4
        %v6625 = vshll.u32 %v6527, 16
        %v6627 = vrot.slane %v6625, 5
        %v6628 = vor.u32 %v6624, %v6627
        %v6629 = vrot.slane %v6628, 4
        %v6631 = vshll.u32 %v6535, 16
        %v6633 = vrot.slane %v6631, 5
        %v6634 = vsel %vm976, %v6629, %v6633
        %v6636 = vshrl.u32 %v6528, 16
        %v6638 = vrot.slane %v6636, 4
        %v6639 = vshll.u32 %v6528, 16
        %v6641 = vrot.slane %v6639, 5
        %v6642 = vor.u32 %v6638, %v6641
        %v6643 = vrot.slane %v6642, 4
        %v6645 = vshll.u32 %v6536, 16
        %v6647 = vrot.slane %v6645, 5
        %v6648 = vsel %vm976, %v6643, %v6647
        %v6649 = vld [vmem:[%s5893] sm:$0xe]
        %v6650 = vld [vmem:[%s5893 + $0x8] sm:$0xe]
        %v6651 = vld [vmem:[%s5893 + $0x10] sm:$0xe]
        %v6652 = vld [vmem:[%s5893 + $0x18] sm:$0xe]
        %v6653 = vld [vmem:[%s5893 + $0x20] sm:$0xe]
        %v6654 = vld [vmem:[%s5893 + $0x28] sm:$0xe]
        %v6655 = vld [vmem:[%s5893 + $0x30] sm:$0xe]
        %v6656 = vld [vmem:[%s5893 + $0x38] sm:$0xe]
        %v6673 = vrot.slane %v6649, 5
        %v6674 = vrot.slane %v6673, 4
        %v6675 = vrot.slane %v6529, 5
        %v6676 = vsel %vm1427, %v6674, %v6675
        %v6677 = vrot.slane %v6650, 5
        %v6678 = vrot.slane %v6677, 4
        %v6679 = vrot.slane %v6530, 5
        %v6680 = vsel %vm1427, %v6678, %v6679
        %v6681 = vrot.slane %v6651, 5
        %v6682 = vrot.slane %v6681, 4
        %v6683 = vrot.slane %v6531, 5
        %v6684 = vsel %vm1427, %v6682, %v6683
        %v6685 = vrot.slane %v6652, 5
        %v6686 = vrot.slane %v6685, 4
        %v6687 = vrot.slane %v6532, 5
        %v6688 = vsel %vm1427, %v6686, %v6687
        %v6689 = vrot.slane %v6653, 5
        %v6690 = vrot.slane %v6689, 4
        %v6691 = vrot.slane %v6533, 5
        %v6692 = vsel %vm1427, %v6690, %v6691
        %v6693 = vrot.slane %v6654, 5
        %v6694 = vrot.slane %v6693, 4
        %v6695 = vrot.slane %v6534, 5
        %v6696 = vsel %vm1427, %v6694, %v6695
        %v6697 = vrot.slane %v6655, 5
        %v6698 = vrot.slane %v6697, 4
        %v6699 = vrot.slane %v6535, 5
        %v6700 = vsel %vm1427, %v6698, %v6699
        %v6701 = vrot.slane %v6656, 5
        %v6702 = vrot.slane %v6701, 4
        %v6703 = vrot.slane %v6536, 5
        %v6704 = vsel %vm1427, %v6702, %v6703
        %s6705 = scalar_lea.vmem [#allocation3], 16
        %v6706 = vld [vmem:[%s6705] sm:$0xf]
        %v6707 = vld [vmem:[%s6705 + $0x8] sm:$0xf]
        %v6708 = vld [vmem:[%s6705 + $0x10] sm:$0xf]
        %v6709 = vld [vmem:[%s6705 + $0x18] sm:$0xf]
        %v6710 = vld [vmem:[%s6705 + $0x20] sm:$0xf]
        %v6711 = vld [vmem:[%s6705 + $0x28] sm:$0xf]
        %v6712 = vld [vmem:[%s6705 + $0x30] sm:$0xf]
        %v6713 = vld [vmem:[%s6705 + $0x38] sm:$0xf]
        %v6714 = vld [vmem:[%s6705 + $0x4] sm:$0x1]
        %v6715 = vld [vmem:[%s6705 + $0xc] sm:$0x1]
        %v6716 = vld [vmem:[%s6705 + $0x14] sm:$0x1]
        %v6717 = vld [vmem:[%s6705 + $0x1c] sm:$0x1]
        %v6718 = vld [vmem:[%s6705 + $0x24] sm:$0x1]
        %v6719 = vld [vmem:[%s6705 + $0x2c] sm:$0x1]
        %v6720 = vld [vmem:[%s6705 + $0x34] sm:$0x1]
        %v6721 = vld [vmem:[%s6705 + $0x3c] sm:$0x1]
        %v6723 = vshrl.u32 %v6706, 16
        %v6725 = vrot.slane %v6723, 4
        %v6726 = vshll.u32 %v6706, 16
        %v6728 = vrot.slane %v6726, 5
        %v6729 = vor.u32 %v6725, %v6728
        %v6730 = vrot.slane %v6729, 4
        %v6732 = vshll.u32 %v6714, 16
        %v6734 = vrot.slane %v6732, 5
        %v6735 = vsel %vm976, %v6730, %v6734
        %v6737 = vshrl.u32 %v6707, 16
        %v6739 = vrot.slane %v6737, 4
        %v6740 = vshll.u32 %v6707, 16
        %v6742 = vrot.slane %v6740, 5
        %v6743 = vor.u32 %v6739, %v6742
        %v6744 = vrot.slane %v6743, 4
        %v6746 = vshll.u32 %v6715, 16
        %v6748 = vrot.slane %v6746, 5
        %v6749 = vsel %vm976, %v6744, %v6748
        %v6751 = vshrl.u32 %v6708, 16
        %v6753 = vrot.slane %v6751, 4
        %v6754 = vshll.u32 %v6708, 16
        %v6756 = vrot.slane %v6754, 5
        %v6757 = vor.u32 %v6753, %v6756
        %v6758 = vrot.slane %v6757, 4
        %v6760 = vshll.u32 %v6716, 16
        %v6762 = vrot.slane %v6760, 5
        %v6763 = vsel %vm976, %v6758, %v6762
        %v6765 = vshrl.u32 %v6709, 16
        %v6767 = vrot.slane %v6765, 4
        %v6768 = vshll.u32 %v6709, 16
        %v6770 = vrot.slane %v6768, 5
        %v6771 = vor.u32 %v6767, %v6770
        %v6772 = vrot.slane %v6771, 4
        %v6774 = vshll.u32 %v6717, 16
        %v6776 = vrot.slane %v6774, 5
        %v6777 = vsel %vm976, %v6772, %v6776
        %v6779 = vshrl.u32 %v6710, 16
        %v6781 = vrot.slane %v6779, 4
        %v6782 = vshll.u32 %v6710, 16
        %v6784 = vrot.slane %v6782, 5
        %v6785 = vor.u32 %v6781, %v6784
        %v6786 = vrot.slane %v6785, 4
        %v6788 = vshll.u32 %v6718, 16
        %v6790 = vrot.slane %v6788, 5
        %v6791 = vsel %vm976, %v6786, %v6790
        %v6793 = vshrl.u32 %v6711, 16
        %v6795 = vrot.slane %v6793, 4
        %v6796 = vshll.u32 %v6711, 16
        %v6798 = vrot.slane %v6796, 5
        %v6799 = vor.u32 %v6795, %v6798
        %v6800 = vrot.slane %v6799, 4
        %v6802 = vshll.u32 %v6719, 16
        %v6804 = vrot.slane %v6802, 5
        %v6805 = vsel %vm976, %v6800, %v6804
        %v6807 = vshrl.u32 %v6712, 16
        %v6809 = vrot.slane %v6807, 4
        %v6810 = vshll.u32 %v6712, 16
        %v6812 = vrot.slane %v6810, 5
        %v6813 = vor.u32 %v6809, %v6812
        %v6814 = vrot.slane %v6813, 4
        %v6816 = vshll.u32 %v6720, 16
        %v6818 = vrot.slane %v6816, 5
        %v6819 = vsel %vm976, %v6814, %v6818
        %v6821 = vshrl.u32 %v6713, 16
        %v6823 = vrot.slane %v6821, 4
        %v6824 = vshll.u32 %v6713, 16
        %v6826 = vrot.slane %v6824, 5
        %v6827 = vor.u32 %v6823, %v6826
        %v6828 = vrot.slane %v6827, 4
        %v6830 = vshll.u32 %v6721, 16
        %v6832 = vrot.slane %v6830, 5
        %v6833 = vsel %vm976, %v6828, %v6832
        %v6834 = vld [vmem:[%s6705] sm:$0xe]
        %v6835 = vld [vmem:[%s6705 + $0x8] sm:$0xe]
        %v6836 = vld [vmem:[%s6705 + $0x10] sm:$0xe]
        %v6837 = vld [vmem:[%s6705 + $0x18] sm:$0xe]
        %v6838 = vld [vmem:[%s6705 + $0x20] sm:$0xe]
        %v6839 = vld [vmem:[%s6705 + $0x28] sm:$0xe]
        %v6840 = vld [vmem:[%s6705 + $0x30] sm:$0xe]
        %v6841 = vld [vmem:[%s6705 + $0x38] sm:$0xe]
        %v6858 = vrot.slane %v6834, 5
        %v6859 = vrot.slane %v6858, 4
        %v6860 = vrot.slane %v6714, 5
        %v6861 = vsel %vm1427, %v6859, %v6860
        %v6862 = vrot.slane %v6835, 5
        %v6863 = vrot.slane %v6862, 4
        %v6864 = vrot.slane %v6715, 5
        %v6865 = vsel %vm1427, %v6863, %v6864
        %v6866 = vrot.slane %v6836, 5
        %v6867 = vrot.slane %v6866, 4
        %v6868 = vrot.slane %v6716, 5
        %v6869 = vsel %vm1427, %v6867, %v6868
        %v6870 = vrot.slane %v6837, 5
        %v6871 = vrot.slane %v6870, 4
        %v6872 = vrot.slane %v6717, 5
        %v6873 = vsel %vm1427, %v6871, %v6872
        %v6874 = vrot.slane %v6838, 5
        %v6875 = vrot.slane %v6874, 4
        %v6876 = vrot.slane %v6718, 5
        %v6877 = vsel %vm1427, %v6875, %v6876
        %v6878 = vrot.slane %v6839, 5
        %v6879 = vrot.slane %v6878, 4
        %v6880 = vrot.slane %v6719, 5
        %v6881 = vsel %vm1427, %v6879, %v6880
        %v6882 = vrot.slane %v6840, 5
        %v6883 = vrot.slane %v6882, 4
        %v6884 = vrot.slane %v6720, 5
        %v6885 = vsel %vm1427, %v6883, %v6884
        %v6886 = vrot.slane %v6841, 5
        %v6887 = vrot.slane %v6886, 4
        %v6888 = vrot.slane %v6721, 5
        %v6889 = vsel %vm1427, %v6887, %v6888
        %v6898 = vunpack.c.l.b16 %v6337
        %v6899 = vunpack.c.l.b16 %v6338
        %v6900 = vunpack.c.l.b16 %v6339
        %v6901 = vunpack.c.l.b16 %v6340
        %v6902 = vunpack.c.l.b16 %v6341
        %v6903 = vunpack.c.l.b16 %v6342
        %v6904 = vunpack.c.l.b16 %v6343
        %v6905 = vunpack.c.l.b16 %v6344
        %v6906 = vpack.c.b16 %v6899, %v6898
        %v6907 = vpack.c.b16 %v6901, %v6900
        %v6908 = vpack.c.b16 %v6903, %v6902
        %v6909 = vpack.c.b16 %v6905, %v6904
        %v6910 = vunpack.c.l.b16 %v6366
        %v6911 = vunpack.c.l.b16 %v6380
        %v6912 = vunpack.c.l.b16 %v6394
        %v6913 = vunpack.c.l.b16 %v6408
        %v6914 = vunpack.c.l.b16 %v6422
        %v6915 = vunpack.c.l.b16 %v6436
        %v6916 = vunpack.c.l.b16 %v6450
        %v6917 = vunpack.c.l.b16 %v6464
        %v6918 = vpack.c.b16 %v6911, %v6910
        %v6919 = vpack.c.b16 %v6913, %v6912
        %v6920 = vpack.c.b16 %v6915, %v6914
        %v6921 = vpack.c.b16 %v6917, %v6916
        %6922 = vrot.lane.b32.xlu0 %v6918, 64
        %v6923 = vpop.permute.xlu0 %6922
        %6924 = vrot.lane.b32.xlu0 %v6919, 64
        %v6925 = vpop.permute.xlu0 %6924
        %6926 = vrot.lane.b32.xlu0 %v6920, 64
        %v6927 = vpop.permute.xlu0 %6926
        %6928 = vrot.lane.b32.xlu0 %v6921, 64
        %v6929 = vpop.permute.xlu0 %6928
        %v6930 = vunpack.c.l.b16 %v6492
        %v6931 = vunpack.c.l.b16 %v6496
        %v6932 = vunpack.c.l.b16 %v6500
        %v6933 = vunpack.c.l.b16 %v6504
        %v6934 = vunpack.c.l.b16 %v6508
        %v6935 = vunpack.c.l.b16 %v6512
        %v6936 = vunpack.c.l.b16 %v6516
        %v6937 = vunpack.c.l.b16 %v6520
        %v6938 = vpack.c.b16 %v6931, %v6930
        %v6939 = vpack.c.b16 %v6933, %v6932
        %v6940 = vpack.c.b16 %v6935, %v6934
        %v6941 = vpack.c.b16 %v6937, %v6936
        %v6950 = vunpack.c.l.b16 %v6521
        %v6951 = vunpack.c.l.b16 %v6522
        %v6952 = vunpack.c.l.b16 %v6523
        %v6953 = vunpack.c.l.b16 %v6524
        %v6954 = vunpack.c.l.b16 %v6525
        %v6955 = vunpack.c.l.b16 %v6526
        %v6956 = vunpack.c.l.b16 %v6527
        %v6957 = vunpack.c.l.b16 %v6528
        %v6958 = vpack.c.b16 %v6951, %v6950
        %v6959 = vpack.c.b16 %v6953, %v6952
        %v6960 = vpack.c.b16 %v6955, %v6954
        %v6961 = vpack.c.b16 %v6957, %v6956
        %6962 = vrot.lane.b32.xlu0 %v6958, 64
        %v6963 = vpop.permute.xlu0 %6962
        %6964 = vrot.lane.b32.xlu0 %v6959, 64
        %v6965 = vpop.permute.xlu0 %6964
        %6966 = vrot.lane.b32.xlu0 %v6960, 64
        %v6967 = vpop.permute.xlu0 %6966
        %6968 = vrot.lane.b32.xlu0 %v6961, 64
        %v6969 = vpop.permute.xlu0 %6968
        %v6970 = vunpack.c.l.b16 %v6550
        %v6971 = vunpack.c.l.b16 %v6564
        %v6972 = vunpack.c.l.b16 %v6578
        %v6973 = vunpack.c.l.b16 %v6592
        %v6974 = vunpack.c.l.b16 %v6606
        %v6975 = vunpack.c.l.b16 %v6620
        %v6976 = vunpack.c.l.b16 %v6634
        %v6977 = vunpack.c.l.b16 %v6648
        %v6978 = vpack.c.b16 %v6971, %v6970
        %v6979 = vpack.c.b16 %v6973, %v6972
        %v6980 = vpack.c.b16 %v6975, %v6974
        %v6981 = vpack.c.b16 %v6977, %v6976
        %v6982 = vunpack.c.l.b16 %v6676
        %v6983 = vunpack.c.l.b16 %v6680
        %v6984 = vunpack.c.l.b16 %v6684
        %v6985 = vunpack.c.l.b16 %v6688
        %v6986 = vunpack.c.l.b16 %v6692
        %v6987 = vunpack.c.l.b16 %v6696
        %v6988 = vunpack.c.l.b16 %v6700
        %v6989 = vunpack.c.l.b16 %v6704
        %v6990 = vpack.c.b16 %v6983, %v6982
        %v6991 = vpack.c.b16 %v6985, %v6984
        %v6992 = vpack.c.b16 %v6987, %v6986
        %v6993 = vpack.c.b16 %v6989, %v6988
        %6994 = vrot.lane.b32.xlu0 %v6990, 64
        %v6995 = vpop.permute.xlu0 %6994
        %6996 = vrot.lane.b32.xlu0 %v6991, 64
        %v6997 = vpop.permute.xlu0 %6996
        %6998 = vrot.lane.b32.xlu0 %v6992, 64
        %v6999 = vpop.permute.xlu0 %6998
        %7000 = vrot.lane.b32.xlu0 %v6993, 64
        %v7001 = vpop.permute.xlu0 %7000
        %v7010 = vunpack.c.l.b16 %v6706
        %v7011 = vunpack.c.l.b16 %v6707
        %v7012 = vunpack.c.l.b16 %v6708
        %v7013 = vunpack.c.l.b16 %v6709
        %v7014 = vunpack.c.l.b16 %v6710
        %v7015 = vunpack.c.l.b16 %v6711
        %v7016 = vunpack.c.l.b16 %v6712
        %v7017 = vunpack.c.l.b16 %v6713
        %v7018 = vpack.c.b16 %v7011, %v7010
        %v7019 = vpack.c.b16 %v7013, %v7012
        %v7020 = vpack.c.b16 %v7015, %v7014
        %v7021 = vpack.c.b16 %v7017, %v7016
        %v7022 = vunpack.c.l.b16 %v6735
        %v7023 = vunpack.c.l.b16 %v6749
        %v7024 = vunpack.c.l.b16 %v6763
        %v7025 = vunpack.c.l.b16 %v6777
        %v7026 = vunpack.c.l.b16 %v6791
        %v7027 = vunpack.c.l.b16 %v6805
        %v7028 = vunpack.c.l.b16 %v6819
        %v7029 = vunpack.c.l.b16 %v6833
        %v7030 = vpack.c.b16 %v7023, %v7022
        %v7031 = vpack.c.b16 %v7025, %v7024
        %v7032 = vpack.c.b16 %v7027, %v7026
        %v7033 = vpack.c.b16 %v7029, %v7028
        %7034 = vrot.lane.b32.xlu0 %v7030, 64
        %v7035 = vpop.permute.xlu0 %7034
        %7036 = vrot.lane.b32.xlu0 %v7031, 64
        %v7037 = vpop.permute.xlu0 %7036
        %7038 = vrot.lane.b32.xlu0 %v7032, 64
        %v7039 = vpop.permute.xlu0 %7038
        %7040 = vrot.lane.b32.xlu0 %v7033, 64
        %v7041 = vpop.permute.xlu0 %7040
        %v7042 = vunpack.c.l.b16 %v6861
        %v7043 = vunpack.c.l.b16 %v6865
        %v7044 = vunpack.c.l.b16 %v6869
        %v7045 = vunpack.c.l.b16 %v6873
        %v7046 = vunpack.c.l.b16 %v6877
        %v7047 = vunpack.c.l.b16 %v6881
        %v7048 = vunpack.c.l.b16 %v6885
        %v7049 = vunpack.c.l.b16 %v6889
        %v7050 = vpack.c.b16 %v7043, %v7042
        %v7051 = vpack.c.b16 %v7045, %v7044
        %v7052 = vpack.c.b16 %v7047, %v7046
        %v7053 = vpack.c.b16 %v7049, %v7048
        %v7056 = vsel %vm5629, %v6906, %v6923
        %v7060 = vsel %vm5629, %v6907, %v6925
        %v7064 = vsel %vm5629, %v6908, %v6927
        %v7068 = vsel %vm5629, %v6909, %v6929
        %v7072 = vsel %vm5629, %v6938, %v6963
        %v7076 = vsel %vm5629, %v6939, %v6965
        %v7080 = vsel %vm5629, %v6940, %v6967
        %v7084 = vsel %vm5629, %v6941, %v6969
        %v7088 = vsel %vm5629, %v6978, %v6995
        %v7092 = vsel %vm5629, %v6979, %v6997
        %v7096 = vsel %vm5629, %v6980, %v6999
        %v7100 = vsel %vm5629, %v6981, %v7001
        %v7104 = vsel %vm5629, %v7018, %v7035
        %v7108 = vsel %vm5629, %v7019, %v7037
        %v7112 = vsel %vm5629, %v7020, %v7039
        %v7116 = vsel %vm5629, %v7021, %v7041
        %v7118 = vld [vmem:[%s3] sm:$0xf]
        %v7119 = vld [vmem:[%s3 + $0x4] sm:$0xf]
        %v7120 = vld [vmem:[%s3 + $0x8] sm:$0xf]
        %v7121 = vld [vmem:[%s3 + $0xc] sm:$0xf]
        %v7122 = vld [vmem:[%s3 + $0x10] sm:$0xf]
        %v7123 = vld [vmem:[%s3 + $0x14] sm:$0xf]
        %v7124 = vld [vmem:[%s3 + $0x18] sm:$0xf]
        %v7125 = vld [vmem:[%s3 + $0x1c] sm:$0xf]
        %v7126 = vld [vmem:[%s3 + $0x20] sm:$0xf]
        %v7127 = vld [vmem:[%s3 + $0x24] sm:$0xf]
        %v7128 = vld [vmem:[%s3 + $0x28] sm:$0xf]
        %v7129 = vld [vmem:[%s3 + $0x2c] sm:$0xf]
        %v7130 = vld [vmem:[%s3 + $0x30] sm:$0xf]
        %v7131 = vld [vmem:[%s3 + $0x34] sm:$0xf]
        %v7132 = vld [vmem:[%s3 + $0x38] sm:$0xf]
        %v7133 = vld [vmem:[%s3 + $0x3c] sm:$0xf]
        %v7134 = vld [vmem:[%s3 + $0x40] sm:$0xf]
        %v7135 = vld [vmem:[%s3 + $0x44] sm:$0xf]
        %v7136 = vld [vmem:[%s3 + $0x48] sm:$0xf]
        %v7137 = vld [vmem:[%s3 + $0x4c] sm:$0xf]
        %v7138 = vld [vmem:[%s3 + $0x50] sm:$0xf]
        %v7139 = vld [vmem:[%s3 + $0x54] sm:$0xf]
        %v7140 = vld [vmem:[%s3 + $0x58] sm:$0xf]
        %v7141 = vld [vmem:[%s3 + $0x5c] sm:$0xf]
        %v7142 = vld [vmem:[%s3 + $0x60] sm:$0xf]
        %v7143 = vld [vmem:[%s3 + $0x64] sm:$0xf]
        %v7144 = vld [vmem:[%s3 + $0x68] sm:$0xf]
        %v7145 = vld [vmem:[%s3 + $0x6c] sm:$0xf]
        %v7146 = vld [vmem:[%s3 + $0x70] sm:$0xf]
        %v7147 = vld [vmem:[%s3 + $0x74] sm:$0xf]
        %v7148 = vld [vmem:[%s3 + $0x78] sm:$0xf]
        %v7149 = vld [vmem:[%s3 + $0x7c] sm:$0xf]
        %v7150 = vld [vmem:[%s3 + $0x80] sm:$0xf]
        %v7151 = vld [vmem:[%s3 + $0x84] sm:$0xf]
        %v7152 = vld [vmem:[%s3 + $0x88] sm:$0xf]
        %v7153 = vld [vmem:[%s3 + $0x8c] sm:$0xf]
        %v7154 = vld [vmem:[%s3 + $0x90] sm:$0xf]
        %v7155 = vld [vmem:[%s3 + $0x94] sm:$0xf]
        %v7156 = vld [vmem:[%s3 + $0x98] sm:$0xf]
        %v7157 = vld [vmem:[%s3 + $0x9c] sm:$0xf]
        %v7158 = vld [vmem:[%s3 + $0xa0] sm:$0xf]
        %v7159 = vld [vmem:[%s3 + $0xa4] sm:$0xf]
        %v7160 = vld [vmem:[%s3 + $0xa8] sm:$0xf]
        %v7161 = vld [vmem:[%s3 + $0xac] sm:$0xf]
        %v7162 = vld [vmem:[%s3 + $0xb0] sm:$0xf]
        %v7163 = vld [vmem:[%s3 + $0xb4] sm:$0xf]
        %v7164 = vld [vmem:[%s3 + $0xb8] sm:$0xf]
        %v7165 = vld [vmem:[%s3 + $0xbc] sm:$0xf]
        %v7166 = vld [vmem:[%s3 + $0xc0] sm:$0xf]
        %v7167 = vld [vmem:[%s3 + $0xc4] sm:$0xf]
        %v7168 = vld [vmem:[%s3 + $0xc8] sm:$0xf]
        %v7169 = vld [vmem:[%s3 + $0xcc] sm:$0xf]
        %v7170 = vld [vmem:[%s3 + $0xd0] sm:$0xf]
        %v7171 = vld [vmem:[%s3 + $0xd4] sm:$0xf]
        %v7172 = vld [vmem:[%s3 + $0xd8] sm:$0xf]
        %v7173 = vld [vmem:[%s3 + $0xdc] sm:$0xf]
        %v7174 = vld [vmem:[%s3 + $0xe0] sm:$0xf]
        %v7175 = vld [vmem:[%s3 + $0xe4] sm:$0xf]
        %v7176 = vld [vmem:[%s3 + $0xe8] sm:$0xf]
        %v7177 = vld [vmem:[%s3 + $0xec] sm:$0xf]
        %v7178 = vld [vmem:[%s3 + $0xf0] sm:$0xf]
        %v7179 = vld [vmem:[%s3 + $0xf4] sm:$0xf]
        %v7180 = vld [vmem:[%s3 + $0xf8] sm:$0xf]
        %v7181 = vld [vmem:[%s3 + $0xfc] sm:$0xf]
        %v7182 = vld [vmem:[%s3 + $0x100] sm:$0xf]
        %v7183 = vld [vmem:[%s3 + $0x104] sm:$0xf]
        %v7184 = vld [vmem:[%s3 + $0x108] sm:$0xf]
        %v7185 = vld [vmem:[%s3 + $0x10c] sm:$0xf]
        %v7186 = vld [vmem:[%s3 + $0x110] sm:$0xf]
        %v7187 = vld [vmem:[%s3 + $0x114] sm:$0xf]
        %v7188 = vld [vmem:[%s3 + $0x118] sm:$0xf]
        %v7189 = vld [vmem:[%s3 + $0x11c] sm:$0xf]
        %v7190 = vld [vmem:[%s4] sm:$0x1]
        %v7192 = vlaneseq
        %v7193 = vshrl.u32 %v7192, 7
        %v7194 = vsub.s32 0, %v7193
        %v7195 = vrot.slane %v7190, %v7194
        %v7269 = vunpack.c.l.b16 %v7118
        %v7270 = vunpack.c.l.b16 %v7119
        %v7271 = vunpack.c.l.b16 %v7120
        %v7272 = vunpack.c.l.b16 %v7121
        %v7273 = vunpack.c.l.b16 %v7122
        %v7274 = vunpack.c.l.b16 %v7123
        %v7275 = vunpack.c.l.b16 %v7124
        %v7276 = vunpack.c.l.b16 %v7125
        %v7277 = vunpack.c.l.b16 %v7126
        %v7278 = vunpack.c.l.b16 %v7127
        %v7279 = vunpack.c.l.b16 %v7128
        %v7280 = vunpack.c.l.b16 %v7129
        %v7281 = vunpack.c.l.b16 %v7130
        %v7282 = vunpack.c.l.b16 %v7131
        %v7283 = vunpack.c.l.b16 %v7132
        %v7284 = vunpack.c.l.b16 %v7133
        %v7285 = vunpack.c.l.b16 %v7134
        %v7286 = vunpack.c.l.b16 %v7135
        %v7287 = vunpack.c.l.b16 %v7136
        %v7288 = vunpack.c.l.b16 %v7137
        %v7289 = vunpack.c.l.b16 %v7138
        %v7290 = vunpack.c.l.b16 %v7139
        %v7291 = vunpack.c.l.b16 %v7140
        %v7292 = vunpack.c.l.b16 %v7141
        %v7293 = vunpack.c.l.b16 %v7142
        %v7294 = vunpack.c.l.b16 %v7143
        %v7295 = vunpack.c.l.b16 %v7144
        %v7296 = vunpack.c.l.b16 %v7145
        %v7297 = vunpack.c.l.b16 %v7146
        %v7298 = vunpack.c.l.b16 %v7147
        %v7299 = vunpack.c.l.b16 %v7148
        %v7300 = vunpack.c.l.b16 %v7149
        %v7301 = vunpack.c.l.b16 %v7150
        %v7302 = vunpack.c.l.b16 %v7151
        %v7303 = vunpack.c.l.b16 %v7152
        %v7304 = vunpack.c.l.b16 %v7153
        %v7305 = vunpack.c.l.b16 %v7154
        %v7306 = vunpack.c.l.b16 %v7155
        %v7307 = vunpack.c.l.b16 %v7156
        %v7308 = vunpack.c.l.b16 %v7157
        %v7309 = vunpack.c.l.b16 %v7158
        %v7310 = vunpack.c.l.b16 %v7159
        %v7311 = vunpack.c.l.b16 %v7160
        %v7312 = vunpack.c.l.b16 %v7161
        %v7313 = vunpack.c.l.b16 %v7162
        %v7314 = vunpack.c.l.b16 %v7163
        %v7315 = vunpack.c.l.b16 %v7164
        %v7316 = vunpack.c.l.b16 %v7165
        %v7317 = vunpack.c.l.b16 %v7166
        %v7318 = vunpack.c.l.b16 %v7167
        %v7319 = vunpack.c.l.b16 %v7168
        %v7320 = vunpack.c.l.b16 %v7169
        %v7321 = vunpack.c.l.b16 %v7170
        %v7322 = vunpack.c.l.b16 %v7171
        %v7323 = vunpack.c.l.b16 %v7172
        %v7324 = vunpack.c.l.b16 %v7173
        %v7325 = vunpack.c.l.b16 %v7174
        %v7326 = vunpack.c.l.b16 %v7175
        %v7327 = vunpack.c.l.b16 %v7176
        %v7328 = vunpack.c.l.b16 %v7177
        %v7329 = vunpack.c.l.b16 %v7178
        %v7330 = vunpack.c.l.b16 %v7179
        %v7331 = vunpack.c.l.b16 %v7180
        %v7332 = vunpack.c.l.b16 %v7181
        %v7333 = vunpack.c.l.b16 %v7182
        %v7334 = vunpack.c.l.b16 %v7183
        %v7335 = vunpack.c.l.b16 %v7184
        %v7336 = vunpack.c.l.b16 %v7185
        %v7337 = vunpack.c.l.b16 %v7186
        %v7338 = vunpack.c.l.b16 %v7187
        %v7339 = vunpack.c.l.b16 %v7188
        %v7340 = vunpack.c.l.b16 %v7189
        %v7341 = vpack.c.b16 %v7270, %v7269
        %v7342 = vpack.c.b16 %v7272, %v7271
        %v7343 = vpack.c.b16 %v7274, %v7273
        %v7344 = vpack.c.b16 %v7276, %v7275
        %v7345 = vpack.c.b16 %v7278, %v7277
        %v7346 = vpack.c.b16 %v7280, %v7279
        %v7347 = vpack.c.b16 %v7282, %v7281
        %v7348 = vpack.c.b16 %v7284, %v7283
        %v7349 = vpack.c.b16 %v7286, %v7285
        %v7350 = vpack.c.b16 %v7288, %v7287
        %v7351 = vpack.c.b16 %v7290, %v7289
        %v7352 = vpack.c.b16 %v7292, %v7291
        %v7353 = vpack.c.b16 %v7294, %v7293
        %v7354 = vpack.c.b16 %v7296, %v7295
        %v7355 = vpack.c.b16 %v7298, %v7297
        %v7356 = vpack.c.b16 %v7300, %v7299
        %v7357 = vpack.c.b16 %v7302, %v7301
        %v7358 = vpack.c.b16 %v7304, %v7303
        %v7359 = vpack.c.b16 %v7306, %v7305
        %v7360 = vpack.c.b16 %v7308, %v7307
        %v7361 = vpack.c.b16 %v7310, %v7309
        %v7362 = vpack.c.b16 %v7312, %v7311
        %v7363 = vpack.c.b16 %v7314, %v7313
        %v7364 = vpack.c.b16 %v7316, %v7315
        %v7365 = vpack.c.b16 %v7318, %v7317
        %v7366 = vpack.c.b16 %v7320, %v7319
        %v7367 = vpack.c.b16 %v7322, %v7321
        %v7368 = vpack.c.b16 %v7324, %v7323
        %v7369 = vpack.c.b16 %v7326, %v7325
        %v7370 = vpack.c.b16 %v7328, %v7327
        %v7371 = vpack.c.b16 %v7330, %v7329
        %v7372 = vpack.c.b16 %v7332, %v7331
        %v7373 = vpack.c.b16 %v7334, %v7333
        %v7374 = vpack.c.b16 %v7336, %v7335
        %v7375 = vpack.c.b16 %v7338, %v7337
        %v7376 = vpack.c.b16 %v7340, %v7339
        %v7414 = vsel %vm5629, %v7050, 0
        %v7417 = vsel %vm5629, %v7051, 0
        %v7420 = vsel %vm5629, %v7052, 0
        %v7423 = vsel %vm5629, %v7053, 0
        %7425 = vmatprep.subr.bf16.mxu0 0
        %7426 = vmatpush1.bf16.msra.mxu0 %v7341
        %7427 = vmatprep.subr.bf16.mxu0 0
        %7428 = vmatpush1.bf16.msra.mxu0 %v7342
        %7429 = vmatprep.subr.bf16.mxu0 0
        %7430 = vmatpush1.bf16.msra.mxu0 %v7343
        %7431 = vmatprep.subr.bf16.mxu0 0
        %7432 = vmatpush1.bf16.msra.mxu0 %v7344
        %7433 = vmatprep.subr.bf16.mxu0 0
        %7434 = vmatpush1.bf16.msra.mxu0 %v7345
        %7435 = vmatprep.subr.bf16.mxu0 0
        %7436 = vmatpush1.bf16.msra.mxu0 %v7346
        %7437 = vmatprep.subr.bf16.mxu0 0
        %7438 = vmatpush1.bf16.msra.mxu0 %v7347
        %7439 = vmatprep.subr.bf16.mxu0 0
        %7440 = vmatpush1.bf16.msra.mxu0 %v7348
        %7441 = vmatprep.subr.bf16.mxu0 0
        %7442 = vmatpush1.bf16.msra.mxu0 %v7349
        %7443 = vmatprep.subr.bf16.mxu0 0
        %7444 = vmatpush1.bf16.msra.mxu0 %v7350
        %7445 = vmatprep.subr.bf16.mxu0 0
        %7446 = vmatpush1.bf16.msra.mxu0 %v7351
        %7447 = vmatprep.subr.bf16.mxu0 0
        %7448 = vmatpush1.bf16.msra.mxu0 %v7352
        %7449 = vmatprep.subr.bf16.mxu0 0
        %7450 = vmatpush1.bf16.msra.mxu0 %v7353
        %7451 = vmatprep.subr.bf16.mxu0 0
        %7452 = vmatpush1.bf16.msra.mxu0 %v7354
        %7453 = vmatprep.subr.bf16.mxu0 0
        %7454 = vmatpush1.bf16.msra.mxu0 %v7355
        %7455 = vmatprep.subr.bf16.mxu0 0
        %7456 = vmatpush1.bf16.msra.mxu0 %v7356
        %7457 = vmatprep.mubr.bf16.mxu0 %v7072
        %7458 = vmatmul.mubr.bf16.gmra.mrb[0].mxu0 %v7056
        %v7459 = vpop.f32.mrb[0].mxu0
        %v7460 = vadd.f32 %v7195, %v7459
        %v7461 = vpop.f32.mrb[0].mxu0
        %v7462 = vpop.f32.mrb[0].mxu0
        %v7463 = vadd.f32 %v7195, %v7462
        %v7464 = vpop.f32.mrb[0].mxu0
        %7465 = vmatprep.mubr.bf16.mxu0 %v7076
        %7466 = vmatmul.mubr.bf16.gmra.mrb[0].mxu0 %v7060
        %v7467 = vpop.f32.mrb[0].mxu0
        %v7468 = vadd.f32 %v7195, %v7467
        %v7469 = vpop.f32.mrb[0].mxu0
        %v7470 = vpop.f32.mrb[0].mxu0
        %v7471 = vadd.f32 %v7195, %v7470
        %v7472 = vpop.f32.mrb[0].mxu0
        %7473 = vmatprep.mubr.bf16.mxu0 %v7080
        %7474 = vmatmul.mubr.bf16.gmra.mrb[0].mxu0 %v7064
        %v7475 = vpop.f32.mrb[0].mxu0
        %v7476 = vadd.f32 %v7195, %v7475
        %v7477 = vpop.f32.mrb[0].mxu0
        %v7478 = vpop.f32.mrb[0].mxu0
        %v7479 = vadd.f32 %v7195, %v7478
        %v7480 = vpop.f32.mrb[0].mxu0
        %7481 = vmatprep.mubr.bf16.mxu0 %v7084
        %7482 = vmatmul.mubr.bf16.gmra.mrb[0].mxu0 %v7068
        %v7483 = vpop.f32.mrb[0].mxu0
        %v7484 = vadd.f32 %v7195, %v7483
        %v7485 = vpop.f32.mrb[0].mxu0
        %v7486 = vpop.f32.mrb[0].mxu0
        %v7487 = vadd.f32 %v7195, %v7486
        %v7488 = vpop.f32.mrb[0].mxu0
        %7489 = vdwg.mxu0
        %7490 = vmatprep.subr.bf16.mxu0 0
        %7491 = vmatpush1.bf16.msra.mxu0 %v7357
        %7492 = vmatprep.subr.bf16.mxu0 0
        %7493 = vmatpush1.bf16.msra.mxu0 %v7358
        %7494 = vmatprep.subr.bf16.mxu0 0
        %7495 = vmatpush1.bf16.msra.mxu0 %v7359
        %7496 = vmatprep.subr.bf16.mxu0 0
        %7497 = vmatpush1.bf16.msra.mxu0 %v7360
        %7498 = vmatprep.subr.bf16.mxu0 0
        %7499 = vmatpush1.bf16.msra.mxu0 %v7361
        %7500 = vmatprep.subr.bf16.mxu0 0
        %7501 = vmatpush1.bf16.msra.mxu0 %v7362
        %7502 = vmatprep.subr.bf16.mxu0 0
        %7503 = vmatpush1.bf16.msra.mxu0 %v7363
        %7504 = vmatprep.subr.bf16.mxu0 0
        %7505 = vmatpush1.bf16.msra.mxu0 %v7364
        %7506 = vmatprep.subr.bf16.mxu0 0
        %7507 = vmatpush1.bf16.msra.mxu0 %v7365
        %7508 = vmatprep.subr.bf16.mxu0 0
        %7509 = vmatpush1.bf16.msra.mxu0 %v7366
        %7510 = vmatprep.subr.bf16.mxu0 0
        %7511 = vmatpush1.bf16.msra.mxu0 %v7367
        %7512 = vmatprep.subr.bf16.mxu0 0
        %7513 = vmatpush1.bf16.msra.mxu0 %v7368
        %7514 = vmatprep.subr.bf16.mxu0 0
        %7515 = vmatpush1.bf16.msra.mxu0 %v7369
        %7516 = vmatprep.subr.bf16.mxu0 0
        %7517 = vmatpush1.bf16.msra.mxu0 %v7370
        %7518 = vmatprep.subr.bf16.mxu0 0
        %7519 = vmatpush1.bf16.msra.mxu0 %v7371
        %7520 = vmatprep.subr.bf16.mxu0 0
        %7521 = vmatpush1.bf16.msra.mxu0 %v7372
        %7522 = vmatprep.mubr.bf16.mxu0 %v7104
        %7523 = vmatmul.mubr.bf16.gmra.mrb[0].mxu0 %v7088
        %v7524 = vpop.f32.mrb[0].mxu0
        %v7525 = vadd.f32 %v7460, %v7524
        %v7526 = vpop.f32.mrb[0].mxu0
        %v7527 = vpop.f32.mrb[0].mxu0
        %v7528 = vadd.f32 %v7463, %v7527
        %v7529 = vpop.f32.mrb[0].mxu0
        %7530 = vmatprep.mubr.bf16.mxu0 %v7108
        %7531 = vmatmul.mubr.bf16.gmra.mrb[0].mxu0 %v7092
        %v7532 = vpop.f32.mrb[0].mxu0
        %v7533 = vadd.f32 %v7468, %v7532
        %v7534 = vpop.f32.mrb[0].mxu0
        %v7535 = vpop.f32.mrb[0].mxu0
        %v7536 = vadd.f32 %v7471, %v7535
        %v7537 = vpop.f32.mrb[0].mxu0
        %7538 = vmatprep.mubr.bf16.mxu0 %v7112
        %7539 = vmatmul.mubr.bf16.gmra.mrb[0].mxu0 %v7096
        %v7540 = vpop.f32.mrb[0].mxu0
        %v7541 = vadd.f32 %v7476, %v7540
        %v7542 = vpop.f32.mrb[0].mxu0
        %v7543 = vpop.f32.mrb[0].mxu0
        %v7544 = vadd.f32 %v7479, %v7543
        %v7545 = vpop.f32.mrb[0].mxu0
        %7546 = vmatprep.mubr.bf16.mxu0 %v7116
        %7547 = vmatmul.mubr.bf16.gmra.mrb[0].mxu0 %v7100
        %v7548 = vpop.f32.mrb[0].mxu0
        %v7549 = vadd.f32 %v7484, %v7548
        %v7550 = vpop.f32.mrb[0].mxu0
        %v7551 = vpop.f32.mrb[0].mxu0
        %v7552 = vadd.f32 %v7487, %v7551
        %v7553 = vpop.f32.mrb[0].mxu0
        %7554 = vdwg.mxu0
        %7555 = vmatprep.subr.bf16.mxu0 0
        %7556 = vmatpush1.bf16.msra.mxu0 %v7373
        %7557 = vmatprep.subr.bf16.mxu0 0
        %7558 = vmatpush1.bf16.msra.mxu0 %v7374
        %7559 = vmatprep.subr.bf16.mxu0 0
        %7560 = vmatpush1.bf16.msra.mxu0 %v7375
        %7561 = vmatprep.subr.bf16.mxu0 0
        %7562 = vmatpush1.bf16.msra.mxu0 %v7376
        %7563 = vmatprep.subr.bf16.mxu0 0
        %7564 = vmatpush1.bf16.msra.mxu0 0
        %7565 = vmatprep.subr.bf16.mxu0 0
        %7566 = vmatpush1.bf16.msra.mxu0 0
        %7567 = vmatprep.subr.bf16.mxu0 0
        %7568 = vmatpush1.bf16.msra.mxu0 0
        %7569 = vmatprep.subr.bf16.mxu0 0
        %7570 = vmatpush1.bf16.msra.mxu0 0
        %7571 = vmatprep.subr.bf16.mxu0 0
        %7572 = vmatpush1.bf16.msra.mxu0 0
        %7573 = vmatprep.subr.bf16.mxu0 0
        %7574 = vmatpush1.bf16.msra.mxu0 0
        %7575 = vmatprep.subr.bf16.mxu0 0
        %7576 = vmatpush1.bf16.msra.mxu0 0
        %7577 = vmatprep.subr.bf16.mxu0 0
        %7578 = vmatpush1.bf16.msra.mxu0 0
        %7579 = vmatprep.subr.bf16.mxu0 0
        %7580 = vmatpush1.bf16.msra.mxu0 0
        %7581 = vmatprep.subr.bf16.mxu0 0
        %7582 = vmatpush1.bf16.msra.mxu0 0
        %7583 = vmatprep.subr.bf16.mxu0 0
        %7584 = vmatpush1.bf16.msra.mxu0 0
        %7585 = vmatprep.subr.bf16.mxu0 0
        %7586 = vmatpush1.bf16.msra.mxu0 0
        %7587 = vmatprep.mubr.bf16.mxu0 0
        %7588 = vmatmul.mubr.bf16.gmra.mrb[0].mxu0 %v7414
        %v7589 = vpop.f32.mrb[0].mxu0
        %v7590 = vadd.f32 %v7525, %v7589
        %v7591 = vpop.f32.mrb[0].mxu0
        %v7592 = vpop.f32.mrb[0].mxu0
        %v7593 = vadd.f32 %v7528, %v7592
        %v7594 = vpop.f32.mrb[0].mxu0
        %7595 = vmatprep.mubr.bf16.mxu0 0
        %7596 = vmatmul.mubr.bf16.gmra.mrb[0].mxu0 %v7417
        %v7597 = vpop.f32.mrb[0].mxu0
        %v7598 = vadd.f32 %v7533, %v7597
        %v7599 = vpop.f32.mrb[0].mxu0
        %v7600 = vpop.f32.mrb[0].mxu0
        %v7601 = vadd.f32 %v7536, %v7600
        %v7602 = vpop.f32.mrb[0].mxu0
        %7603 = vmatprep.mubr.bf16.mxu0 0
        %7604 = vmatmul.mubr.bf16.gmra.mrb[0].mxu0 %v7420
        %v7605 = vpop.f32.mrb[0].mxu0
        %v7606 = vadd.f32 %v7541, %v7605
        %v7607 = vpop.f32.mrb[0].mxu0
        %v7608 = vpop.f32.mrb[0].mxu0
        %v7609 = vadd.f32 %v7544, %v7608
        %v7610 = vpop.f32.mrb[0].mxu0
        %7611 = vmatprep.mubr.bf16.mxu0 0
        %7612 = vmatmul.mubr.bf16.gmra.mrb[0].mxu0 %v7423
        %v7613 = vpop.f32.mrb[0].mxu0
        %v7614 = vadd.f32 %v7549, %v7613
        %v7615 = vpop.f32.mrb[0].mxu0
        %v7616 = vpop.f32.mrb[0].mxu0
        %v7617 = vadd.f32 %v7552, %v7616
        %v7618 = vpop.f32.mrb[0].mxu0
        %7619 = vdwg.mxu0
        %v7620 = vmax.f32 %v7590, 0.0
        %v7621 = vmax.f32 %v7593, 0.0
        %v7622 = vmax.f32 %v7598, 0.0
        %v7623 = vmax.f32 %v7601, 0.0
        %v7624 = vmax.f32 %v7606, 0.0
        %v7625 = vmax.f32 %v7609, 0.0
        %v7626 = vmax.f32 %v7614, 0.0
        %v7627 = vmax.f32 %v7617, 0.0
        %v7636 = vcombine.high %v7620, %v7620
        %v7638 = vunpack.c.l.s4 1983009808
        %v7639 = vunpack.c.0.s8 %v7638
        %v7640 = vlaneseq
        %v7641 = vshrl.u32 %v7640, 7
        %v7642 = vsub.s32 %v7639, %v7641
        %v7643 = vrot.slane %v7620, %v7642
        %v7645 = vunpack.c.l.s4 1983009808
        %v7646 = vunpack.c.0.s8 %v7645
        %v7647 = vlaneseq
        %v7648 = vshrl.u32 %v7647, 7
        %v7649 = vsub.s32 %v7646, %v7648
        %v7650 = vrot.slane %v7636, %v7649
        %v7651 = vcombine.high %v7643, %v7643
        %v7652 = vcombine.high %v7650, %v7650
        %v7653 = vcombine.high %v7621, %v7621
        %v7655 = vunpack.c.l.s4 1983009808
        %v7656 = vunpack.c.0.s8 %v7655
        %v7657 = vlaneseq
        %v7658 = vshrl.u32 %v7657, 7
        %v7659 = vsub.s32 %v7656, %v7658
        %v7660 = vrot.slane %v7621, %v7659
        %v7662 = vunpack.c.l.s4 1983009808
        %v7663 = vunpack.c.0.s8 %v7662
        %v7664 = vlaneseq
        %v7665 = vshrl.u32 %v7664, 7
        %v7666 = vsub.s32 %v7663, %v7665
        %v7667 = vrot.slane %v7653, %v7666
        %v7668 = vcombine.high %v7660, %v7660
        %v7669 = vcombine.high %v7667, %v7667
        %v7670 = vcombine.high %v7622, %v7622
        %v7672 = vunpack.c.l.s4 1983009808
        %v7673 = vunpack.c.0.s8 %v7672
        %v7674 = vlaneseq
        %v7675 = vshrl.u32 %v7674, 7
        %v7676 = vsub.s32 %v7673, %v7675
        %v7677 = vrot.slane %v7622, %v7676
        %v7679 = vunpack.c.l.s4 1983009808
        %v7680 = vunpack.c.0.s8 %v7679
        %v7681 = vlaneseq
        %v7682 = vshrl.u32 %v7681, 7
        %v7683 = vsub.s32 %v7680, %v7682
        %v7684 = vrot.slane %v7670, %v7683
        %v7685 = vcombine.high %v7677, %v7677
        %v7686 = vcombine.high %v7684, %v7684
        %v7687 = vcombine.high %v7623, %v7623
        %v7689 = vunpack.c.l.s4 1983009808
        %v7690 = vunpack.c.0.s8 %v7689
        %v7691 = vlaneseq
        %v7692 = vshrl.u32 %v7691, 7
        %v7693 = vsub.s32 %v7690, %v7692
        %v7694 = vrot.slane %v7623, %v7693
        %v7696 = vunpack.c.l.s4 1983009808
        %v7697 = vunpack.c.0.s8 %v7696
        %v7698 = vlaneseq
        %v7699 = vshrl.u32 %v7698, 7
        %v7700 = vsub.s32 %v7697, %v7699
        %v7701 = vrot.slane %v7687, %v7700
        %v7702 = vcombine.high %v7694, %v7694
        %v7703 = vcombine.high %v7701, %v7701
        %v7704 = vcombine.high %v7624, %v7624
        %v7706 = vunpack.c.l.s4 1983009808
        %v7707 = vunpack.c.0.s8 %v7706
        %v7708 = vlaneseq
        %v7709 = vshrl.u32 %v7708, 7
        %v7710 = vsub.s32 %v7707, %v7709
        %v7711 = vrot.slane %v7624, %v7710
        %v7713 = vunpack.c.l.s4 1983009808
        %v7714 = vunpack.c.0.s8 %v7713
        %v7715 = vlaneseq
        %v7716 = vshrl.u32 %v7715, 7
        %v7717 = vsub.s32 %v7714, %v7716
        %v7718 = vrot.slane %v7704, %v7717
        %v7719 = vcombine.high %v7711, %v7711
        %v7720 = vcombine.high %v7718, %v7718
        %v7721 = vcombine.high %v7625, %v7625
        %v7723 = vunpack.c.l.s4 1983009808
        %v7724 = vunpack.c.0.s8 %v7723
        %v7725 = vlaneseq
        %v7726 = vshrl.u32 %v7725, 7
        %v7727 = vsub.s32 %v7724, %v7726
        %v7728 = vrot.slane %v7625, %v7727
        %v7730 = vunpack.c.l.s4 1983009808
        %v7731 = vunpack.c.0.s8 %v7730
        %v7732 = vlaneseq
        %v7733 = vshrl.u32 %v7732, 7
        %v7734 = vsub.s32 %v7731, %v7733
        %v7735 = vrot.slane %v7721, %v7734
        %v7736 = vcombine.high %v7728, %v7728
        %v7737 = vcombine.high %v7735, %v7735
        %v7738 = vcombine.high %v7626, %v7626
        %v7740 = vunpack.c.l.s4 1983009808
        %v7741 = vunpack.c.0.s8 %v7740
        %v7742 = vlaneseq
        %v7743 = vshrl.u32 %v7742, 7
        %v7744 = vsub.s32 %v7741, %v7743
        %v7745 = vrot.slane %v7626, %v7744
        %v7747 = vunpack.c.l.s4 1983009808
        %v7748 = vunpack.c.0.s8 %v7747
        %v7749 = vlaneseq
        %v7750 = vshrl.u32 %v7749, 7
        %v7751 = vsub.s32 %v7748, %v7750
        %v7752 = vrot.slane %v7738, %v7751
        %v7753 = vcombine.high %v7745, %v7745
        %v7754 = vcombine.high %v7752, %v7752
        %v7755 = vcombine.high %v7627, %v7627
        %v7757 = vunpack.c.l.s4 1983009808
        %v7758 = vunpack.c.0.s8 %v7757
        %v7759 = vlaneseq
        %v7760 = vshrl.u32 %v7759, 7
        %v7761 = vsub.s32 %v7758, %v7760
        %v7762 = vrot.slane %v7627, %v7761
        %v7764 = vunpack.c.l.s4 1983009808
        %v7765 = vunpack.c.0.s8 %v7764
        %v7766 = vlaneseq
        %v7767 = vshrl.u32 %v7766, 7
        %v7768 = vsub.s32 %v7765, %v7767
        %v7769 = vrot.slane %v7755, %v7768
        %v7770 = vcombine.high %v7762, %v7762
        %v7771 = vcombine.high %v7769, %v7769
        %vm7804 = vcmask 1041408
        %v7805 = vsel %vm7804, %v7643, -inf
        %v7806 = vrot.slane %v7805, 4
        %v7807 = vmax.f32 %v7805, %v7806
        %v7808 = vrot.slane %v7807, 2
        %v7809 = vmax.f32 %v7807, %v7808
        %v7810 = vrot.slane %v7809, 1
        %v7811 = vmax.f32 %v7809, %v7810
        %v7812 = vsel %vm7804, %v7651, -inf
        %v7813 = vrot.slane %v7812, 4
        %v7814 = vmax.f32 %v7812, %v7813
        %v7815 = vrot.slane %v7814, 2
        %v7816 = vmax.f32 %v7814, %v7815
        %v7817 = vrot.slane %v7816, 1
        %v7818 = vmax.f32 %v7816, %v7817
        %v7819 = vsel %vm7804, %v7650, -inf
        %v7820 = vrot.slane %v7819, 4
        %v7821 = vmax.f32 %v7819, %v7820
        %v7822 = vrot.slane %v7821, 2
        %v7823 = vmax.f32 %v7821, %v7822
        %v7824 = vrot.slane %v7823, 1
        %v7825 = vmax.f32 %v7823, %v7824
        %v7826 = vsel %vm7804, %v7652, -inf
        %v7827 = vrot.slane %v7826, 4
        %v7828 = vmax.f32 %v7826, %v7827
        %v7829 = vrot.slane %v7828, 2
        %v7830 = vmax.f32 %v7828, %v7829
        %v7831 = vrot.slane %v7830, 1
        %v7832 = vmax.f32 %v7830, %v7831
        %v7833 = vsel %vm7804, %v7660, -inf
        %v7834 = vrot.slane %v7833, 4
        %v7835 = vmax.f32 %v7833, %v7834
        %v7836 = vrot.slane %v7835, 2
        %v7837 = vmax.f32 %v7835, %v7836
        %v7838 = vrot.slane %v7837, 1
        %v7839 = vmax.f32 %v7837, %v7838
        %v7840 = vsel %vm7804, %v7668, -inf
        %v7841 = vrot.slane %v7840, 4
        %v7842 = vmax.f32 %v7840, %v7841
        %v7843 = vrot.slane %v7842, 2
        %v7844 = vmax.f32 %v7842, %v7843
        %v7845 = vrot.slane %v7844, 1
        %v7846 = vmax.f32 %v7844, %v7845
        %v7847 = vsel %vm7804, %v7667, -inf
        %v7848 = vrot.slane %v7847, 4
        %v7849 = vmax.f32 %v7847, %v7848
        %v7850 = vrot.slane %v7849, 2
        %v7851 = vmax.f32 %v7849, %v7850
        %v7852 = vrot.slane %v7851, 1
        %v7853 = vmax.f32 %v7851, %v7852
        %v7854 = vsel %vm7804, %v7669, -inf
        %v7855 = vrot.slane %v7854, 4
        %v7856 = vmax.f32 %v7854, %v7855
        %v7857 = vrot.slane %v7856, 2
        %v7858 = vmax.f32 %v7856, %v7857
        %v7859 = vrot.slane %v7858, 1
        %v7860 = vmax.f32 %v7858, %v7859
        %v7861 = vsel %vm7804, %v7677, -inf
        %v7862 = vrot.slane %v7861, 4
        %v7863 = vmax.f32 %v7861, %v7862
        %v7864 = vrot.slane %v7863, 2
        %v7865 = vmax.f32 %v7863, %v7864
        %v7866 = vrot.slane %v7865, 1
        %v7867 = vmax.f32 %v7865, %v7866
        %v7868 = vsel %vm7804, %v7685, -inf
        %v7869 = vrot.slane %v7868, 4
        %v7870 = vmax.f32 %v7868, %v7869
        %v7871 = vrot.slane %v7870, 2
        %v7872 = vmax.f32 %v7870, %v7871
        %v7873 = vrot.slane %v7872, 1
        %v7874 = vmax.f32 %v7872, %v7873
        %v7875 = vsel %vm7804, %v7684, -inf
        %v7876 = vrot.slane %v7875, 4
        %v7877 = vmax.f32 %v7875, %v7876
        %v7878 = vrot.slane %v7877, 2
        %v7879 = vmax.f32 %v7877, %v7878
        %v7880 = vrot.slane %v7879, 1
        %v7881 = vmax.f32 %v7879, %v7880
        %v7882 = vsel %vm7804, %v7686, -inf
        %v7883 = vrot.slane %v7882, 4
        %v7884 = vmax.f32 %v7882, %v7883
        %v7885 = vrot.slane %v7884, 2
        %v7886 = vmax.f32 %v7884, %v7885
        %v7887 = vrot.slane %v7886, 1
        %v7888 = vmax.f32 %v7886, %v7887
        %v7889 = vsel %vm7804, %v7694, -inf
        %v7890 = vrot.slane %v7889, 4
        %v7891 = vmax.f32 %v7889, %v7890
        %v7892 = vrot.slane %v7891, 2
        %v7893 = vmax.f32 %v7891, %v7892
        %v7894 = vrot.slane %v7893, 1
        %v7895 = vmax.f32 %v7893, %v7894
        %v7896 = vsel %vm7804, %v7702, -inf
        %v7897 = vrot.slane %v7896, 4
        %v7898 = vmax.f32 %v7896, %v7897
        %v7899 = vrot.slane %v7898, 2
        %v7900 = vmax.f32 %v7898, %v7899
        %v7901 = vrot.slane %v7900, 1
        %v7902 = vmax.f32 %v7900, %v7901
        %v7903 = vsel %vm7804, %v7701, -inf
        %v7904 = vrot.slane %v7903, 4
        %v7905 = vmax.f32 %v7903, %v7904
        %v7906 = vrot.slane %v7905, 2
        %v7907 = vmax.f32 %v7905, %v7906
        %v7908 = vrot.slane %v7907, 1
        %v7909 = vmax.f32 %v7907, %v7908
        %v7910 = vsel %vm7804, %v7703, -inf
        %v7911 = vrot.slane %v7910, 4
        %v7912 = vmax.f32 %v7910, %v7911
        %v7913 = vrot.slane %v7912, 2
        %v7914 = vmax.f32 %v7912, %v7913
        %v7915 = vrot.slane %v7914, 1
        %v7916 = vmax.f32 %v7914, %v7915
        %v7917 = vsel %vm7804, %v7711, -inf
        %v7918 = vrot.slane %v7917, 4
        %v7919 = vmax.f32 %v7917, %v7918
        %v7920 = vrot.slane %v7919, 2
        %v7921 = vmax.f32 %v7919, %v7920
        %v7922 = vrot.slane %v7921, 1
        %v7923 = vmax.f32 %v7921, %v7922
        %v7924 = vsel %vm7804, %v7719, -inf
        %v7925 = vrot.slane %v7924, 4
        %v7926 = vmax.f32 %v7924, %v7925
        %v7927 = vrot.slane %v7926, 2
        %v7928 = vmax.f32 %v7926, %v7927
        %v7929 = vrot.slane %v7928, 1
        %v7930 = vmax.f32 %v7928, %v7929
        %v7931 = vsel %vm7804, %v7718, -inf
        %v7932 = vrot.slane %v7931, 4
        %v7933 = vmax.f32 %v7931, %v7932
        %v7934 = vrot.slane %v7933, 2
        %v7935 = vmax.f32 %v7933, %v7934
        %v7936 = vrot.slane %v7935, 1
        %v7937 = vmax.f32 %v7935, %v7936
        %v7938 = vsel %vm7804, %v7720, -inf
        %v7939 = vrot.slane %v7938, 4
        %v7940 = vmax.f32 %v7938, %v7939
        %v7941 = vrot.slane %v7940, 2
        %v7942 = vmax.f32 %v7940, %v7941
        %v7943 = vrot.slane %v7942, 1
        %v7944 = vmax.f32 %v7942, %v7943
        %v7945 = vsel %vm7804, %v7728, -inf
        %v7946 = vrot.slane %v7945, 4
        %v7947 = vmax.f32 %v7945, %v7946
        %v7948 = vrot.slane %v7947, 2
        %v7949 = vmax.f32 %v7947, %v7948
        %v7950 = vrot.slane %v7949, 1
        %v7951 = vmax.f32 %v7949, %v7950
        %v7952 = vsel %vm7804, %v7736, -inf
        %v7953 = vrot.slane %v7952, 4
        %v7954 = vmax.f32 %v7952, %v7953
        %v7955 = vrot.slane %v7954, 2
        %v7956 = vmax.f32 %v7954, %v7955
        %v7957 = vrot.slane %v7956, 1
        %v7958 = vmax.f32 %v7956, %v7957
        %v7959 = vsel %vm7804, %v7735, -inf
        %v7960 = vrot.slane %v7959, 4
        %v7961 = vmax.f32 %v7959, %v7960
        %v7962 = vrot.slane %v7961, 2
        %v7963 = vmax.f32 %v7961, %v7962
        %v7964 = vrot.slane %v7963, 1
        %v7965 = vmax.f32 %v7963, %v7964
        %v7966 = vsel %vm7804, %v7737, -inf
        %v7967 = vrot.slane %v7966, 4
        %v7968 = vmax.f32 %v7966, %v7967
        %v7969 = vrot.slane %v7968, 2
        %v7970 = vmax.f32 %v7968, %v7969
        %v7971 = vrot.slane %v7970, 1
        %v7972 = vmax.f32 %v7970, %v7971
        %v7973 = vsel %vm7804, %v7745, -inf
        %v7974 = vrot.slane %v7973, 4
        %v7975 = vmax.f32 %v7973, %v7974
        %v7976 = vrot.slane %v7975, 2
        %v7977 = vmax.f32 %v7975, %v7976
        %v7978 = vrot.slane %v7977, 1
        %v7979 = vmax.f32 %v7977, %v7978
        %v7980 = vsel %vm7804, %v7753, -inf
        %v7981 = vrot.slane %v7980, 4
        %v7982 = vmax.f32 %v7980, %v7981
        %v7983 = vrot.slane %v7982, 2
        %v7984 = vmax.f32 %v7982, %v7983
        %v7985 = vrot.slane %v7984, 1
        %v7986 = vmax.f32 %v7984, %v7985
        %v7987 = vsel %vm7804, %v7752, -inf
        %v7988 = vrot.slane %v7987, 4
        %v7989 = vmax.f32 %v7987, %v7988
        %v7990 = vrot.slane %v7989, 2
        %v7991 = vmax.f32 %v7989, %v7990
        %v7992 = vrot.slane %v7991, 1
        %v7993 = vmax.f32 %v7991, %v7992
        %v7994 = vsel %vm7804, %v7754, -inf
        %v7995 = vrot.slane %v7994, 4
        %v7996 = vmax.f32 %v7994, %v7995
        %v7997 = vrot.slane %v7996, 2
        %v7998 = vmax.f32 %v7996, %v7997
        %v7999 = vrot.slane %v7998, 1
        %v8000 = vmax.f32 %v7998, %v7999
        %v8001 = vsel %vm7804, %v7762, -inf
        %v8002 = vrot.slane %v8001, 4
        %v8003 = vmax.f32 %v8001, %v8002
        %v8004 = vrot.slane %v8003, 2
        %v8005 = vmax.f32 %v8003, %v8004
        %v8006 = vrot.slane %v8005, 1
        %v8007 = vmax.f32 %v8005, %v8006
        %v8008 = vsel %vm7804, %v7770, -inf
        %v8009 = vrot.slane %v8008, 4
        %v8010 = vmax.f32 %v8008, %v8009
        %v8011 = vrot.slane %v8010, 2
        %v8012 = vmax.f32 %v8010, %v8011
        %v8013 = vrot.slane %v8012, 1
        %v8014 = vmax.f32 %v8012, %v8013
        %v8015 = vsel %vm7804, %v7769, -inf
        %v8016 = vrot.slane %v8015, 4
        %v8017 = vmax.f32 %v8015, %v8016
        %v8018 = vrot.slane %v8017, 2
        %v8019 = vmax.f32 %v8017, %v8018
        %v8020 = vrot.slane %v8019, 1
        %v8021 = vmax.f32 %v8019, %v8020
        %v8022 = vsel %vm7804, %v7771, -inf
        %v8023 = vrot.slane %v8022, 4
        %v8024 = vmax.f32 %v8022, %v8023
        %v8025 = vrot.slane %v8024, 2
        %v8026 = vmax.f32 %v8024, %v8025
        %v8027 = vrot.slane %v8026, 1
        %v8028 = vmax.f32 %v8026, %v8027
        %v8029 = vmax.f32 %v7811, %v7839
        %v8030 = vmax.f32 %v7818, %v7846
        %v8031 = vmax.f32 %v7825, %v7853
        %v8032 = vmax.f32 %v7832, %v7860
        %v8033 = vmax.f32 %v7867, %v7895
        %v8034 = vmax.f32 %v7874, %v7902
        %v8035 = vmax.f32 %v7881, %v7909
        %v8036 = vmax.f32 %v7888, %v7916
        %v8037 = vmax.f32 %v7923, %v7951
        %v8038 = vmax.f32 %v7930, %v7958
        %v8039 = vmax.f32 %v7937, %v7965
        %v8040 = vmax.f32 %v7944, %v7972
        %v8041 = vmax.f32 %v7979, %v8007
        %v8042 = vmax.f32 %v7986, %v8014
        %v8043 = vmax.f32 %v7993, %v8021
        %v8044 = vmax.f32 %v8000, %v8028
        %v8045 = vpack.c.bf16 %v8029, %v8029
        %v8046 = vpack.c.bf16 %v8030, %v8030
        %v8047 = vpack.c.bf16 %v8031, %v8031
        %v8048 = vpack.c.bf16 %v8032, %v8032
        %v8049 = vpack.c.bf16 %v8033, %v8033
        %v8050 = vpack.c.bf16 %v8034, %v8034
        %v8051 = vpack.c.bf16 %v8035, %v8035
        %v8052 = vpack.c.bf16 %v8036, %v8036
        %v8053 = vpack.c.bf16 %v8037, %v8037
        %v8054 = vpack.c.bf16 %v8038, %v8038
        %v8055 = vpack.c.bf16 %v8039, %v8039
        %v8056 = vpack.c.bf16 %v8040, %v8040
        %v8057 = vpack.c.bf16 %v8041, %v8041
        %v8058 = vpack.c.bf16 %v8042, %v8042
        %v8059 = vpack.c.bf16 %v8043, %v8043
        %v8060 = vpack.c.bf16 %v8044, %v8044
        %8061 = vst [vmem:[#allocation4] sm:$0x7] 0
        %s8062 = scalar_lea.vmem [#allocation4], 20
        %8063 = vst [vmem:[%s8062] sm:$0x7] 0
        %s8064 = scalar_lea.vmem [#allocation4], 4
        %vm8065 = vcmask 1040384
        %vm8066 = vmand %vm8065, %vm390
        %v8067 = vld [vmem:[%s8064] sm:$0x1]
        %v8068 = vsel %vm8066, 0, %v8067
        %8069 = vst [vmem:[%s8064] sm:$0x1] %v8068
        %v8070 = vld [vmem:[%s8064 + $0x4] sm:$0x1]
        %v8071 = vsel %vm8066, 0, %v8070
        %8072 = vst [vmem:[%s8064 + $0x4] sm:$0x1] %v8071
        %v8073 = vld [vmem:[%s8064 + $0x8] sm:$0x1]
        %v8074 = vsel %vm8066, 0, %v8073
        %8075 = vst [vmem:[%s8064 + $0x8] sm:$0x1] %v8074
        %v8076 = vld [vmem:[%s8064 + $0xc] sm:$0x1]
        %v8077 = vsel %vm8066, 0, %v8076
        %8078 = vst [vmem:[%s8064 + $0xc] sm:$0x1] %v8077
        %vm8079 = vcmask 1042434
        %vm8080 = vsmask.f32 7946
        %vm8081 = vmand %vm8079, %vm8080
        %v8082 = vld [vmem:[%s8064] sm:$0x4]
        %v8083 = vsel %vm8081, 0, %v8082
        %8084 = vst [vmem:[%s8064] sm:$0x4] %v8083
        %v8085 = vld [vmem:[%s8064 + $0x4] sm:$0x4]
        %v8086 = vsel %vm8081, 0, %v8085
        %8087 = vst [vmem:[%s8064 + $0x4] sm:$0x4] %v8086
        %v8088 = vld [vmem:[%s8064 + $0x8] sm:$0x4]
        %v8089 = vsel %vm8081, 0, %v8088
        %8090 = vst [vmem:[%s8064 + $0x8] sm:$0x4] %v8089
        %v8091 = vld [vmem:[%s8064 + $0xc] sm:$0x4]
        %v8092 = vsel %vm8081, 0, %v8091
        %8093 = vst [vmem:[%s8064 + $0xc] sm:$0x4] %v8092
        %v8110 = vunpack.c.l.b16 %v8045
        %v8111 = vunpack.c.l.b16 %v8046
        %v8112 = vunpack.c.l.b16 %v8047
        %v8113 = vunpack.c.l.b16 %v8048
        %v8114 = vunpack.c.l.b16 %v8049
        %v8115 = vunpack.c.l.b16 %v8050
        %v8116 = vunpack.c.l.b16 %v8051
        %v8117 = vunpack.c.l.b16 %v8052
        %v8118 = vunpack.c.l.b16 %v8053
        %v8119 = vunpack.c.l.b16 %v8054
        %v8120 = vunpack.c.l.b16 %v8055
        %v8121 = vunpack.c.l.b16 %v8056
        %v8122 = vunpack.c.l.b16 %v8057
        %v8123 = vunpack.c.l.b16 %v8058
        %v8124 = vunpack.c.l.b16 %v8059
        %v8125 = vunpack.c.l.b16 %v8060
        %v8126 = vpack.c.b16 %v8110, %v8110
        %v8127 = vpack.c.b16 %v8111, %v8111
        %v8128 = vpack.c.b16 %v8112, %v8112
        %v8129 = vpack.c.b16 %v8113, %v8113
        %v8130 = vpack.c.b16 %v8114, %v8114
        %v8131 = vpack.c.b16 %v8115, %v8115
        %v8132 = vpack.c.b16 %v8116, %v8116
        %v8133 = vpack.c.b16 %v8117, %v8117
        %v8134 = vpack.c.b16 %v8118, %v8118
        %v8135 = vpack.c.b16 %v8119, %v8119
        %v8136 = vpack.c.b16 %v8120, %v8120
        %v8137 = vpack.c.b16 %v8121, %v8121
        %v8138 = vpack.c.b16 %v8122, %v8122
        %v8139 = vpack.c.b16 %v8123, %v8123
        %v8140 = vpack.c.b16 %v8124, %v8124
        %v8141 = vpack.c.b16 %v8125, %v8125
        %v8142 = vunpack.c.l.b16 %v8126
        %v8143 = vunpack.c.l.b16 %v8127
        %v8144 = vunpack.c.l.b16 %v8128
        %v8145 = vunpack.c.l.b16 %v8129
        %v8146 = vunpack.c.l.b16 %v8130
        %v8147 = vunpack.c.l.b16 %v8131
        %v8148 = vunpack.c.l.b16 %v8132
        %v8149 = vunpack.c.l.b16 %v8133
        %v8150 = vunpack.c.l.b16 %v8134
        %v8151 = vunpack.c.l.b16 %v8135
        %v8152 = vunpack.c.l.b16 %v8136
        %v8153 = vunpack.c.l.b16 %v8137
        %v8154 = vunpack.c.l.b16 %v8138
        %v8155 = vunpack.c.l.b16 %v8139
        %v8156 = vunpack.c.l.b16 %v8140
        %v8157 = vunpack.c.l.b16 %v8141
        %v8158 = vsel %vm6201, %v8143, %v8142
        %v8159 = vsel %vm6203, %v8144, %v8158
        %v8160 = vsel %vm6205, %v8145, %v8159
        %v8161 = vsel %vm6201, %v8147, %v8146
        %v8162 = vsel %vm6203, %v8148, %v8161
        %v8163 = vsel %vm6205, %v8149, %v8162
        %v8164 = vsel %vm6201, %v8151, %v8150
        %v8165 = vsel %vm6203, %v8152, %v8164
        %v8166 = vsel %vm6205, %v8153, %v8165
        %v8167 = vsel %vm6201, %v8155, %v8154
        %v8168 = vsel %vm6203, %v8156, %v8167
        %v8169 = vsel %vm6205, %v8157, %v8168
        %v8170 = vpack.c.b16 %v8160, %v8160
        %v8171 = vpack.c.b16 %v8163, %v8163
        %v8172 = vpack.c.b16 %v8166, %v8166
        %v8173 = vpack.c.b16 %v8169, %v8169
        %vm8178 = vsmask.f32 2306
        %vm8179 = vmand %vm1425, %vm8178
        %v8180 = vld [vmem:[%s8064] sm:$0x7]
        %v8181 = vsel %vm8179, %v8170, %v8180
        %8182 = vst [vmem:[%s8064] sm:$0x7] %v8181
        %v8183 = vld [vmem:[%s8064 + $0x4] sm:$0x7]
        %v8184 = vsel %vm8179, %v8171, %v8183
        %8185 = vst [vmem:[%s8064 + $0x4] sm:$0x7] %v8184
        %v8186 = vld [vmem:[%s8064 + $0x8] sm:$0x7]
        %v8187 = vsel %vm8179, %v8172, %v8186
        %8188 = vst [vmem:[%s8064 + $0x8] sm:$0x7] %v8187
        %v8189 = vld [vmem:[%s8064 + $0xc] sm:$0x7]
        %v8190 = vsel %vm8179, %v8173, %v8189
        %8191 = vst [vmem:[%s8064 + $0xc] sm:$0x7] %v8190
        %v8192 = vld [vmem:[#allocation4] sm:$0x3]
        %v8193 = vld [vmem:[#allocation4 + $0x4] sm:$0x3]
        %v8194 = vld [vmem:[#allocation4 + $0x8] sm:$0x3]
        %v8195 = vld [vmem:[#allocation4 + $0xc] sm:$0x3]
        %v8196 = vld [vmem:[#allocation4] sm:$0x7]
        %v8197 = vld [vmem:[#allocation4 + $0x4] sm:$0x7]
        %v8198 = vld [vmem:[#allocation4 + $0x8] sm:$0x7]
        %v8199 = vld [vmem:[#allocation4 + $0xc] sm:$0x7]
        %v8205 = vunpack.c.l.s4 1983009808
        %v8206 = vunpack.c.0.s8 %v8205
        %v8207 = vlaneseq
        %v8208 = vshrl.u32 %v8207, 7
        %v8209 = vsub.s32 %v8206, %v8208
        %v8210 = vrot.slane %v8196, %v8209
        %v8211 = vcombine.high %v8210, %v8210
        %v8213 = vunpack.c.l.s4 1983009808
        %v8214 = vunpack.c.0.s8 %v8213
        %v8215 = vlaneseq
        %v8216 = vshrl.u32 %v8215, 7
        %v8217 = vsub.s32 %v8214, %v8216
        %v8218 = vrot.slane %v8197, %v8217
        %v8219 = vcombine.high %v8218, %v8218
        %v8221 = vunpack.c.l.s4 1983009808
        %v8222 = vunpack.c.0.s8 %v8221
        %v8223 = vlaneseq
        %v8224 = vshrl.u32 %v8223, 7
        %v8225 = vsub.s32 %v8222, %v8224
        %v8226 = vrot.slane %v8198, %v8225
        %v8227 = vcombine.high %v8226, %v8226
        %v8229 = vunpack.c.l.s4 1983009808
        %v8230 = vunpack.c.0.s8 %v8229
        %v8231 = vlaneseq
        %v8232 = vshrl.u32 %v8231, 7
        %v8233 = vsub.s32 %v8230, %v8232
        %v8234 = vrot.slane %v8199, %v8233
        %v8235 = vcombine.high %v8234, %v8234
        %vm8236 = vsmask.f32 1280
        %vm8237 = vsmask.f32 3336
        %vm8238 = vmor %vm8236, %vm8237
        %vm8239 = vsmask.f32 5392
        %vm8240 = vmor %vm8238, %vm8239
        %vm8241 = vsmask.f32 7448
        %vm8242 = vmor %vm8240, %vm8241
        %v8244 = vshrl.u32 %v8210, 16
        %v8246 = vrot.slane %v8244, 6
        %v8247 = vshll.u32 %v8210, 16
        %v8249 = vrot.slane %v8247, 7
        %v8250 = vor.u32 %v8246, %v8249
        %v8251 = vrot.slane %v8250, 2
        %v8253 = vshll.u32 %v8211, 16
        %v8255 = vrot.slane %v8253, 7
        %v8256 = vsel %vm8242, %v8251, %v8255
        %v8258 = vshrl.u32 %v8218, 16
        %v8260 = vrot.slane %v8258, 6
        %v8261 = vshll.u32 %v8218, 16
        %v8263 = vrot.slane %v8261, 7
        %v8264 = vor.u32 %v8260, %v8263
        %v8265 = vrot.slane %v8264, 2
        %v8267 = vshll.u32 %v8219, 16
        %v8269 = vrot.slane %v8267, 7
        %v8270 = vsel %vm8242, %v8265, %v8269
        %v8272 = vshrl.u32 %v8226, 16
        %v8274 = vrot.slane %v8272, 6
        %v8275 = vshll.u32 %v8226, 16
        %v8277 = vrot.slane %v8275, 7
        %v8278 = vor.u32 %v8274, %v8277
        %v8279 = vrot.slane %v8278, 2
        %v8281 = vshll.u32 %v8227, 16
        %v8283 = vrot.slane %v8281, 7
        %v8284 = vsel %vm8242, %v8279, %v8283
        %v8286 = vshrl.u32 %v8234, 16
        %v8288 = vrot.slane %v8286, 6
        %v8289 = vshll.u32 %v8234, 16
        %v8291 = vrot.slane %v8289, 7
        %v8292 = vor.u32 %v8288, %v8291
        %v8293 = vrot.slane %v8292, 2
        %v8295 = vshll.u32 %v8235, 16
        %v8297 = vrot.slane %v8295, 7
        %v8298 = vsel %vm8242, %v8293, %v8297
        %v8299 = vld [vmem:[#allocation4] sm:$0x6]
        %v8300 = vld [vmem:[#allocation4 + $0x4] sm:$0x6]
        %v8301 = vld [vmem:[#allocation4 + $0x8] sm:$0x6]
        %v8302 = vld [vmem:[#allocation4 + $0xc] sm:$0x6]
        %v8308 = vunpack.c.l.s4 1983009808
        %v8309 = vunpack.c.0.s8 %v8308
        %v8310 = vlaneseq
        %v8311 = vshrl.u32 %v8310, 7
        %v8312 = vsub.s32 %v8309, %v8311
        %v8313 = vrot.slane %v8299, %v8312
        %v8314 = vcombine.high %v8313, %v8313
        %v8316 = vunpack.c.l.s4 1983009808
        %v8317 = vunpack.c.0.s8 %v8316
        %v8318 = vlaneseq
        %v8319 = vshrl.u32 %v8318, 7
        %v8320 = vsub.s32 %v8317, %v8319
        %v8321 = vrot.slane %v8300, %v8320
        %v8322 = vcombine.high %v8321, %v8321
        %v8324 = vunpack.c.l.s4 1983009808
        %v8325 = vunpack.c.0.s8 %v8324
        %v8326 = vlaneseq
        %v8327 = vshrl.u32 %v8326, 7
        %v8328 = vsub.s32 %v8325, %v8327
        %v8329 = vrot.slane %v8301, %v8328
        %v8330 = vcombine.high %v8329, %v8329
        %v8332 = vunpack.c.l.s4 1983009808
        %v8333 = vunpack.c.0.s8 %v8332
        %v8334 = vlaneseq
        %v8335 = vshrl.u32 %v8334, 7
        %v8336 = vsub.s32 %v8333, %v8335
        %v8337 = vrot.slane %v8302, %v8336
        %v8338 = vcombine.high %v8337, %v8337
        %vm8339 = vmor %vm8065, %vm8079
        %vm8340 = vcmask 1044484
        %vm8341 = vmor %vm8339, %vm8340
        %vm8342 = vcmask 1046534
        %vm8343 = vmor %vm8341, %vm8342
        %v8344 = vrot.slane %v8313, 7
        %v8345 = vrot.slane %v8344, 2
        %v8346 = vrot.slane %v8314, 7
        %v8347 = vsel %vm8343, %v8345, %v8346
        %v8348 = vrot.slane %v8321, 7
        %v8349 = vrot.slane %v8348, 2
        %v8350 = vrot.slane %v8322, 7
        %v8351 = vsel %vm8343, %v8349, %v8350
        %v8352 = vrot.slane %v8329, 7
        %v8353 = vrot.slane %v8352, 2
        %v8354 = vrot.slane %v8330, 7
        %v8355 = vsel %vm8343, %v8353, %v8354
        %v8356 = vrot.slane %v8337, 7
        %v8357 = vrot.slane %v8356, 2
        %v8358 = vrot.slane %v8338, 7
        %v8359 = vsel %vm8343, %v8357, %v8358
        %v8360 = vld [vmem:[%s8064] sm:$0x3]
        %v8361 = vld [vmem:[%s8064 + $0x4] sm:$0x3]
        %v8362 = vld [vmem:[%s8064 + $0x8] sm:$0x3]
        %v8363 = vld [vmem:[%s8064 + $0xc] sm:$0x3]
        %v8364 = vld [vmem:[%s8064] sm:$0x7]
        %v8365 = vld [vmem:[%s8064 + $0x4] sm:$0x7]
        %v8366 = vld [vmem:[%s8064 + $0x8] sm:$0x7]
        %v8367 = vld [vmem:[%s8064 + $0xc] sm:$0x7]
        %v8373 = vunpack.c.l.s4 1983009808
        %v8374 = vunpack.c.0.s8 %v8373
        %v8375 = vlaneseq
        %v8376 = vshrl.u32 %v8375, 7
        %v8377 = vsub.s32 %v8374, %v8376
        %v8378 = vrot.slane %v8364, %v8377
        %v8379 = vcombine.high %v8378, %v8378
        %v8381 = vunpack.c.l.s4 1983009808
        %v8382 = vunpack.c.0.s8 %v8381
        %v8383 = vlaneseq
        %v8384 = vshrl.u32 %v8383, 7
        %v8385 = vsub.s32 %v8382, %v8384
        %v8386 = vrot.slane %v8365, %v8385
        %v8387 = vcombine.high %v8386, %v8386
        %v8389 = vunpack.c.l.s4 1983009808
        %v8390 = vunpack.c.0.s8 %v8389
        %v8391 = vlaneseq
        %v8392 = vshrl.u32 %v8391, 7
        %v8393 = vsub.s32 %v8390, %v8392
        %v8394 = vrot.slane %v8366, %v8393
        %v8395 = vcombine.high %v8394, %v8394
        %v8397 = vunpack.c.l.s4 1983009808
        %v8398 = vunpack.c.0.s8 %v8397
        %v8399 = vlaneseq
        %v8400 = vshrl.u32 %v8399, 7
        %v8401 = vsub.s32 %v8398, %v8400
        %v8402 = vrot.slane %v8367, %v8401
        %v8403 = vcombine.high %v8402, %v8402
        %v8405 = vshrl.u32 %v8378, 16
        %v8407 = vrot.slane %v8405, 6
        %v8408 = vshll.u32 %v8378, 16
        %v8410 = vrot.slane %v8408, 7
        %v8411 = vor.u32 %v8407, %v8410
        %v8412 = vrot.slane %v8411, 2
        %v8414 = vshll.u32 %v8379, 16
        %v8416 = vrot.slane %v8414, 7
        %v8417 = vsel %vm8242, %v8412, %v8416
        %v8419 = vshrl.u32 %v8386, 16
        %v8421 = vrot.slane %v8419, 6
        %v8422 = vshll.u32 %v8386, 16
        %v8424 = vrot.slane %v8422, 7
        %v8425 = vor.u32 %v8421, %v8424
        %v8426 = vrot.slane %v8425, 2
        %v8428 = vshll.u32 %v8387, 16
        %v8430 = vrot.slane %v8428, 7
        %v8431 = vsel %vm8242, %v8426, %v8430
        %v8433 = vshrl.u32 %v8394, 16
        %v8435 = vrot.slane %v8433, 6
        %v8436 = vshll.u32 %v8394, 16
        %v8438 = vrot.slane %v8436, 7
        %v8439 = vor.u32 %v8435, %v8438
        %v8440 = vrot.slane %v8439, 2
        %v8442 = vshll.u32 %v8395, 16
        %v8444 = vrot.slane %v8442, 7
        %v8445 = vsel %vm8242, %v8440, %v8444
        %v8447 = vshrl.u32 %v8402, 16
        %v8449 = vrot.slane %v8447, 6
        %v8450 = vshll.u32 %v8402, 16
        %v8452 = vrot.slane %v8450, 7
        %v8453 = vor.u32 %v8449, %v8452
        %v8454 = vrot.slane %v8453, 2
        %v8456 = vshll.u32 %v8403, 16
        %v8458 = vrot.slane %v8456, 7
        %v8459 = vsel %vm8242, %v8454, %v8458
        %v8460 = vld [vmem:[%s8064] sm:$0x6]
        %v8461 = vld [vmem:[%s8064 + $0x4] sm:$0x6]
        %v8462 = vld [vmem:[%s8064 + $0x8] sm:$0x6]
        %v8463 = vld [vmem:[%s8064 + $0xc] sm:$0x6]
        %v8469 = vunpack.c.l.s4 1983009808
        %v8470 = vunpack.c.0.s8 %v8469
        %v8471 = vlaneseq
        %v8472 = vshrl.u32 %v8471, 7
        %v8473 = vsub.s32 %v8470, %v8472
        %v8474 = vrot.slane %v8460, %v8473
        %v8475 = vcombine.high %v8474, %v8474
        %v8477 = vunpack.c.l.s4 1983009808
        %v8478 = vunpack.c.0.s8 %v8477
        %v8479 = vlaneseq
        %v8480 = vshrl.u32 %v8479, 7
        %v8481 = vsub.s32 %v8478, %v8480
        %v8482 = vrot.slane %v8461, %v8481
        %v8483 = vcombine.high %v8482, %v8482
        %v8485 = vunpack.c.l.s4 1983009808
        %v8486 = vunpack.c.0.s8 %v8485
        %v8487 = vlaneseq
        %v8488 = vshrl.u32 %v8487, 7
        %v8489 = vsub.s32 %v8486, %v8488
        %v8490 = vrot.slane %v8462, %v8489
        %v8491 = vcombine.high %v8490, %v8490
        %v8493 = vunpack.c.l.s4 1983009808
        %v8494 = vunpack.c.0.s8 %v8493
        %v8495 = vlaneseq
        %v8496 = vshrl.u32 %v8495, 7
        %v8497 = vsub.s32 %v8494, %v8496
        %v8498 = vrot.slane %v8463, %v8497
        %v8499 = vcombine.high %v8498, %v8498
        %v8500 = vrot.slane %v8474, 7
        %v8501 = vrot.slane %v8500, 2
        %v8502 = vrot.slane %v8475, 7
        %v8503 = vsel %vm8343, %v8501, %v8502
        %v8504 = vrot.slane %v8482, 7
        %v8505 = vrot.slane %v8504, 2
        %v8506 = vrot.slane %v8483, 7
        %v8507 = vsel %vm8343, %v8505, %v8506
        %v8508 = vrot.slane %v8490, 7
        %v8509 = vrot.slane %v8508, 2
        %v8510 = vrot.slane %v8491, 7
        %v8511 = vsel %vm8343, %v8509, %v8510
        %v8512 = vrot.slane %v8498, 7
        %v8513 = vrot.slane %v8512, 2
        %v8514 = vrot.slane %v8499, 7
        %v8515 = vsel %vm8343, %v8513, %v8514
        %s8516 = scalar_lea.vmem [#allocation4], 8
        %v8517 = vld [vmem:[%s8516] sm:$0x3]
        %v8518 = vld [vmem:[%s8516 + $0x4] sm:$0x3]
        %v8519 = vld [vmem:[%s8516 + $0x8] sm:$0x3]
        %v8520 = vld [vmem:[%s8516 + $0xc] sm:$0x3]
        %v8521 = vld [vmem:[%s8516] sm:$0x7]
        %v8522 = vld [vmem:[%s8516 + $0x4] sm:$0x7]
        %v8523 = vld [vmem:[%s8516 + $0x8] sm:$0x7]
        %v8524 = vld [vmem:[%s8516 + $0xc] sm:$0x7]
        %v8530 = vunpack.c.l.s4 1983009808
        %v8531 = vunpack.c.0.s8 %v8530
        %v8532 = vlaneseq
        %v8533 = vshrl.u32 %v8532, 7
        %v8534 = vsub.s32 %v8531, %v8533
        %v8535 = vrot.slane %v8521, %v8534
        %v8536 = vcombine.high %v8535, %v8535
        %v8538 = vunpack.c.l.s4 1983009808
        %v8539 = vunpack.c.0.s8 %v8538
        %v8540 = vlaneseq
        %v8541 = vshrl.u32 %v8540, 7
        %v8542 = vsub.s32 %v8539, %v8541
        %v8543 = vrot.slane %v8522, %v8542
        %v8544 = vcombine.high %v8543, %v8543
        %v8546 = vunpack.c.l.s4 1983009808
        %v8547 = vunpack.c.0.s8 %v8546
        %v8548 = vlaneseq
        %v8549 = vshrl.u32 %v8548, 7
        %v8550 = vsub.s32 %v8547, %v8549
        %v8551 = vrot.slane %v8523, %v8550
        %v8552 = vcombine.high %v8551, %v8551
        %v8554 = vunpack.c.l.s4 1983009808
        %v8555 = vunpack.c.0.s8 %v8554
        %v8556 = vlaneseq
        %v8557 = vshrl.u32 %v8556, 7
        %v8558 = vsub.s32 %v8555, %v8557
        %v8559 = vrot.slane %v8524, %v8558
        %v8560 = vcombine.high %v8559, %v8559
        %v8562 = vshrl.u32 %v8535, 16
        %v8564 = vrot.slane %v8562, 6
        %v8565 = vshll.u32 %v8535, 16
        %v8567 = vrot.slane %v8565, 7
        %v8568 = vor.u32 %v8564, %v8567
        %v8569 = vrot.slane %v8568, 2
        %v8571 = vshll.u32 %v8536, 16
        %v8573 = vrot.slane %v8571, 7
        %v8574 = vsel %vm8242, %v8569, %v8573
        %v8576 = vshrl.u32 %v8543, 16
        %v8578 = vrot.slane %v8576, 6
        %v8579 = vshll.u32 %v8543, 16
        %v8581 = vrot.slane %v8579, 7
        %v8582 = vor.u32 %v8578, %v8581
        %v8583 = vrot.slane %v8582, 2
        %v8585 = vshll.u32 %v8544, 16
        %v8587 = vrot.slane %v8585, 7
        %v8588 = vsel %vm8242, %v8583, %v8587
        %v8590 = vshrl.u32 %v8551, 16
        %v8592 = vrot.slane %v8590, 6
        %v8593 = vshll.u32 %v8551, 16
        %v8595 = vrot.slane %v8593, 7
        %v8596 = vor.u32 %v8592, %v8595
        %v8597 = vrot.slane %v8596, 2
        %v8599 = vshll.u32 %v8552, 16
        %v8601 = vrot.slane %v8599, 7
        %v8602 = vsel %vm8242, %v8597, %v8601
        %v8604 = vshrl.u32 %v8559, 16
        %v8606 = vrot.slane %v8604, 6
        %v8607 = vshll.u32 %v8559, 16
        %v8609 = vrot.slane %v8607, 7
        %v8610 = vor.u32 %v8606, %v8609
        %v8611 = vrot.slane %v8610, 2
        %v8613 = vshll.u32 %v8560, 16
        %v8615 = vrot.slane %v8613, 7
        %v8616 = vsel %vm8242, %v8611, %v8615
        %v8617 = vld [vmem:[%s8516] sm:$0x6]
        %v8618 = vld [vmem:[%s8516 + $0x4] sm:$0x6]
        %v8619 = vld [vmem:[%s8516 + $0x8] sm:$0x6]
        %v8620 = vld [vmem:[%s8516 + $0xc] sm:$0x6]
        %v8626 = vunpack.c.l.s4 1983009808
        %v8627 = vunpack.c.0.s8 %v8626
        %v8628 = vlaneseq
        %v8629 = vshrl.u32 %v8628, 7
        %v8630 = vsub.s32 %v8627, %v8629
        %v8631 = vrot.slane %v8617, %v8630
        %v8632 = vcombine.high %v8631, %v8631
        %v8634 = vunpack.c.l.s4 1983009808
        %v8635 = vunpack.c.0.s8 %v8634
        %v8636 = vlaneseq
        %v8637 = vshrl.u32 %v8636, 7
        %v8638 = vsub.s32 %v8635, %v8637
        %v8639 = vrot.slane %v8618, %v8638
        %v8640 = vcombine.high %v8639, %v8639
        %v8642 = vunpack.c.l.s4 1983009808
        %v8643 = vunpack.c.0.s8 %v8642
        %v8644 = vlaneseq
        %v8645 = vshrl.u32 %v8644, 7
        %v8646 = vsub.s32 %v8643, %v8645
        %v8647 = vrot.slane %v8619, %v8646
        %v8648 = vcombine.high %v8647, %v8647
        %v8650 = vunpack.c.l.s4 1983009808
        %v8651 = vunpack.c.0.s8 %v8650
        %v8652 = vlaneseq
        %v8653 = vshrl.u32 %v8652, 7
        %v8654 = vsub.s32 %v8651, %v8653
        %v8655 = vrot.slane %v8620, %v8654
        %v8656 = vcombine.high %v8655, %v8655
        %v8657 = vrot.slane %v8631, 7
        %v8658 = vrot.slane %v8657, 2
        %v8659 = vrot.slane %v8632, 7
        %v8660 = vsel %vm8343, %v8658, %v8659
        %v8661 = vrot.slane %v8639, 7
        %v8662 = vrot.slane %v8661, 2
        %v8663 = vrot.slane %v8640, 7
        %v8664 = vsel %vm8343, %v8662, %v8663
        %v8665 = vrot.slane %v8647, 7
        %v8666 = vrot.slane %v8665, 2
        %v8667 = vrot.slane %v8648, 7
        %v8668 = vsel %vm8343, %v8666, %v8667
        %v8669 = vrot.slane %v8655, 7
        %v8670 = vrot.slane %v8669, 2
        %v8671 = vrot.slane %v8656, 7
        %v8672 = vsel %vm8343, %v8670, %v8671
        %v8677 = vcombine.low %v8192, %v8193
        %v8678 = vcombine.low %v8194, %v8195
        %v8680 = vunpack.c.l.s4 1983009808
        %v8681 = vunpack.c.0.s8 %v8680
        %v8682 = vlaneseq
        %v8683 = vshrl.u32 %v8682, 7
        %v8684 = vsub.s32 %v8681, %v8683
        %v8685 = vrot.slane %v8677, %v8684
        %v8687 = vunpack.c.l.s4 1983009808
        %v8688 = vunpack.c.0.s8 %v8687
        %v8689 = vlaneseq
        %v8690 = vshrl.u32 %v8689, 7
        %v8691 = vsub.s32 %v8688, %v8690
        %v8692 = vrot.slane %v8678, %v8691
        %v8693 = vcombine.low %v8685, %v8692
        %v8695 = vcombine.low %v8256, %v8270
        %v8696 = vcombine.low %v8284, %v8298
        %v8698 = vunpack.c.l.s4 1983009808
        %v8699 = vunpack.c.0.s8 %v8698
        %v8700 = vlaneseq
        %v8701 = vshrl.u32 %v8700, 7
        %v8702 = vsub.s32 %v8699, %v8701
        %v8703 = vrot.slane %v8695, %v8702
        %v8705 = vunpack.c.l.s4 1983009808
        %v8706 = vunpack.c.0.s8 %v8705
        %v8707 = vlaneseq
        %v8708 = vshrl.u32 %v8707, 7
        %v8709 = vsub.s32 %v8706, %v8708
        %v8710 = vrot.slane %v8696, %v8709
        %v8711 = vcombine.low %v8703, %v8710
        %v8713 = vcombine.low %v8347, %v8351
        %v8714 = vcombine.low %v8355, %v8359
        %v8716 = vunpack.c.l.s4 1983009808
        %v8717 = vunpack.c.0.s8 %v8716
        %v8718 = vlaneseq
        %v8719 = vshrl.u32 %v8718, 7
        %v8720 = vsub.s32 %v8717, %v8719
        %v8721 = vrot.slane %v8713, %v8720
        %v8723 = vunpack.c.l.s4 1983009808
        %v8724 = vunpack.c.0.s8 %v8723
        %v8725 = vlaneseq
        %v8726 = vshrl.u32 %v8725, 7
        %v8727 = vsub.s32 %v8724, %v8726
        %v8728 = vrot.slane %v8714, %v8727
        %v8729 = vcombine.low %v8721, %v8728
        %v8735 = vcombine.low %v8360, %v8361
        %v8736 = vcombine.low %v8362, %v8363
        %v8738 = vunpack.c.l.s4 1983009808
        %v8739 = vunpack.c.0.s8 %v8738
        %v8740 = vlaneseq
        %v8741 = vshrl.u32 %v8740, 7
        %v8742 = vsub.s32 %v8739, %v8741
        %v8743 = vrot.slane %v8735, %v8742
        %v8745 = vunpack.c.l.s4 1983009808
        %v8746 = vunpack.c.0.s8 %v8745
        %v8747 = vlaneseq
        %v8748 = vshrl.u32 %v8747, 7
        %v8749 = vsub.s32 %v8746, %v8748
        %v8750 = vrot.slane %v8736, %v8749
        %v8751 = vcombine.low %v8743, %v8750
        %v8753 = vcombine.low %v8417, %v8431
        %v8754 = vcombine.low %v8445, %v8459
        %v8756 = vunpack.c.l.s4 1983009808
        %v8757 = vunpack.c.0.s8 %v8756
        %v8758 = vlaneseq
        %v8759 = vshrl.u32 %v8758, 7
        %v8760 = vsub.s32 %v8757, %v8759
        %v8761 = vrot.slane %v8753, %v8760
        %v8763 = vunpack.c.l.s4 1983009808
        %v8764 = vunpack.c.0.s8 %v8763
        %v8765 = vlaneseq
        %v8766 = vshrl.u32 %v8765, 7
        %v8767 = vsub.s32 %v8764, %v8766
        %v8768 = vrot.slane %v8754, %v8767
        %v8769 = vcombine.low %v8761, %v8768
        %v8771 = vcombine.low %v8503, %v8507
        %v8772 = vcombine.low %v8511, %v8515
        %v8774 = vunpack.c.l.s4 1983009808
        %v8775 = vunpack.c.0.s8 %v8774
        %v8776 = vlaneseq
        %v8777 = vshrl.u32 %v8776, 7
        %v8778 = vsub.s32 %v8775, %v8777
        %v8779 = vrot.slane %v8771, %v8778
        %v8781 = vunpack.c.l.s4 1983009808
        %v8782 = vunpack.c.0.s8 %v8781
        %v8783 = vlaneseq
        %v8784 = vshrl.u32 %v8783, 7
        %v8785 = vsub.s32 %v8782, %v8784
        %v8786 = vrot.slane %v8772, %v8785
        %v8787 = vcombine.low %v8779, %v8786
        %v8793 = vcombine.low %v8517, %v8518
        %v8794 = vcombine.low %v8519, %v8520
        %v8796 = vunpack.c.l.s4 1983009808
        %v8797 = vunpack.c.0.s8 %v8796
        %v8798 = vlaneseq
        %v8799 = vshrl.u32 %v8798, 7
        %v8800 = vsub.s32 %v8797, %v8799
        %v8801 = vrot.slane %v8793, %v8800
        %v8803 = vunpack.c.l.s4 1983009808
        %v8804 = vunpack.c.0.s8 %v8803
        %v8805 = vlaneseq
        %v8806 = vshrl.u32 %v8805, 7
        %v8807 = vsub.s32 %v8804, %v8806
        %v8808 = vrot.slane %v8794, %v8807
        %v8809 = vcombine.low %v8801, %v8808
        %v8811 = vcombine.low %v8574, %v8588
        %v8812 = vcombine.low %v8602, %v8616
        %v8814 = vunpack.c.l.s4 1983009808
        %v8815 = vunpack.c.0.s8 %v8814
        %v8816 = vlaneseq
        %v8817 = vshrl.u32 %v8816, 7
        %v8818 = vsub.s32 %v8815, %v8817
        %v8819 = vrot.slane %v8811, %v8818
        %v8821 = vunpack.c.l.s4 1983009808
        %v8822 = vunpack.c.0.s8 %v8821
        %v8823 = vlaneseq
        %v8824 = vshrl.u32 %v8823, 7
        %v8825 = vsub.s32 %v8822, %v8824
        %v8826 = vrot.slane %v8812, %v8825
        %v8827 = vcombine.low %v8819, %v8826
        %v8829 = vcombine.low %v8660, %v8664
        %v8830 = vcombine.low %v8668, %v8672
        %v8832 = vunpack.c.l.s4 1983009808
        %v8833 = vunpack.c.0.s8 %v8832
        %v8834 = vlaneseq
        %v8835 = vshrl.u32 %v8834, 7
        %v8836 = vsub.s32 %v8833, %v8835
        %v8837 = vrot.slane %v8829, %v8836
        %v8839 = vunpack.c.l.s4 1983009808
        %v8840 = vunpack.c.0.s8 %v8839
        %v8841 = vlaneseq
        %v8842 = vshrl.u32 %v8841, 7
        %v8843 = vsub.s32 %v8840, %v8842
        %v8844 = vrot.slane %v8830, %v8843
        %v8845 = vcombine.low %v8837, %v8844
        %v8847 = vld [vmem:[#allocation5] sm:$0xff]
        %v8848 = vld [vmem:[#allocation5 + $0x8] sm:$0xff]
        %v8849 = vld [vmem:[#allocation5 + $0x10] sm:$0xff]
        %v8850 = vld [vmem:[#allocation5 + $0x18] sm:$0xff]
        %v8851 = vld [vmem:[#allocation5 + $0x20] sm:$0xff]
        %v8852 = vld [vmem:[#allocation5 + $0x28] sm:$0xff]
        %v8853 = vld [vmem:[#allocation5 + $0x30] sm:$0xff]
        %v8854 = vld [vmem:[#allocation5 + $0x38] sm:$0xff]
        %v8855 = vld [vmem:[#allocation5 + $0x40] sm:$0xff]
        %v8856 = vld [vmem:[#allocation5 + $0x48] sm:$0xff]
        %v8857 = vld [vmem:[#allocation5 + $0x50] sm:$0xff]
        %v8858 = vld [vmem:[#allocation5 + $0x58] sm:$0xff]
        %v8859 = vld [vmem:[#allocation5 + $0x60] sm:$0xff]
        %v8860 = vld [vmem:[#allocation5 + $0x68] sm:$0xff]
        %v8861 = vld [vmem:[#allocation5 + $0x70] sm:$0xff]
        %v8862 = vld [vmem:[#allocation5 + $0x78] sm:$0xff]
        %v8863 = vld [vmem:[#allocation5 + $0x80] sm:$0xff]
        %v8864 = vld [vmem:[#allocation5 + $0x88] sm:$0xff]
        %v8865 = vld [vmem:[#allocation5 + $0x90] sm:$0xff]
        %v8866 = vld [vmem:[#allocation5 + $0x98] sm:$0xff]
        %v8867 = vld [vmem:[#allocation5 + $0xa0] sm:$0xff]
        %v8868 = vld [vmem:[#allocation5 + $0xa8] sm:$0xff]
        %v8869 = vld [vmem:[#allocation5 + $0xb0] sm:$0xff]
        %v8870 = vld [vmem:[#allocation5 + $0xb8] sm:$0xff]
        %v8871 = vld [vmem:[#allocation5 + $0xc0] sm:$0xff]
        %v8872 = vld [vmem:[#allocation5 + $0xc8] sm:$0xff]
        %v8873 = vld [vmem:[#allocation5 + $0xd0] sm:$0xff]
        %v8874 = vld [vmem:[#allocation5 + $0xd8] sm:$0xff]
        %v8875 = vld [vmem:[#allocation5 + $0xe0] sm:$0xff]
        %v8876 = vld [vmem:[#allocation5 + $0xe8] sm:$0xff]
        %v8877 = vld [vmem:[#allocation5 + $0xf0] sm:$0xff]
        %v8878 = vld [vmem:[#allocation5 + $0xf8] sm:$0xff]
        %v8879 = vld [vmem:[#allocation5 + $0x100] sm:$0xff]
        %v8880 = vld [vmem:[#allocation5 + $0x108] sm:$0xff]
        %v8881 = vld [vmem:[#allocation5 + $0x110] sm:$0xff]
        %v8882 = vld [vmem:[#allocation5 + $0x118] sm:$0xff]
        %v8883 = vld [vmem:[#allocation5 + $0x120] sm:$0xff]
        %v8884 = vld [vmem:[#allocation5 + $0x128] sm:$0xff]
        %v8885 = vld [vmem:[#allocation5 + $0x130] sm:$0xff]
        %v8886 = vld [vmem:[#allocation5 + $0x138] sm:$0xff]
        %v8887 = vld [vmem:[#allocation5 + $0x140] sm:$0xff]
        %v8888 = vld [vmem:[#allocation5 + $0x148] sm:$0xff]
        %v8889 = vld [vmem:[#allocation5 + $0x150] sm:$0xff]
        %v8890 = vld [vmem:[#allocation5 + $0x158] sm:$0xff]
        %v8891 = vld [vmem:[#allocation5 + $0x160] sm:$0xff]
        %v8892 = vld [vmem:[#allocation5 + $0x168] sm:$0xff]
        %v8893 = vld [vmem:[#allocation5 + $0x170] sm:$0xff]
        %v8894 = vld [vmem:[#allocation5 + $0x178] sm:$0xff]
        %v8895 = vld [vmem:[#allocation5 + $0x180] sm:$0xff]
        %v8896 = vld [vmem:[#allocation5 + $0x188] sm:$0xff]
        %v8897 = vld [vmem:[#allocation5 + $0x190] sm:$0xff]
        %v8898 = vld [vmem:[#allocation5 + $0x198] sm:$0xff]
        %v8899 = vld [vmem:[#allocation5 + $0x1a0] sm:$0xff]
        %v8900 = vld [vmem:[#allocation5 + $0x1a8] sm:$0xff]
        %v8901 = vld [vmem:[#allocation5 + $0x1b0] sm:$0xff]
        %v8902 = vld [vmem:[#allocation5 + $0x1b8] sm:$0xff]
        %v8903 = vld [vmem:[#allocation5 + $0x1c0] sm:$0xff]
        %v8904 = vld [vmem:[#allocation5 + $0x1c8] sm:$0xff]
        %v8905 = vld [vmem:[#allocation5 + $0x1d0] sm:$0xff]
        %v8906 = vld [vmem:[#allocation5 + $0x1d8] sm:$0xff]
        %v8907 = vld [vmem:[#allocation5 + $0x1e0] sm:$0xff]
        %v8908 = vld [vmem:[#allocation5 + $0x1e8] sm:$0xff]
        %v8909 = vld [vmem:[#allocation5 + $0x1f0] sm:$0xff]
        %v8910 = vld [vmem:[#allocation5 + $0x1f8] sm:$0xff]
        %v8911 = vld [vmem:[#allocation5 + $0x200] sm:$0xff]
        %v8912 = vld [vmem:[#allocation5 + $0x208] sm:$0xff]
        %v8913 = vld [vmem:[#allocation5 + $0x210] sm:$0xff]
        %v8914 = vld [vmem:[#allocation5 + $0x218] sm:$0xff]
        %v8915 = vld [vmem:[#allocation5 + $0x220] sm:$0xff]
        %v8916 = vld [vmem:[#allocation5 + $0x228] sm:$0xff]
        %v8917 = vld [vmem:[#allocation5 + $0x230] sm:$0xff]
        %v8918 = vld [vmem:[#allocation5 + $0x238] sm:$0xff]
        %v8919 = vld [vmem:[#allocation5 + $0x240] sm:$0xff]
        %v8920 = vld [vmem:[#allocation5 + $0x248] sm:$0xff]
        %v8921 = vld [vmem:[#allocation5 + $0x250] sm:$0xff]
        %v8922 = vld [vmem:[#allocation5 + $0x258] sm:$0xff]
        %v8923 = vld [vmem:[#allocation5 + $0x260] sm:$0xff]
        %v8924 = vld [vmem:[#allocation5 + $0x268] sm:$0xff]
        %v8925 = vld [vmem:[#allocation5 + $0x270] sm:$0xff]
        %v8926 = vld [vmem:[#allocation5 + $0x278] sm:$0xff]
        %v8927 = vld [vmem:[#allocation5 + $0x280] sm:$0xff]
        %v8928 = vld [vmem:[#allocation5 + $0x288] sm:$0xff]
        %v8929 = vld [vmem:[#allocation5 + $0x290] sm:$0xff]
        %v8930 = vld [vmem:[#allocation5 + $0x298] sm:$0xff]
        %v8931 = vld [vmem:[#allocation5 + $0x2a0] sm:$0xff]
        %v8932 = vld [vmem:[#allocation5 + $0x2a8] sm:$0xff]
        %v8933 = vld [vmem:[#allocation5 + $0x2b0] sm:$0xff]
        %v8934 = vld [vmem:[#allocation5 + $0x2b8] sm:$0xff]
        %v8935 = vld [vmem:[#allocation5 + $0x2c0] sm:$0xff]
        %v8936 = vld [vmem:[#allocation5 + $0x2c8] sm:$0xff]
        %v8937 = vld [vmem:[#allocation5 + $0x2d0] sm:$0xff]
        %v8938 = vld [vmem:[#allocation5 + $0x2d8] sm:$0xff]
        %v8939 = vld [vmem:[#allocation5 + $0x2e0] sm:$0xff]
        %v8940 = vld [vmem:[#allocation5 + $0x2e8] sm:$0xff]
        %v8941 = vld [vmem:[#allocation5 + $0x2f0] sm:$0xff]
        %v8942 = vld [vmem:[#allocation5 + $0x2f8] sm:$0xff]
        %v8943 = vld [vmem:[#allocation5 + $0x300] sm:$0xff]
        %v8944 = vld [vmem:[#allocation5 + $0x308] sm:$0xff]
        %v8945 = vld [vmem:[#allocation5 + $0x310] sm:$0xff]
        %v8946 = vld [vmem:[#allocation5 + $0x318] sm:$0xff]
        %v8947 = vld [vmem:[#allocation5 + $0x320] sm:$0xff]
        %v8948 = vld [vmem:[#allocation5 + $0x328] sm:$0xff]
        %v8949 = vld [vmem:[#allocation5 + $0x330] sm:$0xff]
        %v8950 = vld [vmem:[#allocation5 + $0x338] sm:$0xff]
        %v8951 = vld [vmem:[#allocation5 + $0x340] sm:$0xff]
        %v8952 = vld [vmem:[#allocation5 + $0x348] sm:$0xff]
        %v8953 = vld [vmem:[#allocation5 + $0x350] sm:$0xff]
        %v8954 = vld [vmem:[#allocation5 + $0x358] sm:$0xff]
        %v8955 = vld [vmem:[#allocation5 + $0x360] sm:$0xff]
        %v8956 = vld [vmem:[#allocation5 + $0x368] sm:$0xff]
        %v8957 = vld [vmem:[#allocation5 + $0x370] sm:$0xff]
        %v8958 = vld [vmem:[#allocation5 + $0x378] sm:$0xff]
        %v8959 = vld [vmem:[#allocation5 + $0x380] sm:$0xff]
        %v8960 = vld [vmem:[#allocation5 + $0x388] sm:$0xff]
        %v8961 = vld [vmem:[#allocation5 + $0x390] sm:$0xff]
        %v8962 = vld [vmem:[#allocation5 + $0x398] sm:$0xff]
        %v8963 = vld [vmem:[#allocation5 + $0x3a0] sm:$0xff]
        %v8964 = vld [vmem:[#allocation5 + $0x3a8] sm:$0xff]
        %v8965 = vld [vmem:[#allocation5 + $0x3b0] sm:$0xff]
        %v8966 = vld [vmem:[#allocation5 + $0x3b8] sm:$0xff]
        %v8967 = vld [vmem:[#allocation5 + $0x3c0] sm:$0xff]
        %v8968 = vld [vmem:[#allocation5 + $0x3c8] sm:$0xff]
        %v8969 = vld [vmem:[#allocation5 + $0x3d0] sm:$0xff]
        %v8970 = vld [vmem:[#allocation5 + $0x3d8] sm:$0xff]
        %v8971 = vld [vmem:[#allocation5 + $0x3e0] sm:$0xff]
        %v8972 = vld [vmem:[#allocation5 + $0x3e8] sm:$0xff]
        %v8973 = vld [vmem:[#allocation5 + $0x3f0] sm:$0xff]
        %v8974 = vld [vmem:[#allocation5 + $0x3f8] sm:$0xff]
        %v8975 = vld [vmem:[#allocation5 + $0x400] sm:$0xff]
        %v8976 = vld [vmem:[#allocation5 + $0x408] sm:$0xff]
        %v8977 = vld [vmem:[#allocation5 + $0x410] sm:$0xff]
        %v8978 = vld [vmem:[#allocation5 + $0x418] sm:$0xff]
        %v8979 = vld [vmem:[#allocation5 + $0x420] sm:$0xff]
        %v8980 = vld [vmem:[#allocation5 + $0x428] sm:$0xff]
        %v8981 = vld [vmem:[#allocation5 + $0x430] sm:$0xff]
        %v8982 = vld [vmem:[#allocation5 + $0x438] sm:$0xff]
        %v8983 = vld [vmem:[#allocation5 + $0x440] sm:$0xff]
        %v8984 = vld [vmem:[#allocation5 + $0x448] sm:$0xff]
        %v8985 = vld [vmem:[#allocation5 + $0x450] sm:$0xff]
        %v8986 = vld [vmem:[#allocation5 + $0x458] sm:$0xff]
        %v8987 = vld [vmem:[#allocation5 + $0x460] sm:$0xff]
        %v8988 = vld [vmem:[#allocation5 + $0x468] sm:$0xff]
        %v8989 = vld [vmem:[#allocation5 + $0x470] sm:$0xff]
        %v8990 = vld [vmem:[#allocation5 + $0x478] sm:$0xff]
        %v8991 = vld [vmem:[%s6] sm:$0x3]
        %v8993 = vlaneseq
        %v8994 = vshrl.u32 %v8993, 7
        %v8995 = vsub.s32 0, %v8994
        %v8996 = vrot.slane %v8991, %v8995
        %v8997 = vlaneseq
        %v8998 = vshrl.u32 %v8997, 7
        %v8999 = vsub.s32 1, %v8998
        %v9000 = vrot.slane %v8991, %v8999
        %v9147 = vunpack.c.l.b16 %v8847
        %v9148 = vunpack.c.h.b16 %v8847
        %v9149 = vunpack.c.l.b16 %v8848
        %v9150 = vunpack.c.h.b16 %v8848
        %v9151 = vunpack.c.l.b16 %v8849
        %v9152 = vunpack.c.h.b16 %v8849
        %v9153 = vunpack.c.l.b16 %v8850
        %v9154 = vunpack.c.h.b16 %v8850
        %v9155 = vunpack.c.l.b16 %v8851
        %v9156 = vunpack.c.h.b16 %v8851
        %v9157 = vunpack.c.l.b16 %v8852
        %v9158 = vunpack.c.h.b16 %v8852
        %v9159 = vunpack.c.l.b16 %v8853
        %v9160 = vunpack.c.h.b16 %v8853
        %v9161 = vunpack.c.l.b16 %v8854
        %v9162 = vunpack.c.h.b16 %v8854
        %v9163 = vunpack.c.l.b16 %v8855
        %v9164 = vunpack.c.h.b16 %v8855
        %v9165 = vunpack.c.l.b16 %v8856
        %v9166 = vunpack.c.h.b16 %v8856
        %v9167 = vunpack.c.l.b16 %v8857
        %v9168 = vunpack.c.h.b16 %v8857
        %v9169 = vunpack.c.l.b16 %v8858
        %v9170 = vunpack.c.h.b16 %v8858
        %v9171 = vunpack.c.l.b16 %v8859
        %v9172 = vunpack.c.h.b16 %v8859
        %v9173 = vunpack.c.l.b16 %v8860
        %v9174 = vunpack.c.h.b16 %v8860
        %v9175 = vunpack.c.l.b16 %v8861
        %v9176 = vunpack.c.h.b16 %v8861
        %v9177 = vunpack.c.l.b16 %v8862
        %v9178 = vunpack.c.h.b16 %v8862
        %v9179 = vunpack.c.l.b16 %v8863
        %v9180 = vunpack.c.h.b16 %v8863
        %v9181 = vunpack.c.l.b16 %v8864
        %v9182 = vunpack.c.h.b16 %v8864
        %v9183 = vunpack.c.l.b16 %v8865
        %v9184 = vunpack.c.h.b16 %v8865
        %v9185 = vunpack.c.l.b16 %v8866
        %v9186 = vunpack.c.h.b16 %v8866
        %v9187 = vunpack.c.l.b16 %v8867
        %v9188 = vunpack.c.h.b16 %v8867
        %v9189 = vunpack.c.l.b16 %v8868
        %v9190 = vunpack.c.h.b16 %v8868
        %v9191 = vunpack.c.l.b16 %v8869
        %v9192 = vunpack.c.h.b16 %v8869
        %v9193 = vunpack.c.l.b16 %v8870
        %v9194 = vunpack.c.h.b16 %v8870
        %v9195 = vunpack.c.l.b16 %v8871
        %v9196 = vunpack.c.h.b16 %v8871
        %v9197 = vunpack.c.l.b16 %v8872
        %v9198 = vunpack.c.h.b16 %v8872
        %v9199 = vunpack.c.l.b16 %v8873
        %v9200 = vunpack.c.h.b16 %v8873
        %v9201 = vunpack.c.l.b16 %v8874
        %v9202 = vunpack.c.h.b16 %v8874
        %v9203 = vunpack.c.l.b16 %v8875
        %v9204 = vunpack.c.h.b16 %v8875
        %v9205 = vunpack.c.l.b16 %v8876
        %v9206 = vunpack.c.h.b16 %v8876
        %v9207 = vunpack.c.l.b16 %v8877
        %v9208 = vunpack.c.h.b16 %v8877
        %v9209 = vunpack.c.l.b16 %v8878
        %v9210 = vunpack.c.h.b16 %v8878
        %v9211 = vunpack.c.l.b16 %v8879
        %v9212 = vunpack.c.h.b16 %v8879
        %v9213 = vunpack.c.l.b16 %v8880
        %v9214 = vunpack.c.h.b16 %v8880
        %v9215 = vunpack.c.l.b16 %v8881
        %v9216 = vunpack.c.h.b16 %v8881
        %v9217 = vunpack.c.l.b16 %v8882
        %v9218 = vunpack.c.h.b16 %v8882
        %v9219 = vunpack.c.l.b16 %v8883
        %v9220 = vunpack.c.h.b16 %v8883
        %v9221 = vunpack.c.l.b16 %v8884
        %v9222 = vunpack.c.h.b16 %v8884
        %v9223 = vunpack.c.l.b16 %v8885
        %v9224 = vunpack.c.h.b16 %v8885
        %v9225 = vunpack.c.l.b16 %v8886
        %v9226 = vunpack.c.h.b16 %v8886
        %v9227 = vunpack.c.l.b16 %v8887
        %v9228 = vunpack.c.h.b16 %v8887
        %v9229 = vunpack.c.l.b16 %v8888
        %v9230 = vunpack.c.h.b16 %v8888
        %v9231 = vunpack.c.l.b16 %v8889
        %v9232 = vunpack.c.h.b16 %v8889
        %v9233 = vunpack.c.l.b16 %v8890
        %v9234 = vunpack.c.h.b16 %v8890
        %v9235 = vunpack.c.l.b16 %v8891
        %v9236 = vunpack.c.h.b16 %v8891
        %v9237 = vunpack.c.l.b16 %v8892
        %v9238 = vunpack.c.h.b16 %v8892
        %v9239 = vunpack.c.l.b16 %v8893
        %v9240 = vunpack.c.h.b16 %v8893
        %v9241 = vunpack.c.l.b16 %v8894
        %v9242 = vunpack.c.h.b16 %v8894
        %v9243 = vunpack.c.l.b16 %v8895
        %v9244 = vunpack.c.h.b16 %v8895
        %v9245 = vunpack.c.l.b16 %v8896
        %v9246 = vunpack.c.h.b16 %v8896
        %v9247 = vunpack.c.l.b16 %v8897
        %v9248 = vunpack.c.h.b16 %v8897
        %v9249 = vunpack.c.l.b16 %v8898
        %v9250 = vunpack.c.h.b16 %v8898
        %v9251 = vunpack.c.l.b16 %v8899
        %v9252 = vunpack.c.h.b16 %v8899
        %v9253 = vunpack.c.l.b16 %v8900
        %v9254 = vunpack.c.h.b16 %v8900
        %v9255 = vunpack.c.l.b16 %v8901
        %v9256 = vunpack.c.h.b16 %v8901
        %v9257 = vunpack.c.l.b16 %v8902
        %v9258 = vunpack.c.h.b16 %v8902
        %v9259 = vunpack.c.l.b16 %v8903
        %v9260 = vunpack.c.h.b16 %v8903
        %v9261 = vunpack.c.l.b16 %v8904
        %v9262 = vunpack.c.h.b16 %v8904
        %v9263 = vunpack.c.l.b16 %v8905
        %v9264 = vunpack.c.h.b16 %v8905
        %v9265 = vunpack.c.l.b16 %v8906
        %v9266 = vunpack.c.h.b16 %v8906
        %v9267 = vunpack.c.l.b16 %v8907
        %v9268 = vunpack.c.h.b16 %v8907
        %v9269 = vunpack.c.l.b16 %v8908
        %v9270 = vunpack.c.h.b16 %v8908
        %v9271 = vunpack.c.l.b16 %v8909
        %v9272 = vunpack.c.h.b16 %v8909
        %v9273 = vunpack.c.l.b16 %v8910
        %v9274 = vunpack.c.h.b16 %v8910
        %v9275 = vunpack.c.l.b16 %v8911
        %v9276 = vunpack.c.h.b16 %v8911
        %v9277 = vunpack.c.l.b16 %v8912
        %v9278 = vunpack.c.h.b16 %v8912
        %v9279 = vunpack.c.l.b16 %v8913
        %v9280 = vunpack.c.h.b16 %v8913
        %v9281 = vunpack.c.l.b16 %v8914
        %v9282 = vunpack.c.h.b16 %v8914
        %v9283 = vunpack.c.l.b16 %v8915
        %v9284 = vunpack.c.h.b16 %v8915
        %v9285 = vunpack.c.l.b16 %v8916
        %v9286 = vunpack.c.h.b16 %v8916
        %v9287 = vunpack.c.l.b16 %v8917
        %v9288 = vunpack.c.h.b16 %v8917
        %v9289 = vunpack.c.l.b16 %v8918
        %v9290 = vunpack.c.h.b16 %v8918
        %v9291 = vunpack.c.l.b16 %v8919
        %v9292 = vunpack.c.h.b16 %v8919
        %v9293 = vunpack.c.l.b16 %v8920
        %v9294 = vunpack.c.h.b16 %v8920
        %v9295 = vunpack.c.l.b16 %v8921
        %v9296 = vunpack.c.h.b16 %v8921
        %v9297 = vunpack.c.l.b16 %v8922
        %v9298 = vunpack.c.h.b16 %v8922
        %v9299 = vunpack.c.l.b16 %v8923
        %v9300 = vunpack.c.h.b16 %v8923
        %v9301 = vunpack.c.l.b16 %v8924
        %v9302 = vunpack.c.h.b16 %v8924
        %v9303 = vunpack.c.l.b16 %v8925
        %v9304 = vunpack.c.h.b16 %v8925
        %v9305 = vunpack.c.l.b16 %v8926
        %v9306 = vunpack.c.h.b16 %v8926
        %v9307 = vunpack.c.l.b16 %v8927
        %v9308 = vunpack.c.h.b16 %v8927
        %v9309 = vunpack.c.l.b16 %v8928
        %v9310 = vunpack.c.h.b16 %v8928
        %v9311 = vunpack.c.l.b16 %v8929
        %v9312 = vunpack.c.h.b16 %v8929
        %v9313 = vunpack.c.l.b16 %v8930
        %v9314 = vunpack.c.h.b16 %v8930
        %v9315 = vunpack.c.l.b16 %v8931
        %v9316 = vunpack.c.h.b16 %v8931
        %v9317 = vunpack.c.l.b16 %v8932
        %v9318 = vunpack.c.h.b16 %v8932
        %v9319 = vunpack.c.l.b16 %v8933
        %v9320 = vunpack.c.h.b16 %v8933
        %v9321 = vunpack.c.l.b16 %v8934
        %v9322 = vunpack.c.h.b16 %v8934
        %v9323 = vunpack.c.l.b16 %v8935
        %v9324 = vunpack.c.h.b16 %v8935
        %v9325 = vunpack.c.l.b16 %v8936
        %v9326 = vunpack.c.h.b16 %v8936
        %v9327 = vunpack.c.l.b16 %v8937
        %v9328 = vunpack.c.h.b16 %v8937
        %v9329 = vunpack.c.l.b16 %v8938
        %v9330 = vunpack.c.h.b16 %v8938
        %v9331 = vunpack.c.l.b16 %v8939
        %v9332 = vunpack.c.h.b16 %v8939
        %v9333 = vunpack.c.l.b16 %v8940
        %v9334 = vunpack.c.h.b16 %v8940
        %v9335 = vunpack.c.l.b16 %v8941
        %v9336 = vunpack.c.h.b16 %v8941
        %v9337 = vunpack.c.l.b16 %v8942
        %v9338 = vunpack.c.h.b16 %v8942
        %v9339 = vunpack.c.l.b16 %v8943
        %v9340 = vunpack.c.h.b16 %v8943
        %v9341 = vunpack.c.l.b16 %v8944
        %v9342 = vunpack.c.h.b16 %v8944
        %v9343 = vunpack.c.l.b16 %v8945
        %v9344 = vunpack.c.h.b16 %v8945
        %v9345 = vunpack.c.l.b16 %v8946
        %v9346 = vunpack.c.h.b16 %v8946
        %v9347 = vunpack.c.l.b16 %v8947
        %v9348 = vunpack.c.h.b16 %v8947
        %v9349 = vunpack.c.l.b16 %v8948
        %v9350 = vunpack.c.h.b16 %v8948
        %v9351 = vunpack.c.l.b16 %v8949
        %v9352 = vunpack.c.h.b16 %v8949
        %v9353 = vunpack.c.l.b16 %v8950
        %v9354 = vunpack.c.h.b16 %v8950
        %v9355 = vunpack.c.l.b16 %v8951
        %v9356 = vunpack.c.h.b16 %v8951
        %v9357 = vunpack.c.l.b16 %v8952
        %v9358 = vunpack.c.h.b16 %v8952
        %v9359 = vunpack.c.l.b16 %v8953
        %v9360 = vunpack.c.h.b16 %v8953
        %v9361 = vunpack.c.l.b16 %v8954
        %v9362 = vunpack.c.h.b16 %v8954
        %v9363 = vunpack.c.l.b16 %v8955
        %v9364 = vunpack.c.h.b16 %v8955
        %v9365 = vunpack.c.l.b16 %v8956
        %v9366 = vunpack.c.h.b16 %v8956
        %v9367 = vunpack.c.l.b16 %v8957
        %v9368 = vunpack.c.h.b16 %v8957
        %v9369 = vunpack.c.l.b16 %v8958
        %v9370 = vunpack.c.h.b16 %v8958
        %v9371 = vunpack.c.l.b16 %v8959
        %v9372 = vunpack.c.h.b16 %v8959
        %v9373 = vunpack.c.l.b16 %v8960
        %v9374 = vunpack.c.h.b16 %v8960
        %v9375 = vunpack.c.l.b16 %v8961
        %v9376 = vunpack.c.h.b16 %v8961
        %v9377 = vunpack.c.l.b16 %v8962
        %v9378 = vunpack.c.h.b16 %v8962
        %v9379 = vunpack.c.l.b16 %v8963
        %v9380 = vunpack.c.h.b16 %v8963
        %v9381 = vunpack.c.l.b16 %v8964
        %v9382 = vunpack.c.h.b16 %v8964
        %v9383 = vunpack.c.l.b16 %v8965
        %v9384 = vunpack.c.h.b16 %v8965
        %v9385 = vunpack.c.l.b16 %v8966
        %v9386 = vunpack.c.h.b16 %v8966
        %v9387 = vunpack.c.l.b16 %v8967
        %v9388 = vunpack.c.h.b16 %v8967
        %v9389 = vunpack.c.l.b16 %v8968
        %v9390 = vunpack.c.h.b16 %v8968
        %v9391 = vunpack.c.l.b16 %v8969
        %v9392 = vunpack.c.h.b16 %v8969
        %v9393 = vunpack.c.l.b16 %v8970
        %v9394 = vunpack.c.h.b16 %v8970
        %v9395 = vunpack.c.l.b16 %v8971
        %v9396 = vunpack.c.h.b16 %v8971
        %v9397 = vunpack.c.l.b16 %v8972
        %v9398 = vunpack.c.h.b16 %v8972
        %v9399 = vunpack.c.l.b16 %v8973
        %v9400 = vunpack.c.h.b16 %v8973
        %v9401 = vunpack.c.l.b16 %v8974
        %v9402 = vunpack.c.h.b16 %v8974
        %v9403 = vunpack.c.l.b16 %v8975
        %v9404 = vunpack.c.h.b16 %v8975
        %v9405 = vunpack.c.l.b16 %v8976
        %v9406 = vunpack.c.h.b16 %v8976
        %v9407 = vunpack.c.l.b16 %v8977
        %v9408 = vunpack.c.h.b16 %v8977
        %v9409 = vunpack.c.l.b16 %v8978
        %v9410 = vunpack.c.h.b16 %v8978
        %v9411 = vunpack.c.l.b16 %v8979
        %v9412 = vunpack.c.h.b16 %v8979
        %v9413 = vunpack.c.l.b16 %v8980
        %v9414 = vunpack.c.h.b16 %v8980
        %v9415 = vunpack.c.l.b16 %v8981
        %v9416 = vunpack.c.h.b16 %v8981
        %v9417 = vunpack.c.l.b16 %v8982
        %v9418 = vunpack.c.h.b16 %v8982
        %v9419 = vunpack.c.l.b16 %v8983
        %v9420 = vunpack.c.h.b16 %v8983
        %v9421 = vunpack.c.l.b16 %v8984
        %v9422 = vunpack.c.h.b16 %v8984
        %v9423 = vunpack.c.l.b16 %v8985
        %v9424 = vunpack.c.h.b16 %v8985
        %v9425 = vunpack.c.l.b16 %v8986
        %v9426 = vunpack.c.h.b16 %v8986
        %v9427 = vunpack.c.l.b16 %v8987
        %v9428 = vunpack.c.h.b16 %v8987
        %v9429 = vunpack.c.l.b16 %v8988
        %v9430 = vunpack.c.h.b16 %v8988
        %v9431 = vunpack.c.l.b16 %v8989
        %v9432 = vunpack.c.h.b16 %v8989
        %v9433 = vunpack.c.l.b16 %v8990
        %v9434 = vunpack.c.h.b16 %v8990
        %v9435 = vpack.c.b16 %v9149, %v9147
        %v9436 = vpack.c.b16 %v9150, %v9148
        %v9437 = vpack.c.b16 %v9153, %v9151
        %v9438 = vpack.c.b16 %v9154, %v9152
        %v9439 = vpack.c.b16 %v9157, %v9155
        %v9440 = vpack.c.b16 %v9158, %v9156
        %v9441 = vpack.c.b16 %v9161, %v9159
        %v9442 = vpack.c.b16 %v9162, %v9160
        %v9443 = vpack.c.b16 %v9165, %v9163
        %v9444 = vpack.c.b16 %v9166, %v9164
        %v9445 = vpack.c.b16 %v9169, %v9167
        %v9446 = vpack.c.b16 %v9170, %v9168
        %v9447 = vpack.c.b16 %v9173, %v9171
        %v9448 = vpack.c.b16 %v9174, %v9172
        %v9449 = vpack.c.b16 %v9177, %v9175
        %v9450 = vpack.c.b16 %v9178, %v9176
        %v9451 = vpack.c.b16 %v9181, %v9179
        %v9452 = vpack.c.b16 %v9182, %v9180
        %v9453 = vpack.c.b16 %v9185, %v9183
        %v9454 = vpack.c.b16 %v9186, %v9184
        %v9455 = vpack.c.b16 %v9189, %v9187
        %v9456 = vpack.c.b16 %v9190, %v9188
        %v9457 = vpack.c.b16 %v9193, %v9191
        %v9458 = vpack.c.b16 %v9194, %v9192
        %v9459 = vpack.c.b16 %v9197, %v9195
        %v9460 = vpack.c.b16 %v9198, %v9196
        %v9461 = vpack.c.b16 %v9201, %v9199
        %v9462 = vpack.c.b16 %v9202, %v9200
        %v9463 = vpack.c.b16 %v9205, %v9203
        %v9464 = vpack.c.b16 %v9206, %v9204
        %v9465 = vpack.c.b16 %v9209, %v9207
        %v9466 = vpack.c.b16 %v9210, %v9208
        %v9467 = vpack.c.b16 %v9213, %v9211
        %v9468 = vpack.c.b16 %v9214, %v9212
        %v9469 = vpack.c.b16 %v9217, %v9215
        %v9470 = vpack.c.b16 %v9218, %v9216
        %v9471 = vpack.c.b16 %v9221, %v9219
        %v9472 = vpack.c.b16 %v9222, %v9220
        %v9473 = vpack.c.b16 %v9225, %v9223
        %v9474 = vpack.c.b16 %v9226, %v9224
        %v9475 = vpack.c.b16 %v9229, %v9227
        %v9476 = vpack.c.b16 %v9230, %v9228
        %v9477 = vpack.c.b16 %v9233, %v9231
        %v9478 = vpack.c.b16 %v9234, %v9232
        %v9479 = vpack.c.b16 %v9237, %v9235
        %v9480 = vpack.c.b16 %v9238, %v9236
        %v9481 = vpack.c.b16 %v9241, %v9239
        %v9482 = vpack.c.b16 %v9242, %v9240
        %v9483 = vpack.c.b16 %v9245, %v9243
        %v9484 = vpack.c.b16 %v9246, %v9244
        %v9485 = vpack.c.b16 %v9249, %v9247
        %v9486 = vpack.c.b16 %v9250, %v9248
        %v9487 = vpack.c.b16 %v9253, %v9251
        %v9488 = vpack.c.b16 %v9254, %v9252
        %v9489 = vpack.c.b16 %v9257, %v9255
        %v9490 = vpack.c.b16 %v9258, %v9256
        %v9491 = vpack.c.b16 %v9261, %v9259
        %v9492 = vpack.c.b16 %v9262, %v9260
        %v9493 = vpack.c.b16 %v9265, %v9263
        %v9494 = vpack.c.b16 %v9266, %v9264
        %v9495 = vpack.c.b16 %v9269, %v9267
        %v9496 = vpack.c.b16 %v9270, %v9268
        %v9497 = vpack.c.b16 %v9273, %v9271
        %v9498 = vpack.c.b16 %v9274, %v9272
        %v9499 = vpack.c.b16 %v9277, %v9275
        %v9500 = vpack.c.b16 %v9278, %v9276
        %v9501 = vpack.c.b16 %v9281, %v9279
        %v9502 = vpack.c.b16 %v9282, %v9280
        %v9503 = vpack.c.b16 %v9285, %v9283
        %v9504 = vpack.c.b16 %v9286, %v9284
        %v9505 = vpack.c.b16 %v9289, %v9287
        %v9506 = vpack.c.b16 %v9290, %v9288
        %v9507 = vpack.c.b16 %v9293, %v9291
        %v9508 = vpack.c.b16 %v9294, %v9292
        %v9509 = vpack.c.b16 %v9297, %v9295
        %v9510 = vpack.c.b16 %v9298, %v9296
        %v9511 = vpack.c.b16 %v9301, %v9299
        %v9512 = vpack.c.b16 %v9302, %v9300
        %v9513 = vpack.c.b16 %v9305, %v9303
        %v9514 = vpack.c.b16 %v9306, %v9304
        %v9515 = vpack.c.b16 %v9309, %v9307
        %v9516 = vpack.c.b16 %v9310, %v9308
        %v9517 = vpack.c.b16 %v9313, %v9311
        %v9518 = vpack.c.b16 %v9314, %v9312
        %v9519 = vpack.c.b16 %v9317, %v9315
        %v9520 = vpack.c.b16 %v9318, %v9316
        %v9521 = vpack.c.b16 %v9321, %v9319
        %v9522 = vpack.c.b16 %v9322, %v9320
        %v9523 = vpack.c.b16 %v9325, %v9323
        %v9524 = vpack.c.b16 %v9326, %v9324
        %v9525 = vpack.c.b16 %v9329, %v9327
        %v9526 = vpack.c.b16 %v9330, %v9328
        %v9527 = vpack.c.b16 %v9333, %v9331
        %v9528 = vpack.c.b16 %v9334, %v9332
        %v9529 = vpack.c.b16 %v9337, %v9335
        %v9530 = vpack.c.b16 %v9338, %v9336
        %v9531 = vpack.c.b16 %v9341, %v9339
        %v9532 = vpack.c.b16 %v9342, %v9340
        %v9533 = vpack.c.b16 %v9345, %v9343
        %v9534 = vpack.c.b16 %v9346, %v9344
        %v9535 = vpack.c.b16 %v9349, %v9347
        %v9536 = vpack.c.b16 %v9350, %v9348
        %v9537 = vpack.c.b16 %v9353, %v9351
        %v9538 = vpack.c.b16 %v9354, %v9352
        %v9539 = vpack.c.b16 %v9357, %v9355
        %v9540 = vpack.c.b16 %v9358, %v9356
        %v9541 = vpack.c.b16 %v9361, %v9359
        %v9542 = vpack.c.b16 %v9362, %v9360
        %v9543 = vpack.c.b16 %v9365, %v9363
        %v9544 = vpack.c.b16 %v9366, %v9364
        %v9545 = vpack.c.b16 %v9369, %v9367
        %v9546 = vpack.c.b16 %v9370, %v9368
        %v9547 = vpack.c.b16 %v9373, %v9371
        %v9548 = vpack.c.b16 %v9374, %v9372
        %v9549 = vpack.c.b16 %v9377, %v9375
        %v9550 = vpack.c.b16 %v9378, %v9376
        %v9551 = vpack.c.b16 %v9381, %v9379
        %v9552 = vpack.c.b16 %v9382, %v9380
        %v9553 = vpack.c.b16 %v9385, %v9383
        %v9554 = vpack.c.b16 %v9386, %v9384
        %v9555 = vpack.c.b16 %v9389, %v9387
        %v9556 = vpack.c.b16 %v9390, %v9388
        %v9557 = vpack.c.b16 %v9393, %v9391
        %v9558 = vpack.c.b16 %v9394, %v9392
        %v9559 = vpack.c.b16 %v9397, %v9395
        %v9560 = vpack.c.b16 %v9398, %v9396
        %v9561 = vpack.c.b16 %v9401, %v9399
        %v9562 = vpack.c.b16 %v9402, %v9400
        %v9563 = vpack.c.b16 %v9405, %v9403
        %v9564 = vpack.c.b16 %v9406, %v9404
        %v9565 = vpack.c.b16 %v9409, %v9407
        %v9566 = vpack.c.b16 %v9410, %v9408
        %v9567 = vpack.c.b16 %v9413, %v9411
        %v9568 = vpack.c.b16 %v9414, %v9412
        %v9569 = vpack.c.b16 %v9417, %v9415
        %v9570 = vpack.c.b16 %v9418, %v9416
        %v9571 = vpack.c.b16 %v9421, %v9419
        %v9572 = vpack.c.b16 %v9422, %v9420
        %v9573 = vpack.c.b16 %v9425, %v9423
        %v9574 = vpack.c.b16 %v9426, %v9424
        %v9575 = vpack.c.b16 %v9429, %v9427
        %v9576 = vpack.c.b16 %v9430, %v9428
        %v9577 = vpack.c.b16 %v9433, %v9431
        %v9578 = vpack.c.b16 %v9434, %v9432
        %9723 = vmatprep.subr.bf16.mxu0 %v9436
        %9724 = vmatpush1.bf16.msra.mxu0 %v9435
        %9725 = vmatprep.subr.bf16.mxu0 %v9438
        %9726 = vmatpush1.bf16.msra.mxu0 %v9437
        %9727 = vmatprep.subr.bf16.mxu0 %v9440
        %9728 = vmatpush1.bf16.msra.mxu0 %v9439
        %9729 = vmatprep.subr.bf16.mxu0 %v9442
        %9730 = vmatpush1.bf16.msra.mxu0 %v9441
        %9731 = vmatprep.subr.bf16.mxu0 %v9444
        %9732 = vmatpush1.bf16.msra.mxu0 %v9443
        %9733 = vmatprep.subr.bf16.mxu0 %v9446
        %9734 = vmatpush1.bf16.msra.mxu0 %v9445
        %9735 = vmatprep.subr.bf16.mxu0 %v9448
        %9736 = vmatpush1.bf16.msra.mxu0 %v9447
        %9737 = vmatprep.subr.bf16.mxu0 %v9450
        %9738 = vmatpush1.bf16.msra.mxu0 %v9449
        %9739 = vmatprep.subr.bf16.mxu0 %v9452
        %9740 = vmatpush1.bf16.msra.mxu0 %v9451
        %9741 = vmatprep.subr.bf16.mxu0 %v9454
        %9742 = vmatpush1.bf16.msra.mxu0 %v9453
        %9743 = vmatprep.subr.bf16.mxu0 %v9456
        %9744 = vmatpush1.bf16.msra.mxu0 %v9455
        %9745 = vmatprep.subr.bf16.mxu0 %v9458
        %9746 = vmatpush1.bf16.msra.mxu0 %v9457
        %9747 = vmatprep.subr.bf16.mxu0 %v9460
        %9748 = vmatpush1.bf16.msra.mxu0 %v9459
        %9749 = vmatprep.subr.bf16.mxu0 %v9462
        %9750 = vmatpush1.bf16.msra.mxu0 %v9461
        %9751 = vmatprep.subr.bf16.mxu0 %v9464
        %9752 = vmatpush1.bf16.msra.mxu0 %v9463
        %9753 = vmatprep.subr.bf16.mxu0 %v9466
        %9754 = vmatpush1.bf16.msra.mxu0 %v9465
        %9755 = vmatprep.mubr.bf16.mxu0 %v8711
        %9756 = vmatmul.mubr.bf16.gmra.mrb[0].mxu0 %v8693
        %v9757 = vpop.f32.mrb[0].mxu0
        %v9758 = vadd.f32 %v8996, %v9757
        %v9759 = vpop.f32.mrb[0].mxu0
        %v9760 = vadd.f32 %v9000, %v9759
        %v9761 = vpop.f32.mrb[0].mxu0
        %v9762 = vadd.f32 %v8996, %v9761
        %v9763 = vpop.f32.mrb[0].mxu0
        %v9764 = vadd.f32 %v9000, %v9763
        %9765 = vdwg.mxu0
        %9766 = vmatprep.subr.bf16.mxu0 %v9468
        %9767 = vmatpush1.bf16.msra.mxu0 %v9467
        %9768 = vmatprep.subr.bf16.mxu0 %v9470
        %9769 = vmatpush1.bf16.msra.mxu0 %v9469
        %9770 = vmatprep.subr.bf16.mxu0 %v9472
        %9771 = vmatpush1.bf16.msra.mxu0 %v9471
        %9772 = vmatprep.subr.bf16.mxu0 %v9474
        %9773 = vmatpush1.bf16.msra.mxu0 %v9473
        %9774 = vmatprep.subr.bf16.mxu0 %v9476
        %9775 = vmatpush1.bf16.msra.mxu0 %v9475
        %9776 = vmatprep.subr.bf16.mxu0 %v9478
        %9777 = vmatpush1.bf16.msra.mxu0 %v9477
        %9778 = vmatprep.subr.bf16.mxu0 %v9480
        %9779 = vmatpush1.bf16.msra.mxu0 %v9479
        %9780 = vmatprep.subr.bf16.mxu0 %v9482
        %9781 = vmatpush1.bf16.msra.mxu0 %v9481
        %9782 = vmatprep.subr.bf16.mxu0 %v9484
        %9783 = vmatpush1.bf16.msra.mxu0 %v9483
        %9784 = vmatprep.subr.bf16.mxu0 %v9486
        %9785 = vmatpush1.bf16.msra.mxu0 %v9485
        %9786 = vmatprep.subr.bf16.mxu0 %v9488
        %9787 = vmatpush1.bf16.msra.mxu0 %v9487
        %9788 = vmatprep.subr.bf16.mxu0 %v9490
        %9789 = vmatpush1.bf16.msra.mxu0 %v9489
        %9790 = vmatprep.subr.bf16.mxu0 %v9492
        %9791 = vmatpush1.bf16.msra.mxu0 %v9491
        %9792 = vmatprep.subr.bf16.mxu0 %v9494
        %9793 = vmatpush1.bf16.msra.mxu0 %v9493
        %9794 = vmatprep.subr.bf16.mxu0 %v9496
        %9795 = vmatpush1.bf16.msra.mxu0 %v9495
        %9796 = vmatprep.subr.bf16.mxu0 %v9498
        %9797 = vmatpush1.bf16.msra.mxu0 %v9497
        %9798 = vmatprep.mubr.bf16.mxu0 %v8751
        %9799 = vmatmul.mubr.bf16.gmra.mrb[0].mxu0 %v8729
        %v9800 = vpop.f32.mrb[0].mxu0
        %v9801 = vadd.f32 %v9758, %v9800
        %v9802 = vpop.f32.mrb[0].mxu0
        %v9803 = vadd.f32 %v9760, %v9802
        %v9804 = vpop.f32.mrb[0].mxu0
        %v9805 = vadd.f32 %v9762, %v9804
        %v9806 = vpop.f32.mrb[0].mxu0
        %v9807 = vadd.f32 %v9764, %v9806
        %9808 = vdwg.mxu0
        %9809 = vmatprep.subr.bf16.mxu0 %v9500
        %9810 = vmatpush1.bf16.msra.mxu0 %v9499
        %9811 = vmatprep.subr.bf16.mxu0 %v9502
        %9812 = vmatpush1.bf16.msra.mxu0 %v9501
        %9813 = vmatprep.subr.bf16.mxu0 %v9504
        %9814 = vmatpush1.bf16.msra.mxu0 %v9503
        %9815 = vmatprep.subr.bf16.mxu0 %v9506
        %9816 = vmatpush1.bf16.msra.mxu0 %v9505
        %9817 = vmatprep.subr.bf16.mxu0 %v9508
        %9818 = vmatpush1.bf16.msra.mxu0 %v9507
        %9819 = vmatprep.subr.bf16.mxu0 %v9510
        %9820 = vmatpush1.bf16.msra.mxu0 %v9509
        %9821 = vmatprep.subr.bf16.mxu0 %v9512
        %9822 = vmatpush1.bf16.msra.mxu0 %v9511
        %9823 = vmatprep.subr.bf16.mxu0 %v9514
        %9824 = vmatpush1.bf16.msra.mxu0 %v9513
        %9825 = vmatprep.subr.bf16.mxu0 %v9516
        %9826 = vmatpush1.bf16.msra.mxu0 %v9515
        %9827 = vmatprep.subr.bf16.mxu0 %v9518
        %9828 = vmatpush1.bf16.msra.mxu0 %v9517
        %9829 = vmatprep.subr.bf16.mxu0 %v9520
        %9830 = vmatpush1.bf16.msra.mxu0 %v9519
        %9831 = vmatprep.subr.bf16.mxu0 %v9522
        %9832 = vmatpush1.bf16.msra.mxu0 %v9521
        %9833 = vmatprep.subr.bf16.mxu0 %v9524
        %9834 = vmatpush1.bf16.msra.mxu0 %v9523
        %9835 = vmatprep.subr.bf16.mxu0 %v9526
        %9836 = vmatpush1.bf16.msra.mxu0 %v9525
        %9837 = vmatprep.subr.bf16.mxu0 %v9528
        %9838 = vmatpush1.bf16.msra.mxu0 %v9527
        %9839 = vmatprep.subr.bf16.mxu0 %v9530
        %9840 = vmatpush1.bf16.msra.mxu0 %v9529
        %9841 = vmatprep.mubr.bf16.mxu0 %v8787
        %9842 = vmatmul.mubr.bf16.gmra.mrb[0].mxu0 %v8769
        %v9843 = vpop.f32.mrb[0].mxu0
        %v9844 = vadd.f32 %v9801, %v9843
        %v9845 = vpop.f32.mrb[0].mxu0
        %v9846 = vadd.f32 %v9803, %v9845
        %v9847 = vpop.f32.mrb[0].mxu0
        %v9848 = vadd.f32 %v9805, %v9847
        %v9849 = vpop.f32.mrb[0].mxu0
        %v9850 = vadd.f32 %v9807, %v9849
        %9851 = vdwg.mxu0
        %9852 = vmatprep.subr.bf16.mxu0 %v9532
        %9853 = vmatpush1.bf16.msra.mxu0 %v9531
        %9854 = vmatprep.subr.bf16.mxu0 %v9534
        %9855 = vmatpush1.bf16.msra.mxu0 %v9533
        %9856 = vmatprep.subr.bf16.mxu0 %v9536
        %9857 = vmatpush1.bf16.msra.mxu0 %v9535
        %9858 = vmatprep.subr.bf16.mxu0 %v9538
        %9859 = vmatpush1.bf16.msra.mxu0 %v9537
        %9860 = vmatprep.subr.bf16.mxu0 %v9540
        %9861 = vmatpush1.bf16.msra.mxu0 %v9539
        %9862 = vmatprep.subr.bf16.mxu0 %v9542
        %9863 = vmatpush1.bf16.msra.mxu0 %v9541
        %9864 = vmatprep.subr.bf16.mxu0 %v9544
        %9865 = vmatpush1.bf16.msra.mxu0 %v9543
        %9866 = vmatprep.subr.bf16.mxu0 %v9546
        %9867 = vmatpush1.bf16.msra.mxu0 %v9545
        %9868 = vmatprep.subr.bf16.mxu0 %v9548
        %9869 = vmatpush1.bf16.msra.mxu0 %v9547
        %9870 = vmatprep.subr.bf16.mxu0 %v9550
        %9871 = vmatpush1.bf16.msra.mxu0 %v9549
        %9872 = vmatprep.subr.bf16.mxu0 %v9552
        %9873 = vmatpush1.bf16.msra.mxu0 %v9551
        %9874 = vmatprep.subr.bf16.mxu0 %v9554
        %9875 = vmatpush1.bf16.msra.mxu0 %v9553
        %9876 = vmatprep.subr.bf16.mxu0 %v9556
        %9877 = vmatpush1.bf16.msra.mxu0 %v9555
        %9878 = vmatprep.subr.bf16.mxu0 %v9558
        %9879 = vmatpush1.bf16.msra.mxu0 %v9557
        %9880 = vmatprep.subr.bf16.mxu0 %v9560
        %9881 = vmatpush1.bf16.msra.mxu0 %v9559
        %9882 = vmatprep.subr.bf16.mxu0 %v9562
        %9883 = vmatpush1.bf16.msra.mxu0 %v9561
        %9884 = vmatprep.mubr.bf16.mxu0 %v8827
        %9885 = vmatmul.mubr.bf16.gmra.mrb[0].mxu0 %v8809
        %v9886 = vpop.f32.mrb[0].mxu0
        %v9887 = vadd.f32 %v9844, %v9886
        %v9888 = vpop.f32.mrb[0].mxu0
        %v9889 = vadd.f32 %v9846, %v9888
        %v9890 = vpop.f32.mrb[0].mxu0
        %v9891 = vadd.f32 %v9848, %v9890
        %v9892 = vpop.f32.mrb[0].mxu0
        %v9893 = vadd.f32 %v9850, %v9892
        %9894 = vdwg.mxu0
        %9895 = vmatprep.subr.bf16.mxu0 %v9564
        %9896 = vmatpush1.bf16.msra.mxu0 %v9563
        %9897 = vmatprep.subr.bf16.mxu0 %v9566
        %9898 = vmatpush1.bf16.msra.mxu0 %v9565
        %9899 = vmatprep.subr.bf16.mxu0 %v9568
        %9900 = vmatpush1.bf16.msra.mxu0 %v9567
        %9901 = vmatprep.subr.bf16.mxu0 %v9570
        %9902 = vmatpush1.bf16.msra.mxu0 %v9569
        %9903 = vmatprep.subr.bf16.mxu0 %v9572
        %9904 = vmatpush1.bf16.msra.mxu0 %v9571
        %9905 = vmatprep.subr.bf16.mxu0 %v9574
        %9906 = vmatpush1.bf16.msra.mxu0 %v9573
        %9907 = vmatprep.subr.bf16.mxu0 %v9576
        %9908 = vmatpush1.bf16.msra.mxu0 %v9575
        %9909 = vmatprep.subr.bf16.mxu0 %v9578
        %9910 = vmatpush1.bf16.msra.mxu0 %v9577
        %9911 = vmatprep.subr.bf16.mxu0 0
        %9912 = vmatpush1.bf16.msra.mxu0 0
        %9913 = vmatprep.subr.bf16.mxu0 0
        %9914 = vmatpush1.bf16.msra.mxu0 0
        %9915 = vmatprep.subr.bf16.mxu0 0
        %9916 = vmatpush1.bf16.msra.mxu0 0
        %9917 = vmatprep.subr.bf16.mxu0 0
        %9918 = vmatpush1.bf16.msra.mxu0 0
        %9919 = vmatprep.subr.bf16.mxu0 0
        %9920 = vmatpush1.bf16.msra.mxu0 0
        %9921 = vmatprep.subr.bf16.mxu0 0
        %9922 = vmatpush1.bf16.msra.mxu0 0
        %9923 = vmatprep.subr.bf16.mxu0 0
        %9924 = vmatpush1.bf16.msra.mxu0 0
        %9925 = vmatprep.subr.bf16.mxu0 0
        %9926 = vmatpush1.bf16.msra.mxu0 0
        %9927 = vmatprep.mubr.bf16.mxu0 0
        %9928 = vmatmul.mubr.bf16.gmra.mrb[0].mxu0 %v8845
        %v9929 = vpop.f32.mrb[0].mxu0
        %v9930 = vadd.f32 %v9887, %v9929
        %v9931 = vpop.f32.mrb[0].mxu0
        %v9932 = vadd.f32 %v9889, %v9931
        %v9933 = vpop.f32.mrb[0].mxu0
        %v9934 = vadd.f32 %v9891, %v9933
        %v9935 = vpop.f32.mrb[0].mxu0
        %v9936 = vadd.f32 %v9893, %v9935
        %9937 = vdwg.mxu0
        %v9938 = vmax.f32 %v9930, 0.0
        %v9939 = vmax.f32 %v9932, 0.0
        %v9940 = vmax.f32 %v9934, 0.0
        %v9941 = vmax.f32 %v9936, 0.0
        %v9946 = vcombine.low %v9938, %v9939
        %v9947 = vcombine.high %v9938, %v9939
        %v9949 = vunpack.c.l.s4 1983009808
        %v9950 = vunpack.c.0.s8 %v9949
        %v9951 = vlaneseq
        %v9952 = vshrl.u32 %v9951, 7
        %v9953 = vsub.s32 %v9950, %v9952
        %v9954 = vrot.slane %v9946, %v9953
        %v9956 = vunpack.c.l.s4 1983009808
        %v9957 = vunpack.c.0.s8 %v9956
        %v9958 = vlaneseq
        %v9959 = vshrl.u32 %v9958, 7
        %v9960 = vsub.s32 %v9957, %v9959
        %v9961 = vrot.slane %v9947, %v9960
        %v9962 = vcombine.high %v9954, %v9954
        %v9963 = vcombine.high %v9961, %v9961
        %v9964 = vcombine.low %v9940, %v9941
        %v9965 = vcombine.high %v9940, %v9941
        %v9967 = vunpack.c.l.s4 1983009808
        %v9968 = vunpack.c.0.s8 %v9967
        %v9969 = vlaneseq
        %v9970 = vshrl.u32 %v9969, 7
        %v9971 = vsub.s32 %v9968, %v9970
        %v9972 = vrot.slane %v9964, %v9971
        %v9974 = vunpack.c.l.s4 1983009808
        %v9975 = vunpack.c.0.s8 %v9974
        %v9976 = vlaneseq
        %v9977 = vshrl.u32 %v9976, 7
        %v9978 = vsub.s32 %v9975, %v9977
        %v9979 = vrot.slane %v9965, %v9978
        %v9980 = vcombine.high %v9972, %v9972
        %v9981 = vcombine.high %v9979, %v9979
        %v9983 = vunpack.c.l.s4 1983009808
        %v9984 = vunpack.c.0.s8 %v9983
        %v9985 = vlaneseq
        %v9986 = vshrl.u32 %v9985, 7
        %v9987 = vsub.s32 %v9984, %v9986
        %v9988 = vrot.slane %v9954, %v9987
        %v9989 = vcombine.high %v9988, %v9988
        %v9991 = vunpack.c.l.s4 1983009808
        %v9992 = vunpack.c.0.s8 %v9991
        %v9993 = vlaneseq
        %v9994 = vshrl.u32 %v9993, 7
        %v9995 = vsub.s32 %v9992, %v9994
        %v9996 = vrot.slane %v9962, %v9995
        %v9997 = vcombine.high %v9996, %v9996
        %v9999 = vunpack.c.l.s4 1983009808
        %v10000 = vunpack.c.0.s8 %v9999
        %v10001 = vlaneseq
        %v10002 = vshrl.u32 %v10001, 7
        %v10003 = vsub.s32 %v10000, %v10002
        %v10004 = vrot.slane %v9961, %v10003
        %v10005 = vcombine.high %v10004, %v10004
        %v10007 = vunpack.c.l.s4 1983009808
        %v10008 = vunpack.c.0.s8 %v10007
        %v10009 = vlaneseq
        %v10010 = vshrl.u32 %v10009, 7
        %v10011 = vsub.s32 %v10008, %v10010
        %v10012 = vrot.slane %v9963, %v10011
        %v10013 = vcombine.high %v10012, %v10012
        %v10015 = vunpack.c.l.s4 1983009808
        %v10016 = vunpack.c.0.s8 %v10015
        %v10017 = vlaneseq
        %v10018 = vshrl.u32 %v10017, 7
        %v10019 = vsub.s32 %v10016, %v10018
        %v10020 = vrot.slane %v9972, %v10019
        %v10021 = vcombine.high %v10020, %v10020
        %v10023 = vunpack.c.l.s4 1983009808
        %v10024 = vunpack.c.0.s8 %v10023
        %v10025 = vlaneseq
        %v10026 = vshrl.u32 %v10025, 7
        %v10027 = vsub.s32 %v10024, %v10026
        %v10028 = vrot.slane %v9980, %v10027
        %v10029 = vcombine.high %v10028, %v10028
        %v10031 = vunpack.c.l.s4 1983009808
        %v10032 = vunpack.c.0.s8 %v10031
        %v10033 = vlaneseq
        %v10034 = vshrl.u32 %v10033, 7
        %v10035 = vsub.s32 %v10032, %v10034
        %v10036 = vrot.slane %v9979, %v10035
        %v10037 = vcombine.high %v10036, %v10036
        %v10039 = vunpack.c.l.s4 1983009808
        %v10040 = vunpack.c.0.s8 %v10039
        %v10041 = vlaneseq
        %v10042 = vshrl.u32 %v10041, 7
        %v10043 = vsub.s32 %v10040, %v10042
        %v10044 = vrot.slane %v9981, %v10043
        %v10045 = vcombine.high %v10044, %v10044
        %v10062 = vsel %vm7804, %v9988, -inf
        %v10063 = vrot.slane %v10062, 4
        %v10064 = vmax.f32 %v10062, %v10063
        %v10065 = vrot.slane %v10064, 2
        %v10066 = vmax.f32 %v10064, %v10065
        %v10067 = vrot.slane %v10066, 1
        %v10068 = vmax.f32 %v10066, %v10067
        %v10069 = vsel %vm7804, %v9989, -inf
        %v10070 = vrot.slane %v10069, 4
        %v10071 = vmax.f32 %v10069, %v10070
        %v10072 = vrot.slane %v10071, 2
        %v10073 = vmax.f32 %v10071, %v10072
        %v10074 = vrot.slane %v10073, 1
        %v10075 = vmax.f32 %v10073, %v10074
        %v10076 = vsel %vm7804, %v9996, -inf
        %v10077 = vrot.slane %v10076, 4
        %v10078 = vmax.f32 %v10076, %v10077
        %v10079 = vrot.slane %v10078, 2
        %v10080 = vmax.f32 %v10078, %v10079
        %v10081 = vrot.slane %v10080, 1
        %v10082 = vmax.f32 %v10080, %v10081
        %v10083 = vsel %vm7804, %v9997, -inf
        %v10084 = vrot.slane %v10083, 4
        %v10085 = vmax.f32 %v10083, %v10084
        %v10086 = vrot.slane %v10085, 2
        %v10087 = vmax.f32 %v10085, %v10086
        %v10088 = vrot.slane %v10087, 1
        %v10089 = vmax.f32 %v10087, %v10088
        %v10090 = vsel %vm7804, %v10004, -inf
        %v10091 = vrot.slane %v10090, 4
        %v10092 = vmax.f32 %v10090, %v10091
        %v10093 = vrot.slane %v10092, 2
        %v10094 = vmax.f32 %v10092, %v10093
        %v10095 = vrot.slane %v10094, 1
        %v10096 = vmax.f32 %v10094, %v10095
        %v10097 = vsel %vm7804, %v10005, -inf
        %v10098 = vrot.slane %v10097, 4
        %v10099 = vmax.f32 %v10097, %v10098
        %v10100 = vrot.slane %v10099, 2
        %v10101 = vmax.f32 %v10099, %v10100
        %v10102 = vrot.slane %v10101, 1
        %v10103 = vmax.f32 %v10101, %v10102
        %v10104 = vsel %vm7804, %v10012, -inf
        %v10105 = vrot.slane %v10104, 4
        %v10106 = vmax.f32 %v10104, %v10105
        %v10107 = vrot.slane %v10106, 2
        %v10108 = vmax.f32 %v10106, %v10107
        %v10109 = vrot.slane %v10108, 1
        %v10110 = vmax.f32 %v10108, %v10109
        %v10111 = vsel %vm7804, %v10013, -inf
        %v10112 = vrot.slane %v10111, 4
        %v10113 = vmax.f32 %v10111, %v10112
        %v10114 = vrot.slane %v10113, 2
        %v10115 = vmax.f32 %v10113, %v10114
        %v10116 = vrot.slane %v10115, 1
        %v10117 = vmax.f32 %v10115, %v10116
        %v10118 = vsel %vm7804, %v10020, -inf
        %v10119 = vrot.slane %v10118, 4
        %v10120 = vmax.f32 %v10118, %v10119
        %v10121 = vrot.slane %v10120, 2
        %v10122 = vmax.f32 %v10120, %v10121
        %v10123 = vrot.slane %v10122, 1
        %v10124 = vmax.f32 %v10122, %v10123
        %v10125 = vsel %vm7804, %v10021, -inf
        %v10126 = vrot.slane %v10125, 4
        %v10127 = vmax.f32 %v10125, %v10126
        %v10128 = vrot.slane %v10127, 2
        %v10129 = vmax.f32 %v10127, %v10128
        %v10130 = vrot.slane %v10129, 1
        %v10131 = vmax.f32 %v10129, %v10130
        %v10132 = vsel %vm7804, %v10028, -inf
        %v10133 = vrot.slane %v10132, 4
        %v10134 = vmax.f32 %v10132, %v10133
        %v10135 = vrot.slane %v10134, 2
        %v10136 = vmax.f32 %v10134, %v10135
        %v10137 = vrot.slane %v10136, 1
        %v10138 = vmax.f32 %v10136, %v10137
        %v10139 = vsel %vm7804, %v10029, -inf
        %v10140 = vrot.slane %v10139, 4
        %v10141 = vmax.f32 %v10139, %v10140
        %v10142 = vrot.slane %v10141, 2
        %v10143 = vmax.f32 %v10141, %v10142
        %v10144 = vrot.slane %v10143, 1
        %v10145 = vmax.f32 %v10143, %v10144
        %v10146 = vsel %vm7804, %v10036, -inf
        %v10147 = vrot.slane %v10146, 4
        %v10148 = vmax.f32 %v10146, %v10147
        %v10149 = vrot.slane %v10148, 2
        %v10150 = vmax.f32 %v10148, %v10149
        %v10151 = vrot.slane %v10150, 1
        %v10152 = vmax.f32 %v10150, %v10151
        %v10153 = vsel %vm7804, %v10037, -inf
        %v10154 = vrot.slane %v10153, 4
        %v10155 = vmax.f32 %v10153, %v10154
        %v10156 = vrot.slane %v10155, 2
        %v10157 = vmax.f32 %v10155, %v10156
        %v10158 = vrot.slane %v10157, 1
        %v10159 = vmax.f32 %v10157, %v10158
        %v10160 = vsel %vm7804, %v10044, -inf
        %v10161 = vrot.slane %v10160, 4
        %v10162 = vmax.f32 %v10160, %v10161
        %v10163 = vrot.slane %v10162, 2
        %v10164 = vmax.f32 %v10162, %v10163
        %v10165 = vrot.slane %v10164, 1
        %v10166 = vmax.f32 %v10164, %v10165
        %v10167 = vsel %vm7804, %v10045, -inf
        %v10168 = vrot.slane %v10167, 4
        %v10169 = vmax.f32 %v10167, %v10168
        %v10170 = vrot.slane %v10169, 2
        %v10171 = vmax.f32 %v10169, %v10170
        %v10172 = vrot.slane %v10171, 1
        %v10173 = vmax.f32 %v10171, %v10172
        %v10174 = vmax.f32 %v10068, %v10096
        %v10175 = vmax.f32 %v10075, %v10103
        %v10176 = vmax.f32 %v10082, %v10110
        %v10177 = vmax.f32 %v10089, %v10117
        %v10178 = vmax.f32 %v10124, %v10152
        %v10179 = vmax.f32 %v10131, %v10159
        %v10180 = vmax.f32 %v10138, %v10166
        %v10181 = vmax.f32 %v10145, %v10173
        %v10182 = vpack.c.bf16 %v10174, %v10174
        %v10183 = vpack.c.bf16 %v10175, %v10175
        %v10184 = vpack.c.bf16 %v10176, %v10176
        %v10185 = vpack.c.bf16 %v10177, %v10177
        %v10186 = vpack.c.bf16 %v10178, %v10178
        %v10187 = vpack.c.bf16 %v10179, %v10179
        %v10188 = vpack.c.bf16 %v10180, %v10180
        %v10189 = vpack.c.bf16 %v10181, %v10181
        %v10190 = vld [vmem:[%s7] sm:$0xf]
        %v10191 = vld [vmem:[%s7 + $0x4] sm:$0xf]
        %v10192 = vld [vmem:[%s7 + $0x8] sm:$0xf]
        %v10193 = vld [vmem:[%s7 + $0xc] sm:$0xf]
        %v10194 = vld [vmem:[%s7 + $0x10] sm:$0xf]
        %v10195 = vld [vmem:[%s7 + $0x14] sm:$0xf]
        %v10196 = vld [vmem:[%s7 + $0x18] sm:$0xf]
        %v10197 = vld [vmem:[%s7 + $0x1c] sm:$0xf]
        %v10198 = vld [vmem:[%s7 + $0x20] sm:$0xf]
        %v10199 = vld [vmem:[%s7 + $0x24] sm:$0xf]
        %v10200 = vld [vmem:[%s7 + $0x28] sm:$0xf]
        %v10201 = vld [vmem:[%s7 + $0x2c] sm:$0xf]
        %v10202 = vld [vmem:[%s7 + $0x30] sm:$0xf]
        %v10203 = vld [vmem:[%s7 + $0x34] sm:$0xf]
        %v10204 = vld [vmem:[%s7 + $0x38] sm:$0xf]
        %v10205 = vld [vmem:[%s7 + $0x3c] sm:$0xf]
        %v10206 = vld [vmem:[%s7 + $0x40] sm:$0xf]
        %v10207 = vld [vmem:[%s7 + $0x44] sm:$0xf]
        %v10208 = vld [vmem:[%s7 + $0x48] sm:$0xf]
        %v10209 = vld [vmem:[%s7 + $0x4c] sm:$0xf]
        %v10210 = vld [vmem:[%s7 + $0x50] sm:$0xf]
        %v10211 = vld [vmem:[%s7 + $0x54] sm:$0xf]
        %v10212 = vld [vmem:[%s7 + $0x58] sm:$0xf]
        %v10213 = vld [vmem:[%s7 + $0x5c] sm:$0xf]
        %v10214 = vld [vmem:[%s7 + $0x60] sm:$0xf]
        %v10215 = vld [vmem:[%s7 + $0x64] sm:$0xf]
        %v10216 = vld [vmem:[%s7 + $0x68] sm:$0xf]
        %v10217 = vld [vmem:[%s7 + $0x6c] sm:$0xf]
        %v10218 = vld [vmem:[%s7 + $0x70] sm:$0xf]
        %v10219 = vld [vmem:[%s7 + $0x74] sm:$0xf]
        %v10220 = vld [vmem:[%s7 + $0x78] sm:$0xf]
        %v10221 = vld [vmem:[%s7 + $0x7c] sm:$0xf]
        %v10222 = vld [vmem:[%s8] sm:$0x1]
        %v10224 = vlaneseq
        %v10225 = vshrl.u32 %v10224, 7
        %v10226 = vsub.s32 0, %v10225
        %v10227 = vrot.slane %v10222, %v10226
        %v10237 = vunpack.c.l.b16 %v10182
        %v10238 = vunpack.c.l.b16 %v10183
        %v10239 = vunpack.c.l.b16 %v10184
        %v10240 = vunpack.c.l.b16 %v10185
        %v10241 = vunpack.c.l.b16 %v10186
        %v10242 = vunpack.c.l.b16 %v10187
        %v10243 = vunpack.c.l.b16 %v10188
        %v10244 = vunpack.c.l.b16 %v10189
        %vm10245 = vcmask 1041409
        %v10246 = vsel %vm10245, %v10239, %v10237
        %v10247 = vsel %vm6201, %v10241, %v10246
        %v10248 = vsel %vm6203, %v10243, %v10247
        %v10249 = vsel %vm10245, %v10240, %v10238
        %v10250 = vsel %vm6201, %v10242, %v10249
        %v10251 = vsel %vm6203, %v10244, %v10250
        %v10252 = vpack.c.b16 %v10248, %v10248
        %v10253 = vpack.c.b16 %v10251, %v10251
        %v10288 = vunpack.c.l.b16 %v10190
        %v10289 = vunpack.c.l.b16 %v10191
        %v10290 = vunpack.c.l.b16 %v10192
        %v10291 = vunpack.c.l.b16 %v10193
        %v10292 = vunpack.c.l.b16 %v10194
        %v10293 = vunpack.c.l.b16 %v10195
        %v10294 = vunpack.c.l.b16 %v10196
        %v10295 = vunpack.c.l.b16 %v10197
        %v10296 = vunpack.c.l.b16 %v10198
        %v10297 = vunpack.c.l.b16 %v10199
        %v10298 = vunpack.c.l.b16 %v10200
        %v10299 = vunpack.c.l.b16 %v10201
        %v10300 = vunpack.c.l.b16 %v10202
        %v10301 = vunpack.c.l.b16 %v10203
        %v10302 = vunpack.c.l.b16 %v10204
        %v10303 = vunpack.c.l.b16 %v10205
        %v10304 = vunpack.c.l.b16 %v10206
        %v10305 = vunpack.c.l.b16 %v10207
        %v10306 = vunpack.c.l.b16 %v10208
        %v10307 = vunpack.c.l.b16 %v10209
        %v10308 = vunpack.c.l.b16 %v10210
        %v10309 = vunpack.c.l.b16 %v10211
        %v10310 = vunpack.c.l.b16 %v10212
        %v10311 = vunpack.c.l.b16 %v10213
        %v10312 = vunpack.c.l.b16 %v10214
        %v10313 = vunpack.c.l.b16 %v10215
        %v10314 = vunpack.c.l.b16 %v10216
        %v10315 = vunpack.c.l.b16 %v10217
        %v10316 = vunpack.c.l.b16 %v10218
        %v10317 = vunpack.c.l.b16 %v10219
        %v10318 = vunpack.c.l.b16 %v10220
        %v10319 = vunpack.c.l.b16 %v10221
        %v10320 = vpack.c.b16 %v10289, %v10288
        %v10321 = vpack.c.b16 %v10291, %v10290
        %v10322 = vpack.c.b16 %v10293, %v10292
        %v10323 = vpack.c.b16 %v10295, %v10294
        %v10324 = vpack.c.b16 %v10297, %v10296
        %v10325 = vpack.c.b16 %v10299, %v10298
        %v10326 = vpack.c.b16 %v10301, %v10300
        %v10327 = vpack.c.b16 %v10303, %v10302
        %v10328 = vpack.c.b16 %v10305, %v10304
        %v10329 = vpack.c.b16 %v10307, %v10306
        %v10330 = vpack.c.b16 %v10309, %v10308
        %v10331 = vpack.c.b16 %v10311, %v10310
        %v10332 = vpack.c.b16 %v10313, %v10312
        %v10333 = vpack.c.b16 %v10315, %v10314
        %v10334 = vpack.c.b16 %v10317, %v10316
        %v10335 = vpack.c.b16 %v10319, %v10318
        %10352 = vmatprep.subr.bf16.mxu0 0
        %10353 = vmatpush1.bf16.msra.mxu0 %v10320
        %10354 = vmatprep.subr.bf16.mxu0 0
        %10355 = vmatpush1.bf16.msra.mxu0 %v10321
        %10356 = vmatprep.subr.bf16.mxu0 0
        %10357 = vmatpush1.bf16.msra.mxu0 %v10322
        %10358 = vmatprep.subr.bf16.mxu0 0
        %10359 = vmatpush1.bf16.msra.mxu0 %v10323
        %10360 = vmatprep.subr.bf16.mxu0 0
        %10361 = vmatpush1.bf16.msra.mxu0 %v10324
        %10362 = vmatprep.subr.bf16.mxu0 0
        %10363 = vmatpush1.bf16.msra.mxu0 %v10325
        %10364 = vmatprep.subr.bf16.mxu0 0
        %10365 = vmatpush1.bf16.msra.mxu0 %v10326
        %10366 = vmatprep.subr.bf16.mxu0 0
        %10367 = vmatpush1.bf16.msra.mxu0 %v10327
        %10368 = vmatprep.subr.bf16.mxu0 0
        %10369 = vmatpush1.bf16.msra.mxu0 %v10328
        %10370 = vmatprep.subr.bf16.mxu0 0
        %10371 = vmatpush1.bf16.msra.mxu0 %v10329
        %10372 = vmatprep.subr.bf16.mxu0 0
        %10373 = vmatpush1.bf16.msra.mxu0 %v10330
        %10374 = vmatprep.subr.bf16.mxu0 0
        %10375 = vmatpush1.bf16.msra.mxu0 %v10331
        %10376 = vmatprep.subr.bf16.mxu0 0
        %10377 = vmatpush1.bf16.msra.mxu0 %v10332
        %10378 = vmatprep.subr.bf16.mxu0 0
        %10379 = vmatpush1.bf16.msra.mxu0 %v10333
        %10380 = vmatprep.subr.bf16.mxu0 0
        %10381 = vmatpush1.bf16.msra.mxu0 %v10334
        %10382 = vmatprep.subr.bf16.mxu0 0
        %10383 = vmatpush1.bf16.msra.mxu0 %v10335
        %10384 = vmatprep.mubr.bf16.mxu0 %v10253
        %10385 = vmatmul.mubr.bf16.gmra.mrb[0].mxu0 %v10252
        %v10386 = vpop.f32.mrb[0].mxu0
        %v10387 = vadd.f32 %v10227, %v10386
        %v10388 = vpop.f32.mrb[0].mxu0
        %v10389 = vpop.f32.mrb[0].mxu0
        %v10390 = vpop.f32.mrb[0].mxu0
        %10391 = vdwg.mxu0
        %v10392 = vxor.u32 %v10387, 2147483648
        %v10393 = vmul.f32 %v10392, 1.442695
        %v10394 = vpow.pop %v10393
        %v10395 = vadd.f32 %v10394, 1.0
        %v10396 = vrcp.pop %v10395
        %v10397 = vmul.f32 1.0, %v10396
        %10398 = vst [vmem:[%s345] sm:$0xf] %v10397
        %p10399 = scmp.lt.s32.totalorder %s21, 1
        %s10400 = scalar_select %p10399, %s21, 1
        %s10401 = smul.addr %s10400, 4
        %s10402 = scalar_lea.vmem %s9, %s10401
        // Predicated region
        $region61: #{dwm_forward.1} parent=55 // pred_check
          %p10403 = pneg %p233
        $region62: #{dwm_forward.1} parent=55 // pred_check_branch
          %10405 = sbr.rel (%p10403) target = $region64
        $region63: #{dwm_forward.1} parent=55 // pred_region
          _
        $region64: #{dwm_forward.1} parent=55 // pred_fallthru
          _
      $region56: #{dwm_forward.1} parent=5 // pred_fallthru
        _
      %p10406 = scmp.le.s32.totalorder 2, %s16
      // Predicated region
      $region65: #{dwm_forward.1} parent=5 // pred_check
        %p10407 = pneg %p10406
      $region66: #{dwm_forward.1} parent=5 // pred_check_branch
        %10409 = sbr.rel (%p10407) target = $region68
      $region67: #{dwm_forward.1} parent=5 // pred_region
        %s10410 = ssub.s32 %s16, 2
        // Predicated region
        $region69: #{dwm_forward.1} parent=67 // pred_check
          %p10411 = pneg %p239
        $region70: #{dwm_forward.1} parent=67 // pred_check_branch
          %10413 = sbr.rel (%p10411) target = $region72
        $region71: #{dwm_forward.1} parent=67 // pred_region
          %p10414 = scmp.lt.s32.totalorder %s22, 1
          %s10415 = scalar_select %p10414, %s22, 1
          %s10416 = smul.addr %s10415, 4
          %s10417 = scalar_lea.vmem %s9, %s10416
        $region72: #{dwm_forward.1} parent=67 // pred_fallthru
          _
      $region68: #{dwm_forward.1} parent=5 // pred_fallthru
        _
    $region6: #{dwm_forward.1} parent=1 // loop_footer
      %s20 = sadd.s32 1, %s16
    $region7: #{dwm_forward.1} parent=1 // loop_footer_branch
      %15 = sbr.rel target = $region3
    $region8: #{dwm_forward.1} parent=1 // loop_exit
      _
    %10418 = vsyncpa [#allocation6], 1
    %s10419 = scalar_lea.sflag [#allocation6], 1
    %10420 = vsyncpa %s10419, 1

</llo_original>
